<compile_context>
chip_gen: v7x
topology: tpu7x:2x2x1
jax: 0.10.0
libtpu: 0.0.40
codegen_flags: <defaults>
</compile_context>

<pallas_src>
import functools

import jax
import jax.numpy as jnp
import numpy as np
from jax.experimental import pallas as pl
from jax.experimental.pallas import tpu as pltpu

TN = 1024                               # row tile over points (review: sweep 512-2048)
BN_EPS = 1e-5
_KERNEL1_VMEM_LIMIT = 48 * 1024 * 1024  # explicit scoped-VMEM limit for kernel 1


def _tensorcores_per_chip():
    """2 TensorCores per chip on v7x, 1 on v5e/v6e."""
    try:
        kind = jax.devices()[0].device_kind.lower()
    except Exception:
        kind = ""
    return 2 if "v7" in kind else 1


# ----------------------------- Kernel 1 --------------------------------------
def _input_mlp_pool_kernel(x_ref, batch_ref,
                           w1_ref, t1_ref,
                           w2_ref, t2_ref,
                           w3_ref, t3_ref,
                           out_ref, *,
                           num_graphs, tiles_per_split, num_tiles, guard_tail):
    """Fused per-point MLP (BN folded) + segment max-pool for one core's split.

    The (G, 1024) pooled accumulator stays resident in VMEM across the tile
    axis (output block index is constant along grid axis 1).
    """
    @pl.when(pl.program_id(1) == 0)
    def _init():
        out_ref[...] = jnp.full(out_ref.shape, -jnp.inf, dtype=out_ref.dtype)

    def _compute():
        # Input MLP: bf16 matmul inputs, f32 MXU accumulation, f32 shift+ReLU.
        x = x_ref[...]                                               # (TN, 64) bf16
        h = jnp.maximum(
            jnp.dot(x, w1_ref[...], preferred_element_type=jnp.float32)
            + t1_ref[...], 0.0)                                      # (TN, 64) f32
        h = jnp.maximum(
            jnp.dot(h.astype(jnp.bfloat16), w2_ref[...],
                    preferred_element_type=jnp.float32)
            + t2_ref[...], 0.0)                                      # (TN, 128)
        h = jnp.maximum(
            jnp.dot(h.astype(jnp.bfloat16), w3_ref[...],
                    preferred_element_type=jnp.float32)
            + t3_ref[...], 0.0)                                      # (TN, 1024)

        # Segment max-pool.  Padded rows carry batch id == num_graphs and match
        # no real graph.  Fine for small G (one VPU where-pass + one XLU
        # sublane-reduce per graph per tile); see sorted-segment TODO for big G.
        bidx = batch_ref[...]                                        # (TN, 1) int32
        tile_max = jnp.concatenate(
            [jnp.max(jnp.where(bidx == b, h, -jnp.inf), axis=0, keepdims=True)
             for b in range(num_graphs)], axis=0)                    # (G, 1024)
        out_ref[...] = jnp.maximum(out_ref[...], tile_max)

    if guard_tail:
        # The last split may be handed a duplicated (clamped) tile; skip its work.
        pl.when(pl.program_id(0) * tiles_per_split + pl.program_id(1) < num_tiles)(_compute)
    else:
        _compute()


# ----------------------------- Kernel 2 --------------------------------------
def _output_mlp_kernel(p_ref,
                       w4_ref, t4_ref,
                       w5_ref, t5_ref,
                       w6_ref, b6_ref,
                       out_ref):
    # bf16 weights and bf16 activation inputs, f32 MXU accumulation (kernel 2 is
    # HBM-bandwidth bound on its ~3.3 MiB of weights).
    p = p_ref[...].astype(jnp.bfloat16)                              # (B, 1024)
    h = jnp.maximum(
        jnp.dot(p, w4_ref[...], preferred_element_type=jnp.float32)
        + t4_ref[...], 0.0)                                          # (B, 512)
    h = jnp.maximum(
        jnp.dot(h.astype(jnp.bfloat16), w5_ref[...],
                preferred_element_type=jnp.float32)
        + t5_ref[...], 0.0)                                          # (B, 256)
    # eye(64) is pre-folded into b6 on the host.
    out_ref[...] = (jnp.dot(h.astype(jnp.bfloat16), w6_ref[...],
                            preferred_element_type=jnp.float32)
                    + b6_ref[...])                                   # (B, 4096)


# ----------------------------- Wrapper ---------------------------------------
def feature_tnet_forward(x, batch, params, num_graphs, *, tn=TN, num_splits=None):
    """x: [N, 64] float32, batch: [N] int32 graph ids in [0, num_graphs)."""
    (w1, t1, w2, t2, w3, t3, w4, t4, w5, t5, w6, b6) = params

    if num_splits is None:
        num_splits = _tensorcores_per_chip()

    n = x.shape[0]
    num_tiles = max(1, pl.cdiv(n, tn))
    n_pad = num_tiles * tn                        # pad only up to one TN tile
    tiles_per_split = pl.cdiv(num_tiles, num_splits)
    guard_tail = (num_splits * tiles_per_split != num_tiles)

    x_p = jnp.pad(x, ((0, n_pad - n), (0, 0))).astype(jnp.bfloat16)
    # Padded rows get a graph id that matches no real graph.
    # NOTE: the (TN,1) int32 operand lane-pads to 128 in VMEM (~0.5 MiB/buffer
    # at TN=1024) -- accepted knowingly; removed by the sorted-segment TODO.
    batch_p = jnp.pad(batch.astype(jnp.int32), (0, n_pad - n),
                      constant_values=num_graphs).reshape(n_pad, 1)

    def tile_index(c, i):
        t = c * tiles_per_split + i
        if guard_tail:
            # Clamp the duplicated trailing tile; its compute is skipped in-kernel
            # (and re-maxing identical rows would be a no-op anyway).
            t = jnp.minimum(t, num_tiles - 1)
        return t

    def full2(a):
        return pl.BlockSpec(a.shape, lambda c, i: (0, 0))

    flops1 = 2 * n_pad * (64 * 64 + 64 * 128 + 128 * 1024)
    bytes1 = (x_p.size * 2 + batch_p.size * 4
              + (64 * 64 + 64 * 128 + 128 * 1024) * 2
              + (64 + 128 + 1024) * 4
              + num_splits * num_graphs * 1024 * 4)

    if num_splits > 1:
        # Only core_parallel reliably shards a grid axis across v7x's 2 TCs.
        dim_sem = (getattr(pltpu, "CORE_PARALLEL", "parallel"), "arbitrary")
    else:
        dim_sem = ("arbitrary", "arbitrary")

    pooled_split = pl.pallas_call(
        functools.partial(_input_mlp_pool_kernel,
                          num_graphs=num_graphs,
                          tiles_per_split=tiles_per_split,
                          num_tiles=num_tiles,
                          guard_tail=guard_tail),
        out_shape=jax.ShapeDtypeStruct((num_splits, num_graphs, 1024), jnp.float32),
        grid=(num_splits, tiles_per_split),
        in_specs=[
            pl.BlockSpec((tn, 64), lambda c, i: (tile_index(c, i), 0)),
            pl.BlockSpec((tn, 1), lambda c, i: (tile_index(c, i), 0)),
            full2(w1), full2(t1),
            full2(w2), full2(t2),
            full2(w3), full2(t3),
        ],
        out_specs=pl.BlockSpec((None, num_graphs, 1024), lambda c, i: (c, 0, 0)),
        compiler_params=pltpu.CompilerParams(
            dimension_semantics=dim_sem,
            vmem_limit_bytes=_KERNEL1_VMEM_LIMIT),
        cost_estimate=pl.CostEstimate(flops=flops1, transcendentals=0,
                                      bytes_accessed=bytes1),
    )(x_p, batch_p, w1, t1, w2, t2, w3, t3)

    # Tiny cross-core combine of the per-split running maxes (size-1 axis on
    # single-TC chips, so effectively free there).
    pooled = jnp.max(pooled_split, axis=0)                           # (G, 1024)

    def full1(a):
        return pl.BlockSpec(a.shape, lambda i: (0, 0))

    flops2 = 2 * num_graphs * (1024 * 512 + 512 * 256 + 256 * 64 * 64)
    bytes2 = ((1024 * 512 + 512 * 256 + 256 * 64 * 64) * 2
              + (512 + 256 + 64 * 64) * 4
              + num_graphs * 1024 * 4 + num_graphs * 64 * 64 * 4)

    # With bf16 weights the double-buffered VMEM footprint of kernel 2 is
    # ~7 MiB, under every generation's default scoped-VMEM limit, so no vmem
    # override / explicit single-buffering is needed for this grid=(1,) call.
    out_flat = pl.pallas_call(
        _output_mlp_kernel,
        out_shape=jax.ShapeDtypeStruct((num_graphs, 64 * 64), jnp.float32),
        grid=(1,),
        in_specs=[
            full1(pooled),
            full1(w4), full1(t4),
            full1(w5), full1(t5),
            full1(w6), full1(b6),
        ],
        out_specs=pl.BlockSpec((num_graphs, 64 * 64), lambda i: (0, 0)),
        compiler_params=pltpu.CompilerParams(
            dimension_semantics=("arbitrary",)),
        cost_estimate=pl.CostEstimate(flops=flops2, transcendentals=0,
                                      bytes_accessed=bytes2),
    )(pooled, w4, t4, w5, t5, w6, b6)

    return out_flat.reshape(num_graphs, 64, 64)


# ------------------------ Parameter construction -----------------------------
def _linear_init(key, fin, fout):
    k1, k2 = jax.random.split(key)
    w = jax.random.normal(k1, (fin, fout), jnp.float32) / jnp.sqrt(float(fin))
    b = 0.05 * jax.random.normal(k2, (fout,), jnp.float32)
    return w, b


def _bn_init(key, c):
    k1, k2, k3, k4 = jax.random.split(key, 4)
    gamma = 1.0 + 0.1 * jax.random.normal(k1, (c,), jnp.float32)
    beta = 0.1 * jax.random.normal(k2, (c,), jnp.float32)
    mean = 0.1 * jax.random.normal(k3, (c,), jnp.float32)
    var = jax.random.uniform(k4, (c,), jnp.float32, minval=0.5, maxval=1.5)
    return gamma, beta, mean, var


def _fold(bias, gamma, beta, mean, var):
    scale = gamma / jnp.sqrt(var + BN_EPS)
    shift = (bias - mean) * scale + beta
    return scale.reshape(1, -1), shift.reshape(1, -1)


def make_params(key):
    keys = jax.random.split(key, 12)
    dims = [(64, 64), (64, 128), (128, 1024), (1024, 512), (512, 256)]
    raw = []
    for i, (fi, fo) in enumerate(dims):
        w, b = _linear_init(keys[2 * i], fi, fo)
        g, be, m, v = _bn_init(keys[2 * i + 1], fo)
        s, t = _fold(b, g, be, m, v)
        raw.append((w, s, t))
    w6, b6 = _linear_init(keys[10], 256, 64 * 64)

    # Host-side folding: BN scale into weights (exact in f32), eye(64) into the
    # final bias, all matmul weight operands cast to bf16 (f32 accumulation).
    folded = []
    for (w, s, t) in raw:
        folded.extend([(w * s).astype(jnp.bfloat16), t])
    b6_eff = (b6 + jnp.eye(64, dtype=jnp.float32).reshape(-1)).reshape(1, -1)
    folded.extend([w6.astype(jnp.bfloat16), b6_eff])
    return tuple(folded), raw, (w6, b6)


# ------------------------------ References -----------------------------------
def ref_forward(x, batch, raw, final, num_graphs):
    """Unfolded f32 reference matching the PyTorch module (eval-mode BN)."""
    h = x
    for w, s, t in raw[:3]:
        h = jnp.maximum((h @ w) * s + t, 0.0)
    pooled = jax.ops.segment_max(h, batch, num_segments=num_graphs)
    h = pooled
    for w, s, t in raw[3:]:
        h = jnp.maximum((h @ w) * s + t, 0.0)
    w6, b6 = final
    y = (h @ w6 + b6).reshape(num_graphs, 64, 64)
    return y + jnp.eye(64, dtype=y.dtype)[None]


def ref_forward_folded(x, batch, params, num_graphs):
    """Reference mirroring the kernel math (folded bf16 weights, bf16 matmul inputs)."""
    (w1, t1, w2, t2, w3, t3, w4, t4, w5, t5, w6, b6) = params

    def dot_bf16(a, w):
        return jnp.dot(a.astype(jnp.bfloat16), w, preferred_element_type=jnp.float32)

    h = jnp.maximum(dot_bf16(x, w1) + t1, 0.0)
    h = jnp.maximum(dot_bf16(h, w2) + t2, 0.0)
    h = jnp.maximum(dot_bf16(h, w3) + t3, 0.0)
    pooled = jax.ops.segment_max(h, batch, num_segments=num_graphs)
    h = jnp.maximum(dot_bf16(pooled, w4) + t4, 0.0)
    h = jnp.maximum(dot_bf16(h, w5) + t5, 0.0)
    y = dot_bf16(h, w6) + b6
    return y.reshape(num_graphs, 64, 64)


# -------------------------------- Main ---------------------------------------
if __name__ == "__main__":
    key = jax.random.PRNGKey(0)
    kp, kx = jax.random.split(key)
    params, raw, final = make_params(kp)

    num_graphs = 2
    n_points = 14  # exercises the padded tail (padded up to one TN-row tile)
    x = jax.random.normal(kx, (n_points, 64), jnp.float32)
    batch = jnp.array([0] * 6 + [1] * 8, dtype=jnp.int32)

    out = feature_tnet_forward(x, batch, params, num_graphs)
    out = jax.block_until_ready(out)
    assert out.shape == (num_graphs, 64, 64)

    # Tight check against a reference mirroring the kernel's folded/bf16 math.
    ref_fold = ref_forward_folded(x, batch, params, num_graphs)
    np.testing.assert_allclose(np.asarray(out), np.asarray(ref_fold),
                               rtol=3e-3, atol=3e-3)

    # Looser check against the full-f32 PyTorch-semantics reference (slack
    # covers bf16 matmul inputs throughout both MLPs).
    ref = ref_forward(x, batch, raw, final, num_graphs)
    np.testing.assert_allclose(np.asarray(out), np.asarray(ref),
                               rtol=1e-1, atol=1e-1)

    print("KERNEL_OK")
</pallas_src>

<mosaic_0001>
module attributes {stable_mosaic.version = 11 : i64} {
  func.func @_input_mlp_pool_kernel(%arg0: i32, %arg1: i32, %arg2: memref<1024x64xbf16, #tpu.memory_space<vmem>>, %arg3: memref<1024x1xi32, #tpu.memory_space<vmem>>, %arg4: memref<64x64xbf16, #tpu.memory_space<vmem>>, %arg5: memref<1x64xf32, #tpu.memory_space<vmem>>, %arg6: memref<64x128xbf16, #tpu.memory_space<vmem>>, %arg7: memref<1x128xf32, #tpu.memory_space<vmem>>, %arg8: memref<128x1024xbf16, #tpu.memory_space<vmem>>, %arg9: memref<1x1024xf32, #tpu.memory_space<vmem>>, %arg10: memref<1x2x1024xf32, #tpu.memory_space<vmem>>) attributes {dimension_semantics = [#tpu.dimension_semantics<arbitrary>, #tpu.dimension_semantics<arbitrary>], iteration_bounds = array<i64: 1, 1>, scalar_prefetch = 0 : i64, scratch_operands = 0 : i64, tpu.core_type = #tpu.core_type<tc>, window_params = [{transform_indices = @transform_0, window_bounds = array<i64: 1024, 64>}, {transform_indices = @transform_1, window_bounds = array<i64: 1024, 1>}, {pipeline_mode = #tpu.pipeline_mode<synchronous>, transform_indices = @transform_2, window_bounds = array<i64: 64, 64>}, {pipeline_mode = #tpu.pipeline_mode<synchronous>, transform_indices = @transform_3, window_bounds = array<i64: 1, 64>}, {pipeline_mode = #tpu.pipeline_mode<synchronous>, transform_indices = @transform_4, window_bounds = array<i64: 64, 128>}, {pipeline_mode = #tpu.pipeline_mode<synchronous>, transform_indices = @transform_5, window_bounds = array<i64: 1, 128>}, {pipeline_mode = #tpu.pipeline_mode<synchronous>, transform_indices = @transform_6, window_bounds = array<i64: 128, 1024>}, {pipeline_mode = #tpu.pipeline_mode<synchronous>, transform_indices = @transform_7, window_bounds = array<i64: 1, 1024>}, {transform_indices = @transform_8, window_bounds = array<i64: 1, 2, 1024>}]} {
    %c0_i32 = arith.constant 0 : i32
    %0 = arith.cmpi eq, %arg1, %c0_i32 : i32
    %1 = arith.extui %0 : i1 to i32
    %c0_i32_0 = arith.constant 0 : i32
    %2 = arith.cmpi ne, %1, %c0_i32_0 : i32
    scf.if %2 {
      %cst_32 = arith.constant 0xFF800000 : f32
      %51 = vector.broadcast %cst_32 : f32 to vector<2x1024xf32>
      %c0_33 = arith.constant 0 : index
      %c0_34 = arith.constant 0 : index
      %c0_35 = arith.constant 0 : index
      %52 = vector.load %arg10[%c0_33, %c0_34, %c0_35] : memref<1x2x1024xf32, #tpu.memory_space<vmem>>, vector<1x2x1024xf32>
      %53 = vector.shape_cast %52 : vector<1x2x1024xf32> to vector<2x1024xf32>
      %54 = vector.shape_cast %51 : vector<2x1024xf32> to vector<1x2x1024xf32>
      tpu.vector_store %arg10[%c0_33, %c0_34, %c0_35], %54 {strides = array<i32>} : memref<1x2x1024xf32, #tpu.memory_space<vmem>>, vector<1x2x1024xf32>,
    } else {
    }
    %c0 = arith.constant 0 : index
    %c0_1 = arith.constant 0 : index
    %3 = vector.load %arg2[%c0, %c0_1] : memref<1024x64xbf16, #tpu.memory_space<vmem>>, vector<1024x64xbf16>
    %c0_2 = arith.constant 0 : index
    %c0_3 = arith.constant 0 : index
    %4 = vector.load %arg4[%c0_2, %c0_3] : memref<64x64xbf16, #tpu.memory_space<vmem>>, vector<64x64xbf16>
    %cst = arith.constant dense<0.000000e+00> : vector<1024x64xf32>
    %5 = tpu.matmul %3, %4, %cst {dimension_numbers = #tpu.dot_dimension_numbers<[1], [0], [0], [1], [0, 0, 1, 1], [], []>} : vector<1024x64xbf16>, vector<64x64xbf16>, vector<1024x64xf32> -> vector<1024x64xf32>
    %c0_4 = arith.constant 0 : index
    %c0_5 = arith.constant 0 : index
    %6 = vector.load %arg5[%c0_4, %c0_5] : memref<1x64xf32, #tpu.memory_space<vmem>>, vector<1x64xf32>
    %7 = vector.broadcast %6 : vector<1x64xf32> to vector<1024x64xf32>
    %8 = arith.addf %5, %7 : vector<1024x64xf32>
    %cst_6 = arith.constant 0.000000e+00 : f32
    %9 = vector.broadcast %cst_6 : f32 to vector<1024x64xf32>
    %10 = arith.maximumf %8, %9 : vector<1024x64xf32>
    %11 = arith.truncf %10 : vector<1024x64xf32> to vector<1024x64xbf16>
    %c0_7 = arith.constant 0 : index
    %c0_8 = arith.constant 0 : index
    %12 = vector.load %arg6[%c0_7, %c0_8] : memref<64x128xbf16, #tpu.memory_space<vmem>>, vector<64x128xbf16>
    %cst_9 = arith.constant dense<0.000000e+00> : vector<1024x128xf32>
    %13 = tpu.matmul %11, %12, %cst_9 {dimension_numbers = #tpu.dot_dimension_numbers<[1], [0], [0], [1], [0, 0, 1, 1], [], []>} : vector<1024x64xbf16>, vector<64x128xbf16>, vector<1024x128xf32> -> vector<1024x128xf32>
    %c0_10 = arith.constant 0 : index
    %c0_11 = arith.constant 0 : index
    %14 = vector.load %arg7[%c0_10, %c0_11] : memref<1x128xf32, #tpu.memory_space<vmem>>, vector<1x128xf32>
    %15 = vector.broadcast %14 : vector<1x128xf32> to vector<1024x128xf32>
    %16 = arith.addf %13, %15 : vector<1024x128xf32>
    %cst_12 = arith.constant 0.000000e+00 : f32
    %17 = vector.broadcast %cst_12 : f32 to vector<1024x128xf32>
    %18 = arith.maximumf %16, %17 : vector<1024x128xf32>
    %19 = arith.truncf %18 : vector<1024x128xf32> to vector<1024x128xbf16>
    %c0_13 = arith.constant 0 : index
    %c0_14 = arith.constant 0 : index
    %20 = vector.load %arg8[%c0_13, %c0_14] : memref<128x1024xbf16, #tpu.memory_space<vmem>>, vector<128x1024xbf16>
    %cst_15 = arith.constant dense<0.000000e+00> : vector<1024x1024xf32>
    %21 = tpu.matmul %19, %20, %cst_15 {dimension_numbers = #tpu.dot_dimension_numbers<[1], [0], [0], [1], [0, 0, 1, 1], [], []>} : vector<1024x128xbf16>, vector<128x1024xbf16>, vector<1024x1024xf32> -> vector<1024x1024xf32>
    %c0_16 = arith.constant 0 : index
    %c0_17 = arith.constant 0 : index
    %22 = vector.load %arg9[%c0_16, %c0_17] : memref<1x1024xf32, #tpu.memory_space<vmem>>, vector<1x1024xf32>
    %23 = vector.broadcast %22 : vector<1x1024xf32> to vector<1024x1024xf32>
    %24 = arith.addf %21, %23 : vector<1024x1024xf32>
    %cst_18 = arith.constant 0.000000e+00 : f32
    %25 = vector.broadcast %cst_18 : f32 to vector<1024x1024xf32>
    %26 = arith.maximumf %24, %25 : vector<1024x1024xf32>
    %c0_19 = arith.constant 0 : index
    %c0_20 = arith.constant 0 : index
    %27 = vector.load %arg3[%c0_19, %c0_20] : memref<1024x1xi32, #tpu.memory_space<vmem>>, vector<1024x1xi32>
    %c0_i32_21 = arith.constant 0 : i32
    %28 = vector.broadcast %c0_i32_21 : i32 to vector<1024x1xi32>
    %29 = arith.cmpi eq, %27, %28 : vector<1024x1xi32>
    %cst_22 = arith.constant 0xFF800000 : f32
    %30 = vector.shape_cast %29 : vector<1024x1xi1> to vector<1024x1xi1>
    %31 = vector.broadcast %30 : vector<1024x1xi1> to vector<1024x1024xi1>
    %32 = vector.broadcast %cst_22 : f32 to vector<1024x1024xf32>
    %33 = arith.select %31, %26, %32 : vector<1024x1024xi1>, vector<1024x1024xf32>
    %cst_23 = arith.constant dense<0xFF800000> : vector<1024xf32>
    %34 = vector.multi_reduction <maximumf>, %33, %cst_23 [0] : vector<1024x1024xf32> to vector<1024xf32>
    %35 = vector.shape_cast %34 : vector<1024xf32> to vector<1x1024xf32>
    %c1_i32 = arith.constant 1 : i32
    %36 = vector.broadcast %c1_i32 : i32 to vector<1024x1xi32>
    %37 = arith.cmpi eq, %27, %36 : vector<1024x1xi32>
    %cst_24 = arith.constant 0xFF800000 : f32
    %38 = vector.shape_cast %37 : vector<1024x1xi1> to vector<1024x1xi1>
    %39 = vector.broadcast %38 : vector<1024x1xi1> to vector<1024x1024xi1>
    %40 = vector.broadcast %cst_24 : f32 to vector<1024x1024xf32>
    %41 = arith.select %39, %26, %40 : vector<1024x1024xi1>, vector<1024x1024xf32>
    %cst_25 = arith.constant dense<0xFF800000> : vector<1024xf32>
    %42 = vector.multi_reduction <maximumf>, %41, %cst_25 [0] : vector<1024x1024xf32> to vector<1024xf32>
    %43 = vector.shape_cast %42 : vector<1024xf32> to vector<1x1024xf32>
    %44 = tpu.concatenate %35, %43 in 0 : vector<1x1024xf32>, vector<1x1024xf32> -> vector<2x1024xf32>
    %c0_26 = arith.constant 0 : index
    %c0_27 = arith.constant 0 : index
    %c0_28 = arith.constant 0 : index
    %45 = vector.load %arg10[%c0_26, %c0_27, %c0_28] : memref<1x2x1024xf32, #tpu.memory_space<vmem>>, vector<1x2x1024xf32>
    %46 = vector.shape_cast %45 : vector<1x2x1024xf32> to vector<2x1024xf32>
    %47 = arith.maximumf %46, %44 : vector<2x1024xf32>
    %c0_29 = arith.constant 0 : index
    %c0_30 = arith.constant 0 : index
    %c0_31 = arith.constant 0 : index
    %48 = vector.load %arg10[%c0_29, %c0_30, %c0_31] : memref<1x2x1024xf32, #tpu.memory_space<vmem>>, vector<1x2x1024xf32>
    %49 = vector.shape_cast %48 : vector<1x2x1024xf32> to vector<2x1024xf32>
    %50 = vector.shape_cast %47 : vector<2x1024xf32> to vector<1x2x1024xf32>
    tpu.vector_store %arg10[%c0_29, %c0_30, %c0_31], %50 {strides = array<i32>} : memref<1x2x1024xf32, #tpu.memory_space<vmem>>, vector<1x2x1024xf32>,
    return
  }
  func.func @transform_0(%arg0: i32, %arg1: i32) -> (i32, i32) {
    %c1_i32 = arith.constant 1 : i32
    %0 = arith.muli %arg0, %c1_i32 : i32
    %1 = arith.addi %0, %arg1 : i32
    %c0_i32 = arith.constant 0 : i32
    %c0_i32_0 = arith.constant 0 : i32
    return %1, %c0_i32 : i32, i32
  }
  func.func @transform_1(%arg0: i32, %arg1: i32) -> (i32, i32) {
    %c1_i32 = arith.constant 1 : i32
    %0 = arith.muli %arg0, %c1_i32 : i32
    %1 = arith.addi %0, %arg1 : i32
    %c0_i32 = arith.constant 0 : i32
    %c0_i32_0 = arith.constant 0 : i32
    return %1, %c0_i32 : i32, i32
  }
  func.func @transform_2(%arg0: i32, %arg1: i32) -> (i32, i32) {
    %c0_i32 = arith.constant 0 : i32
    %c0_i32_0 = arith.constant 0 : i32
    %c0_i32_1 = arith.constant 0 : i32
    return %c0_i32, %c0_i32_0 : i32, i32
  }
  func.func @transform_3(%arg0: i32, %arg1: i32) -> (i32, i32) {
    %c0_i32 = arith.constant 0 : i32
    %c0_i32_0 = arith.constant 0 : i32
    %c0_i32_1 = arith.constant 0 : i32
    return %c0_i32, %c0_i32_0 : i32, i32
  }
  func.func @transform_4(%arg0: i32, %arg1: i32) -> (i32, i32) {
    %c0_i32 = arith.constant 0 : i32
    %c0_i32_0 = arith.constant 0 : i32
    %c0_i32_1 = arith.constant 0 : i32
    return %c0_i32, %c0_i32_0 : i32, i32
  }
  func.func @transform_5(%arg0: i32, %arg1: i32) -> (i32, i32) {
    %c0_i32 = arith.constant 0 : i32
    %c0_i32_0 = arith.constant 0 : i32
    %c0_i32_1 = arith.constant 0 : i32
    return %c0_i32, %c0_i32_0 : i32, i32
  }
  func.func @transform_6(%arg0: i32, %arg1: i32) -> (i32, i32) {
    %c0_i32 = arith.constant 0 : i32
    %c0_i32_0 = arith.constant 0 : i32
    %c0_i32_1 = arith.constant 0 : i32
    return %c0_i32, %c0_i32_0 : i32, i32
  }
  func.func @transform_7(%arg0: i32, %arg1: i32) -> (i32, i32) {
    %c0_i32 = arith.constant 0 : i32
    %c0_i32_0 = arith.constant 0 : i32
    %c0_i32_1 = arith.constant 0 : i32
    return %c0_i32, %c0_i32_0 : i32, i32
  }
  func.func @transform_8(%arg0: i32, %arg1: i32) -> (i32, i32, i32) {
    %c0_i32 = arith.constant 0 : i32
    %c0_i32_0 = arith.constant 0 : i32
    %c0_i32_1 = arith.constant 0 : i32
    return %arg0, %c0_i32, %c0_i32_0 : i32, i32, i32
  }
}

</mosaic_0001>

<llo_original>
// kernel: tpu_custom_call.1
$region0: #{tpu_custom_call.1}
  #allocation0 [shape = 'u32[]', space=smem, size = 0x4, offset = 0x4, fixed_abs, tag = 'smem constant byte address 0x4 - core index']
  #allocation1 [shape = 'u32[144,128]{1,0:T(1,128)}', space=vmem, size = 0x12000, scoped, tag = 'internal scratch']
  %s0 = inlined_call_operand.vmem [shape: bf16[1024,64], index: 0, kind: input, shape index: {}]
  %s1 = inlined_call_operand.vmem [shape: s32[1024,1], index: 1, kind: input, shape index: {}]
  %s2 = inlined_call_operand.vmem [shape: bf16[64,64], index: 2, kind: input, shape index: {}]
  %s3 = inlined_call_operand.vmem [shape: f32[1,64], index: 3, kind: input, shape index: {}]
  %s4 = inlined_call_operand.vmem [shape: bf16[64,128], index: 4, kind: input, shape index: {}]
  %s5 = inlined_call_operand.vmem [shape: f32[1,128], index: 5, kind: input, shape index: {}]
  %s6 = inlined_call_operand.vmem [shape: bf16[128,1024], index: 6, kind: input, shape index: {}]
  %s7 = inlined_call_operand.vmem [shape: f32[1,1024], index: 7, kind: input, shape index: {}]
  %s8 = inlined_call_operand.hbm [shape: f32[1,2,1024], index: 8, kind: output, shape index: {}]
  %s9 = sld [smem:[#allocation0]]
  $region46: #{tpu_custom_call.1} parent=0
    _
  %s11 = ssub.s32 1, %s9
  %s12 = scalar_select 0, %s11, %s9
  $region1: #{tpu_custom_call.1} parent=0
    #allocation2 [shape = 'u8[8192]{0}', space=vmem, size = 0x2000, scoped, tag = 'output window, operand 0, single buffered']
    #allocation3 [shape = 's32[1]{0}', space=sflag, size = 0x4, scoped, tag = 'scoped memory for tpu_custom_call.1']
    %13 = vsyncpa [#allocation3], 0
    // Predicated region
    $region2: #{tpu_custom_call.1} parent=1 // pred_check
      _
    $region3: #{tpu_custom_call.1} parent=1 // pred_check_branch
      %15 = sbr.rel (0) target = $region5
    $region4: #{tpu_custom_call.1} parent=1 // pred_region
      %s16 = sadd.s32 0, 0
      %s17 = smul.u32 128, %s16
      %p18 = scmp.lt.s32.totalorder %s17, 127
      %s19 = scalar_select %p18, %s17, 127
      %s20 = smul.addr %s19, 4
      %s21 = scalar_lea.vmem %s0, %s20
      %s22 = sadd.s32 0, 0
      %s23 = smul.u32 128, %s22
    $region5: #{tpu_custom_call.1} parent=1 // pred_fallthru
      _
    // Predicated region
    $region6: #{tpu_custom_call.1} parent=1 // pred_check
      _
    $region7: #{tpu_custom_call.1} parent=1 // pred_check_branch
      %25 = sbr.rel (0) target = $region9
    $region8: #{tpu_custom_call.1} parent=1 // pred_region
      %s26 = sadd.s32 0, 0
      %s27 = smul.u32 128, %s26
      %p28 = scmp.lt.s32.totalorder %s27, 127
      %s29 = scalar_select %p28, %s27, 127
      %s30 = smul.addr %s29, 8
      %s31 = scalar_lea.vmem %s1, %s30
      %s32 = sadd.s32 0, 0
      %s33 = smul.u32 128, %s32
    $region9: #{tpu_custom_call.1} parent=1 // pred_fallthru
      _
    // Predicated region
    $region10: #{tpu_custom_call.1} parent=1 // pred_check
      _
    $region11: #{tpu_custom_call.1} parent=1 // pred_check_branch
      %35 = sbr.rel (0) target = $region13
    $region12: #{tpu_custom_call.1} parent=1 // pred_region
      _
    $region13: #{tpu_custom_call.1} parent=1 // pred_fallthru
      _
    // Predicated region
    $region14: #{tpu_custom_call.1} parent=1 // pred_check
      _
    $region15: #{tpu_custom_call.1} parent=1 // pred_check_branch
      %37 = sbr.rel (0) target = $region17
    $region16: #{tpu_custom_call.1} parent=1 // pred_region
      _
    $region17: #{tpu_custom_call.1} parent=1 // pred_fallthru
      _
    // Predicated region
    $region18: #{tpu_custom_call.1} parent=1 // pred_check
      _
    $region19: #{tpu_custom_call.1} parent=1 // pred_check_branch
      %39 = sbr.rel (0) target = $region21
    $region20: #{tpu_custom_call.1} parent=1 // pred_region
      _
    $region21: #{tpu_custom_call.1} parent=1 // pred_fallthru
      _
    // Predicated region
    $region22: #{tpu_custom_call.1} parent=1 // pred_check
      _
    $region23: #{tpu_custom_call.1} parent=1 // pred_check_branch
      %41 = sbr.rel (0) target = $region25
    $region24: #{tpu_custom_call.1} parent=1 // pred_region
      _
    $region25: #{tpu_custom_call.1} parent=1 // pred_fallthru
      _
    // Predicated region
    $region26: #{tpu_custom_call.1} parent=1 // pred_check
      _
    $region27: #{tpu_custom_call.1} parent=1 // pred_check_branch
      %43 = sbr.rel (0) target = $region29
    $region28: #{tpu_custom_call.1} parent=1 // pred_region
      _
    $region29: #{tpu_custom_call.1} parent=1 // pred_fallthru
      _
    // Predicated region
    $region30: #{tpu_custom_call.1} parent=1 // pred_check
      _
    $region31: #{tpu_custom_call.1} parent=1 // pred_check_branch
      %45 = sbr.rel (0) target = $region33
    $region32: #{tpu_custom_call.1} parent=1 // pred_region
      _
    $region33: #{tpu_custom_call.1} parent=1 // pred_fallthru
      _
    %s46 = sadd.s32 0, 0
    %s47 = smul.u32 128, %s46
    %p48 = scmp.lt.s32.totalorder %s47, 127
    %s49 = scalar_select %p48, %s47, 127
    %s50 = smul.addr %s49, 4
    %s51 = scalar_lea.vmem %s0, %s50
    %s52 = sadd.s32 0, 0
    %s53 = smul.u32 128, %s52
    %p54 = scmp.lt.s32.totalorder %s53, 127
    %s55 = scalar_select %p54, %s53, 127
    %s56 = smul.addr %s55, 8
    %s57 = scalar_lea.vmem %s1, %s56
    %s58 = sadd.s32 0, 0
    %s59 = smul.u32 128, %s58
    %p60 = scmp.lt.s32.totalorder %s59, 127
    %s61 = scalar_select %p60, %s59, 127
    %s62 = smul.addr %s61, 4
    %s63 = scalar_lea.vmem %s0, %s62
    %s64 = sadd.s32 0, 0
    %s65 = smul.u32 128, %s64
    %s66 = sadd.s32 0, 0
    %s67 = smul.u32 128, %s66
    %p68 = scmp.lt.s32.totalorder %s67, 127
    %s69 = scalar_select %p68, %s67, 127
    %s70 = smul.addr %s69, 8
    %s71 = scalar_lea.vmem %s1, %s70
    %s72 = sadd.s32 0, 0
    %s73 = smul.u32 128, %s72
    %p75 = scmp.eq.s32.totalorder 0, 0
    // Predicated region
    $region34: #{tpu_custom_call.1} parent=1 // pred_check
      %p76 = pneg %p75
    $region35: #{tpu_custom_call.1} parent=1 // pred_check_branch
      %78 = sbr.rel (%p76) target = $region37
    $region36: #{tpu_custom_call.1} parent=1 // pred_region
      %79 = vst [vmem:[#allocation2] sm:$0xff] -inf
      %80 = vst [vmem:[#allocation2 + $0x8] sm:$0xff] -inf
    $region37: #{tpu_custom_call.1} parent=1 // pred_fallthru
      _
    %v81 = vld [vmem:[%s63] sm:$0xf]
    %v82 = vld [vmem:[%s63 + $0x4] sm:$0xf]
    %v83 = vld [vmem:[%s63 + $0x8] sm:$0xf]
    %v84 = vld [vmem:[%s63 + $0xc] sm:$0xf]
    %v85 = vld [vmem:[%s63 + $0x10] sm:$0xf]
    %v86 = vld [vmem:[%s63 + $0x14] sm:$0xf]
    %v87 = vld [vmem:[%s63 + $0x18] sm:$0xf]
    %v88 = vld [vmem:[%s63 + $0x1c] sm:$0xf]
    %v89 = vld [vmem:[%s63 + $0x20] sm:$0xf]
    %v90 = vld [vmem:[%s63 + $0x24] sm:$0xf]
    %v91 = vld [vmem:[%s63 + $0x28] sm:$0xf]
    %v92 = vld [vmem:[%s63 + $0x2c] sm:$0xf]
    %v93 = vld [vmem:[%s63 + $0x30] sm:$0xf]
    %v94 = vld [vmem:[%s63 + $0x34] sm:$0xf]
    %v95 = vld [vmem:[%s63 + $0x38] sm:$0xf]
    %v96 = vld [vmem:[%s63 + $0x3c] sm:$0xf]
    %v97 = vld [vmem:[%s63 + $0x40] sm:$0xf]
    %v98 = vld [vmem:[%s63 + $0x44] sm:$0xf]
    %v99 = vld [vmem:[%s63 + $0x48] sm:$0xf]
    %v100 = vld [vmem:[%s63 + $0x4c] sm:$0xf]
    %v101 = vld [vmem:[%s63 + $0x50] sm:$0xf]
    %v102 = vld [vmem:[%s63 + $0x54] sm:$0xf]
    %v103 = vld [vmem:[%s63 + $0x58] sm:$0xf]
    %v104 = vld [vmem:[%s63 + $0x5c] sm:$0xf]
    %v105 = vld [vmem:[%s63 + $0x60] sm:$0xf]
    %v106 = vld [vmem:[%s63 + $0x64] sm:$0xf]
    %v107 = vld [vmem:[%s63 + $0x68] sm:$0xf]
    %v108 = vld [vmem:[%s63 + $0x6c] sm:$0xf]
    %v109 = vld [vmem:[%s63 + $0x70] sm:$0xf]
    %v110 = vld [vmem:[%s63 + $0x74] sm:$0xf]
    %v111 = vld [vmem:[%s63 + $0x78] sm:$0xf]
    %v112 = vld [vmem:[%s63 + $0x7c] sm:$0xf]
    %v113 = vld [vmem:[%s63 + $0x80] sm:$0xf]
    %v114 = vld [vmem:[%s63 + $0x84] sm:$0xf]
    %v115 = vld [vmem:[%s63 + $0x88] sm:$0xf]
    %v116 = vld [vmem:[%s63 + $0x8c] sm:$0xf]
    %v117 = vld [vmem:[%s63 + $0x90] sm:$0xf]
    %v118 = vld [vmem:[%s63 + $0x94] sm:$0xf]
    %v119 = vld [vmem:[%s63 + $0x98] sm:$0xf]
    %v120 = vld [vmem:[%s63 + $0x9c] sm:$0xf]
    %v121 = vld [vmem:[%s63 + $0xa0] sm:$0xf]
    %v122 = vld [vmem:[%s63 + $0xa4] sm:$0xf]
    %v123 = vld [vmem:[%s63 + $0xa8] sm:$0xf]
    %v124 = vld [vmem:[%s63 + $0xac] sm:$0xf]
    %v125 = vld [vmem:[%s63 + $0xb0] sm:$0xf]
    %v126 = vld [vmem:[%s63 + $0xb4] sm:$0xf]
    %v127 = vld [vmem:[%s63 + $0xb8] sm:$0xf]
    %v128 = vld [vmem:[%s63 + $0xbc] sm:$0xf]
    %v129 = vld [vmem:[%s63 + $0xc0] sm:$0xf]
    %v130 = vld [vmem:[%s63 + $0xc4] sm:$0xf]
    %v131 = vld [vmem:[%s63 + $0xc8] sm:$0xf]
    %v132 = vld [vmem:[%s63 + $0xcc] sm:$0xf]
    %v133 = vld [vmem:[%s63 + $0xd0] sm:$0xf]
    %v134 = vld [vmem:[%s63 + $0xd4] sm:$0xf]
    %v135 = vld [vmem:[%s63 + $0xd8] sm:$0xf]
    %v136 = vld [vmem:[%s63 + $0xdc] sm:$0xf]
    %v137 = vld [vmem:[%s63 + $0xe0] sm:$0xf]
    %v138 = vld [vmem:[%s63 + $0xe4] sm:$0xf]
    %v139 = vld [vmem:[%s63 + $0xe8] sm:$0xf]
    %v140 = vld [vmem:[%s63 + $0xec] sm:$0xf]
    %v141 = vld [vmem:[%s63 + $0xf0] sm:$0xf]
    %v142 = vld [vmem:[%s63 + $0xf4] sm:$0xf]
    %v143 = vld [vmem:[%s63 + $0xf8] sm:$0xf]
    %v144 = vld [vmem:[%s63 + $0xfc] sm:$0xf]
    %v145 = vld [vmem:[%s63 + $0x100] sm:$0xf]
    %v146 = vld [vmem:[%s63 + $0x104] sm:$0xf]
    %v147 = vld [vmem:[%s63 + $0x108] sm:$0xf]
    %v148 = vld [vmem:[%s63 + $0x10c] sm:$0xf]
    %v149 = vld [vmem:[%s63 + $0x110] sm:$0xf]
    %v150 = vld [vmem:[%s63 + $0x114] sm:$0xf]
    %v151 = vld [vmem:[%s63 + $0x118] sm:$0xf]
    %v152 = vld [vmem:[%s63 + $0x11c] sm:$0xf]
    %v153 = vld [vmem:[%s63 + $0x120] sm:$0xf]
    %v154 = vld [vmem:[%s63 + $0x124] sm:$0xf]
    %v155 = vld [vmem:[%s63 + $0x128] sm:$0xf]
    %v156 = vld [vmem:[%s63 + $0x12c] sm:$0xf]
    %v157 = vld [vmem:[%s63 + $0x130] sm:$0xf]
    %v158 = vld [vmem:[%s63 + $0x134] sm:$0xf]
    %v159 = vld [vmem:[%s63 + $0x138] sm:$0xf]
    %v160 = vld [vmem:[%s63 + $0x13c] sm:$0xf]
    %v161 = vld [vmem:[%s63 + $0x140] sm:$0xf]
    %v162 = vld [vmem:[%s63 + $0x144] sm:$0xf]
    %v163 = vld [vmem:[%s63 + $0x148] sm:$0xf]
    %v164 = vld [vmem:[%s63 + $0x14c] sm:$0xf]
    %v165 = vld [vmem:[%s63 + $0x150] sm:$0xf]
    %v166 = vld [vmem:[%s63 + $0x154] sm:$0xf]
    %v167 = vld [vmem:[%s63 + $0x158] sm:$0xf]
    %v168 = vld [vmem:[%s63 + $0x15c] sm:$0xf]
    %v169 = vld [vmem:[%s63 + $0x160] sm:$0xf]
    %v170 = vld [vmem:[%s63 + $0x164] sm:$0xf]
    %v171 = vld [vmem:[%s63 + $0x168] sm:$0xf]
    %v172 = vld [vmem:[%s63 + $0x16c] sm:$0xf]
    %v173 = vld [vmem:[%s63 + $0x170] sm:$0xf]
    %v174 = vld [vmem:[%s63 + $0x174] sm:$0xf]
    %v175 = vld [vmem:[%s63 + $0x178] sm:$0xf]
    %v176 = vld [vmem:[%s63 + $0x17c] sm:$0xf]
    %v177 = vld [vmem:[%s63 + $0x180] sm:$0xf]
    %v178 = vld [vmem:[%s63 + $0x184] sm:$0xf]
    %v179 = vld [vmem:[%s63 + $0x188] sm:$0xf]
    %v180 = vld [vmem:[%s63 + $0x18c] sm:$0xf]
    %v181 = vld [vmem:[%s63 + $0x190] sm:$0xf]
    %v182 = vld [vmem:[%s63 + $0x194] sm:$0xf]
    %v183 = vld [vmem:[%s63 + $0x198] sm:$0xf]
    %v184 = vld [vmem:[%s63 + $0x19c] sm:$0xf]
    %v185 = vld [vmem:[%s63 + $0x1a0] sm:$0xf]
    %v186 = vld [vmem:[%s63 + $0x1a4] sm:$0xf]
    %v187 = vld [vmem:[%s63 + $0x1a8] sm:$0xf]
    %v188 = vld [vmem:[%s63 + $0x1ac] sm:$0xf]
    %v189 = vld [vmem:[%s63 + $0x1b0] sm:$0xf]
    %v190 = vld [vmem:[%s63 + $0x1b4] sm:$0xf]
    %v191 = vld [vmem:[%s63 + $0x1b8] sm:$0xf]
    %v192 = vld [vmem:[%s63 + $0x1bc] sm:$0xf]
    %v193 = vld [vmem:[%s63 + $0x1c0] sm:$0xf]
    %v194 = vld [vmem:[%s63 + $0x1c4] sm:$0xf]
    %v195 = vld [vmem:[%s63 + $0x1c8] sm:$0xf]
    %v196 = vld [vmem:[%s63 + $0x1cc] sm:$0xf]
    %v197 = vld [vmem:[%s63 + $0x1d0] sm:$0xf]
    %v198 = vld [vmem:[%s63 + $0x1d4] sm:$0xf]
    %v199 = vld [vmem:[%s63 + $0x1d8] sm:$0xf]
    %v200 = vld [vmem:[%s63 + $0x1dc] sm:$0xf]
    %v201 = vld [vmem:[%s63 + $0x1e0] sm:$0xf]
    %v202 = vld [vmem:[%s63 + $0x1e4] sm:$0xf]
    %v203 = vld [vmem:[%s63 + $0x1e8] sm:$0xf]
    %v204 = vld [vmem:[%s63 + $0x1ec] sm:$0xf]
    %v205 = vld [vmem:[%s63 + $0x1f0] sm:$0xf]
    %v206 = vld [vmem:[%s63 + $0x1f4] sm:$0xf]
    %v207 = vld [vmem:[%s63 + $0x1f8] sm:$0xf]
    %v208 = vld [vmem:[%s63 + $0x1fc] sm:$0xf]
    %v209 = vld [vmem:[%s2] sm:$0xf]
    %v210 = vld [vmem:[%s2 + $0x4] sm:$0xf]
    %v211 = vld [vmem:[%s2 + $0x8] sm:$0xf]
    %v212 = vld [vmem:[%s2 + $0xc] sm:$0xf]
    %v213 = vld [vmem:[%s2 + $0x10] sm:$0xf]
    %v214 = vld [vmem:[%s2 + $0x14] sm:$0xf]
    %v215 = vld [vmem:[%s2 + $0x18] sm:$0xf]
    %v216 = vld [vmem:[%s2 + $0x1c] sm:$0xf]
    %v217 = vld [vmem:[%s3] sm:$0x1]
    %v219 = vlaneseq
    %v220 = vshrl.u32 %v219, 7
    %v221 = vsub.s32 0, %v220
    %v222 = vrot.slane %v217, %v221
    %v352 = vunpack.c.l.b16 %v81
    %v353 = vunpack.c.l.b16 %v82
    %v354 = vunpack.c.l.b16 %v83
    %v355 = vunpack.c.l.b16 %v84
    %v356 = vunpack.c.l.b16 %v85
    %v357 = vunpack.c.l.b16 %v86
    %v358 = vunpack.c.l.b16 %v87
    %v359 = vunpack.c.l.b16 %v88
    %v360 = vunpack.c.l.b16 %v89
    %v361 = vunpack.c.l.b16 %v90
    %v362 = vunpack.c.l.b16 %v91
    %v363 = vunpack.c.l.b16 %v92
    %v364 = vunpack.c.l.b16 %v93
    %v365 = vunpack.c.l.b16 %v94
    %v366 = vunpack.c.l.b16 %v95
    %v367 = vunpack.c.l.b16 %v96
    %v368 = vunpack.c.l.b16 %v97
    %v369 = vunpack.c.l.b16 %v98
    %v370 = vunpack.c.l.b16 %v99
    %v371 = vunpack.c.l.b16 %v100
    %v372 = vunpack.c.l.b16 %v101
    %v373 = vunpack.c.l.b16 %v102
    %v374 = vunpack.c.l.b16 %v103
    %v375 = vunpack.c.l.b16 %v104
    %v376 = vunpack.c.l.b16 %v105
    %v377 = vunpack.c.l.b16 %v106
    %v378 = vunpack.c.l.b16 %v107
    %v379 = vunpack.c.l.b16 %v108
    %v380 = vunpack.c.l.b16 %v109
    %v381 = vunpack.c.l.b16 %v110
    %v382 = vunpack.c.l.b16 %v111
    %v383 = vunpack.c.l.b16 %v112
    %v384 = vunpack.c.l.b16 %v113
    %v385 = vunpack.c.l.b16 %v114
    %v386 = vunpack.c.l.b16 %v115
    %v387 = vunpack.c.l.b16 %v116
    %v388 = vunpack.c.l.b16 %v117
    %v389 = vunpack.c.l.b16 %v118
    %v390 = vunpack.c.l.b16 %v119
    %v391 = vunpack.c.l.b16 %v120
    %v392 = vunpack.c.l.b16 %v121
    %v393 = vunpack.c.l.b16 %v122
    %v394 = vunpack.c.l.b16 %v123
    %v395 = vunpack.c.l.b16 %v124
    %v396 = vunpack.c.l.b16 %v125
    %v397 = vunpack.c.l.b16 %v126
    %v398 = vunpack.c.l.b16 %v127
    %v399 = vunpack.c.l.b16 %v128
    %v400 = vunpack.c.l.b16 %v129
    %v401 = vunpack.c.l.b16 %v130
    %v402 = vunpack.c.l.b16 %v131
    %v403 = vunpack.c.l.b16 %v132
    %v404 = vunpack.c.l.b16 %v133
    %v405 = vunpack.c.l.b16 %v134
    %v406 = vunpack.c.l.b16 %v135
    %v407 = vunpack.c.l.b16 %v136
    %v408 = vunpack.c.l.b16 %v137
    %v409 = vunpack.c.l.b16 %v138
    %v410 = vunpack.c.l.b16 %v139
    %v411 = vunpack.c.l.b16 %v140
    %v412 = vunpack.c.l.b16 %v141
    %v413 = vunpack.c.l.b16 %v142
    %v414 = vunpack.c.l.b16 %v143
    %v415 = vunpack.c.l.b16 %v144
    %v416 = vunpack.c.l.b16 %v145
    %v417 = vunpack.c.l.b16 %v146
    %v418 = vunpack.c.l.b16 %v147
    %v419 = vunpack.c.l.b16 %v148
    %v420 = vunpack.c.l.b16 %v149
    %v421 = vunpack.c.l.b16 %v150
    %v422 = vunpack.c.l.b16 %v151
    %v423 = vunpack.c.l.b16 %v152
    %v424 = vunpack.c.l.b16 %v153
    %v425 = vunpack.c.l.b16 %v154
    %v426 = vunpack.c.l.b16 %v155
    %v427 = vunpack.c.l.b16 %v156
    %v428 = vunpack.c.l.b16 %v157
    %v429 = vunpack.c.l.b16 %v158
    %v430 = vunpack.c.l.b16 %v159
    %v431 = vunpack.c.l.b16 %v160
    %v432 = vunpack.c.l.b16 %v161
    %v433 = vunpack.c.l.b16 %v162
    %v434 = vunpack.c.l.b16 %v163
    %v435 = vunpack.c.l.b16 %v164
    %v436 = vunpack.c.l.b16 %v165
    %v437 = vunpack.c.l.b16 %v166
    %v438 = vunpack.c.l.b16 %v167
    %v439 = vunpack.c.l.b16 %v168
    %v440 = vunpack.c.l.b16 %v169
    %v441 = vunpack.c.l.b16 %v170
    %v442 = vunpack.c.l.b16 %v171
    %v443 = vunpack.c.l.b16 %v172
    %v444 = vunpack.c.l.b16 %v173
    %v445 = vunpack.c.l.b16 %v174
    %v446 = vunpack.c.l.b16 %v175
    %v447 = vunpack.c.l.b16 %v176
    %v448 = vunpack.c.l.b16 %v177
    %v449 = vunpack.c.l.b16 %v178
    %v450 = vunpack.c.l.b16 %v179
    %v451 = vunpack.c.l.b16 %v180
    %v452 = vunpack.c.l.b16 %v181
    %v453 = vunpack.c.l.b16 %v182
    %v454 = vunpack.c.l.b16 %v183
    %v455 = vunpack.c.l.b16 %v184
    %v456 = vunpack.c.l.b16 %v185
    %v457 = vunpack.c.l.b16 %v186
    %v458 = vunpack.c.l.b16 %v187
    %v459 = vunpack.c.l.b16 %v188
    %v460 = vunpack.c.l.b16 %v189
    %v461 = vunpack.c.l.b16 %v190
    %v462 = vunpack.c.l.b16 %v191
    %v463 = vunpack.c.l.b16 %v192
    %v464 = vunpack.c.l.b16 %v193
    %v465 = vunpack.c.l.b16 %v194
    %v466 = vunpack.c.l.b16 %v195
    %v467 = vunpack.c.l.b16 %v196
    %v468 = vunpack.c.l.b16 %v197
    %v469 = vunpack.c.l.b16 %v198
    %v470 = vunpack.c.l.b16 %v199
    %v471 = vunpack.c.l.b16 %v200
    %v472 = vunpack.c.l.b16 %v201
    %v473 = vunpack.c.l.b16 %v202
    %v474 = vunpack.c.l.b16 %v203
    %v475 = vunpack.c.l.b16 %v204
    %v476 = vunpack.c.l.b16 %v205
    %v477 = vunpack.c.l.b16 %v206
    %v478 = vunpack.c.l.b16 %v207
    %v479 = vunpack.c.l.b16 %v208
    %v480 = vpack.c.b16 %v353, %v352
    %v481 = vpack.c.b16 %v355, %v354
    %v482 = vpack.c.b16 %v357, %v356
    %v483 = vpack.c.b16 %v359, %v358
    %v484 = vpack.c.b16 %v361, %v360
    %v485 = vpack.c.b16 %v363, %v362
    %v486 = vpack.c.b16 %v365, %v364
    %v487 = vpack.c.b16 %v367, %v366
    %v488 = vpack.c.b16 %v369, %v368
    %v489 = vpack.c.b16 %v371, %v370
    %v490 = vpack.c.b16 %v373, %v372
    %v491 = vpack.c.b16 %v375, %v374
    %v492 = vpack.c.b16 %v377, %v376
    %v493 = vpack.c.b16 %v379, %v378
    %v494 = vpack.c.b16 %v381, %v380
    %v495 = vpack.c.b16 %v383, %v382
    %v496 = vpack.c.b16 %v385, %v384
    %v497 = vpack.c.b16 %v387, %v386
    %v498 = vpack.c.b16 %v389, %v388
    %v499 = vpack.c.b16 %v391, %v390
    %v500 = vpack.c.b16 %v393, %v392
    %v501 = vpack.c.b16 %v395, %v394
    %v502 = vpack.c.b16 %v397, %v396
    %v503 = vpack.c.b16 %v399, %v398
    %v504 = vpack.c.b16 %v401, %v400
    %v505 = vpack.c.b16 %v403, %v402
    %v506 = vpack.c.b16 %v405, %v404
    %v507 = vpack.c.b16 %v407, %v406
    %v508 = vpack.c.b16 %v409, %v408
    %v509 = vpack.c.b16 %v411, %v410
    %v510 = vpack.c.b16 %v413, %v412
    %v511 = vpack.c.b16 %v415, %v414
    %v512 = vpack.c.b16 %v417, %v416
    %v513 = vpack.c.b16 %v419, %v418
    %v514 = vpack.c.b16 %v421, %v420
    %v515 = vpack.c.b16 %v423, %v422
    %v516 = vpack.c.b16 %v425, %v424
    %v517 = vpack.c.b16 %v427, %v426
    %v518 = vpack.c.b16 %v429, %v428
    %v519 = vpack.c.b16 %v431, %v430
    %v520 = vpack.c.b16 %v433, %v432
    %v521 = vpack.c.b16 %v435, %v434
    %v522 = vpack.c.b16 %v437, %v436
    %v523 = vpack.c.b16 %v439, %v438
    %v524 = vpack.c.b16 %v441, %v440
    %v525 = vpack.c.b16 %v443, %v442
    %v526 = vpack.c.b16 %v445, %v444
    %v527 = vpack.c.b16 %v447, %v446
    %v528 = vpack.c.b16 %v449, %v448
    %v529 = vpack.c.b16 %v451, %v450
    %v530 = vpack.c.b16 %v453, %v452
    %v531 = vpack.c.b16 %v455, %v454
    %v532 = vpack.c.b16 %v457, %v456
    %v533 = vpack.c.b16 %v459, %v458
    %v534 = vpack.c.b16 %v461, %v460
    %v535 = vpack.c.b16 %v463, %v462
    %v536 = vpack.c.b16 %v465, %v464
    %v537 = vpack.c.b16 %v467, %v466
    %v538 = vpack.c.b16 %v469, %v468
    %v539 = vpack.c.b16 %v471, %v470
    %v540 = vpack.c.b16 %v473, %v472
    %v541 = vpack.c.b16 %v475, %v474
    %v542 = vpack.c.b16 %v477, %v476
    %v543 = vpack.c.b16 %v479, %v478
    %v552 = vunpack.c.l.b16 %v209
    %v553 = vunpack.c.l.b16 %v210
    %v554 = vunpack.c.l.b16 %v211
    %v555 = vunpack.c.l.b16 %v212
    %v556 = vunpack.c.l.b16 %v213
    %v557 = vunpack.c.l.b16 %v214
    %v558 = vunpack.c.l.b16 %v215
    %v559 = vunpack.c.l.b16 %v216
    %v560 = vpack.c.b16 %v553, %v552
    %v561 = vpack.c.b16 %v555, %v554
    %v562 = vpack.c.b16 %v557, %v556
    %v563 = vpack.c.b16 %v559, %v558
    %vm568 = vcmask 523264
    %v570 = vsel %vm568, %v480, 0
    %v573 = vsel %vm568, %v481, 0
    %v576 = vsel %vm568, %v482, 0
    %v579 = vsel %vm568, %v483, 0
    %v582 = vsel %vm568, %v484, 0
    %v585 = vsel %vm568, %v485, 0
    %v588 = vsel %vm568, %v486, 0
    %v591 = vsel %vm568, %v487, 0
    %v594 = vsel %vm568, %v488, 0
    %v597 = vsel %vm568, %v489, 0
    %v600 = vsel %vm568, %v490, 0
    %v603 = vsel %vm568, %v491, 0
    %v606 = vsel %vm568, %v492, 0
    %v609 = vsel %vm568, %v493, 0
    %v612 = vsel %vm568, %v494, 0
    %v615 = vsel %vm568, %v495, 0
    %v618 = vsel %vm568, %v496, 0
    %v621 = vsel %vm568, %v497, 0
    %v624 = vsel %vm568, %v498, 0
    %v627 = vsel %vm568, %v499, 0
    %v630 = vsel %vm568, %v500, 0
    %v633 = vsel %vm568, %v501, 0
    %v636 = vsel %vm568, %v502, 0
    %v639 = vsel %vm568, %v503, 0
    %v642 = vsel %vm568, %v504, 0
    %v645 = vsel %vm568, %v505, 0
    %v648 = vsel %vm568, %v506, 0
    %v651 = vsel %vm568, %v507, 0
    %v654 = vsel %vm568, %v508, 0
    %v657 = vsel %vm568, %v509, 0
    %v660 = vsel %vm568, %v510, 0
    %v663 = vsel %vm568, %v511, 0
    %v666 = vsel %vm568, %v512, 0
    %v669 = vsel %vm568, %v513, 0
    %v672 = vsel %vm568, %v514, 0
    %v675 = vsel %vm568, %v515, 0
    %v678 = vsel %vm568, %v516, 0
    %v681 = vsel %vm568, %v517, 0
    %v684 = vsel %vm568, %v518, 0
    %v687 = vsel %vm568, %v519, 0
    %v690 = vsel %vm568, %v520, 0
    %v693 = vsel %vm568, %v521, 0
    %v696 = vsel %vm568, %v522, 0
    %v699 = vsel %vm568, %v523, 0
    %v702 = vsel %vm568, %v524, 0
    %v705 = vsel %vm568, %v525, 0
    %v708 = vsel %vm568, %v526, 0
    %v711 = vsel %vm568, %v527, 0
    %v714 = vsel %vm568, %v528, 0
    %v717 = vsel %vm568, %v529, 0
    %v720 = vsel %vm568, %v530, 0
    %v723 = vsel %vm568, %v531, 0
    %v726 = vsel %vm568, %v532, 0
    %v729 = vsel %vm568, %v533, 0
    %v732 = vsel %vm568, %v534, 0
    %v735 = vsel %vm568, %v535, 0
    %v738 = vsel %vm568, %v536, 0
    %v741 = vsel %vm568, %v537, 0
    %v744 = vsel %vm568, %v538, 0
    %v747 = vsel %vm568, %v539, 0
    %v750 = vsel %vm568, %v540, 0
    %v753 = vsel %vm568, %v541, 0
    %v756 = vsel %vm568, %v542, 0
    %v759 = vsel %vm568, %v543, 0
    %761 = vmatprep.subr.bf16.mxu0 0
    %762 = vmatpush1.bf16.msra.mxu0 %v560
    %763 = vmatprep.subr.bf16.mxu0 0
    %764 = vmatpush1.bf16.msra.mxu0 %v561
    %765 = vmatprep.subr.bf16.mxu0 0
    %766 = vmatpush1.bf16.msra.mxu0 %v562
    %767 = vmatprep.subr.bf16.mxu0 0
    %768 = vmatpush1.bf16.msra.mxu0 %v563
    %769 = vmatprep.subr.bf16.mxu0 0
    %770 = vmatpush1.bf16.msra.mxu0 0
    %771 = vmatprep.subr.bf16.mxu0 0
    %772 = vmatpush1.bf16.msra.mxu0 0
    %773 = vmatprep.subr.bf16.mxu0 0
    %774 = vmatpush1.bf16.msra.mxu0 0
    %775 = vmatprep.subr.bf16.mxu0 0
    %776 = vmatpush1.bf16.msra.mxu0 0
    %777 = vmatprep.subr.bf16.mxu0 0
    %778 = vmatpush1.bf16.msra.mxu0 0
    %779 = vmatprep.subr.bf16.mxu0 0
    %780 = vmatpush1.bf16.msra.mxu0 0
    %781 = vmatprep.subr.bf16.mxu0 0
    %782 = vmatpush1.bf16.msra.mxu0 0
    %783 = vmatprep.subr.bf16.mxu0 0
    %784 = vmatpush1.bf16.msra.mxu0 0
    %785 = vmatprep.subr.bf16.mxu0 0
    %786 = vmatpush1.bf16.msra.mxu0 0
    %787 = vmatprep.subr.bf16.mxu0 0
    %788 = vmatpush1.bf16.msra.mxu0 0
    %789 = vmatprep.subr.bf16.mxu0 0
    %790 = vmatpush1.bf16.msra.mxu0 0
    %791 = vmatprep.subr.bf16.mxu0 0
    %792 = vmatpush1.bf16.msra.mxu0 0
    %793 = vmatprep.mubr.bf16.mxu0 0
    %794 = vmatmul.mubr.bf16.gmra.mrb[0].mxu0 %v570
    %v795 = vpop.f32.mrb[0].mxu0
    %v796 = vadd.f32 %v222, %v795
    %v797 = vpop.f32.mrb[0].mxu0
    %v798 = vpop.f32.mrb[0].mxu0
    %v799 = vadd.f32 %v222, %v798
    %v800 = vpop.f32.mrb[0].mxu0
    %801 = vmatprep.mubr.bf16.mxu0 0
    %802 = vmatmul.mubr.bf16.gmra.mrb[0].mxu0 %v573
    %v803 = vpop.f32.mrb[0].mxu0
    %v804 = vadd.f32 %v222, %v803
    %v805 = vpop.f32.mrb[0].mxu0
    %v806 = vpop.f32.mrb[0].mxu0
    %v807 = vadd.f32 %v222, %v806
    %v808 = vpop.f32.mrb[0].mxu0
    %809 = vmatprep.mubr.bf16.mxu0 0
    %810 = vmatmul.mubr.bf16.gmra.mrb[0].mxu0 %v576
    %v811 = vpop.f32.mrb[0].mxu0
    %v812 = vadd.f32 %v222, %v811
    %v813 = vpop.f32.mrb[0].mxu0
    %v814 = vpop.f32.mrb[0].mxu0
    %v815 = vadd.f32 %v222, %v814
    %v816 = vpop.f32.mrb[0].mxu0
    %817 = vmatprep.mubr.bf16.mxu0 0
    %818 = vmatmul.mubr.bf16.gmra.mrb[0].mxu0 %v579
    %v819 = vpop.f32.mrb[0].mxu0
    %v820 = vadd.f32 %v222, %v819
    %v821 = vpop.f32.mrb[0].mxu0
    %v822 = vpop.f32.mrb[0].mxu0
    %v823 = vadd.f32 %v222, %v822
    %v824 = vpop.f32.mrb[0].mxu0
    %825 = vmatprep.mubr.bf16.mxu0 0
    %826 = vmatmul.mubr.bf16.gmra.mrb[0].mxu0 %v582
    %v827 = vpop.f32.mrb[0].mxu0
    %v828 = vadd.f32 %v222, %v827
    %v829 = vpop.f32.mrb[0].mxu0
    %v830 = vpop.f32.mrb[0].mxu0
    %v831 = vadd.f32 %v222, %v830
    %v832 = vpop.f32.mrb[0].mxu0
    %833 = vmatprep.mubr.bf16.mxu0 0
    %834 = vmatmul.mubr.bf16.gmra.mrb[0].mxu0 %v585
    %v835 = vpop.f32.mrb[0].mxu0
    %v836 = vadd.f32 %v222, %v835
    %v837 = vpop.f32.mrb[0].mxu0
    %v838 = vpop.f32.mrb[0].mxu0
    %v839 = vadd.f32 %v222, %v838
    %v840 = vpop.f32.mrb[0].mxu0
    %841 = vmatprep.mubr.bf16.mxu0 0
    %842 = vmatmul.mubr.bf16.gmra.mrb[0].mxu0 %v588
    %v843 = vpop.f32.mrb[0].mxu0
    %v844 = vadd.f32 %v222, %v843
    %v845 = vpop.f32.mrb[0].mxu0
    %v846 = vpop.f32.mrb[0].mxu0
    %v847 = vadd.f32 %v222, %v846
    %v848 = vpop.f32.mrb[0].mxu0
    %849 = vmatprep.mubr.bf16.mxu0 0
    %850 = vmatmul.mubr.bf16.gmra.mrb[0].mxu0 %v591
    %v851 = vpop.f32.mrb[0].mxu0
    %v852 = vadd.f32 %v222, %v851
    %v853 = vpop.f32.mrb[0].mxu0
    %v854 = vpop.f32.mrb[0].mxu0
    %v855 = vadd.f32 %v222, %v854
    %v856 = vpop.f32.mrb[0].mxu0
    %857 = vmatprep.mubr.bf16.mxu0 0
    %858 = vmatmul.mubr.bf16.gmra.mrb[0].mxu0 %v594
    %v859 = vpop.f32.mrb[0].mxu0
    %v860 = vadd.f32 %v222, %v859
    %v861 = vpop.f32.mrb[0].mxu0
    %v862 = vpop.f32.mrb[0].mxu0
    %v863 = vadd.f32 %v222, %v862
    %v864 = vpop.f32.mrb[0].mxu0
    %865 = vmatprep.mubr.bf16.mxu0 0
    %866 = vmatmul.mubr.bf16.gmra.mrb[0].mxu0 %v597
    %v867 = vpop.f32.mrb[0].mxu0
    %v868 = vadd.f32 %v222, %v867
    %v869 = vpop.f32.mrb[0].mxu0
    %v870 = vpop.f32.mrb[0].mxu0
    %v871 = vadd.f32 %v222, %v870
    %v872 = vpop.f32.mrb[0].mxu0
    %873 = vmatprep.mubr.bf16.mxu0 0
    %874 = vmatmul.mubr.bf16.gmra.mrb[0].mxu0 %v600
    %v875 = vpop.f32.mrb[0].mxu0
    %v876 = vadd.f32 %v222, %v875
    %v877 = vpop.f32.mrb[0].mxu0
    %v878 = vpop.f32.mrb[0].mxu0
    %v879 = vadd.f32 %v222, %v878
    %v880 = vpop.f32.mrb[0].mxu0
    %881 = vmatprep.mubr.bf16.mxu0 0
    %882 = vmatmul.mubr.bf16.gmra.mrb[0].mxu0 %v603
    %v883 = vpop.f32.mrb[0].mxu0
    %v884 = vadd.f32 %v222, %v883
    %v885 = vpop.f32.mrb[0].mxu0
    %v886 = vpop.f32.mrb[0].mxu0
    %v887 = vadd.f32 %v222, %v886
    %v888 = vpop.f32.mrb[0].mxu0
    %889 = vmatprep.mubr.bf16.mxu0 0
    %890 = vmatmul.mubr.bf16.gmra.mrb[0].mxu0 %v606
    %v891 = vpop.f32.mrb[0].mxu0
    %v892 = vadd.f32 %v222, %v891
    %v893 = vpop.f32.mrb[0].mxu0
    %v894 = vpop.f32.mrb[0].mxu0
    %v895 = vadd.f32 %v222, %v894
    %v896 = vpop.f32.mrb[0].mxu0
    %897 = vmatprep.mubr.bf16.mxu0 0
    %898 = vmatmul.mubr.bf16.gmra.mrb[0].mxu0 %v609
    %v899 = vpop.f32.mrb[0].mxu0
    %v900 = vadd.f32 %v222, %v899
    %v901 = vpop.f32.mrb[0].mxu0
    %v902 = vpop.f32.mrb[0].mxu0
    %v903 = vadd.f32 %v222, %v902
    %v904 = vpop.f32.mrb[0].mxu0
    %905 = vmatprep.mubr.bf16.mxu0 0
    %906 = vmatmul.mubr.bf16.gmra.mrb[0].mxu0 %v612
    %v907 = vpop.f32.mrb[0].mxu0
    %v908 = vadd.f32 %v222, %v907
    %v909 = vpop.f32.mrb[0].mxu0
    %v910 = vpop.f32.mrb[0].mxu0
    %v911 = vadd.f32 %v222, %v910
    %v912 = vpop.f32.mrb[0].mxu0
    %913 = vmatprep.mubr.bf16.mxu0 0
    %914 = vmatmul.mubr.bf16.gmra.mrb[0].mxu0 %v615
    %v915 = vpop.f32.mrb[0].mxu0
    %v916 = vadd.f32 %v222, %v915
    %v917 = vpop.f32.mrb[0].mxu0
    %v918 = vpop.f32.mrb[0].mxu0
    %v919 = vadd.f32 %v222, %v918
    %v920 = vpop.f32.mrb[0].mxu0
    %921 = vmatprep.mubr.bf16.mxu0 0
    %922 = vmatmul.mubr.bf16.gmra.mrb[0].mxu0 %v618
    %v923 = vpop.f32.mrb[0].mxu0
    %v924 = vadd.f32 %v222, %v923
    %v925 = vpop.f32.mrb[0].mxu0
    %v926 = vpop.f32.mrb[0].mxu0
    %v927 = vadd.f32 %v222, %v926
    %v928 = vpop.f32.mrb[0].mxu0
    %929 = vmatprep.mubr.bf16.mxu0 0
    %930 = vmatmul.mubr.bf16.gmra.mrb[0].mxu0 %v621
    %v931 = vpop.f32.mrb[0].mxu0
    %v932 = vadd.f32 %v222, %v931
    %v933 = vpop.f32.mrb[0].mxu0
    %v934 = vpop.f32.mrb[0].mxu0
    %v935 = vadd.f32 %v222, %v934
    %v936 = vpop.f32.mrb[0].mxu0
    %937 = vmatprep.mubr.bf16.mxu0 0
    %938 = vmatmul.mubr.bf16.gmra.mrb[0].mxu0 %v624
    %v939 = vpop.f32.mrb[0].mxu0
    %v940 = vadd.f32 %v222, %v939
    %v941 = vpop.f32.mrb[0].mxu0
    %v942 = vpop.f32.mrb[0].mxu0
    %v943 = vadd.f32 %v222, %v942
    %v944 = vpop.f32.mrb[0].mxu0
    %945 = vmatprep.mubr.bf16.mxu0 0
    %946 = vmatmul.mubr.bf16.gmra.mrb[0].mxu0 %v627
    %v947 = vpop.f32.mrb[0].mxu0
    %v948 = vadd.f32 %v222, %v947
    %v949 = vpop.f32.mrb[0].mxu0
    %v950 = vpop.f32.mrb[0].mxu0
    %v951 = vadd.f32 %v222, %v950
    %v952 = vpop.f32.mrb[0].mxu0
    %953 = vmatprep.mubr.bf16.mxu0 0
    %954 = vmatmul.mubr.bf16.gmra.mrb[0].mxu0 %v630
    %v955 = vpop.f32.mrb[0].mxu0
    %v956 = vadd.f32 %v222, %v955
    %v957 = vpop.f32.mrb[0].mxu0
    %v958 = vpop.f32.mrb[0].mxu0
    %v959 = vadd.f32 %v222, %v958
    %v960 = vpop.f32.mrb[0].mxu0
    %961 = vmatprep.mubr.bf16.mxu0 0
    %962 = vmatmul.mubr.bf16.gmra.mrb[0].mxu0 %v633
    %v963 = vpop.f32.mrb[0].mxu0
    %v964 = vadd.f32 %v222, %v963
    %v965 = vpop.f32.mrb[0].mxu0
    %v966 = vpop.f32.mrb[0].mxu0
    %v967 = vadd.f32 %v222, %v966
    %v968 = vpop.f32.mrb[0].mxu0
    %969 = vmatprep.mubr.bf16.mxu0 0
    %970 = vmatmul.mubr.bf16.gmra.mrb[0].mxu0 %v636
    %v971 = vpop.f32.mrb[0].mxu0
    %v972 = vadd.f32 %v222, %v971
    %v973 = vpop.f32.mrb[0].mxu0
    %v974 = vpop.f32.mrb[0].mxu0
    %v975 = vadd.f32 %v222, %v974
    %v976 = vpop.f32.mrb[0].mxu0
    %977 = vmatprep.mubr.bf16.mxu0 0
    %978 = vmatmul.mubr.bf16.gmra.mrb[0].mxu0 %v639
    %v979 = vpop.f32.mrb[0].mxu0
    %v980 = vadd.f32 %v222, %v979
    %v981 = vpop.f32.mrb[0].mxu0
    %v982 = vpop.f32.mrb[0].mxu0
    %v983 = vadd.f32 %v222, %v982
    %v984 = vpop.f32.mrb[0].mxu0
    %985 = vmatprep.mubr.bf16.mxu0 0
    %986 = vmatmul.mubr.bf16.gmra.mrb[0].mxu0 %v642
    %v987 = vpop.f32.mrb[0].mxu0
    %v988 = vadd.f32 %v222, %v987
    %v989 = vpop.f32.mrb[0].mxu0
    %v990 = vpop.f32.mrb[0].mxu0
    %v991 = vadd.f32 %v222, %v990
    %v992 = vpop.f32.mrb[0].mxu0
    %993 = vmatprep.mubr.bf16.mxu0 0
    %994 = vmatmul.mubr.bf16.gmra.mrb[0].mxu0 %v645
    %v995 = vpop.f32.mrb[0].mxu0
    %v996 = vadd.f32 %v222, %v995
    %v997 = vpop.f32.mrb[0].mxu0
    %v998 = vpop.f32.mrb[0].mxu0
    %v999 = vadd.f32 %v222, %v998
    %v1000 = vpop.f32.mrb[0].mxu0
    %1001 = vmatprep.mubr.bf16.mxu0 0
    %1002 = vmatmul.mubr.bf16.gmra.mrb[0].mxu0 %v648
    %v1003 = vpop.f32.mrb[0].mxu0
    %v1004 = vadd.f32 %v222, %v1003
    %v1005 = vpop.f32.mrb[0].mxu0
    %v1006 = vpop.f32.mrb[0].mxu0
    %v1007 = vadd.f32 %v222, %v1006
    %v1008 = vpop.f32.mrb[0].mxu0
    %1009 = vmatprep.mubr.bf16.mxu0 0
    %1010 = vmatmul.mubr.bf16.gmra.mrb[0].mxu0 %v651
    %v1011 = vpop.f32.mrb[0].mxu0
    %v1012 = vadd.f32 %v222, %v1011
    %v1013 = vpop.f32.mrb[0].mxu0
    %v1014 = vpop.f32.mrb[0].mxu0
    %v1015 = vadd.f32 %v222, %v1014
    %v1016 = vpop.f32.mrb[0].mxu0
    %1017 = vmatprep.mubr.bf16.mxu0 0
    %1018 = vmatmul.mubr.bf16.gmra.mrb[0].mxu0 %v654
    %v1019 = vpop.f32.mrb[0].mxu0
    %v1020 = vadd.f32 %v222, %v1019
    %v1021 = vpop.f32.mrb[0].mxu0
    %v1022 = vpop.f32.mrb[0].mxu0
    %v1023 = vadd.f32 %v222, %v1022
    %v1024 = vpop.f32.mrb[0].mxu0
    %1025 = vmatprep.mubr.bf16.mxu0 0
    %1026 = vmatmul.mubr.bf16.gmra.mrb[0].mxu0 %v657
    %v1027 = vpop.f32.mrb[0].mxu0
    %v1028 = vadd.f32 %v222, %v1027
    %v1029 = vpop.f32.mrb[0].mxu0
    %v1030 = vpop.f32.mrb[0].mxu0
    %v1031 = vadd.f32 %v222, %v1030
    %v1032 = vpop.f32.mrb[0].mxu0
    %1033 = vmatprep.mubr.bf16.mxu0 0
    %1034 = vmatmul.mubr.bf16.gmra.mrb[0].mxu0 %v660
    %v1035 = vpop.f32.mrb[0].mxu0
    %v1036 = vadd.f32 %v222, %v1035
    %v1037 = vpop.f32.mrb[0].mxu0
    %v1038 = vpop.f32.mrb[0].mxu0
    %v1039 = vadd.f32 %v222, %v1038
    %v1040 = vpop.f32.mrb[0].mxu0
    %1041 = vmatprep.mubr.bf16.mxu0 0
    %1042 = vmatmul.mubr.bf16.gmra.mrb[0].mxu0 %v663
    %v1043 = vpop.f32.mrb[0].mxu0
    %v1044 = vadd.f32 %v222, %v1043
    %v1045 = vpop.f32.mrb[0].mxu0
    %v1046 = vpop.f32.mrb[0].mxu0
    %v1047 = vadd.f32 %v222, %v1046
    %v1048 = vpop.f32.mrb[0].mxu0
    %1049 = vmatprep.mubr.bf16.mxu0 0
    %1050 = vmatmul.mubr.bf16.gmra.mrb[0].mxu0 %v666
    %v1051 = vpop.f32.mrb[0].mxu0
    %v1052 = vadd.f32 %v222, %v1051
    %v1053 = vpop.f32.mrb[0].mxu0
    %v1054 = vpop.f32.mrb[0].mxu0
    %v1055 = vadd.f32 %v222, %v1054
    %v1056 = vpop.f32.mrb[0].mxu0
    %1057 = vmatprep.mubr.bf16.mxu0 0
    %1058 = vmatmul.mubr.bf16.gmra.mrb[0].mxu0 %v669
    %v1059 = vpop.f32.mrb[0].mxu0
    %v1060 = vadd.f32 %v222, %v1059
    %v1061 = vpop.f32.mrb[0].mxu0
    %v1062 = vpop.f32.mrb[0].mxu0
    %v1063 = vadd.f32 %v222, %v1062
    %v1064 = vpop.f32.mrb[0].mxu0
    %1065 = vmatprep.mubr.bf16.mxu0 0
    %1066 = vmatmul.mubr.bf16.gmra.mrb[0].mxu0 %v672
    %v1067 = vpop.f32.mrb[0].mxu0
    %v1068 = vadd.f32 %v222, %v1067
    %v1069 = vpop.f32.mrb[0].mxu0
    %v1070 = vpop.f32.mrb[0].mxu0
    %v1071 = vadd.f32 %v222, %v1070
    %v1072 = vpop.f32.mrb[0].mxu0
    %1073 = vmatprep.mubr.bf16.mxu0 0
    %1074 = vmatmul.mubr.bf16.gmra.mrb[0].mxu0 %v675
    %v1075 = vpop.f32.mrb[0].mxu0
    %v1076 = vadd.f32 %v222, %v1075
    %v1077 = vpop.f32.mrb[0].mxu0
    %v1078 = vpop.f32.mrb[0].mxu0
    %v1079 = vadd.f32 %v222, %v1078
    %v1080 = vpop.f32.mrb[0].mxu0
    %1081 = vmatprep.mubr.bf16.mxu0 0
    %1082 = vmatmul.mubr.bf16.gmra.mrb[0].mxu0 %v678
    %v1083 = vpop.f32.mrb[0].mxu0
    %v1084 = vadd.f32 %v222, %v1083
    %v1085 = vpop.f32.mrb[0].mxu0
    %v1086 = vpop.f32.mrb[0].mxu0
    %v1087 = vadd.f32 %v222, %v1086
    %v1088 = vpop.f32.mrb[0].mxu0
    %1089 = vmatprep.mubr.bf16.mxu0 0
    %1090 = vmatmul.mubr.bf16.gmra.mrb[0].mxu0 %v681
    %v1091 = vpop.f32.mrb[0].mxu0
    %v1092 = vadd.f32 %v222, %v1091
    %v1093 = vpop.f32.mrb[0].mxu0
    %v1094 = vpop.f32.mrb[0].mxu0
    %v1095 = vadd.f32 %v222, %v1094
    %v1096 = vpop.f32.mrb[0].mxu0
    %1097 = vmatprep.mubr.bf16.mxu0 0
    %1098 = vmatmul.mubr.bf16.gmra.mrb[0].mxu0 %v684
    %v1099 = vpop.f32.mrb[0].mxu0
    %v1100 = vadd.f32 %v222, %v1099
    %v1101 = vpop.f32.mrb[0].mxu0
    %v1102 = vpop.f32.mrb[0].mxu0
    %v1103 = vadd.f32 %v222, %v1102
    %v1104 = vpop.f32.mrb[0].mxu0
    %1105 = vmatprep.mubr.bf16.mxu0 0
    %1106 = vmatmul.mubr.bf16.gmra.mrb[0].mxu0 %v687
    %v1107 = vpop.f32.mrb[0].mxu0
    %v1108 = vadd.f32 %v222, %v1107
    %v1109 = vpop.f32.mrb[0].mxu0
    %v1110 = vpop.f32.mrb[0].mxu0
    %v1111 = vadd.f32 %v222, %v1110
    %v1112 = vpop.f32.mrb[0].mxu0
    %1113 = vmatprep.mubr.bf16.mxu0 0
    %1114 = vmatmul.mubr.bf16.gmra.mrb[0].mxu0 %v690
    %v1115 = vpop.f32.mrb[0].mxu0
    %v1116 = vadd.f32 %v222, %v1115
    %v1117 = vpop.f32.mrb[0].mxu0
    %v1118 = vpop.f32.mrb[0].mxu0
    %v1119 = vadd.f32 %v222, %v1118
    %v1120 = vpop.f32.mrb[0].mxu0
    %1121 = vmatprep.mubr.bf16.mxu0 0
    %1122 = vmatmul.mubr.bf16.gmra.mrb[0].mxu0 %v693
    %v1123 = vpop.f32.mrb[0].mxu0
    %v1124 = vadd.f32 %v222, %v1123
    %v1125 = vpop.f32.mrb[0].mxu0
    %v1126 = vpop.f32.mrb[0].mxu0
    %v1127 = vadd.f32 %v222, %v1126
    %v1128 = vpop.f32.mrb[0].mxu0
    %1129 = vmatprep.mubr.bf16.mxu0 0
    %1130 = vmatmul.mubr.bf16.gmra.mrb[0].mxu0 %v696
    %v1131 = vpop.f32.mrb[0].mxu0
    %v1132 = vadd.f32 %v222, %v1131
    %v1133 = vpop.f32.mrb[0].mxu0
    %v1134 = vpop.f32.mrb[0].mxu0
    %v1135 = vadd.f32 %v222, %v1134
    %v1136 = vpop.f32.mrb[0].mxu0
    %1137 = vmatprep.mubr.bf16.mxu0 0
    %1138 = vmatmul.mubr.bf16.gmra.mrb[0].mxu0 %v699
    %v1139 = vpop.f32.mrb[0].mxu0
    %v1140 = vadd.f32 %v222, %v1139
    %v1141 = vpop.f32.mrb[0].mxu0
    %v1142 = vpop.f32.mrb[0].mxu0
    %v1143 = vadd.f32 %v222, %v1142
    %v1144 = vpop.f32.mrb[0].mxu0
    %1145 = vmatprep.mubr.bf16.mxu0 0
    %1146 = vmatmul.mubr.bf16.gmra.mrb[0].mxu0 %v702
    %v1147 = vpop.f32.mrb[0].mxu0
    %v1148 = vadd.f32 %v222, %v1147
    %v1149 = vpop.f32.mrb[0].mxu0
    %v1150 = vpop.f32.mrb[0].mxu0
    %v1151 = vadd.f32 %v222, %v1150
    %v1152 = vpop.f32.mrb[0].mxu0
    %1153 = vmatprep.mubr.bf16.mxu0 0
    %1154 = vmatmul.mubr.bf16.gmra.mrb[0].mxu0 %v705
    %v1155 = vpop.f32.mrb[0].mxu0
    %v1156 = vadd.f32 %v222, %v1155
    %v1157 = vpop.f32.mrb[0].mxu0
    %v1158 = vpop.f32.mrb[0].mxu0
    %v1159 = vadd.f32 %v222, %v1158
    %v1160 = vpop.f32.mrb[0].mxu0
    %1161 = vmatprep.mubr.bf16.mxu0 0
    %1162 = vmatmul.mubr.bf16.gmra.mrb[0].mxu0 %v708
    %v1163 = vpop.f32.mrb[0].mxu0
    %v1164 = vadd.f32 %v222, %v1163
    %v1165 = vpop.f32.mrb[0].mxu0
    %v1166 = vpop.f32.mrb[0].mxu0
    %v1167 = vadd.f32 %v222, %v1166
    %v1168 = vpop.f32.mrb[0].mxu0
    %1169 = vmatprep.mubr.bf16.mxu0 0
    %1170 = vmatmul.mubr.bf16.gmra.mrb[0].mxu0 %v711
    %v1171 = vpop.f32.mrb[0].mxu0
    %v1172 = vadd.f32 %v222, %v1171
    %v1173 = vpop.f32.mrb[0].mxu0
    %v1174 = vpop.f32.mrb[0].mxu0
    %v1175 = vadd.f32 %v222, %v1174
    %v1176 = vpop.f32.mrb[0].mxu0
    %1177 = vmatprep.mubr.bf16.mxu0 0
    %1178 = vmatmul.mubr.bf16.gmra.mrb[0].mxu0 %v714
    %v1179 = vpop.f32.mrb[0].mxu0
    %v1180 = vadd.f32 %v222, %v1179
    %v1181 = vpop.f32.mrb[0].mxu0
    %v1182 = vpop.f32.mrb[0].mxu0
    %v1183 = vadd.f32 %v222, %v1182
    %v1184 = vpop.f32.mrb[0].mxu0
    %1185 = vmatprep.mubr.bf16.mxu0 0
    %1186 = vmatmul.mubr.bf16.gmra.mrb[0].mxu0 %v717
    %v1187 = vpop.f32.mrb[0].mxu0
    %v1188 = vadd.f32 %v222, %v1187
    %v1189 = vpop.f32.mrb[0].mxu0
    %v1190 = vpop.f32.mrb[0].mxu0
    %v1191 = vadd.f32 %v222, %v1190
    %v1192 = vpop.f32.mrb[0].mxu0
    %1193 = vmatprep.mubr.bf16.mxu0 0
    %1194 = vmatmul.mubr.bf16.gmra.mrb[0].mxu0 %v720
    %v1195 = vpop.f32.mrb[0].mxu0
    %v1196 = vadd.f32 %v222, %v1195
    %v1197 = vpop.f32.mrb[0].mxu0
    %v1198 = vpop.f32.mrb[0].mxu0
    %v1199 = vadd.f32 %v222, %v1198
    %v1200 = vpop.f32.mrb[0].mxu0
    %1201 = vmatprep.mubr.bf16.mxu0 0
    %1202 = vmatmul.mubr.bf16.gmra.mrb[0].mxu0 %v723
    %v1203 = vpop.f32.mrb[0].mxu0
    %v1204 = vadd.f32 %v222, %v1203
    %v1205 = vpop.f32.mrb[0].mxu0
    %v1206 = vpop.f32.mrb[0].mxu0
    %v1207 = vadd.f32 %v222, %v1206
    %v1208 = vpop.f32.mrb[0].mxu0
    %1209 = vmatprep.mubr.bf16.mxu0 0
    %1210 = vmatmul.mubr.bf16.gmra.mrb[0].mxu0 %v726
    %v1211 = vpop.f32.mrb[0].mxu0
    %v1212 = vadd.f32 %v222, %v1211
    %v1213 = vpop.f32.mrb[0].mxu0
    %v1214 = vpop.f32.mrb[0].mxu0
    %v1215 = vadd.f32 %v222, %v1214
    %v1216 = vpop.f32.mrb[0].mxu0
    %1217 = vmatprep.mubr.bf16.mxu0 0
    %1218 = vmatmul.mubr.bf16.gmra.mrb[0].mxu0 %v729
    %v1219 = vpop.f32.mrb[0].mxu0
    %v1220 = vadd.f32 %v222, %v1219
    %v1221 = vpop.f32.mrb[0].mxu0
    %v1222 = vpop.f32.mrb[0].mxu0
    %v1223 = vadd.f32 %v222, %v1222
    %v1224 = vpop.f32.mrb[0].mxu0
    %1225 = vmatprep.mubr.bf16.mxu0 0
    %1226 = vmatmul.mubr.bf16.gmra.mrb[0].mxu0 %v732
    %v1227 = vpop.f32.mrb[0].mxu0
    %v1228 = vadd.f32 %v222, %v1227
    %v1229 = vpop.f32.mrb[0].mxu0
    %v1230 = vpop.f32.mrb[0].mxu0
    %v1231 = vadd.f32 %v222, %v1230
    %v1232 = vpop.f32.mrb[0].mxu0
    %1233 = vmatprep.mubr.bf16.mxu0 0
    %1234 = vmatmul.mubr.bf16.gmra.mrb[0].mxu0 %v735
    %v1235 = vpop.f32.mrb[0].mxu0
    %v1236 = vadd.f32 %v222, %v1235
    %v1237 = vpop.f32.mrb[0].mxu0
    %v1238 = vpop.f32.mrb[0].mxu0
    %v1239 = vadd.f32 %v222, %v1238
    %v1240 = vpop.f32.mrb[0].mxu0
    %1241 = vmatprep.mubr.bf16.mxu0 0
    %1242 = vmatmul.mubr.bf16.gmra.mrb[0].mxu0 %v738
    %v1243 = vpop.f32.mrb[0].mxu0
    %v1244 = vadd.f32 %v222, %v1243
    %v1245 = vpop.f32.mrb[0].mxu0
    %v1246 = vpop.f32.mrb[0].mxu0
    %v1247 = vadd.f32 %v222, %v1246
    %v1248 = vpop.f32.mrb[0].mxu0
    %1249 = vmatprep.mubr.bf16.mxu0 0
    %1250 = vmatmul.mubr.bf16.gmra.mrb[0].mxu0 %v741
    %v1251 = vpop.f32.mrb[0].mxu0
    %v1252 = vadd.f32 %v222, %v1251
    %v1253 = vpop.f32.mrb[0].mxu0
    %v1254 = vpop.f32.mrb[0].mxu0
    %v1255 = vadd.f32 %v222, %v1254
    %v1256 = vpop.f32.mrb[0].mxu0
    %1257 = vmatprep.mubr.bf16.mxu0 0
    %1258 = vmatmul.mubr.bf16.gmra.mrb[0].mxu0 %v744
    %v1259 = vpop.f32.mrb[0].mxu0
    %v1260 = vadd.f32 %v222, %v1259
    %v1261 = vpop.f32.mrb[0].mxu0
    %v1262 = vpop.f32.mrb[0].mxu0
    %v1263 = vadd.f32 %v222, %v1262
    %v1264 = vpop.f32.mrb[0].mxu0
    %1265 = vmatprep.mubr.bf16.mxu0 0
    %1266 = vmatmul.mubr.bf16.gmra.mrb[0].mxu0 %v747
    %v1267 = vpop.f32.mrb[0].mxu0
    %v1268 = vadd.f32 %v222, %v1267
    %v1269 = vpop.f32.mrb[0].mxu0
    %v1270 = vpop.f32.mrb[0].mxu0
    %v1271 = vadd.f32 %v222, %v1270
    %v1272 = vpop.f32.mrb[0].mxu0
    %1273 = vmatprep.mubr.bf16.mxu0 0
    %1274 = vmatmul.mubr.bf16.gmra.mrb[0].mxu0 %v750
    %v1275 = vpop.f32.mrb[0].mxu0
    %v1276 = vadd.f32 %v222, %v1275
    %v1277 = vpop.f32.mrb[0].mxu0
    %v1278 = vpop.f32.mrb[0].mxu0
    %v1279 = vadd.f32 %v222, %v1278
    %v1280 = vpop.f32.mrb[0].mxu0
    %1281 = vmatprep.mubr.bf16.mxu0 0
    %1282 = vmatmul.mubr.bf16.gmra.mrb[0].mxu0 %v753
    %v1283 = vpop.f32.mrb[0].mxu0
    %v1284 = vadd.f32 %v222, %v1283
    %v1285 = vpop.f32.mrb[0].mxu0
    %v1286 = vpop.f32.mrb[0].mxu0
    %v1287 = vadd.f32 %v222, %v1286
    %v1288 = vpop.f32.mrb[0].mxu0
    %1289 = vmatprep.mubr.bf16.mxu0 0
    %1290 = vmatmul.mubr.bf16.gmra.mrb[0].mxu0 %v756
    %v1291 = vpop.f32.mrb[0].mxu0
    %v1292 = vadd.f32 %v222, %v1291
    %v1293 = vpop.f32.mrb[0].mxu0
    %v1294 = vpop.f32.mrb[0].mxu0
    %v1295 = vadd.f32 %v222, %v1294
    %v1296 = vpop.f32.mrb[0].mxu0
    %1297 = vmatprep.mubr.bf16.mxu0 0
    %1298 = vmatmul.mubr.bf16.gmra.mrb[0].mxu0 %v759
    %v1299 = vpop.f32.mrb[0].mxu0
    %v1300 = vadd.f32 %v222, %v1299
    %v1301 = vpop.f32.mrb[0].mxu0
    %v1302 = vpop.f32.mrb[0].mxu0
    %v1303 = vadd.f32 %v222, %v1302
    %v1304 = vpop.f32.mrb[0].mxu0
    %1305 = vdwg.mxu0
    %v1306 = vmax.f32 %v796, 0.0
    %v1307 = vmax.f32 %v799, 0.0
    %v1308 = vmax.f32 %v804, 0.0
    %v1309 = vmax.f32 %v807, 0.0
    %v1310 = vmax.f32 %v812, 0.0
    %v1311 = vmax.f32 %v815, 0.0
    %v1312 = vmax.f32 %v820, 0.0
    %v1313 = vmax.f32 %v823, 0.0
    %v1314 = vmax.f32 %v828, 0.0
    %v1315 = vmax.f32 %v831, 0.0
    %v1316 = vmax.f32 %v836, 0.0
    %v1317 = vmax.f32 %v839, 0.0
    %v1318 = vmax.f32 %v844, 0.0
    %v1319 = vmax.f32 %v847, 0.0
    %v1320 = vmax.f32 %v852, 0.0
    %v1321 = vmax.f32 %v855, 0.0
    %v1322 = vmax.f32 %v860, 0.0
    %v1323 = vmax.f32 %v863, 0.0
    %v1324 = vmax.f32 %v868, 0.0
    %v1325 = vmax.f32 %v871, 0.0
    %v1326 = vmax.f32 %v876, 0.0
    %v1327 = vmax.f32 %v879, 0.0
    %v1328 = vmax.f32 %v884, 0.0
    %v1329 = vmax.f32 %v887, 0.0
    %v1330 = vmax.f32 %v892, 0.0
    %v1331 = vmax.f32 %v895, 0.0
    %v1332 = vmax.f32 %v900, 0.0
    %v1333 = vmax.f32 %v903, 0.0
    %v1334 = vmax.f32 %v908, 0.0
    %v1335 = vmax.f32 %v911, 0.0
    %v1336 = vmax.f32 %v916, 0.0
    %v1337 = vmax.f32 %v919, 0.0
    %v1338 = vmax.f32 %v924, 0.0
    %v1339 = vmax.f32 %v927, 0.0
    %v1340 = vmax.f32 %v932, 0.0
    %v1341 = vmax.f32 %v935, 0.0
    %v1342 = vmax.f32 %v940, 0.0
    %v1343 = vmax.f32 %v943, 0.0
    %v1344 = vmax.f32 %v948, 0.0
    %v1345 = vmax.f32 %v951, 0.0
    %v1346 = vmax.f32 %v956, 0.0
    %v1347 = vmax.f32 %v959, 0.0
    %v1348 = vmax.f32 %v964, 0.0
    %v1349 = vmax.f32 %v967, 0.0
    %v1350 = vmax.f32 %v972, 0.0
    %v1351 = vmax.f32 %v975, 0.0
    %v1352 = vmax.f32 %v980, 0.0
    %v1353 = vmax.f32 %v983, 0.0
    %v1354 = vmax.f32 %v988, 0.0
    %v1355 = vmax.f32 %v991, 0.0
    %v1356 = vmax.f32 %v996, 0.0
    %v1357 = vmax.f32 %v999, 0.0
    %v1358 = vmax.f32 %v1004, 0.0
    %v1359 = vmax.f32 %v1007, 0.0
    %v1360 = vmax.f32 %v1012, 0.0
    %v1361 = vmax.f32 %v1015, 0.0
    %v1362 = vmax.f32 %v1020, 0.0
    %v1363 = vmax.f32 %v1023, 0.0
    %v1364 = vmax.f32 %v1028, 0.0
    %v1365 = vmax.f32 %v1031, 0.0
    %v1366 = vmax.f32 %v1036, 0.0
    %v1367 = vmax.f32 %v1039, 0.0
    %v1368 = vmax.f32 %v1044, 0.0
    %v1369 = vmax.f32 %v1047, 0.0
    %v1370 = vmax.f32 %v1052, 0.0
    %v1371 = vmax.f32 %v1055, 0.0
    %v1372 = vmax.f32 %v1060, 0.0
    %v1373 = vmax.f32 %v1063, 0.0
    %v1374 = vmax.f32 %v1068, 0.0
    %v1375 = vmax.f32 %v1071, 0.0
    %v1376 = vmax.f32 %v1076, 0.0
    %v1377 = vmax.f32 %v1079, 0.0
    %v1378 = vmax.f32 %v1084, 0.0
    %v1379 = vmax.f32 %v1087, 0.0
    %v1380 = vmax.f32 %v1092, 0.0
    %v1381 = vmax.f32 %v1095, 0.0
    %v1382 = vmax.f32 %v1100, 0.0
    %v1383 = vmax.f32 %v1103, 0.0
    %v1384 = vmax.f32 %v1108, 0.0
    %v1385 = vmax.f32 %v1111, 0.0
    %v1386 = vmax.f32 %v1116, 0.0
    %v1387 = vmax.f32 %v1119, 0.0
    %v1388 = vmax.f32 %v1124, 0.0
    %v1389 = vmax.f32 %v1127, 0.0
    %v1390 = vmax.f32 %v1132, 0.0
    %v1391 = vmax.f32 %v1135, 0.0
    %v1392 = vmax.f32 %v1140, 0.0
    %v1393 = vmax.f32 %v1143, 0.0
    %v1394 = vmax.f32 %v1148, 0.0
    %v1395 = vmax.f32 %v1151, 0.0
    %v1396 = vmax.f32 %v1156, 0.0
    %v1397 = vmax.f32 %v1159, 0.0
    %v1398 = vmax.f32 %v1164, 0.0
    %v1399 = vmax.f32 %v1167, 0.0
    %v1400 = vmax.f32 %v1172, 0.0
    %v1401 = vmax.f32 %v1175, 0.0
    %v1402 = vmax.f32 %v1180, 0.0
    %v1403 = vmax.f32 %v1183, 0.0
    %v1404 = vmax.f32 %v1188, 0.0
    %v1405 = vmax.f32 %v1191, 0.0
    %v1406 = vmax.f32 %v1196, 0.0
    %v1407 = vmax.f32 %v1199, 0.0
    %v1408 = vmax.f32 %v1204, 0.0
    %v1409 = vmax.f32 %v1207, 0.0
    %v1410 = vmax.f32 %v1212, 0.0
    %v1411 = vmax.f32 %v1215, 0.0
    %v1412 = vmax.f32 %v1220, 0.0
    %v1413 = vmax.f32 %v1223, 0.0
    %v1414 = vmax.f32 %v1228, 0.0
    %v1415 = vmax.f32 %v1231, 0.0
    %v1416 = vmax.f32 %v1236, 0.0
    %v1417 = vmax.f32 %v1239, 0.0
    %v1418 = vmax.f32 %v1244, 0.0
    %v1419 = vmax.f32 %v1247, 0.0
    %v1420 = vmax.f32 %v1252, 0.0
    %v1421 = vmax.f32 %v1255, 0.0
    %v1422 = vmax.f32 %v1260, 0.0
    %v1423 = vmax.f32 %v1263, 0.0
    %v1424 = vmax.f32 %v1268, 0.0
    %v1425 = vmax.f32 %v1271, 0.0
    %v1426 = vmax.f32 %v1276, 0.0
    %v1427 = vmax.f32 %v1279, 0.0
    %v1428 = vmax.f32 %v1284, 0.0
    %v1429 = vmax.f32 %v1287, 0.0
    %v1430 = vmax.f32 %v1292, 0.0
    %v1431 = vmax.f32 %v1295, 0.0
    %v1432 = vmax.f32 %v1300, 0.0
    %v1433 = vmax.f32 %v1303, 0.0
    %v1434 = vpack.c.bf16 %v1307, %v1306
    %v1435 = vpack.c.bf16 %v1309, %v1308
    %v1436 = vpack.c.bf16 %v1311, %v1310
    %v1437 = vpack.c.bf16 %v1313, %v1312
    %v1438 = vpack.c.bf16 %v1315, %v1314
    %v1439 = vpack.c.bf16 %v1317, %v1316
    %v1440 = vpack.c.bf16 %v1319, %v1318
    %v1441 = vpack.c.bf16 %v1321, %v1320
    %v1442 = vpack.c.bf16 %v1323, %v1322
    %v1443 = vpack.c.bf16 %v1325, %v1324
    %v1444 = vpack.c.bf16 %v1327, %v1326
    %v1445 = vpack.c.bf16 %v1329, %v1328
    %v1446 = vpack.c.bf16 %v1331, %v1330
    %v1447 = vpack.c.bf16 %v1333, %v1332
    %v1448 = vpack.c.bf16 %v1335, %v1334
    %v1449 = vpack.c.bf16 %v1337, %v1336
    %v1450 = vpack.c.bf16 %v1339, %v1338
    %v1451 = vpack.c.bf16 %v1341, %v1340
    %v1452 = vpack.c.bf16 %v1343, %v1342
    %v1453 = vpack.c.bf16 %v1345, %v1344
    %v1454 = vpack.c.bf16 %v1347, %v1346
    %v1455 = vpack.c.bf16 %v1349, %v1348
    %v1456 = vpack.c.bf16 %v1351, %v1350
    %v1457 = vpack.c.bf16 %v1353, %v1352
    %v1458 = vpack.c.bf16 %v1355, %v1354
    %v1459 = vpack.c.bf16 %v1357, %v1356
    %v1460 = vpack.c.bf16 %v1359, %v1358
    %v1461 = vpack.c.bf16 %v1361, %v1360
    %v1462 = vpack.c.bf16 %v1363, %v1362
    %v1463 = vpack.c.bf16 %v1365, %v1364
    %v1464 = vpack.c.bf16 %v1367, %v1366
    %v1465 = vpack.c.bf16 %v1369, %v1368
    %v1466 = vpack.c.bf16 %v1371, %v1370
    %v1467 = vpack.c.bf16 %v1373, %v1372
    %v1468 = vpack.c.bf16 %v1375, %v1374
    %v1469 = vpack.c.bf16 %v1377, %v1376
    %v1470 = vpack.c.bf16 %v1379, %v1378
    %v1471 = vpack.c.bf16 %v1381, %v1380
    %v1472 = vpack.c.bf16 %v1383, %v1382
    %v1473 = vpack.c.bf16 %v1385, %v1384
    %v1474 = vpack.c.bf16 %v1387, %v1386
    %v1475 = vpack.c.bf16 %v1389, %v1388
    %v1476 = vpack.c.bf16 %v1391, %v1390
    %v1477 = vpack.c.bf16 %v1393, %v1392
    %v1478 = vpack.c.bf16 %v1395, %v1394
    %v1479 = vpack.c.bf16 %v1397, %v1396
    %v1480 = vpack.c.bf16 %v1399, %v1398
    %v1481 = vpack.c.bf16 %v1401, %v1400
    %v1482 = vpack.c.bf16 %v1403, %v1402
    %v1483 = vpack.c.bf16 %v1405, %v1404
    %v1484 = vpack.c.bf16 %v1407, %v1406
    %v1485 = vpack.c.bf16 %v1409, %v1408
    %v1486 = vpack.c.bf16 %v1411, %v1410
    %v1487 = vpack.c.bf16 %v1413, %v1412
    %v1488 = vpack.c.bf16 %v1415, %v1414
    %v1489 = vpack.c.bf16 %v1417, %v1416
    %v1490 = vpack.c.bf16 %v1419, %v1418
    %v1491 = vpack.c.bf16 %v1421, %v1420
    %v1492 = vpack.c.bf16 %v1423, %v1422
    %v1493 = vpack.c.bf16 %v1425, %v1424
    %v1494 = vpack.c.bf16 %v1427, %v1426
    %v1495 = vpack.c.bf16 %v1429, %v1428
    %v1496 = vpack.c.bf16 %v1431, %v1430
    %v1497 = vpack.c.bf16 %v1433, %v1432
    %v1498 = vld [vmem:[%s4] sm:$0xf]
    %v1499 = vld [vmem:[%s4 + $0x4] sm:$0xf]
    %v1500 = vld [vmem:[%s4 + $0x8] sm:$0xf]
    %v1501 = vld [vmem:[%s4 + $0xc] sm:$0xf]
    %v1502 = vld [vmem:[%s4 + $0x10] sm:$0xf]
    %v1503 = vld [vmem:[%s4 + $0x14] sm:$0xf]
    %v1504 = vld [vmem:[%s4 + $0x18] sm:$0xf]
    %v1505 = vld [vmem:[%s4 + $0x1c] sm:$0xf]
    %v1506 = vld [vmem:[%s5] sm:$0x1]
    %v1508 = vlaneseq
    %v1509 = vshrl.u32 %v1508, 7
    %v1510 = vsub.s32 0, %v1509
    %v1511 = vrot.slane %v1506, %v1510
    %v1521 = vunpack.c.l.b16 %v1498
    %v1522 = vunpack.c.l.b16 %v1499
    %v1523 = vunpack.c.l.b16 %v1500
    %v1524 = vunpack.c.l.b16 %v1501
    %v1525 = vunpack.c.l.b16 %v1502
    %v1526 = vunpack.c.l.b16 %v1503
    %v1527 = vunpack.c.l.b16 %v1504
    %v1528 = vunpack.c.l.b16 %v1505
    %v1529 = vpack.c.b16 %v1522, %v1521
    %v1530 = vpack.c.b16 %v1524, %v1523
    %v1531 = vpack.c.b16 %v1526, %v1525
    %v1532 = vpack.c.b16 %v1528, %v1527
    %v1538 = vsel %vm568, %v1434, 0
    %v1541 = vsel %vm568, %v1435, 0
    %v1544 = vsel %vm568, %v1436, 0
    %v1547 = vsel %vm568, %v1437, 0
    %v1550 = vsel %vm568, %v1438, 0
    %v1553 = vsel %vm568, %v1439, 0
    %v1556 = vsel %vm568, %v1440, 0
    %v1559 = vsel %vm568, %v1441, 0
    %v1562 = vsel %vm568, %v1442, 0
    %v1565 = vsel %vm568, %v1443, 0
    %v1568 = vsel %vm568, %v1444, 0
    %v1571 = vsel %vm568, %v1445, 0
    %v1574 = vsel %vm568, %v1446, 0
    %v1577 = vsel %vm568, %v1447, 0
    %v1580 = vsel %vm568, %v1448, 0
    %v1583 = vsel %vm568, %v1449, 0
    %v1586 = vsel %vm568, %v1450, 0
    %v1589 = vsel %vm568, %v1451, 0
    %v1592 = vsel %vm568, %v1452, 0
    %v1595 = vsel %vm568, %v1453, 0
    %v1598 = vsel %vm568, %v1454, 0
    %v1601 = vsel %vm568, %v1455, 0
    %v1604 = vsel %vm568, %v1456, 0
    %v1607 = vsel %vm568, %v1457, 0
    %v1610 = vsel %vm568, %v1458, 0
    %v1613 = vsel %vm568, %v1459, 0
    %v1616 = vsel %vm568, %v1460, 0
    %v1619 = vsel %vm568, %v1461, 0
    %v1622 = vsel %vm568, %v1462, 0
    %v1625 = vsel %vm568, %v1463, 0
    %v1628 = vsel %vm568, %v1464, 0
    %v1631 = vsel %vm568, %v1465, 0
    %v1634 = vsel %vm568, %v1466, 0
    %v1637 = vsel %vm568, %v1467, 0
    %v1640 = vsel %vm568, %v1468, 0
    %v1643 = vsel %vm568, %v1469, 0
    %v1646 = vsel %vm568, %v1470, 0
    %v1649 = vsel %vm568, %v1471, 0
    %v1652 = vsel %vm568, %v1472, 0
    %v1655 = vsel %vm568, %v1473, 0
    %v1658 = vsel %vm568, %v1474, 0
    %v1661 = vsel %vm568, %v1475, 0
    %v1664 = vsel %vm568, %v1476, 0
    %v1667 = vsel %vm568, %v1477, 0
    %v1670 = vsel %vm568, %v1478, 0
    %v1673 = vsel %vm568, %v1479, 0
    %v1676 = vsel %vm568, %v1480, 0
    %v1679 = vsel %vm568, %v1481, 0
    %v1682 = vsel %vm568, %v1482, 0
    %v1685 = vsel %vm568, %v1483, 0
    %v1688 = vsel %vm568, %v1484, 0
    %v1691 = vsel %vm568, %v1485, 0
    %v1694 = vsel %vm568, %v1486, 0
    %v1697 = vsel %vm568, %v1487, 0
    %v1700 = vsel %vm568, %v1488, 0
    %v1703 = vsel %vm568, %v1489, 0
    %v1706 = vsel %vm568, %v1490, 0
    %v1709 = vsel %vm568, %v1491, 0
    %v1712 = vsel %vm568, %v1492, 0
    %v1715 = vsel %vm568, %v1493, 0
    %v1718 = vsel %vm568, %v1494, 0
    %v1721 = vsel %vm568, %v1495, 0
    %v1724 = vsel %vm568, %v1496, 0
    %v1727 = vsel %vm568, %v1497, 0
    %1729 = vmatprep.subr.bf16.mxu0 0
    %1730 = vmatpush1.bf16.msra.mxu0 %v1529
    %1731 = vmatprep.subr.bf16.mxu0 0
    %1732 = vmatpush1.bf16.msra.mxu0 %v1530
    %1733 = vmatprep.subr.bf16.mxu0 0
    %1734 = vmatpush1.bf16.msra.mxu0 %v1531
    %1735 = vmatprep.subr.bf16.mxu0 0
    %1736 = vmatpush1.bf16.msra.mxu0 %v1532
    %1737 = vmatprep.subr.bf16.mxu0 0
    %1738 = vmatpush1.bf16.msra.mxu0 0
    %1739 = vmatprep.subr.bf16.mxu0 0
    %1740 = vmatpush1.bf16.msra.mxu0 0
    %1741 = vmatprep.subr.bf16.mxu0 0
    %1742 = vmatpush1.bf16.msra.mxu0 0
    %1743 = vmatprep.subr.bf16.mxu0 0
    %1744 = vmatpush1.bf16.msra.mxu0 0
    %1745 = vmatprep.subr.bf16.mxu0 0
    %1746 = vmatpush1.bf16.msra.mxu0 0
    %1747 = vmatprep.subr.bf16.mxu0 0
    %1748 = vmatpush1.bf16.msra.mxu0 0
    %1749 = vmatprep.subr.bf16.mxu0 0
    %1750 = vmatpush1.bf16.msra.mxu0 0
    %1751 = vmatprep.subr.bf16.mxu0 0
    %1752 = vmatpush1.bf16.msra.mxu0 0
    %1753 = vmatprep.subr.bf16.mxu0 0
    %1754 = vmatpush1.bf16.msra.mxu0 0
    %1755 = vmatprep.subr.bf16.mxu0 0
    %1756 = vmatpush1.bf16.msra.mxu0 0
    %1757 = vmatprep.subr.bf16.mxu0 0
    %1758 = vmatpush1.bf16.msra.mxu0 0
    %1759 = vmatprep.subr.bf16.mxu0 0
    %1760 = vmatpush1.bf16.msra.mxu0 0
    %1761 = vmatprep.mubr.bf16.mxu0 0
    %1762 = vmatmul.mubr.bf16.gmra.mrb[0].mxu0 %v1538
    %v1763 = vpop.f32.mrb[0].mxu0
    %v1764 = vadd.f32 %v1511, %v1763
    %v1765 = vpop.f32.mrb[0].mxu0
    %v1766 = vpop.f32.mrb[0].mxu0
    %v1767 = vadd.f32 %v1511, %v1766
    %v1768 = vpop.f32.mrb[0].mxu0
    %1769 = vmatprep.mubr.bf16.mxu0 0
    %1770 = vmatmul.mubr.bf16.gmra.mrb[0].mxu0 %v1541
    %v1771 = vpop.f32.mrb[0].mxu0
    %v1772 = vadd.f32 %v1511, %v1771
    %v1773 = vpop.f32.mrb[0].mxu0
    %v1774 = vpop.f32.mrb[0].mxu0
    %v1775 = vadd.f32 %v1511, %v1774
    %v1776 = vpop.f32.mrb[0].mxu0
    %1777 = vmatprep.mubr.bf16.mxu0 0
    %1778 = vmatmul.mubr.bf16.gmra.mrb[0].mxu0 %v1544
    %v1779 = vpop.f32.mrb[0].mxu0
    %v1780 = vadd.f32 %v1511, %v1779
    %v1781 = vpop.f32.mrb[0].mxu0
    %v1782 = vpop.f32.mrb[0].mxu0
    %v1783 = vadd.f32 %v1511, %v1782
    %v1784 = vpop.f32.mrb[0].mxu0
    %1785 = vmatprep.mubr.bf16.mxu0 0
    %1786 = vmatmul.mubr.bf16.gmra.mrb[0].mxu0 %v1547
    %v1787 = vpop.f32.mrb[0].mxu0
    %v1788 = vadd.f32 %v1511, %v1787
    %v1789 = vpop.f32.mrb[0].mxu0
    %v1790 = vpop.f32.mrb[0].mxu0
    %v1791 = vadd.f32 %v1511, %v1790
    %v1792 = vpop.f32.mrb[0].mxu0
    %1793 = vmatprep.mubr.bf16.mxu0 0
    %1794 = vmatmul.mubr.bf16.gmra.mrb[0].mxu0 %v1550
    %v1795 = vpop.f32.mrb[0].mxu0
    %v1796 = vadd.f32 %v1511, %v1795
    %v1797 = vpop.f32.mrb[0].mxu0
    %v1798 = vpop.f32.mrb[0].mxu0
    %v1799 = vadd.f32 %v1511, %v1798
    %v1800 = vpop.f32.mrb[0].mxu0
    %1801 = vmatprep.mubr.bf16.mxu0 0
    %1802 = vmatmul.mubr.bf16.gmra.mrb[0].mxu0 %v1553
    %v1803 = vpop.f32.mrb[0].mxu0
    %v1804 = vadd.f32 %v1511, %v1803
    %v1805 = vpop.f32.mrb[0].mxu0
    %v1806 = vpop.f32.mrb[0].mxu0
    %v1807 = vadd.f32 %v1511, %v1806
    %v1808 = vpop.f32.mrb[0].mxu0
    %1809 = vmatprep.mubr.bf16.mxu0 0
    %1810 = vmatmul.mubr.bf16.gmra.mrb[0].mxu0 %v1556
    %v1811 = vpop.f32.mrb[0].mxu0
    %v1812 = vadd.f32 %v1511, %v1811
    %v1813 = vpop.f32.mrb[0].mxu0
    %v1814 = vpop.f32.mrb[0].mxu0
    %v1815 = vadd.f32 %v1511, %v1814
    %v1816 = vpop.f32.mrb[0].mxu0
    %1817 = vmatprep.mubr.bf16.mxu0 0
    %1818 = vmatmul.mubr.bf16.gmra.mrb[0].mxu0 %v1559
    %v1819 = vpop.f32.mrb[0].mxu0
    %v1820 = vadd.f32 %v1511, %v1819
    %v1821 = vpop.f32.mrb[0].mxu0
    %v1822 = vpop.f32.mrb[0].mxu0
    %v1823 = vadd.f32 %v1511, %v1822
    %v1824 = vpop.f32.mrb[0].mxu0
    %1825 = vmatprep.mubr.bf16.mxu0 0
    %1826 = vmatmul.mubr.bf16.gmra.mrb[0].mxu0 %v1562
    %v1827 = vpop.f32.mrb[0].mxu0
    %v1828 = vadd.f32 %v1511, %v1827
    %v1829 = vpop.f32.mrb[0].mxu0
    %v1830 = vpop.f32.mrb[0].mxu0
    %v1831 = vadd.f32 %v1511, %v1830
    %v1832 = vpop.f32.mrb[0].mxu0
    %1833 = vmatprep.mubr.bf16.mxu0 0
    %1834 = vmatmul.mubr.bf16.gmra.mrb[0].mxu0 %v1565
    %v1835 = vpop.f32.mrb[0].mxu0
    %v1836 = vadd.f32 %v1511, %v1835
    %v1837 = vpop.f32.mrb[0].mxu0
    %v1838 = vpop.f32.mrb[0].mxu0
    %v1839 = vadd.f32 %v1511, %v1838
    %v1840 = vpop.f32.mrb[0].mxu0
    %1841 = vmatprep.mubr.bf16.mxu0 0
    %1842 = vmatmul.mubr.bf16.gmra.mrb[0].mxu0 %v1568
    %v1843 = vpop.f32.mrb[0].mxu0
    %v1844 = vadd.f32 %v1511, %v1843
    %v1845 = vpop.f32.mrb[0].mxu0
    %v1846 = vpop.f32.mrb[0].mxu0
    %v1847 = vadd.f32 %v1511, %v1846
    %v1848 = vpop.f32.mrb[0].mxu0
    %1849 = vmatprep.mubr.bf16.mxu0 0
    %1850 = vmatmul.mubr.bf16.gmra.mrb[0].mxu0 %v1571
    %v1851 = vpop.f32.mrb[0].mxu0
    %v1852 = vadd.f32 %v1511, %v1851
    %v1853 = vpop.f32.mrb[0].mxu0
    %v1854 = vpop.f32.mrb[0].mxu0
    %v1855 = vadd.f32 %v1511, %v1854
    %v1856 = vpop.f32.mrb[0].mxu0
    %1857 = vmatprep.mubr.bf16.mxu0 0
    %1858 = vmatmul.mubr.bf16.gmra.mrb[0].mxu0 %v1574
    %v1859 = vpop.f32.mrb[0].mxu0
    %v1860 = vadd.f32 %v1511, %v1859
    %v1861 = vpop.f32.mrb[0].mxu0
    %v1862 = vpop.f32.mrb[0].mxu0
    %v1863 = vadd.f32 %v1511, %v1862
    %v1864 = vpop.f32.mrb[0].mxu0
    %1865 = vmatprep.mubr.bf16.mxu0 0
    %1866 = vmatmul.mubr.bf16.gmra.mrb[0].mxu0 %v1577
    %v1867 = vpop.f32.mrb[0].mxu0
    %v1868 = vadd.f32 %v1511, %v1867
    %v1869 = vpop.f32.mrb[0].mxu0
    %v1870 = vpop.f32.mrb[0].mxu0
    %v1871 = vadd.f32 %v1511, %v1870
    %v1872 = vpop.f32.mrb[0].mxu0
    %1873 = vmatprep.mubr.bf16.mxu0 0
    %1874 = vmatmul.mubr.bf16.gmra.mrb[0].mxu0 %v1580
    %v1875 = vpop.f32.mrb[0].mxu0
    %v1876 = vadd.f32 %v1511, %v1875
    %v1877 = vpop.f32.mrb[0].mxu0
    %v1878 = vpop.f32.mrb[0].mxu0
    %v1879 = vadd.f32 %v1511, %v1878
    %v1880 = vpop.f32.mrb[0].mxu0
    %1881 = vmatprep.mubr.bf16.mxu0 0
    %1882 = vmatmul.mubr.bf16.gmra.mrb[0].mxu0 %v1583
    %v1883 = vpop.f32.mrb[0].mxu0
    %v1884 = vadd.f32 %v1511, %v1883
    %v1885 = vpop.f32.mrb[0].mxu0
    %v1886 = vpop.f32.mrb[0].mxu0
    %v1887 = vadd.f32 %v1511, %v1886
    %v1888 = vpop.f32.mrb[0].mxu0
    %1889 = vmatprep.mubr.bf16.mxu0 0
    %1890 = vmatmul.mubr.bf16.gmra.mrb[0].mxu0 %v1586
    %v1891 = vpop.f32.mrb[0].mxu0
    %v1892 = vadd.f32 %v1511, %v1891
    %v1893 = vpop.f32.mrb[0].mxu0
    %v1894 = vpop.f32.mrb[0].mxu0
    %v1895 = vadd.f32 %v1511, %v1894
    %v1896 = vpop.f32.mrb[0].mxu0
    %1897 = vmatprep.mubr.bf16.mxu0 0
    %1898 = vmatmul.mubr.bf16.gmra.mrb[0].mxu0 %v1589
    %v1899 = vpop.f32.mrb[0].mxu0
    %v1900 = vadd.f32 %v1511, %v1899
    %v1901 = vpop.f32.mrb[0].mxu0
    %v1902 = vpop.f32.mrb[0].mxu0
    %v1903 = vadd.f32 %v1511, %v1902
    %v1904 = vpop.f32.mrb[0].mxu0
    %1905 = vmatprep.mubr.bf16.mxu0 0
    %1906 = vmatmul.mubr.bf16.gmra.mrb[0].mxu0 %v1592
    %v1907 = vpop.f32.mrb[0].mxu0
    %v1908 = vadd.f32 %v1511, %v1907
    %v1909 = vpop.f32.mrb[0].mxu0
    %v1910 = vpop.f32.mrb[0].mxu0
    %v1911 = vadd.f32 %v1511, %v1910
    %v1912 = vpop.f32.mrb[0].mxu0
    %1913 = vmatprep.mubr.bf16.mxu0 0
    %1914 = vmatmul.mubr.bf16.gmra.mrb[0].mxu0 %v1595
    %v1915 = vpop.f32.mrb[0].mxu0
    %v1916 = vadd.f32 %v1511, %v1915
    %v1917 = vpop.f32.mrb[0].mxu0
    %v1918 = vpop.f32.mrb[0].mxu0
    %v1919 = vadd.f32 %v1511, %v1918
    %v1920 = vpop.f32.mrb[0].mxu0
    %1921 = vmatprep.mubr.bf16.mxu0 0
    %1922 = vmatmul.mubr.bf16.gmra.mrb[0].mxu0 %v1598
    %v1923 = vpop.f32.mrb[0].mxu0
    %v1924 = vadd.f32 %v1511, %v1923
    %v1925 = vpop.f32.mrb[0].mxu0
    %v1926 = vpop.f32.mrb[0].mxu0
    %v1927 = vadd.f32 %v1511, %v1926
    %v1928 = vpop.f32.mrb[0].mxu0
    %1929 = vmatprep.mubr.bf16.mxu0 0
    %1930 = vmatmul.mubr.bf16.gmra.mrb[0].mxu0 %v1601
    %v1931 = vpop.f32.mrb[0].mxu0
    %v1932 = vadd.f32 %v1511, %v1931
    %v1933 = vpop.f32.mrb[0].mxu0
    %v1934 = vpop.f32.mrb[0].mxu0
    %v1935 = vadd.f32 %v1511, %v1934
    %v1936 = vpop.f32.mrb[0].mxu0
    %1937 = vmatprep.mubr.bf16.mxu0 0
    %1938 = vmatmul.mubr.bf16.gmra.mrb[0].mxu0 %v1604
    %v1939 = vpop.f32.mrb[0].mxu0
    %v1940 = vadd.f32 %v1511, %v1939
    %v1941 = vpop.f32.mrb[0].mxu0
    %v1942 = vpop.f32.mrb[0].mxu0
    %v1943 = vadd.f32 %v1511, %v1942
    %v1944 = vpop.f32.mrb[0].mxu0
    %1945 = vmatprep.mubr.bf16.mxu0 0
    %1946 = vmatmul.mubr.bf16.gmra.mrb[0].mxu0 %v1607
    %v1947 = vpop.f32.mrb[0].mxu0
    %v1948 = vadd.f32 %v1511, %v1947
    %v1949 = vpop.f32.mrb[0].mxu0
    %v1950 = vpop.f32.mrb[0].mxu0
    %v1951 = vadd.f32 %v1511, %v1950
    %v1952 = vpop.f32.mrb[0].mxu0
    %1953 = vmatprep.mubr.bf16.mxu0 0
    %1954 = vmatmul.mubr.bf16.gmra.mrb[0].mxu0 %v1610
    %v1955 = vpop.f32.mrb[0].mxu0
    %v1956 = vadd.f32 %v1511, %v1955
    %v1957 = vpop.f32.mrb[0].mxu0
    %v1958 = vpop.f32.mrb[0].mxu0
    %v1959 = vadd.f32 %v1511, %v1958
    %v1960 = vpop.f32.mrb[0].mxu0
    %1961 = vmatprep.mubr.bf16.mxu0 0
    %1962 = vmatmul.mubr.bf16.gmra.mrb[0].mxu0 %v1613
    %v1963 = vpop.f32.mrb[0].mxu0
    %v1964 = vadd.f32 %v1511, %v1963
    %v1965 = vpop.f32.mrb[0].mxu0
    %v1966 = vpop.f32.mrb[0].mxu0
    %v1967 = vadd.f32 %v1511, %v1966
    %v1968 = vpop.f32.mrb[0].mxu0
    %1969 = vmatprep.mubr.bf16.mxu0 0
    %1970 = vmatmul.mubr.bf16.gmra.mrb[0].mxu0 %v1616
    %v1971 = vpop.f32.mrb[0].mxu0
    %v1972 = vadd.f32 %v1511, %v1971
    %v1973 = vpop.f32.mrb[0].mxu0
    %v1974 = vpop.f32.mrb[0].mxu0
    %v1975 = vadd.f32 %v1511, %v1974
    %v1976 = vpop.f32.mrb[0].mxu0
    %1977 = vmatprep.mubr.bf16.mxu0 0
    %1978 = vmatmul.mubr.bf16.gmra.mrb[0].mxu0 %v1619
    %v1979 = vpop.f32.mrb[0].mxu0
    %v1980 = vadd.f32 %v1511, %v1979
    %v1981 = vpop.f32.mrb[0].mxu0
    %v1982 = vpop.f32.mrb[0].mxu0
    %v1983 = vadd.f32 %v1511, %v1982
    %v1984 = vpop.f32.mrb[0].mxu0
    %1985 = vmatprep.mubr.bf16.mxu0 0
    %1986 = vmatmul.mubr.bf16.gmra.mrb[0].mxu0 %v1622
    %v1987 = vpop.f32.mrb[0].mxu0
    %v1988 = vadd.f32 %v1511, %v1987
    %v1989 = vpop.f32.mrb[0].mxu0
    %v1990 = vpop.f32.mrb[0].mxu0
    %v1991 = vadd.f32 %v1511, %v1990
    %v1992 = vpop.f32.mrb[0].mxu0
    %1993 = vmatprep.mubr.bf16.mxu0 0
    %1994 = vmatmul.mubr.bf16.gmra.mrb[0].mxu0 %v1625
    %v1995 = vpop.f32.mrb[0].mxu0
    %v1996 = vadd.f32 %v1511, %v1995
    %v1997 = vpop.f32.mrb[0].mxu0
    %v1998 = vpop.f32.mrb[0].mxu0
    %v1999 = vadd.f32 %v1511, %v1998
    %v2000 = vpop.f32.mrb[0].mxu0
    %2001 = vmatprep.mubr.bf16.mxu0 0
    %2002 = vmatmul.mubr.bf16.gmra.mrb[0].mxu0 %v1628
    %v2003 = vpop.f32.mrb[0].mxu0
    %v2004 = vadd.f32 %v1511, %v2003
    %v2005 = vpop.f32.mrb[0].mxu0
    %v2006 = vpop.f32.mrb[0].mxu0
    %v2007 = vadd.f32 %v1511, %v2006
    %v2008 = vpop.f32.mrb[0].mxu0
    %2009 = vmatprep.mubr.bf16.mxu0 0
    %2010 = vmatmul.mubr.bf16.gmra.mrb[0].mxu0 %v1631
    %v2011 = vpop.f32.mrb[0].mxu0
    %v2012 = vadd.f32 %v1511, %v2011
    %v2013 = vpop.f32.mrb[0].mxu0
    %v2014 = vpop.f32.mrb[0].mxu0
    %v2015 = vadd.f32 %v1511, %v2014
    %v2016 = vpop.f32.mrb[0].mxu0
    %2017 = vmatprep.mubr.bf16.mxu0 0
    %2018 = vmatmul.mubr.bf16.gmra.mrb[0].mxu0 %v1634
    %v2019 = vpop.f32.mrb[0].mxu0
    %v2020 = vadd.f32 %v1511, %v2019
    %v2021 = vpop.f32.mrb[0].mxu0
    %v2022 = vpop.f32.mrb[0].mxu0
    %v2023 = vadd.f32 %v1511, %v2022
    %v2024 = vpop.f32.mrb[0].mxu0
    %2025 = vmatprep.mubr.bf16.mxu0 0
    %2026 = vmatmul.mubr.bf16.gmra.mrb[0].mxu0 %v1637
    %v2027 = vpop.f32.mrb[0].mxu0
    %v2028 = vadd.f32 %v1511, %v2027
    %v2029 = vpop.f32.mrb[0].mxu0
    %v2030 = vpop.f32.mrb[0].mxu0
    %v2031 = vadd.f32 %v1511, %v2030
    %v2032 = vpop.f32.mrb[0].mxu0
    %2033 = vmatprep.mubr.bf16.mxu0 0
    %2034 = vmatmul.mubr.bf16.gmra.mrb[0].mxu0 %v1640
    %v2035 = vpop.f32.mrb[0].mxu0
    %v2036 = vadd.f32 %v1511, %v2035
    %v2037 = vpop.f32.mrb[0].mxu0
    %v2038 = vpop.f32.mrb[0].mxu0
    %v2039 = vadd.f32 %v1511, %v2038
    %v2040 = vpop.f32.mrb[0].mxu0
    %2041 = vmatprep.mubr.bf16.mxu0 0
    %2042 = vmatmul.mubr.bf16.gmra.mrb[0].mxu0 %v1643
    %v2043 = vpop.f32.mrb[0].mxu0
    %v2044 = vadd.f32 %v1511, %v2043
    %v2045 = vpop.f32.mrb[0].mxu0
    %v2046 = vpop.f32.mrb[0].mxu0
    %v2047 = vadd.f32 %v1511, %v2046
    %v2048 = vpop.f32.mrb[0].mxu0
    %2049 = vmatprep.mubr.bf16.mxu0 0
    %2050 = vmatmul.mubr.bf16.gmra.mrb[0].mxu0 %v1646
    %v2051 = vpop.f32.mrb[0].mxu0
    %v2052 = vadd.f32 %v1511, %v2051
    %v2053 = vpop.f32.mrb[0].mxu0
    %v2054 = vpop.f32.mrb[0].mxu0
    %v2055 = vadd.f32 %v1511, %v2054
    %v2056 = vpop.f32.mrb[0].mxu0
    %2057 = vmatprep.mubr.bf16.mxu0 0
    %2058 = vmatmul.mubr.bf16.gmra.mrb[0].mxu0 %v1649
    %v2059 = vpop.f32.mrb[0].mxu0
    %v2060 = vadd.f32 %v1511, %v2059
    %v2061 = vpop.f32.mrb[0].mxu0
    %v2062 = vpop.f32.mrb[0].mxu0
    %v2063 = vadd.f32 %v1511, %v2062
    %v2064 = vpop.f32.mrb[0].mxu0
    %2065 = vmatprep.mubr.bf16.mxu0 0
    %2066 = vmatmul.mubr.bf16.gmra.mrb[0].mxu0 %v1652
    %v2067 = vpop.f32.mrb[0].mxu0
    %v2068 = vadd.f32 %v1511, %v2067
    %v2069 = vpop.f32.mrb[0].mxu0
    %v2070 = vpop.f32.mrb[0].mxu0
    %v2071 = vadd.f32 %v1511, %v2070
    %v2072 = vpop.f32.mrb[0].mxu0
    %2073 = vmatprep.mubr.bf16.mxu0 0
    %2074 = vmatmul.mubr.bf16.gmra.mrb[0].mxu0 %v1655
    %v2075 = vpop.f32.mrb[0].mxu0
    %v2076 = vadd.f32 %v1511, %v2075
    %v2077 = vpop.f32.mrb[0].mxu0
    %v2078 = vpop.f32.mrb[0].mxu0
    %v2079 = vadd.f32 %v1511, %v2078
    %v2080 = vpop.f32.mrb[0].mxu0
    %2081 = vmatprep.mubr.bf16.mxu0 0
    %2082 = vmatmul.mubr.bf16.gmra.mrb[0].mxu0 %v1658
    %v2083 = vpop.f32.mrb[0].mxu0
    %v2084 = vadd.f32 %v1511, %v2083
    %v2085 = vpop.f32.mrb[0].mxu0
    %v2086 = vpop.f32.mrb[0].mxu0
    %v2087 = vadd.f32 %v1511, %v2086
    %v2088 = vpop.f32.mrb[0].mxu0
    %2089 = vmatprep.mubr.bf16.mxu0 0
    %2090 = vmatmul.mubr.bf16.gmra.mrb[0].mxu0 %v1661
    %v2091 = vpop.f32.mrb[0].mxu0
    %v2092 = vadd.f32 %v1511, %v2091
    %v2093 = vpop.f32.mrb[0].mxu0
    %v2094 = vpop.f32.mrb[0].mxu0
    %v2095 = vadd.f32 %v1511, %v2094
    %v2096 = vpop.f32.mrb[0].mxu0
    %2097 = vmatprep.mubr.bf16.mxu0 0
    %2098 = vmatmul.mubr.bf16.gmra.mrb[0].mxu0 %v1664
    %v2099 = vpop.f32.mrb[0].mxu0
    %v2100 = vadd.f32 %v1511, %v2099
    %v2101 = vpop.f32.mrb[0].mxu0
    %v2102 = vpop.f32.mrb[0].mxu0
    %v2103 = vadd.f32 %v1511, %v2102
    %v2104 = vpop.f32.mrb[0].mxu0
    %2105 = vmatprep.mubr.bf16.mxu0 0
    %2106 = vmatmul.mubr.bf16.gmra.mrb[0].mxu0 %v1667
    %v2107 = vpop.f32.mrb[0].mxu0
    %v2108 = vadd.f32 %v1511, %v2107
    %v2109 = vpop.f32.mrb[0].mxu0
    %v2110 = vpop.f32.mrb[0].mxu0
    %v2111 = vadd.f32 %v1511, %v2110
    %v2112 = vpop.f32.mrb[0].mxu0
    %2113 = vmatprep.mubr.bf16.mxu0 0
    %2114 = vmatmul.mubr.bf16.gmra.mrb[0].mxu0 %v1670
    %v2115 = vpop.f32.mrb[0].mxu0
    %v2116 = vadd.f32 %v1511, %v2115
    %v2117 = vpop.f32.mrb[0].mxu0
    %v2118 = vpop.f32.mrb[0].mxu0
    %v2119 = vadd.f32 %v1511, %v2118
    %v2120 = vpop.f32.mrb[0].mxu0
    %2121 = vmatprep.mubr.bf16.mxu0 0
    %2122 = vmatmul.mubr.bf16.gmra.mrb[0].mxu0 %v1673
    %v2123 = vpop.f32.mrb[0].mxu0
    %v2124 = vadd.f32 %v1511, %v2123
    %v2125 = vpop.f32.mrb[0].mxu0
    %v2126 = vpop.f32.mrb[0].mxu0
    %v2127 = vadd.f32 %v1511, %v2126
    %v2128 = vpop.f32.mrb[0].mxu0
    %2129 = vmatprep.mubr.bf16.mxu0 0
    %2130 = vmatmul.mubr.bf16.gmra.mrb[0].mxu0 %v1676
    %v2131 = vpop.f32.mrb[0].mxu0
    %v2132 = vadd.f32 %v1511, %v2131
    %v2133 = vpop.f32.mrb[0].mxu0
    %v2134 = vpop.f32.mrb[0].mxu0
    %v2135 = vadd.f32 %v1511, %v2134
    %v2136 = vpop.f32.mrb[0].mxu0
    %2137 = vmatprep.mubr.bf16.mxu0 0
    %2138 = vmatmul.mubr.bf16.gmra.mrb[0].mxu0 %v1679
    %v2139 = vpop.f32.mrb[0].mxu0
    %v2140 = vadd.f32 %v1511, %v2139
    %v2141 = vpop.f32.mrb[0].mxu0
    %v2142 = vpop.f32.mrb[0].mxu0
    %v2143 = vadd.f32 %v1511, %v2142
    %v2144 = vpop.f32.mrb[0].mxu0
    %2145 = vmatprep.mubr.bf16.mxu0 0
    %2146 = vmatmul.mubr.bf16.gmra.mrb[0].mxu0 %v1682
    %v2147 = vpop.f32.mrb[0].mxu0
    %v2148 = vadd.f32 %v1511, %v2147
    %v2149 = vpop.f32.mrb[0].mxu0
    %v2150 = vpop.f32.mrb[0].mxu0
    %v2151 = vadd.f32 %v1511, %v2150
    %v2152 = vpop.f32.mrb[0].mxu0
    %2153 = vmatprep.mubr.bf16.mxu0 0
    %2154 = vmatmul.mubr.bf16.gmra.mrb[0].mxu0 %v1685
    %v2155 = vpop.f32.mrb[0].mxu0
    %v2156 = vadd.f32 %v1511, %v2155
    %v2157 = vpop.f32.mrb[0].mxu0
    %v2158 = vpop.f32.mrb[0].mxu0
    %v2159 = vadd.f32 %v1511, %v2158
    %v2160 = vpop.f32.mrb[0].mxu0
    %2161 = vmatprep.mubr.bf16.mxu0 0
    %2162 = vmatmul.mubr.bf16.gmra.mrb[0].mxu0 %v1688
    %v2163 = vpop.f32.mrb[0].mxu0
    %v2164 = vadd.f32 %v1511, %v2163
    %v2165 = vpop.f32.mrb[0].mxu0
    %v2166 = vpop.f32.mrb[0].mxu0
    %v2167 = vadd.f32 %v1511, %v2166
    %v2168 = vpop.f32.mrb[0].mxu0
    %2169 = vmatprep.mubr.bf16.mxu0 0
    %2170 = vmatmul.mubr.bf16.gmra.mrb[0].mxu0 %v1691
    %v2171 = vpop.f32.mrb[0].mxu0
    %v2172 = vadd.f32 %v1511, %v2171
    %v2173 = vpop.f32.mrb[0].mxu0
    %v2174 = vpop.f32.mrb[0].mxu0
    %v2175 = vadd.f32 %v1511, %v2174
    %v2176 = vpop.f32.mrb[0].mxu0
    %2177 = vmatprep.mubr.bf16.mxu0 0
    %2178 = vmatmul.mubr.bf16.gmra.mrb[0].mxu0 %v1694
    %v2179 = vpop.f32.mrb[0].mxu0
    %v2180 = vadd.f32 %v1511, %v2179
    %v2181 = vpop.f32.mrb[0].mxu0
    %v2182 = vpop.f32.mrb[0].mxu0
    %v2183 = vadd.f32 %v1511, %v2182
    %v2184 = vpop.f32.mrb[0].mxu0
    %2185 = vmatprep.mubr.bf16.mxu0 0
    %2186 = vmatmul.mubr.bf16.gmra.mrb[0].mxu0 %v1697
    %v2187 = vpop.f32.mrb[0].mxu0
    %v2188 = vadd.f32 %v1511, %v2187
    %v2189 = vpop.f32.mrb[0].mxu0
    %v2190 = vpop.f32.mrb[0].mxu0
    %v2191 = vadd.f32 %v1511, %v2190
    %v2192 = vpop.f32.mrb[0].mxu0
    %2193 = vmatprep.mubr.bf16.mxu0 0
    %2194 = vmatmul.mubr.bf16.gmra.mrb[0].mxu0 %v1700
    %v2195 = vpop.f32.mrb[0].mxu0
    %v2196 = vadd.f32 %v1511, %v2195
    %v2197 = vpop.f32.mrb[0].mxu0
    %v2198 = vpop.f32.mrb[0].mxu0
    %v2199 = vadd.f32 %v1511, %v2198
    %v2200 = vpop.f32.mrb[0].mxu0
    %2201 = vmatprep.mubr.bf16.mxu0 0
    %2202 = vmatmul.mubr.bf16.gmra.mrb[0].mxu0 %v1703
    %v2203 = vpop.f32.mrb[0].mxu0
    %v2204 = vadd.f32 %v1511, %v2203
    %v2205 = vpop.f32.mrb[0].mxu0
    %v2206 = vpop.f32.mrb[0].mxu0
    %v2207 = vadd.f32 %v1511, %v2206
    %v2208 = vpop.f32.mrb[0].mxu0
    %2209 = vmatprep.mubr.bf16.mxu0 0
    %2210 = vmatmul.mubr.bf16.gmra.mrb[0].mxu0 %v1706
    %v2211 = vpop.f32.mrb[0].mxu0
    %v2212 = vadd.f32 %v1511, %v2211
    %v2213 = vpop.f32.mrb[0].mxu0
    %v2214 = vpop.f32.mrb[0].mxu0
    %v2215 = vadd.f32 %v1511, %v2214
    %v2216 = vpop.f32.mrb[0].mxu0
    %2217 = vmatprep.mubr.bf16.mxu0 0
    %2218 = vmatmul.mubr.bf16.gmra.mrb[0].mxu0 %v1709
    %v2219 = vpop.f32.mrb[0].mxu0
    %v2220 = vadd.f32 %v1511, %v2219
    %v2221 = vpop.f32.mrb[0].mxu0
    %v2222 = vpop.f32.mrb[0].mxu0
    %v2223 = vadd.f32 %v1511, %v2222
    %v2224 = vpop.f32.mrb[0].mxu0
    %2225 = vmatprep.mubr.bf16.mxu0 0
    %2226 = vmatmul.mubr.bf16.gmra.mrb[0].mxu0 %v1712
    %v2227 = vpop.f32.mrb[0].mxu0
    %v2228 = vadd.f32 %v1511, %v2227
    %v2229 = vpop.f32.mrb[0].mxu0
    %v2230 = vpop.f32.mrb[0].mxu0
    %v2231 = vadd.f32 %v1511, %v2230
    %v2232 = vpop.f32.mrb[0].mxu0
    %2233 = vmatprep.mubr.bf16.mxu0 0
    %2234 = vmatmul.mubr.bf16.gmra.mrb[0].mxu0 %v1715
    %v2235 = vpop.f32.mrb[0].mxu0
    %v2236 = vadd.f32 %v1511, %v2235
    %v2237 = vpop.f32.mrb[0].mxu0
    %v2238 = vpop.f32.mrb[0].mxu0
    %v2239 = vadd.f32 %v1511, %v2238
    %v2240 = vpop.f32.mrb[0].mxu0
    %2241 = vmatprep.mubr.bf16.mxu0 0
    %2242 = vmatmul.mubr.bf16.gmra.mrb[0].mxu0 %v1718
    %v2243 = vpop.f32.mrb[0].mxu0
    %v2244 = vadd.f32 %v1511, %v2243
    %v2245 = vpop.f32.mrb[0].mxu0
    %v2246 = vpop.f32.mrb[0].mxu0
    %v2247 = vadd.f32 %v1511, %v2246
    %v2248 = vpop.f32.mrb[0].mxu0
    %2249 = vmatprep.mubr.bf16.mxu0 0
    %2250 = vmatmul.mubr.bf16.gmra.mrb[0].mxu0 %v1721
    %v2251 = vpop.f32.mrb[0].mxu0
    %v2252 = vadd.f32 %v1511, %v2251
    %v2253 = vpop.f32.mrb[0].mxu0
    %v2254 = vpop.f32.mrb[0].mxu0
    %v2255 = vadd.f32 %v1511, %v2254
    %v2256 = vpop.f32.mrb[0].mxu0
    %2257 = vmatprep.mubr.bf16.mxu0 0
    %2258 = vmatmul.mubr.bf16.gmra.mrb[0].mxu0 %v1724
    %v2259 = vpop.f32.mrb[0].mxu0
    %v2260 = vadd.f32 %v1511, %v2259
    %v2261 = vpop.f32.mrb[0].mxu0
    %v2262 = vpop.f32.mrb[0].mxu0
    %v2263 = vadd.f32 %v1511, %v2262
    %v2264 = vpop.f32.mrb[0].mxu0
    %2265 = vmatprep.mubr.bf16.mxu0 0
    %2266 = vmatmul.mubr.bf16.gmra.mrb[0].mxu0 %v1727
    %v2267 = vpop.f32.mrb[0].mxu0
    %v2268 = vadd.f32 %v1511, %v2267
    %v2269 = vpop.f32.mrb[0].mxu0
    %v2270 = vpop.f32.mrb[0].mxu0
    %v2271 = vadd.f32 %v1511, %v2270
    %v2272 = vpop.f32.mrb[0].mxu0
    %2273 = vdwg.mxu0
    %v2274 = vmax.f32 %v1764, 0.0
    %v2275 = vmax.f32 %v1767, 0.0
    %v2276 = vmax.f32 %v1772, 0.0
    %v2277 = vmax.f32 %v1775, 0.0
    %v2278 = vmax.f32 %v1780, 0.0
    %v2279 = vmax.f32 %v1783, 0.0
    %v2280 = vmax.f32 %v1788, 0.0
    %v2281 = vmax.f32 %v1791, 0.0
    %v2282 = vmax.f32 %v1796, 0.0
    %v2283 = vmax.f32 %v1799, 0.0
    %v2284 = vmax.f32 %v1804, 0.0
    %v2285 = vmax.f32 %v1807, 0.0
    %v2286 = vmax.f32 %v1812, 0.0
    %v2287 = vmax.f32 %v1815, 0.0
    %v2288 = vmax.f32 %v1820, 0.0
    %v2289 = vmax.f32 %v1823, 0.0
    %v2290 = vmax.f32 %v1828, 0.0
    %v2291 = vmax.f32 %v1831, 0.0
    %v2292 = vmax.f32 %v1836, 0.0
    %v2293 = vmax.f32 %v1839, 0.0
    %v2294 = vmax.f32 %v1844, 0.0
    %v2295 = vmax.f32 %v1847, 0.0
    %v2296 = vmax.f32 %v1852, 0.0
    %v2297 = vmax.f32 %v1855, 0.0
    %v2298 = vmax.f32 %v1860, 0.0
    %v2299 = vmax.f32 %v1863, 0.0
    %v2300 = vmax.f32 %v1868, 0.0
    %v2301 = vmax.f32 %v1871, 0.0
    %v2302 = vmax.f32 %v1876, 0.0
    %v2303 = vmax.f32 %v1879, 0.0
    %v2304 = vmax.f32 %v1884, 0.0
    %v2305 = vmax.f32 %v1887, 0.0
    %v2306 = vmax.f32 %v1892, 0.0
    %v2307 = vmax.f32 %v1895, 0.0
    %v2308 = vmax.f32 %v1900, 0.0
    %v2309 = vmax.f32 %v1903, 0.0
    %v2310 = vmax.f32 %v1908, 0.0
    %v2311 = vmax.f32 %v1911, 0.0
    %v2312 = vmax.f32 %v1916, 0.0
    %v2313 = vmax.f32 %v1919, 0.0
    %v2314 = vmax.f32 %v1924, 0.0
    %v2315 = vmax.f32 %v1927, 0.0
    %v2316 = vmax.f32 %v1932, 0.0
    %v2317 = vmax.f32 %v1935, 0.0
    %v2318 = vmax.f32 %v1940, 0.0
    %v2319 = vmax.f32 %v1943, 0.0
    %v2320 = vmax.f32 %v1948, 0.0
    %v2321 = vmax.f32 %v1951, 0.0
    %v2322 = vmax.f32 %v1956, 0.0
    %v2323 = vmax.f32 %v1959, 0.0
    %v2324 = vmax.f32 %v1964, 0.0
    %v2325 = vmax.f32 %v1967, 0.0
    %v2326 = vmax.f32 %v1972, 0.0
    %v2327 = vmax.f32 %v1975, 0.0
    %v2328 = vmax.f32 %v1980, 0.0
    %v2329 = vmax.f32 %v1983, 0.0
    %v2330 = vmax.f32 %v1988, 0.0
    %v2331 = vmax.f32 %v1991, 0.0
    %v2332 = vmax.f32 %v1996, 0.0
    %v2333 = vmax.f32 %v1999, 0.0
    %v2334 = vmax.f32 %v2004, 0.0
    %v2335 = vmax.f32 %v2007, 0.0
    %v2336 = vmax.f32 %v2012, 0.0
    %v2337 = vmax.f32 %v2015, 0.0
    %v2338 = vmax.f32 %v2020, 0.0
    %v2339 = vmax.f32 %v2023, 0.0
    %v2340 = vmax.f32 %v2028, 0.0
    %v2341 = vmax.f32 %v2031, 0.0
    %v2342 = vmax.f32 %v2036, 0.0
    %v2343 = vmax.f32 %v2039, 0.0
    %v2344 = vmax.f32 %v2044, 0.0
    %v2345 = vmax.f32 %v2047, 0.0
    %v2346 = vmax.f32 %v2052, 0.0
    %v2347 = vmax.f32 %v2055, 0.0
    %v2348 = vmax.f32 %v2060, 0.0
    %v2349 = vmax.f32 %v2063, 0.0
    %v2350 = vmax.f32 %v2068, 0.0
    %v2351 = vmax.f32 %v2071, 0.0
    %v2352 = vmax.f32 %v2076, 0.0
    %v2353 = vmax.f32 %v2079, 0.0
    %v2354 = vmax.f32 %v2084, 0.0
    %v2355 = vmax.f32 %v2087, 0.0
    %v2356 = vmax.f32 %v2092, 0.0
    %v2357 = vmax.f32 %v2095, 0.0
    %v2358 = vmax.f32 %v2100, 0.0
    %v2359 = vmax.f32 %v2103, 0.0
    %v2360 = vmax.f32 %v2108, 0.0
    %v2361 = vmax.f32 %v2111, 0.0
    %v2362 = vmax.f32 %v2116, 0.0
    %v2363 = vmax.f32 %v2119, 0.0
    %v2364 = vmax.f32 %v2124, 0.0
    %v2365 = vmax.f32 %v2127, 0.0
    %v2366 = vmax.f32 %v2132, 0.0
    %v2367 = vmax.f32 %v2135, 0.0
    %v2368 = vmax.f32 %v2140, 0.0
    %v2369 = vmax.f32 %v2143, 0.0
    %v2370 = vmax.f32 %v2148, 0.0
    %v2371 = vmax.f32 %v2151, 0.0
    %v2372 = vmax.f32 %v2156, 0.0
    %v2373 = vmax.f32 %v2159, 0.0
    %v2374 = vmax.f32 %v2164, 0.0
    %v2375 = vmax.f32 %v2167, 0.0
    %v2376 = vmax.f32 %v2172, 0.0
    %v2377 = vmax.f32 %v2175, 0.0
    %v2378 = vmax.f32 %v2180, 0.0
    %v2379 = vmax.f32 %v2183, 0.0
    %v2380 = vmax.f32 %v2188, 0.0
    %v2381 = vmax.f32 %v2191, 0.0
    %v2382 = vmax.f32 %v2196, 0.0
    %v2383 = vmax.f32 %v2199, 0.0
    %v2384 = vmax.f32 %v2204, 0.0
    %v2385 = vmax.f32 %v2207, 0.0
    %v2386 = vmax.f32 %v2212, 0.0
    %v2387 = vmax.f32 %v2215, 0.0
    %v2388 = vmax.f32 %v2220, 0.0
    %v2389 = vmax.f32 %v2223, 0.0
    %v2390 = vmax.f32 %v2228, 0.0
    %v2391 = vmax.f32 %v2231, 0.0
    %v2392 = vmax.f32 %v2236, 0.0
    %v2393 = vmax.f32 %v2239, 0.0
    %v2394 = vmax.f32 %v2244, 0.0
    %v2395 = vmax.f32 %v2247, 0.0
    %v2396 = vmax.f32 %v2252, 0.0
    %v2397 = vmax.f32 %v2255, 0.0
    %v2398 = vmax.f32 %v2260, 0.0
    %v2399 = vmax.f32 %v2263, 0.0
    %v2400 = vmax.f32 %v2268, 0.0
    %v2401 = vmax.f32 %v2271, 0.0
    %v2402 = vpack.c.bf16 %v2275, %v2274
    %v2403 = vpack.c.bf16 %v2277, %v2276
    %v2404 = vpack.c.bf16 %v2279, %v2278
    %v2405 = vpack.c.bf16 %v2281, %v2280
    %v2406 = vpack.c.bf16 %v2283, %v2282
    %v2407 = vpack.c.bf16 %v2285, %v2284
    %v2408 = vpack.c.bf16 %v2287, %v2286
    %v2409 = vpack.c.bf16 %v2289, %v2288
    %v2410 = vpack.c.bf16 %v2291, %v2290
    %v2411 = vpack.c.bf16 %v2293, %v2292
    %v2412 = vpack.c.bf16 %v2295, %v2294
    %v2413 = vpack.c.bf16 %v2297, %v2296
    %v2414 = vpack.c.bf16 %v2299, %v2298
    %v2415 = vpack.c.bf16 %v2301, %v2300
    %v2416 = vpack.c.bf16 %v2303, %v2302
    %v2417 = vpack.c.bf16 %v2305, %v2304
    %v2418 = vpack.c.bf16 %v2307, %v2306
    %v2419 = vpack.c.bf16 %v2309, %v2308
    %v2420 = vpack.c.bf16 %v2311, %v2310
    %v2421 = vpack.c.bf16 %v2313, %v2312
    %v2422 = vpack.c.bf16 %v2315, %v2314
    %v2423 = vpack.c.bf16 %v2317, %v2316
    %v2424 = vpack.c.bf16 %v2319, %v2318
    %v2425 = vpack.c.bf16 %v2321, %v2320
    %v2426 = vpack.c.bf16 %v2323, %v2322
    %v2427 = vpack.c.bf16 %v2325, %v2324
    %v2428 = vpack.c.bf16 %v2327, %v2326
    %v2429 = vpack.c.bf16 %v2329, %v2328
    %v2430 = vpack.c.bf16 %v2331, %v2330
    %v2431 = vpack.c.bf16 %v2333, %v2332
    %v2432 = vpack.c.bf16 %v2335, %v2334
    %v2433 = vpack.c.bf16 %v2337, %v2336
    %v2434 = vpack.c.bf16 %v2339, %v2338
    %v2435 = vpack.c.bf16 %v2341, %v2340
    %v2436 = vpack.c.bf16 %v2343, %v2342
    %v2437 = vpack.c.bf16 %v2345, %v2344
    %v2438 = vpack.c.bf16 %v2347, %v2346
    %v2439 = vpack.c.bf16 %v2349, %v2348
    %v2440 = vpack.c.bf16 %v2351, %v2350
    %v2441 = vpack.c.bf16 %v2353, %v2352
    %v2442 = vpack.c.bf16 %v2355, %v2354
    %v2443 = vpack.c.bf16 %v2357, %v2356
    %v2444 = vpack.c.bf16 %v2359, %v2358
    %v2445 = vpack.c.bf16 %v2361, %v2360
    %v2446 = vpack.c.bf16 %v2363, %v2362
    %v2447 = vpack.c.bf16 %v2365, %v2364
    %v2448 = vpack.c.bf16 %v2367, %v2366
    %v2449 = vpack.c.bf16 %v2369, %v2368
    %v2450 = vpack.c.bf16 %v2371, %v2370
    %v2451 = vpack.c.bf16 %v2373, %v2372
    %v2452 = vpack.c.bf16 %v2375, %v2374
    %v2453 = vpack.c.bf16 %v2377, %v2376
    %v2454 = vpack.c.bf16 %v2379, %v2378
    %v2455 = vpack.c.bf16 %v2381, %v2380
    %v2456 = vpack.c.bf16 %v2383, %v2382
    %v2457 = vpack.c.bf16 %v2385, %v2384
    %v2458 = vpack.c.bf16 %v2387, %v2386
    %v2459 = vpack.c.bf16 %v2389, %v2388
    %v2460 = vpack.c.bf16 %v2391, %v2390
    %v2461 = vpack.c.bf16 %v2393, %v2392
    %v2462 = vpack.c.bf16 %v2395, %v2394
    %v2463 = vpack.c.bf16 %v2397, %v2396
    %v2464 = vpack.c.bf16 %v2399, %v2398
    %v2465 = vpack.c.bf16 %v2401, %v2400
    %v2466 = vld [vmem:[%s6] sm:$0xff]
    %v2467 = vld [vmem:[%s6 + $0x8] sm:$0xff]
    %v2468 = vld [vmem:[%s6 + $0x10] sm:$0xff]
    %v2469 = vld [vmem:[%s6 + $0x18] sm:$0xff]
    %v2470 = vld [vmem:[%s6 + $0x20] sm:$0xff]
    %v2471 = vld [vmem:[%s6 + $0x28] sm:$0xff]
    %v2472 = vld [vmem:[%s6 + $0x30] sm:$0xff]
    %v2473 = vld [vmem:[%s6 + $0x38] sm:$0xff]
    %v2474 = vld [vmem:[%s6 + $0x40] sm:$0xff]
    %v2475 = vld [vmem:[%s6 + $0x48] sm:$0xff]
    %v2476 = vld [vmem:[%s6 + $0x50] sm:$0xff]
    %v2477 = vld [vmem:[%s6 + $0x58] sm:$0xff]
    %v2478 = vld [vmem:[%s6 + $0x60] sm:$0xff]
    %v2479 = vld [vmem:[%s6 + $0x68] sm:$0xff]
    %v2480 = vld [vmem:[%s6 + $0x70] sm:$0xff]
    %v2481 = vld [vmem:[%s6 + $0x78] sm:$0xff]
    %v2482 = vld [vmem:[%s6 + $0x80] sm:$0xff]
    %v2483 = vld [vmem:[%s6 + $0x88] sm:$0xff]
    %v2484 = vld [vmem:[%s6 + $0x90] sm:$0xff]
    %v2485 = vld [vmem:[%s6 + $0x98] sm:$0xff]
    %v2486 = vld [vmem:[%s6 + $0xa0] sm:$0xff]
    %v2487 = vld [vmem:[%s6 + $0xa8] sm:$0xff]
    %v2488 = vld [vmem:[%s6 + $0xb0] sm:$0xff]
    %v2489 = vld [vmem:[%s6 + $0xb8] sm:$0xff]
    %v2490 = vld [vmem:[%s6 + $0xc0] sm:$0xff]
    %v2491 = vld [vmem:[%s6 + $0xc8] sm:$0xff]
    %v2492 = vld [vmem:[%s6 + $0xd0] sm:$0xff]
    %v2493 = vld [vmem:[%s6 + $0xd8] sm:$0xff]
    %v2494 = vld [vmem:[%s6 + $0xe0] sm:$0xff]
    %v2495 = vld [vmem:[%s6 + $0xe8] sm:$0xff]
    %v2496 = vld [vmem:[%s6 + $0xf0] sm:$0xff]
    %v2497 = vld [vmem:[%s6 + $0xf8] sm:$0xff]
    %v2498 = vld [vmem:[%s6 + $0x100] sm:$0xff]
    %v2499 = vld [vmem:[%s6 + $0x108] sm:$0xff]
    %v2500 = vld [vmem:[%s6 + $0x110] sm:$0xff]
    %v2501 = vld [vmem:[%s6 + $0x118] sm:$0xff]
    %v2502 = vld [vmem:[%s6 + $0x120] sm:$0xff]
    %v2503 = vld [vmem:[%s6 + $0x128] sm:$0xff]
    %v2504 = vld [vmem:[%s6 + $0x130] sm:$0xff]
    %v2505 = vld [vmem:[%s6 + $0x138] sm:$0xff]
    %v2506 = vld [vmem:[%s6 + $0x140] sm:$0xff]
    %v2507 = vld [vmem:[%s6 + $0x148] sm:$0xff]
    %v2508 = vld [vmem:[%s6 + $0x150] sm:$0xff]
    %v2509 = vld [vmem:[%s6 + $0x158] sm:$0xff]
    %v2510 = vld [vmem:[%s6 + $0x160] sm:$0xff]
    %v2511 = vld [vmem:[%s6 + $0x168] sm:$0xff]
    %v2512 = vld [vmem:[%s6 + $0x170] sm:$0xff]
    %v2513 = vld [vmem:[%s6 + $0x178] sm:$0xff]
    %v2514 = vld [vmem:[%s6 + $0x180] sm:$0xff]
    %v2515 = vld [vmem:[%s6 + $0x188] sm:$0xff]
    %v2516 = vld [vmem:[%s6 + $0x190] sm:$0xff]
    %v2517 = vld [vmem:[%s6 + $0x198] sm:$0xff]
    %v2518 = vld [vmem:[%s6 + $0x1a0] sm:$0xff]
    %v2519 = vld [vmem:[%s6 + $0x1a8] sm:$0xff]
    %v2520 = vld [vmem:[%s6 + $0x1b0] sm:$0xff]
    %v2521 = vld [vmem:[%s6 + $0x1b8] sm:$0xff]
    %v2522 = vld [vmem:[%s6 + $0x1c0] sm:$0xff]
    %v2523 = vld [vmem:[%s6 + $0x1c8] sm:$0xff]
    %v2524 = vld [vmem:[%s6 + $0x1d0] sm:$0xff]
    %v2525 = vld [vmem:[%s6 + $0x1d8] sm:$0xff]
    %v2526 = vld [vmem:[%s6 + $0x1e0] sm:$0xff]
    %v2527 = vld [vmem:[%s6 + $0x1e8] sm:$0xff]
    %v2528 = vld [vmem:[%s6 + $0x1f0] sm:$0xff]
    %v2529 = vld [vmem:[%s6 + $0x1f8] sm:$0xff]
    %v2530 = vld [vmem:[%s7] sm:$0xff]
    %v2532 = vlaneseq
    %v2533 = vshrl.u32 %v2532, 7
    %v2534 = vsub.s32 0, %v2533
    %v2535 = vrot.slane %v2530, %v2534
    %v2536 = vlaneseq
    %v2537 = vshrl.u32 %v2536, 7
    %v2538 = vsub.s32 1, %v2537
    %v2539 = vrot.slane %v2530, %v2538
    %v2540 = vlaneseq
    %v2541 = vshrl.u32 %v2540, 7
    %v2542 = vsub.s32 2, %v2541
    %v2543 = vrot.slane %v2530, %v2542
    %v2544 = vlaneseq
    %v2545 = vshrl.u32 %v2544, 7
    %v2546 = vsub.s32 3, %v2545
    %v2547 = vrot.slane %v2530, %v2546
    %v2548 = vlaneseq
    %v2549 = vshrl.u32 %v2548, 7
    %v2550 = vsub.s32 4, %v2549
    %v2551 = vrot.slane %v2530, %v2550
    %v2552 = vlaneseq
    %v2553 = vshrl.u32 %v2552, 7
    %v2554 = vsub.s32 5, %v2553
    %v2555 = vrot.slane %v2530, %v2554
    %v2556 = vlaneseq
    %v2557 = vshrl.u32 %v2556, 7
    %v2558 = vsub.s32 6, %v2557
    %v2559 = vrot.slane %v2530, %v2558
    %v2560 = vlaneseq
    %v2561 = vshrl.u32 %v2560, 7
    %v2562 = vsub.s32 7, %v2561
    %v2563 = vrot.slane %v2530, %v2562
    %v2636 = vunpack.c.l.b16 %v2466
    %v2637 = vunpack.c.h.b16 %v2466
    %v2638 = vunpack.c.l.b16 %v2467
    %v2639 = vunpack.c.h.b16 %v2467
    %v2640 = vunpack.c.l.b16 %v2468
    %v2641 = vunpack.c.h.b16 %v2468
    %v2642 = vunpack.c.l.b16 %v2469
    %v2643 = vunpack.c.h.b16 %v2469
    %v2644 = vunpack.c.l.b16 %v2470
    %v2645 = vunpack.c.h.b16 %v2470
    %v2646 = vunpack.c.l.b16 %v2471
    %v2647 = vunpack.c.h.b16 %v2471
    %v2648 = vunpack.c.l.b16 %v2472
    %v2649 = vunpack.c.h.b16 %v2472
    %v2650 = vunpack.c.l.b16 %v2473
    %v2651 = vunpack.c.h.b16 %v2473
    %v2652 = vunpack.c.l.b16 %v2474
    %v2653 = vunpack.c.h.b16 %v2474
    %v2654 = vunpack.c.l.b16 %v2475
    %v2655 = vunpack.c.h.b16 %v2475
    %v2656 = vunpack.c.l.b16 %v2476
    %v2657 = vunpack.c.h.b16 %v2476
    %v2658 = vunpack.c.l.b16 %v2477
    %v2659 = vunpack.c.h.b16 %v2477
    %v2660 = vunpack.c.l.b16 %v2478
    %v2661 = vunpack.c.h.b16 %v2478
    %v2662 = vunpack.c.l.b16 %v2479
    %v2663 = vunpack.c.h.b16 %v2479
    %v2664 = vunpack.c.l.b16 %v2480
    %v2665 = vunpack.c.h.b16 %v2480
    %v2666 = vunpack.c.l.b16 %v2481
    %v2667 = vunpack.c.h.b16 %v2481
    %v2668 = vunpack.c.l.b16 %v2482
    %v2669 = vunpack.c.h.b16 %v2482
    %v2670 = vunpack.c.l.b16 %v2483
    %v2671 = vunpack.c.h.b16 %v2483
    %v2672 = vunpack.c.l.b16 %v2484
    %v2673 = vunpack.c.h.b16 %v2484
    %v2674 = vunpack.c.l.b16 %v2485
    %v2675 = vunpack.c.h.b16 %v2485
    %v2676 = vunpack.c.l.b16 %v2486
    %v2677 = vunpack.c.h.b16 %v2486
    %v2678 = vunpack.c.l.b16 %v2487
    %v2679 = vunpack.c.h.b16 %v2487
    %v2680 = vunpack.c.l.b16 %v2488
    %v2681 = vunpack.c.h.b16 %v2488
    %v2682 = vunpack.c.l.b16 %v2489
    %v2683 = vunpack.c.h.b16 %v2489
    %v2684 = vunpack.c.l.b16 %v2490
    %v2685 = vunpack.c.h.b16 %v2490
    %v2686 = vunpack.c.l.b16 %v2491
    %v2687 = vunpack.c.h.b16 %v2491
    %v2688 = vunpack.c.l.b16 %v2492
    %v2689 = vunpack.c.h.b16 %v2492
    %v2690 = vunpack.c.l.b16 %v2493
    %v2691 = vunpack.c.h.b16 %v2493
    %v2692 = vunpack.c.l.b16 %v2494
    %v2693 = vunpack.c.h.b16 %v2494
    %v2694 = vunpack.c.l.b16 %v2495
    %v2695 = vunpack.c.h.b16 %v2495
    %v2696 = vunpack.c.l.b16 %v2496
    %v2697 = vunpack.c.h.b16 %v2496
    %v2698 = vunpack.c.l.b16 %v2497
    %v2699 = vunpack.c.h.b16 %v2497
    %v2700 = vunpack.c.l.b16 %v2498
    %v2701 = vunpack.c.h.b16 %v2498
    %v2702 = vunpack.c.l.b16 %v2499
    %v2703 = vunpack.c.h.b16 %v2499
    %v2704 = vunpack.c.l.b16 %v2500
    %v2705 = vunpack.c.h.b16 %v2500
    %v2706 = vunpack.c.l.b16 %v2501
    %v2707 = vunpack.c.h.b16 %v2501
    %v2708 = vunpack.c.l.b16 %v2502
    %v2709 = vunpack.c.h.b16 %v2502
    %v2710 = vunpack.c.l.b16 %v2503
    %v2711 = vunpack.c.h.b16 %v2503
    %v2712 = vunpack.c.l.b16 %v2504
    %v2713 = vunpack.c.h.b16 %v2504
    %v2714 = vunpack.c.l.b16 %v2505
    %v2715 = vunpack.c.h.b16 %v2505
    %v2716 = vunpack.c.l.b16 %v2506
    %v2717 = vunpack.c.h.b16 %v2506
    %v2718 = vunpack.c.l.b16 %v2507
    %v2719 = vunpack.c.h.b16 %v2507
    %v2720 = vunpack.c.l.b16 %v2508
    %v2721 = vunpack.c.h.b16 %v2508
    %v2722 = vunpack.c.l.b16 %v2509
    %v2723 = vunpack.c.h.b16 %v2509
    %v2724 = vunpack.c.l.b16 %v2510
    %v2725 = vunpack.c.h.b16 %v2510
    %v2726 = vunpack.c.l.b16 %v2511
    %v2727 = vunpack.c.h.b16 %v2511
    %v2728 = vunpack.c.l.b16 %v2512
    %v2729 = vunpack.c.h.b16 %v2512
    %v2730 = vunpack.c.l.b16 %v2513
    %v2731 = vunpack.c.h.b16 %v2513
    %v2732 = vunpack.c.l.b16 %v2514
    %v2733 = vunpack.c.h.b16 %v2514
    %v2734 = vunpack.c.l.b16 %v2515
    %v2735 = vunpack.c.h.b16 %v2515
    %v2736 = vunpack.c.l.b16 %v2516
    %v2737 = vunpack.c.h.b16 %v2516
    %v2738 = vunpack.c.l.b16 %v2517
    %v2739 = vunpack.c.h.b16 %v2517
    %v2740 = vunpack.c.l.b16 %v2518
    %v2741 = vunpack.c.h.b16 %v2518
    %v2742 = vunpack.c.l.b16 %v2519
    %v2743 = vunpack.c.h.b16 %v2519
    %v2744 = vunpack.c.l.b16 %v2520
    %v2745 = vunpack.c.h.b16 %v2520
    %v2746 = vunpack.c.l.b16 %v2521
    %v2747 = vunpack.c.h.b16 %v2521
    %v2748 = vunpack.c.l.b16 %v2522
    %v2749 = vunpack.c.h.b16 %v2522
    %v2750 = vunpack.c.l.b16 %v2523
    %v2751 = vunpack.c.h.b16 %v2523
    %v2752 = vunpack.c.l.b16 %v2524
    %v2753 = vunpack.c.h.b16 %v2524
    %v2754 = vunpack.c.l.b16 %v2525
    %v2755 = vunpack.c.h.b16 %v2525
    %v2756 = vunpack.c.l.b16 %v2526
    %v2757 = vunpack.c.h.b16 %v2526
    %v2758 = vunpack.c.l.b16 %v2527
    %v2759 = vunpack.c.h.b16 %v2527
    %v2760 = vunpack.c.l.b16 %v2528
    %v2761 = vunpack.c.h.b16 %v2528
    %v2762 = vunpack.c.l.b16 %v2529
    %v2763 = vunpack.c.h.b16 %v2529
    %v2764 = vpack.c.b16 %v2644, %v2636
    %v2765 = vpack.c.b16 %v2645, %v2637
    %v2766 = vpack.c.b16 %v2646, %v2638
    %v2767 = vpack.c.b16 %v2647, %v2639
    %v2768 = vpack.c.b16 %v2648, %v2640
    %v2769 = vpack.c.b16 %v2649, %v2641
    %v2770 = vpack.c.b16 %v2650, %v2642
    %v2771 = vpack.c.b16 %v2651, %v2643
    %v2772 = vpack.c.b16 %v2660, %v2652
    %v2773 = vpack.c.b16 %v2661, %v2653
    %v2774 = vpack.c.b16 %v2662, %v2654
    %v2775 = vpack.c.b16 %v2663, %v2655
    %v2776 = vpack.c.b16 %v2664, %v2656
    %v2777 = vpack.c.b16 %v2665, %v2657
    %v2778 = vpack.c.b16 %v2666, %v2658
    %v2779 = vpack.c.b16 %v2667, %v2659
    %v2780 = vpack.c.b16 %v2676, %v2668
    %v2781 = vpack.c.b16 %v2677, %v2669
    %v2782 = vpack.c.b16 %v2678, %v2670
    %v2783 = vpack.c.b16 %v2679, %v2671
    %v2784 = vpack.c.b16 %v2680, %v2672
    %v2785 = vpack.c.b16 %v2681, %v2673
    %v2786 = vpack.c.b16 %v2682, %v2674
    %v2787 = vpack.c.b16 %v2683, %v2675
    %v2788 = vpack.c.b16 %v2692, %v2684
    %v2789 = vpack.c.b16 %v2693, %v2685
    %v2790 = vpack.c.b16 %v2694, %v2686
    %v2791 = vpack.c.b16 %v2695, %v2687
    %v2792 = vpack.c.b16 %v2696, %v2688
    %v2793 = vpack.c.b16 %v2697, %v2689
    %v2794 = vpack.c.b16 %v2698, %v2690
    %v2795 = vpack.c.b16 %v2699, %v2691
    %v2796 = vpack.c.b16 %v2708, %v2700
    %v2797 = vpack.c.b16 %v2709, %v2701
    %v2798 = vpack.c.b16 %v2710, %v2702
    %v2799 = vpack.c.b16 %v2711, %v2703
    %v2800 = vpack.c.b16 %v2712, %v2704
    %v2801 = vpack.c.b16 %v2713, %v2705
    %v2802 = vpack.c.b16 %v2714, %v2706
    %v2803 = vpack.c.b16 %v2715, %v2707
    %v2804 = vpack.c.b16 %v2724, %v2716
    %v2805 = vpack.c.b16 %v2725, %v2717
    %v2806 = vpack.c.b16 %v2726, %v2718
    %v2807 = vpack.c.b16 %v2727, %v2719
    %v2808 = vpack.c.b16 %v2728, %v2720
    %v2809 = vpack.c.b16 %v2729, %v2721
    %v2810 = vpack.c.b16 %v2730, %v2722
    %v2811 = vpack.c.b16 %v2731, %v2723
    %v2812 = vpack.c.b16 %v2740, %v2732
    %v2813 = vpack.c.b16 %v2741, %v2733
    %v2814 = vpack.c.b16 %v2742, %v2734
    %v2815 = vpack.c.b16 %v2743, %v2735
    %v2816 = vpack.c.b16 %v2744, %v2736
    %v2817 = vpack.c.b16 %v2745, %v2737
    %v2818 = vpack.c.b16 %v2746, %v2738
    %v2819 = vpack.c.b16 %v2747, %v2739
    %v2820 = vpack.c.b16 %v2756, %v2748
    %v2821 = vpack.c.b16 %v2757, %v2749
    %v2822 = vpack.c.b16 %v2758, %v2750
    %v2823 = vpack.c.b16 %v2759, %v2751
    %v2824 = vpack.c.b16 %v2760, %v2752
    %v2825 = vpack.c.b16 %v2761, %v2753
    %v2826 = vpack.c.b16 %v2762, %v2754
    %v2827 = vpack.c.b16 %v2763, %v2755
    %2892 = vmatprep.subr.bf16.mxu0 %v2765
    %2893 = vmatpush1.bf16.msra.mxu0 %v2764
    %2894 = vmatprep.subr.bf16.mxu0 %v2773
    %2895 = vmatpush1.bf16.msra.mxu0 %v2772
    %2896 = vmatprep.subr.bf16.mxu0 %v2781
    %2897 = vmatpush1.bf16.msra.mxu0 %v2780
    %2898 = vmatprep.subr.bf16.mxu0 %v2789
    %2899 = vmatpush1.bf16.msra.mxu0 %v2788
    %2900 = vmatprep.subr.bf16.mxu0 %v2797
    %2901 = vmatpush1.bf16.msra.mxu0 %v2796
    %2902 = vmatprep.subr.bf16.mxu0 %v2805
    %2903 = vmatpush1.bf16.msra.mxu0 %v2804
    %2904 = vmatprep.subr.bf16.mxu0 %v2813
    %2905 = vmatpush1.bf16.msra.mxu0 %v2812
    %2906 = vmatprep.subr.bf16.mxu0 %v2821
    %2907 = vmatpush1.bf16.msra.mxu0 %v2820
    %2908 = vmatprep.subr.bf16.mxu0 0
    %2909 = vmatpush1.bf16.msra.mxu0 0
    %2910 = vmatprep.subr.bf16.mxu0 0
    %2911 = vmatpush1.bf16.msra.mxu0 0
    %2912 = vmatprep.subr.bf16.mxu0 0
    %2913 = vmatpush1.bf16.msra.mxu0 0
    %2914 = vmatprep.subr.bf16.mxu0 0
    %2915 = vmatpush1.bf16.msra.mxu0 0
    %2916 = vmatprep.subr.bf16.mxu0 0
    %2917 = vmatpush1.bf16.msra.mxu0 0
    %2918 = vmatprep.subr.bf16.mxu0 0
    %2919 = vmatpush1.bf16.msra.mxu0 0
    %2920 = vmatprep.subr.bf16.mxu0 0
    %2921 = vmatpush1.bf16.msra.mxu0 0
    %2922 = vmatprep.subr.bf16.mxu0 0
    %2923 = vmatpush1.bf16.msra.mxu0 0
    %2924 = vmatprep.mubr.bf16.mxu0 0
    %2925 = vmatmul.mubr.bf16.gmra.mrb[0].mxu0 %v2402
    %v2926 = vpop.f32.mrb[0].mxu0
    %v2927 = vadd.f32 %v2535, %v2926
    %v2928 = vpop.f32.mrb[0].mxu0
    %v2929 = vadd.f32 %v2539, %v2928
    %v2930 = vpop.f32.mrb[0].mxu0
    %v2931 = vadd.f32 %v2535, %v2930
    %v2932 = vpop.f32.mrb[0].mxu0
    %v2933 = vadd.f32 %v2539, %v2932
    %2934 = vmatprep.mubr.bf16.mxu0 0
    %2935 = vmatmul.mubr.bf16.gmra.mrb[0].mxu0 %v2403
    %v2936 = vpop.f32.mrb[0].mxu0
    %v2937 = vadd.f32 %v2535, %v2936
    %v2938 = vpop.f32.mrb[0].mxu0
    %v2939 = vadd.f32 %v2539, %v2938
    %v2940 = vpop.f32.mrb[0].mxu0
    %v2941 = vadd.f32 %v2535, %v2940
    %v2942 = vpop.f32.mrb[0].mxu0
    %v2943 = vadd.f32 %v2539, %v2942
    %2944 = vmatprep.mubr.bf16.mxu0 0
    %2945 = vmatmul.mubr.bf16.gmra.mrb[0].mxu0 %v2404
    %v2946 = vpop.f32.mrb[0].mxu0
    %v2947 = vadd.f32 %v2535, %v2946
    %v2948 = vpop.f32.mrb[0].mxu0
    %v2949 = vadd.f32 %v2539, %v2948
    %v2950 = vpop.f32.mrb[0].mxu0
    %v2951 = vadd.f32 %v2535, %v2950
    %v2952 = vpop.f32.mrb[0].mxu0
    %v2953 = vadd.f32 %v2539, %v2952
    %2954 = vmatprep.mubr.bf16.mxu0 0
    %2955 = vmatmul.mubr.bf16.gmra.mrb[0].mxu0 %v2405
    %v2956 = vpop.f32.mrb[0].mxu0
    %v2957 = vadd.f32 %v2535, %v2956
    %v2958 = vpop.f32.mrb[0].mxu0
    %v2959 = vadd.f32 %v2539, %v2958
    %v2960 = vpop.f32.mrb[0].mxu0
    %v2961 = vadd.f32 %v2535, %v2960
    %v2962 = vpop.f32.mrb[0].mxu0
    %v2963 = vadd.f32 %v2539, %v2962
    %2964 = vmatprep.mubr.bf16.mxu0 0
    %2965 = vmatmul.mubr.bf16.gmra.mrb[0].mxu0 %v2406
    %v2966 = vpop.f32.mrb[0].mxu0
    %v2967 = vadd.f32 %v2535, %v2966
    %v2968 = vpop.f32.mrb[0].mxu0
    %v2969 = vadd.f32 %v2539, %v2968
    %v2970 = vpop.f32.mrb[0].mxu0
    %v2971 = vadd.f32 %v2535, %v2970
    %v2972 = vpop.f32.mrb[0].mxu0
    %v2973 = vadd.f32 %v2539, %v2972
    %2974 = vmatprep.mubr.bf16.mxu0 0
    %2975 = vmatmul.mubr.bf16.gmra.mrb[0].mxu0 %v2407
    %v2976 = vpop.f32.mrb[0].mxu0
    %v2977 = vadd.f32 %v2535, %v2976
    %v2978 = vpop.f32.mrb[0].mxu0
    %v2979 = vadd.f32 %v2539, %v2978
    %v2980 = vpop.f32.mrb[0].mxu0
    %v2981 = vadd.f32 %v2535, %v2980
    %v2982 = vpop.f32.mrb[0].mxu0
    %v2983 = vadd.f32 %v2539, %v2982
    %2984 = vmatprep.mubr.bf16.mxu0 0
    %2985 = vmatmul.mubr.bf16.gmra.mrb[0].mxu0 %v2408
    %v2986 = vpop.f32.mrb[0].mxu0
    %v2987 = vadd.f32 %v2535, %v2986
    %v2988 = vpop.f32.mrb[0].mxu0
    %v2989 = vadd.f32 %v2539, %v2988
    %v2990 = vpop.f32.mrb[0].mxu0
    %v2991 = vadd.f32 %v2535, %v2990
    %v2992 = vpop.f32.mrb[0].mxu0
    %v2993 = vadd.f32 %v2539, %v2992
    %2994 = vmatprep.mubr.bf16.mxu0 0
    %2995 = vmatmul.mubr.bf16.gmra.mrb[0].mxu0 %v2409
    %v2996 = vpop.f32.mrb[0].mxu0
    %v2997 = vadd.f32 %v2535, %v2996
    %v2998 = vpop.f32.mrb[0].mxu0
    %v2999 = vadd.f32 %v2539, %v2998
    %v3000 = vpop.f32.mrb[0].mxu0
    %v3001 = vadd.f32 %v2535, %v3000
    %v3002 = vpop.f32.mrb[0].mxu0
    %v3003 = vadd.f32 %v2539, %v3002
    %3004 = vmatprep.mubr.bf16.mxu0 0
    %3005 = vmatmul.mubr.bf16.gmra.mrb[0].mxu0 %v2410
    %v3006 = vpop.f32.mrb[0].mxu0
    %v3007 = vadd.f32 %v2535, %v3006
    %v3008 = vpop.f32.mrb[0].mxu0
    %v3009 = vadd.f32 %v2539, %v3008
    %v3010 = vpop.f32.mrb[0].mxu0
    %v3011 = vadd.f32 %v2535, %v3010
    %v3012 = vpop.f32.mrb[0].mxu0
    %v3013 = vadd.f32 %v2539, %v3012
    %3014 = vmatprep.mubr.bf16.mxu0 0
    %3015 = vmatmul.mubr.bf16.gmra.mrb[0].mxu0 %v2411
    %v3016 = vpop.f32.mrb[0].mxu0
    %v3017 = vadd.f32 %v2535, %v3016
    %v3018 = vpop.f32.mrb[0].mxu0
    %v3019 = vadd.f32 %v2539, %v3018
    %v3020 = vpop.f32.mrb[0].mxu0
    %v3021 = vadd.f32 %v2535, %v3020
    %v3022 = vpop.f32.mrb[0].mxu0
    %v3023 = vadd.f32 %v2539, %v3022
    %3024 = vmatprep.mubr.bf16.mxu0 0
    %3025 = vmatmul.mubr.bf16.gmra.mrb[0].mxu0 %v2412
    %v3026 = vpop.f32.mrb[0].mxu0
    %v3027 = vadd.f32 %v2535, %v3026
    %v3028 = vpop.f32.mrb[0].mxu0
    %v3029 = vadd.f32 %v2539, %v3028
    %v3030 = vpop.f32.mrb[0].mxu0
    %v3031 = vadd.f32 %v2535, %v3030
    %v3032 = vpop.f32.mrb[0].mxu0
    %v3033 = vadd.f32 %v2539, %v3032
    %3034 = vmatprep.mubr.bf16.mxu0 0
    %3035 = vmatmul.mubr.bf16.gmra.mrb[0].mxu0 %v2413
    %v3036 = vpop.f32.mrb[0].mxu0
    %v3037 = vadd.f32 %v2535, %v3036
    %v3038 = vpop.f32.mrb[0].mxu0
    %v3039 = vadd.f32 %v2539, %v3038
    %v3040 = vpop.f32.mrb[0].mxu0
    %v3041 = vadd.f32 %v2535, %v3040
    %v3042 = vpop.f32.mrb[0].mxu0
    %v3043 = vadd.f32 %v2539, %v3042
    %3044 = vmatprep.mubr.bf16.mxu0 0
    %3045 = vmatmul.mubr.bf16.gmra.mrb[0].mxu0 %v2414
    %v3046 = vpop.f32.mrb[0].mxu0
    %v3047 = vadd.f32 %v2535, %v3046
    %v3048 = vpop.f32.mrb[0].mxu0
    %v3049 = vadd.f32 %v2539, %v3048
    %v3050 = vpop.f32.mrb[0].mxu0
    %v3051 = vadd.f32 %v2535, %v3050
    %v3052 = vpop.f32.mrb[0].mxu0
    %v3053 = vadd.f32 %v2539, %v3052
    %3054 = vmatprep.mubr.bf16.mxu0 0
    %3055 = vmatmul.mubr.bf16.gmra.mrb[0].mxu0 %v2415
    %v3056 = vpop.f32.mrb[0].mxu0
    %v3057 = vadd.f32 %v2535, %v3056
    %v3058 = vpop.f32.mrb[0].mxu0
    %v3059 = vadd.f32 %v2539, %v3058
    %v3060 = vpop.f32.mrb[0].mxu0
    %v3061 = vadd.f32 %v2535, %v3060
    %v3062 = vpop.f32.mrb[0].mxu0
    %v3063 = vadd.f32 %v2539, %v3062
    %3064 = vmatprep.mubr.bf16.mxu0 0
    %3065 = vmatmul.mubr.bf16.gmra.mrb[0].mxu0 %v2416
    %v3066 = vpop.f32.mrb[0].mxu0
    %v3067 = vadd.f32 %v2535, %v3066
    %v3068 = vpop.f32.mrb[0].mxu0
    %v3069 = vadd.f32 %v2539, %v3068
    %v3070 = vpop.f32.mrb[0].mxu0
    %v3071 = vadd.f32 %v2535, %v3070
    %v3072 = vpop.f32.mrb[0].mxu0
    %v3073 = vadd.f32 %v2539, %v3072
    %3074 = vmatprep.mubr.bf16.mxu0 0
    %3075 = vmatmul.mubr.bf16.gmra.mrb[0].mxu0 %v2417
    %v3076 = vpop.f32.mrb[0].mxu0
    %v3077 = vadd.f32 %v2535, %v3076
    %v3078 = vpop.f32.mrb[0].mxu0
    %v3079 = vadd.f32 %v2539, %v3078
    %v3080 = vpop.f32.mrb[0].mxu0
    %v3081 = vadd.f32 %v2535, %v3080
    %v3082 = vpop.f32.mrb[0].mxu0
    %v3083 = vadd.f32 %v2539, %v3082
    %3084 = vmatprep.mubr.bf16.mxu0 0
    %3085 = vmatmul.mubr.bf16.gmra.mrb[0].mxu0 %v2418
    %v3086 = vpop.f32.mrb[0].mxu0
    %v3087 = vadd.f32 %v2535, %v3086
    %v3088 = vpop.f32.mrb[0].mxu0
    %v3089 = vadd.f32 %v2539, %v3088
    %v3090 = vpop.f32.mrb[0].mxu0
    %v3091 = vadd.f32 %v2535, %v3090
    %v3092 = vpop.f32.mrb[0].mxu0
    %v3093 = vadd.f32 %v2539, %v3092
    %3094 = vmatprep.mubr.bf16.mxu0 0
    %3095 = vmatmul.mubr.bf16.gmra.mrb[0].mxu0 %v2419
    %v3096 = vpop.f32.mrb[0].mxu0
    %v3097 = vadd.f32 %v2535, %v3096
    %v3098 = vpop.f32.mrb[0].mxu0
    %v3099 = vadd.f32 %v2539, %v3098
    %v3100 = vpop.f32.mrb[0].mxu0
    %v3101 = vadd.f32 %v2535, %v3100
    %v3102 = vpop.f32.mrb[0].mxu0
    %v3103 = vadd.f32 %v2539, %v3102
    %3104 = vmatprep.mubr.bf16.mxu0 0
    %3105 = vmatmul.mubr.bf16.gmra.mrb[0].mxu0 %v2420
    %v3106 = vpop.f32.mrb[0].mxu0
    %v3107 = vadd.f32 %v2535, %v3106
    %v3108 = vpop.f32.mrb[0].mxu0
    %v3109 = vadd.f32 %v2539, %v3108
    %v3110 = vpop.f32.mrb[0].mxu0
    %v3111 = vadd.f32 %v2535, %v3110
    %v3112 = vpop.f32.mrb[0].mxu0
    %v3113 = vadd.f32 %v2539, %v3112
    %3114 = vmatprep.mubr.bf16.mxu0 0
    %3115 = vmatmul.mubr.bf16.gmra.mrb[0].mxu0 %v2421
    %v3116 = vpop.f32.mrb[0].mxu0
    %v3117 = vadd.f32 %v2535, %v3116
    %v3118 = vpop.f32.mrb[0].mxu0
    %v3119 = vadd.f32 %v2539, %v3118
    %v3120 = vpop.f32.mrb[0].mxu0
    %v3121 = vadd.f32 %v2535, %v3120
    %v3122 = vpop.f32.mrb[0].mxu0
    %v3123 = vadd.f32 %v2539, %v3122
    %3124 = vmatprep.mubr.bf16.mxu0 0
    %3125 = vmatmul.mubr.bf16.gmra.mrb[0].mxu0 %v2422
    %v3126 = vpop.f32.mrb[0].mxu0
    %v3127 = vadd.f32 %v2535, %v3126
    %v3128 = vpop.f32.mrb[0].mxu0
    %v3129 = vadd.f32 %v2539, %v3128
    %v3130 = vpop.f32.mrb[0].mxu0
    %v3131 = vadd.f32 %v2535, %v3130
    %v3132 = vpop.f32.mrb[0].mxu0
    %v3133 = vadd.f32 %v2539, %v3132
    %3134 = vmatprep.mubr.bf16.mxu0 0
    %3135 = vmatmul.mubr.bf16.gmra.mrb[0].mxu0 %v2423
    %v3136 = vpop.f32.mrb[0].mxu0
    %v3137 = vadd.f32 %v2535, %v3136
    %v3138 = vpop.f32.mrb[0].mxu0
    %v3139 = vadd.f32 %v2539, %v3138
    %v3140 = vpop.f32.mrb[0].mxu0
    %v3141 = vadd.f32 %v2535, %v3140
    %v3142 = vpop.f32.mrb[0].mxu0
    %v3143 = vadd.f32 %v2539, %v3142
    %3144 = vmatprep.mubr.bf16.mxu0 0
    %3145 = vmatmul.mubr.bf16.gmra.mrb[0].mxu0 %v2424
    %v3146 = vpop.f32.mrb[0].mxu0
    %v3147 = vadd.f32 %v2535, %v3146
    %v3148 = vpop.f32.mrb[0].mxu0
    %v3149 = vadd.f32 %v2539, %v3148
    %v3150 = vpop.f32.mrb[0].mxu0
    %v3151 = vadd.f32 %v2535, %v3150
    %v3152 = vpop.f32.mrb[0].mxu0
    %v3153 = vadd.f32 %v2539, %v3152
    %3154 = vmatprep.mubr.bf16.mxu0 0
    %3155 = vmatmul.mubr.bf16.gmra.mrb[0].mxu0 %v2425
    %v3156 = vpop.f32.mrb[0].mxu0
    %v3157 = vadd.f32 %v2535, %v3156
    %v3158 = vpop.f32.mrb[0].mxu0
    %v3159 = vadd.f32 %v2539, %v3158
    %v3160 = vpop.f32.mrb[0].mxu0
    %v3161 = vadd.f32 %v2535, %v3160
    %v3162 = vpop.f32.mrb[0].mxu0
    %v3163 = vadd.f32 %v2539, %v3162
    %3164 = vmatprep.mubr.bf16.mxu0 0
    %3165 = vmatmul.mubr.bf16.gmra.mrb[0].mxu0 %v2426
    %v3166 = vpop.f32.mrb[0].mxu0
    %v3167 = vadd.f32 %v2535, %v3166
    %v3168 = vpop.f32.mrb[0].mxu0
    %v3169 = vadd.f32 %v2539, %v3168
    %v3170 = vpop.f32.mrb[0].mxu0
    %v3171 = vadd.f32 %v2535, %v3170
    %v3172 = vpop.f32.mrb[0].mxu0
    %v3173 = vadd.f32 %v2539, %v3172
    %3174 = vmatprep.mubr.bf16.mxu0 0
    %3175 = vmatmul.mubr.bf16.gmra.mrb[0].mxu0 %v2427
    %v3176 = vpop.f32.mrb[0].mxu0
    %v3177 = vadd.f32 %v2535, %v3176
    %v3178 = vpop.f32.mrb[0].mxu0
    %v3179 = vadd.f32 %v2539, %v3178
    %v3180 = vpop.f32.mrb[0].mxu0
    %v3181 = vadd.f32 %v2535, %v3180
    %v3182 = vpop.f32.mrb[0].mxu0
    %v3183 = vadd.f32 %v2539, %v3182
    %3184 = vmatprep.mubr.bf16.mxu0 0
    %3185 = vmatmul.mubr.bf16.gmra.mrb[0].mxu0 %v2428
    %v3186 = vpop.f32.mrb[0].mxu0
    %v3187 = vadd.f32 %v2535, %v3186
    %v3188 = vpop.f32.mrb[0].mxu0
    %v3189 = vadd.f32 %v2539, %v3188
    %v3190 = vpop.f32.mrb[0].mxu0
    %v3191 = vadd.f32 %v2535, %v3190
    %v3192 = vpop.f32.mrb[0].mxu0
    %v3193 = vadd.f32 %v2539, %v3192
    %3194 = vmatprep.mubr.bf16.mxu0 0
    %3195 = vmatmul.mubr.bf16.gmra.mrb[0].mxu0 %v2429
    %v3196 = vpop.f32.mrb[0].mxu0
    %v3197 = vadd.f32 %v2535, %v3196
    %v3198 = vpop.f32.mrb[0].mxu0
    %v3199 = vadd.f32 %v2539, %v3198
    %v3200 = vpop.f32.mrb[0].mxu0
    %v3201 = vadd.f32 %v2535, %v3200
    %v3202 = vpop.f32.mrb[0].mxu0
    %v3203 = vadd.f32 %v2539, %v3202
    %3204 = vmatprep.mubr.bf16.mxu0 0
    %3205 = vmatmul.mubr.bf16.gmra.mrb[0].mxu0 %v2430
    %v3206 = vpop.f32.mrb[0].mxu0
    %v3207 = vadd.f32 %v2535, %v3206
    %v3208 = vpop.f32.mrb[0].mxu0
    %v3209 = vadd.f32 %v2539, %v3208
    %v3210 = vpop.f32.mrb[0].mxu0
    %v3211 = vadd.f32 %v2535, %v3210
    %v3212 = vpop.f32.mrb[0].mxu0
    %v3213 = vadd.f32 %v2539, %v3212
    %3214 = vmatprep.mubr.bf16.mxu0 0
    %3215 = vmatmul.mubr.bf16.gmra.mrb[0].mxu0 %v2431
    %v3216 = vpop.f32.mrb[0].mxu0
    %v3217 = vadd.f32 %v2535, %v3216
    %v3218 = vpop.f32.mrb[0].mxu0
    %v3219 = vadd.f32 %v2539, %v3218
    %v3220 = vpop.f32.mrb[0].mxu0
    %v3221 = vadd.f32 %v2535, %v3220
    %v3222 = vpop.f32.mrb[0].mxu0
    %v3223 = vadd.f32 %v2539, %v3222
    %3224 = vmatprep.mubr.bf16.mxu0 0
    %3225 = vmatmul.mubr.bf16.gmra.mrb[0].mxu0 %v2432
    %v3226 = vpop.f32.mrb[0].mxu0
    %v3227 = vadd.f32 %v2535, %v3226
    %v3228 = vpop.f32.mrb[0].mxu0
    %v3229 = vadd.f32 %v2539, %v3228
    %v3230 = vpop.f32.mrb[0].mxu0
    %v3231 = vadd.f32 %v2535, %v3230
    %v3232 = vpop.f32.mrb[0].mxu0
    %v3233 = vadd.f32 %v2539, %v3232
    %3234 = vmatprep.mubr.bf16.mxu0 0
    %3235 = vmatmul.mubr.bf16.gmra.mrb[0].mxu0 %v2433
    %v3236 = vpop.f32.mrb[0].mxu0
    %v3237 = vadd.f32 %v2535, %v3236
    %v3238 = vpop.f32.mrb[0].mxu0
    %v3239 = vadd.f32 %v2539, %v3238
    %v3240 = vpop.f32.mrb[0].mxu0
    %v3241 = vadd.f32 %v2535, %v3240
    %v3242 = vpop.f32.mrb[0].mxu0
    %v3243 = vadd.f32 %v2539, %v3242
    %3244 = vmatprep.mubr.bf16.mxu0 0
    %3245 = vmatmul.mubr.bf16.gmra.mrb[0].mxu0 %v2434
    %v3246 = vpop.f32.mrb[0].mxu0
    %v3247 = vadd.f32 %v2535, %v3246
    %v3248 = vpop.f32.mrb[0].mxu0
    %v3249 = vadd.f32 %v2539, %v3248
    %v3250 = vpop.f32.mrb[0].mxu0
    %v3251 = vadd.f32 %v2535, %v3250
    %v3252 = vpop.f32.mrb[0].mxu0
    %v3253 = vadd.f32 %v2539, %v3252
    %3254 = vmatprep.mubr.bf16.mxu0 0
    %3255 = vmatmul.mubr.bf16.gmra.mrb[0].mxu0 %v2435
    %v3256 = vpop.f32.mrb[0].mxu0
    %v3257 = vadd.f32 %v2535, %v3256
    %v3258 = vpop.f32.mrb[0].mxu0
    %v3259 = vadd.f32 %v2539, %v3258
    %v3260 = vpop.f32.mrb[0].mxu0
    %v3261 = vadd.f32 %v2535, %v3260
    %v3262 = vpop.f32.mrb[0].mxu0
    %v3263 = vadd.f32 %v2539, %v3262
    %3264 = vmatprep.mubr.bf16.mxu0 0
    %3265 = vmatmul.mubr.bf16.gmra.mrb[0].mxu0 %v2436
    %v3266 = vpop.f32.mrb[0].mxu0
    %v3267 = vadd.f32 %v2535, %v3266
    %v3268 = vpop.f32.mrb[0].mxu0
    %v3269 = vadd.f32 %v2539, %v3268
    %v3270 = vpop.f32.mrb[0].mxu0
    %v3271 = vadd.f32 %v2535, %v3270
    %v3272 = vpop.f32.mrb[0].mxu0
    %v3273 = vadd.f32 %v2539, %v3272
    %3274 = vmatprep.mubr.bf16.mxu0 0
    %3275 = vmatmul.mubr.bf16.gmra.mrb[0].mxu0 %v2437
    %v3276 = vpop.f32.mrb[0].mxu0
    %v3277 = vadd.f32 %v2535, %v3276
    %v3278 = vpop.f32.mrb[0].mxu0
    %v3279 = vadd.f32 %v2539, %v3278
    %v3280 = vpop.f32.mrb[0].mxu0
    %v3281 = vadd.f32 %v2535, %v3280
    %v3282 = vpop.f32.mrb[0].mxu0
    %v3283 = vadd.f32 %v2539, %v3282
    %3284 = vmatprep.mubr.bf16.mxu0 0
    %3285 = vmatmul.mubr.bf16.gmra.mrb[0].mxu0 %v2438
    %v3286 = vpop.f32.mrb[0].mxu0
    %v3287 = vadd.f32 %v2535, %v3286
    %v3288 = vpop.f32.mrb[0].mxu0
    %v3289 = vadd.f32 %v2539, %v3288
    %v3290 = vpop.f32.mrb[0].mxu0
    %v3291 = vadd.f32 %v2535, %v3290
    %v3292 = vpop.f32.mrb[0].mxu0
    %v3293 = vadd.f32 %v2539, %v3292
    %3294 = vmatprep.mubr.bf16.mxu0 0
    %3295 = vmatmul.mubr.bf16.gmra.mrb[0].mxu0 %v2439
    %v3296 = vpop.f32.mrb[0].mxu0
    %v3297 = vadd.f32 %v2535, %v3296
    %v3298 = vpop.f32.mrb[0].mxu0
    %v3299 = vadd.f32 %v2539, %v3298
    %v3300 = vpop.f32.mrb[0].mxu0
    %v3301 = vadd.f32 %v2535, %v3300
    %v3302 = vpop.f32.mrb[0].mxu0
    %v3303 = vadd.f32 %v2539, %v3302
    %3304 = vmatprep.mubr.bf16.mxu0 0
    %3305 = vmatmul.mubr.bf16.gmra.mrb[0].mxu0 %v2440
    %v3306 = vpop.f32.mrb[0].mxu0
    %v3307 = vadd.f32 %v2535, %v3306
    %v3308 = vpop.f32.mrb[0].mxu0
    %v3309 = vadd.f32 %v2539, %v3308
    %v3310 = vpop.f32.mrb[0].mxu0
    %v3311 = vadd.f32 %v2535, %v3310
    %v3312 = vpop.f32.mrb[0].mxu0
    %v3313 = vadd.f32 %v2539, %v3312
    %3314 = vmatprep.mubr.bf16.mxu0 0
    %3315 = vmatmul.mubr.bf16.gmra.mrb[0].mxu0 %v2441
    %v3316 = vpop.f32.mrb[0].mxu0
    %v3317 = vadd.f32 %v2535, %v3316
    %v3318 = vpop.f32.mrb[0].mxu0
    %v3319 = vadd.f32 %v2539, %v3318
    %v3320 = vpop.f32.mrb[0].mxu0
    %v3321 = vadd.f32 %v2535, %v3320
    %v3322 = vpop.f32.mrb[0].mxu0
    %v3323 = vadd.f32 %v2539, %v3322
    %3324 = vmatprep.mubr.bf16.mxu0 0
    %3325 = vmatmul.mubr.bf16.gmra.mrb[0].mxu0 %v2442
    %v3326 = vpop.f32.mrb[0].mxu0
    %v3327 = vadd.f32 %v2535, %v3326
    %v3328 = vpop.f32.mrb[0].mxu0
    %v3329 = vadd.f32 %v2539, %v3328
    %v3330 = vpop.f32.mrb[0].mxu0
    %v3331 = vadd.f32 %v2535, %v3330
    %v3332 = vpop.f32.mrb[0].mxu0
    %v3333 = vadd.f32 %v2539, %v3332
    %3334 = vmatprep.mubr.bf16.mxu0 0
    %3335 = vmatmul.mubr.bf16.gmra.mrb[0].mxu0 %v2443
    %v3336 = vpop.f32.mrb[0].mxu0
    %v3337 = vadd.f32 %v2535, %v3336
    %v3338 = vpop.f32.mrb[0].mxu0
    %v3339 = vadd.f32 %v2539, %v3338
    %v3340 = vpop.f32.mrb[0].mxu0
    %v3341 = vadd.f32 %v2535, %v3340
    %v3342 = vpop.f32.mrb[0].mxu0
    %v3343 = vadd.f32 %v2539, %v3342
    %3344 = vmatprep.mubr.bf16.mxu0 0
    %3345 = vmatmul.mubr.bf16.gmra.mrb[0].mxu0 %v2444
    %v3346 = vpop.f32.mrb[0].mxu0
    %v3347 = vadd.f32 %v2535, %v3346
    %v3348 = vpop.f32.mrb[0].mxu0
    %v3349 = vadd.f32 %v2539, %v3348
    %v3350 = vpop.f32.mrb[0].mxu0
    %v3351 = vadd.f32 %v2535, %v3350
    %v3352 = vpop.f32.mrb[0].mxu0
    %v3353 = vadd.f32 %v2539, %v3352
    %3354 = vmatprep.mubr.bf16.mxu0 0
    %3355 = vmatmul.mubr.bf16.gmra.mrb[0].mxu0 %v2445
    %v3356 = vpop.f32.mrb[0].mxu0
    %v3357 = vadd.f32 %v2535, %v3356
    %v3358 = vpop.f32.mrb[0].mxu0
    %v3359 = vadd.f32 %v2539, %v3358
    %v3360 = vpop.f32.mrb[0].mxu0
    %v3361 = vadd.f32 %v2535, %v3360
    %v3362 = vpop.f32.mrb[0].mxu0
    %v3363 = vadd.f32 %v2539, %v3362
    %3364 = vmatprep.mubr.bf16.mxu0 0
    %3365 = vmatmul.mubr.bf16.gmra.mrb[0].mxu0 %v2446
    %v3366 = vpop.f32.mrb[0].mxu0
    %v3367 = vadd.f32 %v2535, %v3366
    %v3368 = vpop.f32.mrb[0].mxu0
    %v3369 = vadd.f32 %v2539, %v3368
    %v3370 = vpop.f32.mrb[0].mxu0
    %v3371 = vadd.f32 %v2535, %v3370
    %v3372 = vpop.f32.mrb[0].mxu0
    %v3373 = vadd.f32 %v2539, %v3372
    %3374 = vmatprep.mubr.bf16.mxu0 0
    %3375 = vmatmul.mubr.bf16.gmra.mrb[0].mxu0 %v2447
    %v3376 = vpop.f32.mrb[0].mxu0
    %v3377 = vadd.f32 %v2535, %v3376
    %v3378 = vpop.f32.mrb[0].mxu0
    %v3379 = vadd.f32 %v2539, %v3378
    %v3380 = vpop.f32.mrb[0].mxu0
    %v3381 = vadd.f32 %v2535, %v3380
    %v3382 = vpop.f32.mrb[0].mxu0
    %v3383 = vadd.f32 %v2539, %v3382
    %3384 = vmatprep.mubr.bf16.mxu0 0
    %3385 = vmatmul.mubr.bf16.gmra.mrb[0].mxu0 %v2448
    %v3386 = vpop.f32.mrb[0].mxu0
    %v3387 = vadd.f32 %v2535, %v3386
    %v3388 = vpop.f32.mrb[0].mxu0
    %v3389 = vadd.f32 %v2539, %v3388
    %v3390 = vpop.f32.mrb[0].mxu0
    %v3391 = vadd.f32 %v2535, %v3390
    %v3392 = vpop.f32.mrb[0].mxu0
    %v3393 = vadd.f32 %v2539, %v3392
    %3394 = vmatprep.mubr.bf16.mxu0 0
    %3395 = vmatmul.mubr.bf16.gmra.mrb[0].mxu0 %v2449
    %v3396 = vpop.f32.mrb[0].mxu0
    %v3397 = vadd.f32 %v2535, %v3396
    %v3398 = vpop.f32.mrb[0].mxu0
    %v3399 = vadd.f32 %v2539, %v3398
    %v3400 = vpop.f32.mrb[0].mxu0
    %v3401 = vadd.f32 %v2535, %v3400
    %v3402 = vpop.f32.mrb[0].mxu0
    %v3403 = vadd.f32 %v2539, %v3402
    %3404 = vmatprep.mubr.bf16.mxu0 0
    %3405 = vmatmul.mubr.bf16.gmra.mrb[0].mxu0 %v2450
    %v3406 = vpop.f32.mrb[0].mxu0
    %v3407 = vadd.f32 %v2535, %v3406
    %v3408 = vpop.f32.mrb[0].mxu0
    %v3409 = vadd.f32 %v2539, %v3408
    %v3410 = vpop.f32.mrb[0].mxu0
    %v3411 = vadd.f32 %v2535, %v3410
    %v3412 = vpop.f32.mrb[0].mxu0
    %v3413 = vadd.f32 %v2539, %v3412
    %3414 = vmatprep.mubr.bf16.mxu0 0
    %3415 = vmatmul.mubr.bf16.gmra.mrb[0].mxu0 %v2451
    %v3416 = vpop.f32.mrb[0].mxu0
    %v3417 = vadd.f32 %v2535, %v3416
    %v3418 = vpop.f32.mrb[0].mxu0
    %v3419 = vadd.f32 %v2539, %v3418
    %v3420 = vpop.f32.mrb[0].mxu0
    %v3421 = vadd.f32 %v2535, %v3420
    %v3422 = vpop.f32.mrb[0].mxu0
    %v3423 = vadd.f32 %v2539, %v3422
    %3424 = vmatprep.mubr.bf16.mxu0 0
    %3425 = vmatmul.mubr.bf16.gmra.mrb[0].mxu0 %v2452
    %v3426 = vpop.f32.mrb[0].mxu0
    %v3427 = vadd.f32 %v2535, %v3426
    %v3428 = vpop.f32.mrb[0].mxu0
    %v3429 = vadd.f32 %v2539, %v3428
    %v3430 = vpop.f32.mrb[0].mxu0
    %v3431 = vadd.f32 %v2535, %v3430
    %v3432 = vpop.f32.mrb[0].mxu0
    %v3433 = vadd.f32 %v2539, %v3432
    %3434 = vmatprep.mubr.bf16.mxu0 0
    %3435 = vmatmul.mubr.bf16.gmra.mrb[0].mxu0 %v2453
    %v3436 = vpop.f32.mrb[0].mxu0
    %v3437 = vadd.f32 %v2535, %v3436
    %v3438 = vpop.f32.mrb[0].mxu0
    %v3439 = vadd.f32 %v2539, %v3438
    %v3440 = vpop.f32.mrb[0].mxu0
    %v3441 = vadd.f32 %v2535, %v3440
    %v3442 = vpop.f32.mrb[0].mxu0
    %v3443 = vadd.f32 %v2539, %v3442
    %3444 = vmatprep.mubr.bf16.mxu0 0
    %3445 = vmatmul.mubr.bf16.gmra.mrb[0].mxu0 %v2454
    %v3446 = vpop.f32.mrb[0].mxu0
    %v3447 = vadd.f32 %v2535, %v3446
    %v3448 = vpop.f32.mrb[0].mxu0
    %v3449 = vadd.f32 %v2539, %v3448
    %v3450 = vpop.f32.mrb[0].mxu0
    %v3451 = vadd.f32 %v2535, %v3450
    %v3452 = vpop.f32.mrb[0].mxu0
    %v3453 = vadd.f32 %v2539, %v3452
    %3454 = vmatprep.mubr.bf16.mxu0 0
    %3455 = vmatmul.mubr.bf16.gmra.mrb[0].mxu0 %v2455
    %v3456 = vpop.f32.mrb[0].mxu0
    %v3457 = vadd.f32 %v2535, %v3456
    %v3458 = vpop.f32.mrb[0].mxu0
    %v3459 = vadd.f32 %v2539, %v3458
    %v3460 = vpop.f32.mrb[0].mxu0
    %v3461 = vadd.f32 %v2535, %v3460
    %v3462 = vpop.f32.mrb[0].mxu0
    %v3463 = vadd.f32 %v2539, %v3462
    %3464 = vmatprep.mubr.bf16.mxu0 0
    %3465 = vmatmul.mubr.bf16.gmra.mrb[0].mxu0 %v2456
    %v3466 = vpop.f32.mrb[0].mxu0
    %v3467 = vadd.f32 %v2535, %v3466
    %v3468 = vpop.f32.mrb[0].mxu0
    %v3469 = vadd.f32 %v2539, %v3468
    %v3470 = vpop.f32.mrb[0].mxu0
    %v3471 = vadd.f32 %v2535, %v3470
    %v3472 = vpop.f32.mrb[0].mxu0
    %v3473 = vadd.f32 %v2539, %v3472
    %3474 = vmatprep.mubr.bf16.mxu0 0
    %3475 = vmatmul.mubr.bf16.gmra.mrb[0].mxu0 %v2457
    %v3476 = vpop.f32.mrb[0].mxu0
    %v3477 = vadd.f32 %v2535, %v3476
    %v3478 = vpop.f32.mrb[0].mxu0
    %v3479 = vadd.f32 %v2539, %v3478
    %v3480 = vpop.f32.mrb[0].mxu0
    %v3481 = vadd.f32 %v2535, %v3480
    %v3482 = vpop.f32.mrb[0].mxu0
    %v3483 = vadd.f32 %v2539, %v3482
    %3484 = vmatprep.mubr.bf16.mxu0 0
    %3485 = vmatmul.mubr.bf16.gmra.mrb[0].mxu0 %v2458
    %v3486 = vpop.f32.mrb[0].mxu0
    %v3487 = vadd.f32 %v2535, %v3486
    %v3488 = vpop.f32.mrb[0].mxu0
    %v3489 = vadd.f32 %v2539, %v3488
    %v3490 = vpop.f32.mrb[0].mxu0
    %v3491 = vadd.f32 %v2535, %v3490
    %v3492 = vpop.f32.mrb[0].mxu0
    %v3493 = vadd.f32 %v2539, %v3492
    %3494 = vmatprep.mubr.bf16.mxu0 0
    %3495 = vmatmul.mubr.bf16.gmra.mrb[0].mxu0 %v2459
    %v3496 = vpop.f32.mrb[0].mxu0
    %v3497 = vadd.f32 %v2535, %v3496
    %v3498 = vpop.f32.mrb[0].mxu0
    %v3499 = vadd.f32 %v2539, %v3498
    %v3500 = vpop.f32.mrb[0].mxu0
    %v3501 = vadd.f32 %v2535, %v3500
    %v3502 = vpop.f32.mrb[0].mxu0
    %v3503 = vadd.f32 %v2539, %v3502
    %3504 = vmatprep.mubr.bf16.mxu0 0
    %3505 = vmatmul.mubr.bf16.gmra.mrb[0].mxu0 %v2460
    %v3506 = vpop.f32.mrb[0].mxu0
    %v3507 = vadd.f32 %v2535, %v3506
    %v3508 = vpop.f32.mrb[0].mxu0
    %v3509 = vadd.f32 %v2539, %v3508
    %v3510 = vpop.f32.mrb[0].mxu0
    %v3511 = vadd.f32 %v2535, %v3510
    %v3512 = vpop.f32.mrb[0].mxu0
    %v3513 = vadd.f32 %v2539, %v3512
    %3514 = vmatprep.mubr.bf16.mxu0 0
    %3515 = vmatmul.mubr.bf16.gmra.mrb[0].mxu0 %v2461
    %v3516 = vpop.f32.mrb[0].mxu0
    %v3517 = vadd.f32 %v2535, %v3516
    %v3518 = vpop.f32.mrb[0].mxu0
    %v3519 = vadd.f32 %v2539, %v3518
    %v3520 = vpop.f32.mrb[0].mxu0
    %v3521 = vadd.f32 %v2535, %v3520
    %v3522 = vpop.f32.mrb[0].mxu0
    %v3523 = vadd.f32 %v2539, %v3522
    %3524 = vmatprep.mubr.bf16.mxu0 0
    %3525 = vmatmul.mubr.bf16.gmra.mrb[0].mxu0 %v2462
    %v3526 = vpop.f32.mrb[0].mxu0
    %v3527 = vadd.f32 %v2535, %v3526
    %v3528 = vpop.f32.mrb[0].mxu0
    %v3529 = vadd.f32 %v2539, %v3528
    %v3530 = vpop.f32.mrb[0].mxu0
    %v3531 = vadd.f32 %v2535, %v3530
    %v3532 = vpop.f32.mrb[0].mxu0
    %v3533 = vadd.f32 %v2539, %v3532
    %3534 = vmatprep.mubr.bf16.mxu0 0
    %3535 = vmatmul.mubr.bf16.gmra.mrb[0].mxu0 %v2463
    %v3536 = vpop.f32.mrb[0].mxu0
    %v3537 = vadd.f32 %v2535, %v3536
    %v3538 = vpop.f32.mrb[0].mxu0
    %v3539 = vadd.f32 %v2539, %v3538
    %v3540 = vpop.f32.mrb[0].mxu0
    %v3541 = vadd.f32 %v2535, %v3540
    %v3542 = vpop.f32.mrb[0].mxu0
    %v3543 = vadd.f32 %v2539, %v3542
    %3544 = vmatprep.mubr.bf16.mxu0 0
    %3545 = vmatmul.mubr.bf16.gmra.mrb[0].mxu0 %v2464
    %v3546 = vpop.f32.mrb[0].mxu0
    %v3547 = vadd.f32 %v2535, %v3546
    %v3548 = vpop.f32.mrb[0].mxu0
    %v3549 = vadd.f32 %v2539, %v3548
    %v3550 = vpop.f32.mrb[0].mxu0
    %v3551 = vadd.f32 %v2535, %v3550
    %v3552 = vpop.f32.mrb[0].mxu0
    %v3553 = vadd.f32 %v2539, %v3552
    %3554 = vmatprep.mubr.bf16.mxu0 0
    %3555 = vmatmul.mubr.bf16.gmra.mrb[0].mxu0 %v2465
    %v3556 = vpop.f32.mrb[0].mxu0
    %v3557 = vadd.f32 %v2535, %v3556
    %v3558 = vpop.f32.mrb[0].mxu0
    %v3559 = vadd.f32 %v2539, %v3558
    %v3560 = vpop.f32.mrb[0].mxu0
    %v3561 = vadd.f32 %v2535, %v3560
    %v3562 = vpop.f32.mrb[0].mxu0
    %v3563 = vadd.f32 %v2539, %v3562
    %3564 = vdwg.mxu0
    %3565 = vmatprep.subr.bf16.mxu0 %v2767
    %3566 = vmatpush1.bf16.msra.mxu0 %v2766
    %3567 = vmatprep.subr.bf16.mxu0 %v2775
    %3568 = vmatpush1.bf16.msra.mxu0 %v2774
    %3569 = vmatprep.subr.bf16.mxu0 %v2783
    %3570 = vmatpush1.bf16.msra.mxu0 %v2782
    %3571 = vmatprep.subr.bf16.mxu0 %v2791
    %3572 = vmatpush1.bf16.msra.mxu0 %v2790
    %3573 = vmatprep.subr.bf16.mxu0 %v2799
    %3574 = vmatpush1.bf16.msra.mxu0 %v2798
    %3575 = vmatprep.subr.bf16.mxu0 %v2807
    %3576 = vmatpush1.bf16.msra.mxu0 %v2806
    %3577 = vmatprep.subr.bf16.mxu0 %v2815
    %3578 = vmatpush1.bf16.msra.mxu0 %v2814
    %3579 = vmatprep.subr.bf16.mxu0 %v2823
    %3580 = vmatpush1.bf16.msra.mxu0 %v2822
    %3581 = vmatprep.subr.bf16.mxu0 0
    %3582 = vmatpush1.bf16.msra.mxu0 0
    %3583 = vmatprep.subr.bf16.mxu0 0
    %3584 = vmatpush1.bf16.msra.mxu0 0
    %3585 = vmatprep.subr.bf16.mxu0 0
    %3586 = vmatpush1.bf16.msra.mxu0 0
    %3587 = vmatprep.subr.bf16.mxu0 0
    %3588 = vmatpush1.bf16.msra.mxu0 0
    %3589 = vmatprep.subr.bf16.mxu0 0
    %3590 = vmatpush1.bf16.msra.mxu0 0
    %3591 = vmatprep.subr.bf16.mxu0 0
    %3592 = vmatpush1.bf16.msra.mxu0 0
    %3593 = vmatprep.subr.bf16.mxu0 0
    %3594 = vmatpush1.bf16.msra.mxu0 0
    %3595 = vmatprep.subr.bf16.mxu0 0
    %3596 = vmatpush1.bf16.msra.mxu0 0
    %3597 = vmatprep.mubr.bf16.mxu0 0
    %3598 = vmatmul.mubr.bf16.gmra.mrb[0].mxu0 %v2402
    %v3599 = vpop.f32.mrb[0].mxu0
    %v3600 = vadd.f32 %v2543, %v3599
    %v3601 = vpop.f32.mrb[0].mxu0
    %v3602 = vadd.f32 %v2547, %v3601
    %v3603 = vpop.f32.mrb[0].mxu0
    %v3604 = vadd.f32 %v2543, %v3603
    %v3605 = vpop.f32.mrb[0].mxu0
    %v3606 = vadd.f32 %v2547, %v3605
    %3607 = vmatprep.mubr.bf16.mxu0 0
    %3608 = vmatmul.mubr.bf16.gmra.mrb[0].mxu0 %v2403
    %v3609 = vpop.f32.mrb[0].mxu0
    %v3610 = vadd.f32 %v2543, %v3609
    %v3611 = vpop.f32.mrb[0].mxu0
    %v3612 = vadd.f32 %v2547, %v3611
    %v3613 = vpop.f32.mrb[0].mxu0
    %v3614 = vadd.f32 %v2543, %v3613
    %v3615 = vpop.f32.mrb[0].mxu0
    %v3616 = vadd.f32 %v2547, %v3615
    %3617 = vmatprep.mubr.bf16.mxu0 0
    %3618 = vmatmul.mubr.bf16.gmra.mrb[0].mxu0 %v2404
    %v3619 = vpop.f32.mrb[0].mxu0
    %v3620 = vadd.f32 %v2543, %v3619
    %v3621 = vpop.f32.mrb[0].mxu0
    %v3622 = vadd.f32 %v2547, %v3621
    %v3623 = vpop.f32.mrb[0].mxu0
    %v3624 = vadd.f32 %v2543, %v3623
    %v3625 = vpop.f32.mrb[0].mxu0
    %v3626 = vadd.f32 %v2547, %v3625
    %3627 = vmatprep.mubr.bf16.mxu0 0
    %3628 = vmatmul.mubr.bf16.gmra.mrb[0].mxu0 %v2405
    %v3629 = vpop.f32.mrb[0].mxu0
    %v3630 = vadd.f32 %v2543, %v3629
    %v3631 = vpop.f32.mrb[0].mxu0
    %v3632 = vadd.f32 %v2547, %v3631
    %v3633 = vpop.f32.mrb[0].mxu0
    %v3634 = vadd.f32 %v2543, %v3633
    %v3635 = vpop.f32.mrb[0].mxu0
    %v3636 = vadd.f32 %v2547, %v3635
    %3637 = vmatprep.mubr.bf16.mxu0 0
    %3638 = vmatmul.mubr.bf16.gmra.mrb[0].mxu0 %v2406
    %v3639 = vpop.f32.mrb[0].mxu0
    %v3640 = vadd.f32 %v2543, %v3639
    %v3641 = vpop.f32.mrb[0].mxu0
    %v3642 = vadd.f32 %v2547, %v3641
    %v3643 = vpop.f32.mrb[0].mxu0
    %v3644 = vadd.f32 %v2543, %v3643
    %v3645 = vpop.f32.mrb[0].mxu0
    %v3646 = vadd.f32 %v2547, %v3645
    %3647 = vmatprep.mubr.bf16.mxu0 0
    %3648 = vmatmul.mubr.bf16.gmra.mrb[0].mxu0 %v2407
    %v3649 = vpop.f32.mrb[0].mxu0
    %v3650 = vadd.f32 %v2543, %v3649
    %v3651 = vpop.f32.mrb[0].mxu0
    %v3652 = vadd.f32 %v2547, %v3651
    %v3653 = vpop.f32.mrb[0].mxu0
    %v3654 = vadd.f32 %v2543, %v3653
    %v3655 = vpop.f32.mrb[0].mxu0
    %v3656 = vadd.f32 %v2547, %v3655
    %3657 = vmatprep.mubr.bf16.mxu0 0
    %3658 = vmatmul.mubr.bf16.gmra.mrb[0].mxu0 %v2408
    %v3659 = vpop.f32.mrb[0].mxu0
    %v3660 = vadd.f32 %v2543, %v3659
    %v3661 = vpop.f32.mrb[0].mxu0
    %v3662 = vadd.f32 %v2547, %v3661
    %v3663 = vpop.f32.mrb[0].mxu0
    %v3664 = vadd.f32 %v2543, %v3663
    %v3665 = vpop.f32.mrb[0].mxu0
    %v3666 = vadd.f32 %v2547, %v3665
    %3667 = vmatprep.mubr.bf16.mxu0 0
    %3668 = vmatmul.mubr.bf16.gmra.mrb[0].mxu0 %v2409
    %v3669 = vpop.f32.mrb[0].mxu0
    %v3670 = vadd.f32 %v2543, %v3669
    %v3671 = vpop.f32.mrb[0].mxu0
    %v3672 = vadd.f32 %v2547, %v3671
    %v3673 = vpop.f32.mrb[0].mxu0
    %v3674 = vadd.f32 %v2543, %v3673
    %v3675 = vpop.f32.mrb[0].mxu0
    %v3676 = vadd.f32 %v2547, %v3675
    %3677 = vmatprep.mubr.bf16.mxu0 0
    %3678 = vmatmul.mubr.bf16.gmra.mrb[0].mxu0 %v2410
    %v3679 = vpop.f32.mrb[0].mxu0
    %v3680 = vadd.f32 %v2543, %v3679
    %v3681 = vpop.f32.mrb[0].mxu0
    %v3682 = vadd.f32 %v2547, %v3681
    %v3683 = vpop.f32.mrb[0].mxu0
    %v3684 = vadd.f32 %v2543, %v3683
    %v3685 = vpop.f32.mrb[0].mxu0
    %v3686 = vadd.f32 %v2547, %v3685
    %3687 = vmatprep.mubr.bf16.mxu0 0
    %3688 = vmatmul.mubr.bf16.gmra.mrb[0].mxu0 %v2411
    %v3689 = vpop.f32.mrb[0].mxu0
    %v3690 = vadd.f32 %v2543, %v3689
    %v3691 = vpop.f32.mrb[0].mxu0
    %v3692 = vadd.f32 %v2547, %v3691
    %v3693 = vpop.f32.mrb[0].mxu0
    %v3694 = vadd.f32 %v2543, %v3693
    %v3695 = vpop.f32.mrb[0].mxu0
    %v3696 = vadd.f32 %v2547, %v3695
    %3697 = vmatprep.mubr.bf16.mxu0 0
    %3698 = vmatmul.mubr.bf16.gmra.mrb[0].mxu0 %v2412
    %v3699 = vpop.f32.mrb[0].mxu0
    %v3700 = vadd.f32 %v2543, %v3699
    %v3701 = vpop.f32.mrb[0].mxu0
    %v3702 = vadd.f32 %v2547, %v3701
    %v3703 = vpop.f32.mrb[0].mxu0
    %v3704 = vadd.f32 %v2543, %v3703
    %v3705 = vpop.f32.mrb[0].mxu0
    %v3706 = vadd.f32 %v2547, %v3705
    %3707 = vmatprep.mubr.bf16.mxu0 0
    %3708 = vmatmul.mubr.bf16.gmra.mrb[0].mxu0 %v2413
    %v3709 = vpop.f32.mrb[0].mxu0
    %v3710 = vadd.f32 %v2543, %v3709
    %v3711 = vpop.f32.mrb[0].mxu0
    %v3712 = vadd.f32 %v2547, %v3711
    %v3713 = vpop.f32.mrb[0].mxu0
    %v3714 = vadd.f32 %v2543, %v3713
    %v3715 = vpop.f32.mrb[0].mxu0
    %v3716 = vadd.f32 %v2547, %v3715
    %3717 = vmatprep.mubr.bf16.mxu0 0
    %3718 = vmatmul.mubr.bf16.gmra.mrb[0].mxu0 %v2414
    %v3719 = vpop.f32.mrb[0].mxu0
    %v3720 = vadd.f32 %v2543, %v3719
    %v3721 = vpop.f32.mrb[0].mxu0
    %v3722 = vadd.f32 %v2547, %v3721
    %v3723 = vpop.f32.mrb[0].mxu0
    %v3724 = vadd.f32 %v2543, %v3723
    %v3725 = vpop.f32.mrb[0].mxu0
    %v3726 = vadd.f32 %v2547, %v3725
    %3727 = vmatprep.mubr.bf16.mxu0 0
    %3728 = vmatmul.mubr.bf16.gmra.mrb[0].mxu0 %v2415
    %v3729 = vpop.f32.mrb[0].mxu0
    %v3730 = vadd.f32 %v2543, %v3729
    %v3731 = vpop.f32.mrb[0].mxu0
    %v3732 = vadd.f32 %v2547, %v3731
    %v3733 = vpop.f32.mrb[0].mxu0
    %v3734 = vadd.f32 %v2543, %v3733
    %v3735 = vpop.f32.mrb[0].mxu0
    %v3736 = vadd.f32 %v2547, %v3735
    %3737 = vmatprep.mubr.bf16.mxu0 0
    %3738 = vmatmul.mubr.bf16.gmra.mrb[0].mxu0 %v2416
    %v3739 = vpop.f32.mrb[0].mxu0
    %v3740 = vadd.f32 %v2543, %v3739
    %v3741 = vpop.f32.mrb[0].mxu0
    %v3742 = vadd.f32 %v2547, %v3741
    %v3743 = vpop.f32.mrb[0].mxu0
    %v3744 = vadd.f32 %v2543, %v3743
    %v3745 = vpop.f32.mrb[0].mxu0
    %v3746 = vadd.f32 %v2547, %v3745
    %3747 = vmatprep.mubr.bf16.mxu0 0
    %3748 = vmatmul.mubr.bf16.gmra.mrb[0].mxu0 %v2417
    %v3749 = vpop.f32.mrb[0].mxu0
    %v3750 = vadd.f32 %v2543, %v3749
    %v3751 = vpop.f32.mrb[0].mxu0
    %v3752 = vadd.f32 %v2547, %v3751
    %v3753 = vpop.f32.mrb[0].mxu0
    %v3754 = vadd.f32 %v2543, %v3753
    %v3755 = vpop.f32.mrb[0].mxu0
    %v3756 = vadd.f32 %v2547, %v3755
    %3757 = vmatprep.mubr.bf16.mxu0 0
    %3758 = vmatmul.mubr.bf16.gmra.mrb[0].mxu0 %v2418
    %v3759 = vpop.f32.mrb[0].mxu0
    %v3760 = vadd.f32 %v2543, %v3759
    %v3761 = vpop.f32.mrb[0].mxu0
    %v3762 = vadd.f32 %v2547, %v3761
    %v3763 = vpop.f32.mrb[0].mxu0
    %v3764 = vadd.f32 %v2543, %v3763
    %v3765 = vpop.f32.mrb[0].mxu0
    %v3766 = vadd.f32 %v2547, %v3765
    %3767 = vmatprep.mubr.bf16.mxu0 0
    %3768 = vmatmul.mubr.bf16.gmra.mrb[0].mxu0 %v2419
    %v3769 = vpop.f32.mrb[0].mxu0
    %v3770 = vadd.f32 %v2543, %v3769
    %v3771 = vpop.f32.mrb[0].mxu0
    %v3772 = vadd.f32 %v2547, %v3771
    %v3773 = vpop.f32.mrb[0].mxu0
    %v3774 = vadd.f32 %v2543, %v3773
    %v3775 = vpop.f32.mrb[0].mxu0
    %v3776 = vadd.f32 %v2547, %v3775
    %3777 = vmatprep.mubr.bf16.mxu0 0
    %3778 = vmatmul.mubr.bf16.gmra.mrb[0].mxu0 %v2420
    %v3779 = vpop.f32.mrb[0].mxu0
    %v3780 = vadd.f32 %v2543, %v3779
    %v3781 = vpop.f32.mrb[0].mxu0
    %v3782 = vadd.f32 %v2547, %v3781
    %v3783 = vpop.f32.mrb[0].mxu0
    %v3784 = vadd.f32 %v2543, %v3783
    %v3785 = vpop.f32.mrb[0].mxu0
    %v3786 = vadd.f32 %v2547, %v3785
    %3787 = vmatprep.mubr.bf16.mxu0 0
    %3788 = vmatmul.mubr.bf16.gmra.mrb[0].mxu0 %v2421
    %v3789 = vpop.f32.mrb[0].mxu0
    %v3790 = vadd.f32 %v2543, %v3789
    %v3791 = vpop.f32.mrb[0].mxu0
    %v3792 = vadd.f32 %v2547, %v3791
    %v3793 = vpop.f32.mrb[0].mxu0
    %v3794 = vadd.f32 %v2543, %v3793
    %v3795 = vpop.f32.mrb[0].mxu0
    %v3796 = vadd.f32 %v2547, %v3795
    %3797 = vmatprep.mubr.bf16.mxu0 0
    %3798 = vmatmul.mubr.bf16.gmra.mrb[0].mxu0 %v2422
    %v3799 = vpop.f32.mrb[0].mxu0
    %v3800 = vadd.f32 %v2543, %v3799
    %v3801 = vpop.f32.mrb[0].mxu0
    %v3802 = vadd.f32 %v2547, %v3801
    %v3803 = vpop.f32.mrb[0].mxu0
    %v3804 = vadd.f32 %v2543, %v3803
    %v3805 = vpop.f32.mrb[0].mxu0
    %v3806 = vadd.f32 %v2547, %v3805
    %3807 = vmatprep.mubr.bf16.mxu0 0
    %3808 = vmatmul.mubr.bf16.gmra.mrb[0].mxu0 %v2423
    %v3809 = vpop.f32.mrb[0].mxu0
    %v3810 = vadd.f32 %v2543, %v3809
    %v3811 = vpop.f32.mrb[0].mxu0
    %v3812 = vadd.f32 %v2547, %v3811
    %v3813 = vpop.f32.mrb[0].mxu0
    %v3814 = vadd.f32 %v2543, %v3813
    %v3815 = vpop.f32.mrb[0].mxu0
    %v3816 = vadd.f32 %v2547, %v3815
    %3817 = vmatprep.mubr.bf16.mxu0 0
    %3818 = vmatmul.mubr.bf16.gmra.mrb[0].mxu0 %v2424
    %v3819 = vpop.f32.mrb[0].mxu0
    %v3820 = vadd.f32 %v2543, %v3819
    %v3821 = vpop.f32.mrb[0].mxu0
    %v3822 = vadd.f32 %v2547, %v3821
    %v3823 = vpop.f32.mrb[0].mxu0
    %v3824 = vadd.f32 %v2543, %v3823
    %v3825 = vpop.f32.mrb[0].mxu0
    %v3826 = vadd.f32 %v2547, %v3825
    %3827 = vmatprep.mubr.bf16.mxu0 0
    %3828 = vmatmul.mubr.bf16.gmra.mrb[0].mxu0 %v2425
    %v3829 = vpop.f32.mrb[0].mxu0
    %v3830 = vadd.f32 %v2543, %v3829
    %v3831 = vpop.f32.mrb[0].mxu0
    %v3832 = vadd.f32 %v2547, %v3831
    %v3833 = vpop.f32.mrb[0].mxu0
    %v3834 = vadd.f32 %v2543, %v3833
    %v3835 = vpop.f32.mrb[0].mxu0
    %v3836 = vadd.f32 %v2547, %v3835
    %3837 = vmatprep.mubr.bf16.mxu0 0
    %3838 = vmatmul.mubr.bf16.gmra.mrb[0].mxu0 %v2426
    %v3839 = vpop.f32.mrb[0].mxu0
    %v3840 = vadd.f32 %v2543, %v3839
    %v3841 = vpop.f32.mrb[0].mxu0
    %v3842 = vadd.f32 %v2547, %v3841
    %v3843 = vpop.f32.mrb[0].mxu0
    %v3844 = vadd.f32 %v2543, %v3843
    %v3845 = vpop.f32.mrb[0].mxu0
    %v3846 = vadd.f32 %v2547, %v3845
    %3847 = vmatprep.mubr.bf16.mxu0 0
    %3848 = vmatmul.mubr.bf16.gmra.mrb[0].mxu0 %v2427
    %v3849 = vpop.f32.mrb[0].mxu0
    %v3850 = vadd.f32 %v2543, %v3849
    %v3851 = vpop.f32.mrb[0].mxu0
    %v3852 = vadd.f32 %v2547, %v3851
    %v3853 = vpop.f32.mrb[0].mxu0
    %v3854 = vadd.f32 %v2543, %v3853
    %v3855 = vpop.f32.mrb[0].mxu0
    %v3856 = vadd.f32 %v2547, %v3855
    %3857 = vmatprep.mubr.bf16.mxu0 0
    %3858 = vmatmul.mubr.bf16.gmra.mrb[0].mxu0 %v2428
    %v3859 = vpop.f32.mrb[0].mxu0
    %v3860 = vadd.f32 %v2543, %v3859
    %v3861 = vpop.f32.mrb[0].mxu0
    %v3862 = vadd.f32 %v2547, %v3861
    %v3863 = vpop.f32.mrb[0].mxu0
    %v3864 = vadd.f32 %v2543, %v3863
    %v3865 = vpop.f32.mrb[0].mxu0
    %v3866 = vadd.f32 %v2547, %v3865
    %3867 = vmatprep.mubr.bf16.mxu0 0
    %3868 = vmatmul.mubr.bf16.gmra.mrb[0].mxu0 %v2429
    %v3869 = vpop.f32.mrb[0].mxu0
    %v3870 = vadd.f32 %v2543, %v3869
    %v3871 = vpop.f32.mrb[0].mxu0
    %v3872 = vadd.f32 %v2547, %v3871
    %v3873 = vpop.f32.mrb[0].mxu0
    %v3874 = vadd.f32 %v2543, %v3873
    %v3875 = vpop.f32.mrb[0].mxu0
    %v3876 = vadd.f32 %v2547, %v3875
    %3877 = vmatprep.mubr.bf16.mxu0 0
    %3878 = vmatmul.mubr.bf16.gmra.mrb[0].mxu0 %v2430
    %v3879 = vpop.f32.mrb[0].mxu0
    %v3880 = vadd.f32 %v2543, %v3879
    %v3881 = vpop.f32.mrb[0].mxu0
    %v3882 = vadd.f32 %v2547, %v3881
    %v3883 = vpop.f32.mrb[0].mxu0
    %v3884 = vadd.f32 %v2543, %v3883
    %v3885 = vpop.f32.mrb[0].mxu0
    %v3886 = vadd.f32 %v2547, %v3885
    %3887 = vmatprep.mubr.bf16.mxu0 0
    %3888 = vmatmul.mubr.bf16.gmra.mrb[0].mxu0 %v2431
    %v3889 = vpop.f32.mrb[0].mxu0
    %v3890 = vadd.f32 %v2543, %v3889
    %v3891 = vpop.f32.mrb[0].mxu0
    %v3892 = vadd.f32 %v2547, %v3891
    %v3893 = vpop.f32.mrb[0].mxu0
    %v3894 = vadd.f32 %v2543, %v3893
    %v3895 = vpop.f32.mrb[0].mxu0
    %v3896 = vadd.f32 %v2547, %v3895
    %3897 = vmatprep.mubr.bf16.mxu0 0
    %3898 = vmatmul.mubr.bf16.gmra.mrb[0].mxu0 %v2432
    %v3899 = vpop.f32.mrb[0].mxu0
    %v3900 = vadd.f32 %v2543, %v3899
    %v3901 = vpop.f32.mrb[0].mxu0
    %v3902 = vadd.f32 %v2547, %v3901
    %v3903 = vpop.f32.mrb[0].mxu0
    %v3904 = vadd.f32 %v2543, %v3903
    %v3905 = vpop.f32.mrb[0].mxu0
    %v3906 = vadd.f32 %v2547, %v3905
    %3907 = vmatprep.mubr.bf16.mxu0 0
    %3908 = vmatmul.mubr.bf16.gmra.mrb[0].mxu0 %v2433
    %v3909 = vpop.f32.mrb[0].mxu0
    %v3910 = vadd.f32 %v2543, %v3909
    %v3911 = vpop.f32.mrb[0].mxu0
    %v3912 = vadd.f32 %v2547, %v3911
    %v3913 = vpop.f32.mrb[0].mxu0
    %v3914 = vadd.f32 %v2543, %v3913
    %v3915 = vpop.f32.mrb[0].mxu0
    %v3916 = vadd.f32 %v2547, %v3915
    %3917 = vmatprep.mubr.bf16.mxu0 0
    %3918 = vmatmul.mubr.bf16.gmra.mrb[0].mxu0 %v2434
    %v3919 = vpop.f32.mrb[0].mxu0
    %v3920 = vadd.f32 %v2543, %v3919
    %v3921 = vpop.f32.mrb[0].mxu0
    %v3922 = vadd.f32 %v2547, %v3921
    %v3923 = vpop.f32.mrb[0].mxu0
    %v3924 = vadd.f32 %v2543, %v3923
    %v3925 = vpop.f32.mrb[0].mxu0
    %v3926 = vadd.f32 %v2547, %v3925
    %3927 = vmatprep.mubr.bf16.mxu0 0
    %3928 = vmatmul.mubr.bf16.gmra.mrb[0].mxu0 %v2435
    %v3929 = vpop.f32.mrb[0].mxu0
    %v3930 = vadd.f32 %v2543, %v3929
    %v3931 = vpop.f32.mrb[0].mxu0
    %v3932 = vadd.f32 %v2547, %v3931
    %v3933 = vpop.f32.mrb[0].mxu0
    %v3934 = vadd.f32 %v2543, %v3933
    %v3935 = vpop.f32.mrb[0].mxu0
    %v3936 = vadd.f32 %v2547, %v3935
    %3937 = vmatprep.mubr.bf16.mxu0 0
    %3938 = vmatmul.mubr.bf16.gmra.mrb[0].mxu0 %v2436
    %v3939 = vpop.f32.mrb[0].mxu0
    %v3940 = vadd.f32 %v2543, %v3939
    %v3941 = vpop.f32.mrb[0].mxu0
    %v3942 = vadd.f32 %v2547, %v3941
    %v3943 = vpop.f32.mrb[0].mxu0
    %v3944 = vadd.f32 %v2543, %v3943
    %v3945 = vpop.f32.mrb[0].mxu0
    %v3946 = vadd.f32 %v2547, %v3945
    %3947 = vmatprep.mubr.bf16.mxu0 0
    %3948 = vmatmul.mubr.bf16.gmra.mrb[0].mxu0 %v2437
    %v3949 = vpop.f32.mrb[0].mxu0
    %v3950 = vadd.f32 %v2543, %v3949
    %v3951 = vpop.f32.mrb[0].mxu0
    %v3952 = vadd.f32 %v2547, %v3951
    %v3953 = vpop.f32.mrb[0].mxu0
    %v3954 = vadd.f32 %v2543, %v3953
    %v3955 = vpop.f32.mrb[0].mxu0
    %v3956 = vadd.f32 %v2547, %v3955
    %3957 = vmatprep.mubr.bf16.mxu0 0
    %3958 = vmatmul.mubr.bf16.gmra.mrb[0].mxu0 %v2438
    %v3959 = vpop.f32.mrb[0].mxu0
    %v3960 = vadd.f32 %v2543, %v3959
    %v3961 = vpop.f32.mrb[0].mxu0
    %v3962 = vadd.f32 %v2547, %v3961
    %v3963 = vpop.f32.mrb[0].mxu0
    %v3964 = vadd.f32 %v2543, %v3963
    %v3965 = vpop.f32.mrb[0].mxu0
    %v3966 = vadd.f32 %v2547, %v3965
    %3967 = vmatprep.mubr.bf16.mxu0 0
    %3968 = vmatmul.mubr.bf16.gmra.mrb[0].mxu0 %v2439
    %v3969 = vpop.f32.mrb[0].mxu0
    %v3970 = vadd.f32 %v2543, %v3969
    %v3971 = vpop.f32.mrb[0].mxu0
    %v3972 = vadd.f32 %v2547, %v3971
    %v3973 = vpop.f32.mrb[0].mxu0
    %v3974 = vadd.f32 %v2543, %v3973
    %v3975 = vpop.f32.mrb[0].mxu0
    %v3976 = vadd.f32 %v2547, %v3975
    %3977 = vmatprep.mubr.bf16.mxu0 0
    %3978 = vmatmul.mubr.bf16.gmra.mrb[0].mxu0 %v2440
    %v3979 = vpop.f32.mrb[0].mxu0
    %v3980 = vadd.f32 %v2543, %v3979
    %v3981 = vpop.f32.mrb[0].mxu0
    %v3982 = vadd.f32 %v2547, %v3981
    %v3983 = vpop.f32.mrb[0].mxu0
    %v3984 = vadd.f32 %v2543, %v3983
    %v3985 = vpop.f32.mrb[0].mxu0
    %v3986 = vadd.f32 %v2547, %v3985
    %3987 = vmatprep.mubr.bf16.mxu0 0
    %3988 = vmatmul.mubr.bf16.gmra.mrb[0].mxu0 %v2441
    %v3989 = vpop.f32.mrb[0].mxu0
    %v3990 = vadd.f32 %v2543, %v3989
    %v3991 = vpop.f32.mrb[0].mxu0
    %v3992 = vadd.f32 %v2547, %v3991
    %v3993 = vpop.f32.mrb[0].mxu0
    %v3994 = vadd.f32 %v2543, %v3993
    %v3995 = vpop.f32.mrb[0].mxu0
    %v3996 = vadd.f32 %v2547, %v3995
    %3997 = vmatprep.mubr.bf16.mxu0 0
    %3998 = vmatmul.mubr.bf16.gmra.mrb[0].mxu0 %v2442
    %v3999 = vpop.f32.mrb[0].mxu0
    %v4000 = vadd.f32 %v2543, %v3999
    %v4001 = vpop.f32.mrb[0].mxu0
    %v4002 = vadd.f32 %v2547, %v4001
    %v4003 = vpop.f32.mrb[0].mxu0
    %v4004 = vadd.f32 %v2543, %v4003
    %v4005 = vpop.f32.mrb[0].mxu0
    %v4006 = vadd.f32 %v2547, %v4005
    %4007 = vmatprep.mubr.bf16.mxu0 0
    %4008 = vmatmul.mubr.bf16.gmra.mrb[0].mxu0 %v2443
    %v4009 = vpop.f32.mrb[0].mxu0
    %v4010 = vadd.f32 %v2543, %v4009
    %v4011 = vpop.f32.mrb[0].mxu0
    %v4012 = vadd.f32 %v2547, %v4011
    %v4013 = vpop.f32.mrb[0].mxu0
    %v4014 = vadd.f32 %v2543, %v4013
    %v4015 = vpop.f32.mrb[0].mxu0
    %v4016 = vadd.f32 %v2547, %v4015
    %4017 = vmatprep.mubr.bf16.mxu0 0
    %4018 = vmatmul.mubr.bf16.gmra.mrb[0].mxu0 %v2444
    %v4019 = vpop.f32.mrb[0].mxu0
    %v4020 = vadd.f32 %v2543, %v4019
    %v4021 = vpop.f32.mrb[0].mxu0
    %v4022 = vadd.f32 %v2547, %v4021
    %v4023 = vpop.f32.mrb[0].mxu0
    %v4024 = vadd.f32 %v2543, %v4023
    %v4025 = vpop.f32.mrb[0].mxu0
    %v4026 = vadd.f32 %v2547, %v4025
    %4027 = vmatprep.mubr.bf16.mxu0 0
    %4028 = vmatmul.mubr.bf16.gmra.mrb[0].mxu0 %v2445
    %v4029 = vpop.f32.mrb[0].mxu0
    %v4030 = vadd.f32 %v2543, %v4029
    %v4031 = vpop.f32.mrb[0].mxu0
    %v4032 = vadd.f32 %v2547, %v4031
    %v4033 = vpop.f32.mrb[0].mxu0
    %v4034 = vadd.f32 %v2543, %v4033
    %v4035 = vpop.f32.mrb[0].mxu0
    %v4036 = vadd.f32 %v2547, %v4035
    %4037 = vmatprep.mubr.bf16.mxu0 0
    %4038 = vmatmul.mubr.bf16.gmra.mrb[0].mxu0 %v2446
    %v4039 = vpop.f32.mrb[0].mxu0
    %v4040 = vadd.f32 %v2543, %v4039
    %v4041 = vpop.f32.mrb[0].mxu0
    %v4042 = vadd.f32 %v2547, %v4041
    %v4043 = vpop.f32.mrb[0].mxu0
    %v4044 = vadd.f32 %v2543, %v4043
    %v4045 = vpop.f32.mrb[0].mxu0
    %v4046 = vadd.f32 %v2547, %v4045
    %4047 = vmatprep.mubr.bf16.mxu0 0
    %4048 = vmatmul.mubr.bf16.gmra.mrb[0].mxu0 %v2447
    %v4049 = vpop.f32.mrb[0].mxu0
    %v4050 = vadd.f32 %v2543, %v4049
    %v4051 = vpop.f32.mrb[0].mxu0
    %v4052 = vadd.f32 %v2547, %v4051
    %v4053 = vpop.f32.mrb[0].mxu0
    %v4054 = vadd.f32 %v2543, %v4053
    %v4055 = vpop.f32.mrb[0].mxu0
    %v4056 = vadd.f32 %v2547, %v4055
    %4057 = vmatprep.mubr.bf16.mxu0 0
    %4058 = vmatmul.mubr.bf16.gmra.mrb[0].mxu0 %v2448
    %v4059 = vpop.f32.mrb[0].mxu0
    %v4060 = vadd.f32 %v2543, %v4059
    %v4061 = vpop.f32.mrb[0].mxu0
    %v4062 = vadd.f32 %v2547, %v4061
    %v4063 = vpop.f32.mrb[0].mxu0
    %v4064 = vadd.f32 %v2543, %v4063
    %v4065 = vpop.f32.mrb[0].mxu0
    %v4066 = vadd.f32 %v2547, %v4065
    %4067 = vmatprep.mubr.bf16.mxu0 0
    %4068 = vmatmul.mubr.bf16.gmra.mrb[0].mxu0 %v2449
    %v4069 = vpop.f32.mrb[0].mxu0
    %v4070 = vadd.f32 %v2543, %v4069
    %v4071 = vpop.f32.mrb[0].mxu0
    %v4072 = vadd.f32 %v2547, %v4071
    %v4073 = vpop.f32.mrb[0].mxu0
    %v4074 = vadd.f32 %v2543, %v4073
    %v4075 = vpop.f32.mrb[0].mxu0
    %v4076 = vadd.f32 %v2547, %v4075
    %4077 = vmatprep.mubr.bf16.mxu0 0
    %4078 = vmatmul.mubr.bf16.gmra.mrb[0].mxu0 %v2450
    %v4079 = vpop.f32.mrb[0].mxu0
    %v4080 = vadd.f32 %v2543, %v4079
    %v4081 = vpop.f32.mrb[0].mxu0
    %v4082 = vadd.f32 %v2547, %v4081
    %v4083 = vpop.f32.mrb[0].mxu0
    %v4084 = vadd.f32 %v2543, %v4083
    %v4085 = vpop.f32.mrb[0].mxu0
    %v4086 = vadd.f32 %v2547, %v4085
    %4087 = vmatprep.mubr.bf16.mxu0 0
    %4088 = vmatmul.mubr.bf16.gmra.mrb[0].mxu0 %v2451
    %v4089 = vpop.f32.mrb[0].mxu0
    %v4090 = vadd.f32 %v2543, %v4089
    %v4091 = vpop.f32.mrb[0].mxu0
    %v4092 = vadd.f32 %v2547, %v4091
    %v4093 = vpop.f32.mrb[0].mxu0
    %v4094 = vadd.f32 %v2543, %v4093
    %v4095 = vpop.f32.mrb[0].mxu0
    %v4096 = vadd.f32 %v2547, %v4095
    %4097 = vmatprep.mubr.bf16.mxu0 0
    %4098 = vmatmul.mubr.bf16.gmra.mrb[0].mxu0 %v2452
    %v4099 = vpop.f32.mrb[0].mxu0
    %v4100 = vadd.f32 %v2543, %v4099
    %v4101 = vpop.f32.mrb[0].mxu0
    %v4102 = vadd.f32 %v2547, %v4101
    %v4103 = vpop.f32.mrb[0].mxu0
    %v4104 = vadd.f32 %v2543, %v4103
    %v4105 = vpop.f32.mrb[0].mxu0
    %v4106 = vadd.f32 %v2547, %v4105
    %4107 = vmatprep.mubr.bf16.mxu0 0
    %4108 = vmatmul.mubr.bf16.gmra.mrb[0].mxu0 %v2453
    %v4109 = vpop.f32.mrb[0].mxu0
    %v4110 = vadd.f32 %v2543, %v4109
    %v4111 = vpop.f32.mrb[0].mxu0
    %v4112 = vadd.f32 %v2547, %v4111
    %v4113 = vpop.f32.mrb[0].mxu0
    %v4114 = vadd.f32 %v2543, %v4113
    %v4115 = vpop.f32.mrb[0].mxu0
    %v4116 = vadd.f32 %v2547, %v4115
    %4117 = vmatprep.mubr.bf16.mxu0 0
    %4118 = vmatmul.mubr.bf16.gmra.mrb[0].mxu0 %v2454
    %v4119 = vpop.f32.mrb[0].mxu0
    %v4120 = vadd.f32 %v2543, %v4119
    %v4121 = vpop.f32.mrb[0].mxu0
    %v4122 = vadd.f32 %v2547, %v4121
    %v4123 = vpop.f32.mrb[0].mxu0
    %v4124 = vadd.f32 %v2543, %v4123
    %v4125 = vpop.f32.mrb[0].mxu0
    %v4126 = vadd.f32 %v2547, %v4125
    %4127 = vmatprep.mubr.bf16.mxu0 0
    %4128 = vmatmul.mubr.bf16.gmra.mrb[0].mxu0 %v2455
    %v4129 = vpop.f32.mrb[0].mxu0
    %v4130 = vadd.f32 %v2543, %v4129
    %v4131 = vpop.f32.mrb[0].mxu0
    %v4132 = vadd.f32 %v2547, %v4131
    %v4133 = vpop.f32.mrb[0].mxu0
    %v4134 = vadd.f32 %v2543, %v4133
    %v4135 = vpop.f32.mrb[0].mxu0
    %v4136 = vadd.f32 %v2547, %v4135
    %4137 = vmatprep.mubr.bf16.mxu0 0
    %4138 = vmatmul.mubr.bf16.gmra.mrb[0].mxu0 %v2456
    %v4139 = vpop.f32.mrb[0].mxu0
    %v4140 = vadd.f32 %v2543, %v4139
    %v4141 = vpop.f32.mrb[0].mxu0
    %v4142 = vadd.f32 %v2547, %v4141
    %v4143 = vpop.f32.mrb[0].mxu0
    %v4144 = vadd.f32 %v2543, %v4143
    %v4145 = vpop.f32.mrb[0].mxu0
    %v4146 = vadd.f32 %v2547, %v4145
    %4147 = vmatprep.mubr.bf16.mxu0 0
    %4148 = vmatmul.mubr.bf16.gmra.mrb[0].mxu0 %v2457
    %v4149 = vpop.f32.mrb[0].mxu0
    %v4150 = vadd.f32 %v2543, %v4149
    %v4151 = vpop.f32.mrb[0].mxu0
    %v4152 = vadd.f32 %v2547, %v4151
    %v4153 = vpop.f32.mrb[0].mxu0
    %v4154 = vadd.f32 %v2543, %v4153
    %v4155 = vpop.f32.mrb[0].mxu0
    %v4156 = vadd.f32 %v2547, %v4155
    %4157 = vmatprep.mubr.bf16.mxu0 0
    %4158 = vmatmul.mubr.bf16.gmra.mrb[0].mxu0 %v2458
    %v4159 = vpop.f32.mrb[0].mxu0
    %v4160 = vadd.f32 %v2543, %v4159
    %v4161 = vpop.f32.mrb[0].mxu0
    %v4162 = vadd.f32 %v2547, %v4161
    %v4163 = vpop.f32.mrb[0].mxu0
    %v4164 = vadd.f32 %v2543, %v4163
    %v4165 = vpop.f32.mrb[0].mxu0
    %v4166 = vadd.f32 %v2547, %v4165
    %4167 = vmatprep.mubr.bf16.mxu0 0
    %4168 = vmatmul.mubr.bf16.gmra.mrb[0].mxu0 %v2459
    %v4169 = vpop.f32.mrb[0].mxu0
    %v4170 = vadd.f32 %v2543, %v4169
    %v4171 = vpop.f32.mrb[0].mxu0
    %v4172 = vadd.f32 %v2547, %v4171
    %v4173 = vpop.f32.mrb[0].mxu0
    %v4174 = vadd.f32 %v2543, %v4173
    %v4175 = vpop.f32.mrb[0].mxu0
    %v4176 = vadd.f32 %v2547, %v4175
    %4177 = vmatprep.mubr.bf16.mxu0 0
    %4178 = vmatmul.mubr.bf16.gmra.mrb[0].mxu0 %v2460
    %v4179 = vpop.f32.mrb[0].mxu0
    %v4180 = vadd.f32 %v2543, %v4179
    %v4181 = vpop.f32.mrb[0].mxu0
    %v4182 = vadd.f32 %v2547, %v4181
    %v4183 = vpop.f32.mrb[0].mxu0
    %v4184 = vadd.f32 %v2543, %v4183
    %v4185 = vpop.f32.mrb[0].mxu0
    %v4186 = vadd.f32 %v2547, %v4185
    %4187 = vmatprep.mubr.bf16.mxu0 0
    %4188 = vmatmul.mubr.bf16.gmra.mrb[0].mxu0 %v2461
    %v4189 = vpop.f32.mrb[0].mxu0
    %v4190 = vadd.f32 %v2543, %v4189
    %v4191 = vpop.f32.mrb[0].mxu0
    %v4192 = vadd.f32 %v2547, %v4191
    %v4193 = vpop.f32.mrb[0].mxu0
    %v4194 = vadd.f32 %v2543, %v4193
    %v4195 = vpop.f32.mrb[0].mxu0
    %v4196 = vadd.f32 %v2547, %v4195
    %4197 = vmatprep.mubr.bf16.mxu0 0
    %4198 = vmatmul.mubr.bf16.gmra.mrb[0].mxu0 %v2462
    %v4199 = vpop.f32.mrb[0].mxu0
    %v4200 = vadd.f32 %v2543, %v4199
    %v4201 = vpop.f32.mrb[0].mxu0
    %v4202 = vadd.f32 %v2547, %v4201
    %v4203 = vpop.f32.mrb[0].mxu0
    %v4204 = vadd.f32 %v2543, %v4203
    %v4205 = vpop.f32.mrb[0].mxu0
    %v4206 = vadd.f32 %v2547, %v4205
    %4207 = vmatprep.mubr.bf16.mxu0 0
    %4208 = vmatmul.mubr.bf16.gmra.mrb[0].mxu0 %v2463
    %v4209 = vpop.f32.mrb[0].mxu0
    %v4210 = vadd.f32 %v2543, %v4209
    %v4211 = vpop.f32.mrb[0].mxu0
    %v4212 = vadd.f32 %v2547, %v4211
    %v4213 = vpop.f32.mrb[0].mxu0
    %v4214 = vadd.f32 %v2543, %v4213
    %v4215 = vpop.f32.mrb[0].mxu0
    %v4216 = vadd.f32 %v2547, %v4215
    %4217 = vmatprep.mubr.bf16.mxu0 0
    %4218 = vmatmul.mubr.bf16.gmra.mrb[0].mxu0 %v2464
    %v4219 = vpop.f32.mrb[0].mxu0
    %v4220 = vadd.f32 %v2543, %v4219
    %v4221 = vpop.f32.mrb[0].mxu0
    %v4222 = vadd.f32 %v2547, %v4221
    %v4223 = vpop.f32.mrb[0].mxu0
    %v4224 = vadd.f32 %v2543, %v4223
    %v4225 = vpop.f32.mrb[0].mxu0
    %v4226 = vadd.f32 %v2547, %v4225
    %4227 = vmatprep.mubr.bf16.mxu0 0
    %4228 = vmatmul.mubr.bf16.gmra.mrb[0].mxu0 %v2465
    %v4229 = vpop.f32.mrb[0].mxu0
    %v4230 = vadd.f32 %v2543, %v4229
    %v4231 = vpop.f32.mrb[0].mxu0
    %v4232 = vadd.f32 %v2547, %v4231
    %v4233 = vpop.f32.mrb[0].mxu0
    %v4234 = vadd.f32 %v2543, %v4233
    %v4235 = vpop.f32.mrb[0].mxu0
    %v4236 = vadd.f32 %v2547, %v4235
    %4237 = vdwg.mxu0
    %4238 = vmatprep.subr.bf16.mxu0 %v2769
    %4239 = vmatpush1.bf16.msra.mxu0 %v2768
    %4240 = vmatprep.subr.bf16.mxu0 %v2777
    %4241 = vmatpush1.bf16.msra.mxu0 %v2776
    %4242 = vmatprep.subr.bf16.mxu0 %v2785
    %4243 = vmatpush1.bf16.msra.mxu0 %v2784
    %4244 = vmatprep.subr.bf16.mxu0 %v2793
    %4245 = vmatpush1.bf16.msra.mxu0 %v2792
    %4246 = vmatprep.subr.bf16.mxu0 %v2801
    %4247 = vmatpush1.bf16.msra.mxu0 %v2800
    %4248 = vmatprep.subr.bf16.mxu0 %v2809
    %4249 = vmatpush1.bf16.msra.mxu0 %v2808
    %4250 = vmatprep.subr.bf16.mxu0 %v2817
    %4251 = vmatpush1.bf16.msra.mxu0 %v2816
    %4252 = vmatprep.subr.bf16.mxu0 %v2825
    %4253 = vmatpush1.bf16.msra.mxu0 %v2824
    %4254 = vmatprep.subr.bf16.mxu0 0
    %4255 = vmatpush1.bf16.msra.mxu0 0
    %4256 = vmatprep.subr.bf16.mxu0 0
    %4257 = vmatpush1.bf16.msra.mxu0 0
    %4258 = vmatprep.subr.bf16.mxu0 0
    %4259 = vmatpush1.bf16.msra.mxu0 0
    %4260 = vmatprep.subr.bf16.mxu0 0
    %4261 = vmatpush1.bf16.msra.mxu0 0
    %4262 = vmatprep.subr.bf16.mxu0 0
    %4263 = vmatpush1.bf16.msra.mxu0 0
    %4264 = vmatprep.subr.bf16.mxu0 0
    %4265 = vmatpush1.bf16.msra.mxu0 0
    %4266 = vmatprep.subr.bf16.mxu0 0
    %4267 = vmatpush1.bf16.msra.mxu0 0
    %4268 = vmatprep.subr.bf16.mxu0 0
    %4269 = vmatpush1.bf16.msra.mxu0 0
    %4270 = vmatprep.mubr.bf16.mxu0 0
    %4271 = vmatmul.mubr.bf16.gmra.mrb[0].mxu0 %v2402
    %v4272 = vpop.f32.mrb[0].mxu0
    %v4273 = vadd.f32 %v2551, %v4272
    %v4274 = vpop.f32.mrb[0].mxu0
    %v4275 = vadd.f32 %v2555, %v4274
    %v4276 = vpop.f32.mrb[0].mxu0
    %v4277 = vadd.f32 %v2551, %v4276
    %v4278 = vpop.f32.mrb[0].mxu0
    %v4279 = vadd.f32 %v2555, %v4278
    %4280 = vmatprep.mubr.bf16.mxu0 0
    %4281 = vmatmul.mubr.bf16.gmra.mrb[0].mxu0 %v2403
    %v4282 = vpop.f32.mrb[0].mxu0
    %v4283 = vadd.f32 %v2551, %v4282
    %v4284 = vpop.f32.mrb[0].mxu0
    %v4285 = vadd.f32 %v2555, %v4284
    %v4286 = vpop.f32.mrb[0].mxu0
    %v4287 = vadd.f32 %v2551, %v4286
    %v4288 = vpop.f32.mrb[0].mxu0
    %v4289 = vadd.f32 %v2555, %v4288
    %4290 = vmatprep.mubr.bf16.mxu0 0
    %4291 = vmatmul.mubr.bf16.gmra.mrb[0].mxu0 %v2404
    %v4292 = vpop.f32.mrb[0].mxu0
    %v4293 = vadd.f32 %v2551, %v4292
    %v4294 = vpop.f32.mrb[0].mxu0
    %v4295 = vadd.f32 %v2555, %v4294
    %v4296 = vpop.f32.mrb[0].mxu0
    %v4297 = vadd.f32 %v2551, %v4296
    %v4298 = vpop.f32.mrb[0].mxu0
    %v4299 = vadd.f32 %v2555, %v4298
    %4300 = vmatprep.mubr.bf16.mxu0 0
    %4301 = vmatmul.mubr.bf16.gmra.mrb[0].mxu0 %v2405
    %v4302 = vpop.f32.mrb[0].mxu0
    %v4303 = vadd.f32 %v2551, %v4302
    %v4304 = vpop.f32.mrb[0].mxu0
    %v4305 = vadd.f32 %v2555, %v4304
    %v4306 = vpop.f32.mrb[0].mxu0
    %v4307 = vadd.f32 %v2551, %v4306
    %v4308 = vpop.f32.mrb[0].mxu0
    %v4309 = vadd.f32 %v2555, %v4308
    %4310 = vmatprep.mubr.bf16.mxu0 0
    %4311 = vmatmul.mubr.bf16.gmra.mrb[0].mxu0 %v2406
    %v4312 = vpop.f32.mrb[0].mxu0
    %v4313 = vadd.f32 %v2551, %v4312
    %v4314 = vpop.f32.mrb[0].mxu0
    %v4315 = vadd.f32 %v2555, %v4314
    %v4316 = vpop.f32.mrb[0].mxu0
    %v4317 = vadd.f32 %v2551, %v4316
    %v4318 = vpop.f32.mrb[0].mxu0
    %v4319 = vadd.f32 %v2555, %v4318
    %4320 = vmatprep.mubr.bf16.mxu0 0
    %4321 = vmatmul.mubr.bf16.gmra.mrb[0].mxu0 %v2407
    %v4322 = vpop.f32.mrb[0].mxu0
    %v4323 = vadd.f32 %v2551, %v4322
    %v4324 = vpop.f32.mrb[0].mxu0
    %v4325 = vadd.f32 %v2555, %v4324
    %v4326 = vpop.f32.mrb[0].mxu0
    %v4327 = vadd.f32 %v2551, %v4326
    %v4328 = vpop.f32.mrb[0].mxu0
    %v4329 = vadd.f32 %v2555, %v4328
    %4330 = vmatprep.mubr.bf16.mxu0 0
    %4331 = vmatmul.mubr.bf16.gmra.mrb[0].mxu0 %v2408
    %v4332 = vpop.f32.mrb[0].mxu0
    %v4333 = vadd.f32 %v2551, %v4332
    %v4334 = vpop.f32.mrb[0].mxu0
    %v4335 = vadd.f32 %v2555, %v4334
    %v4336 = vpop.f32.mrb[0].mxu0
    %v4337 = vadd.f32 %v2551, %v4336
    %v4338 = vpop.f32.mrb[0].mxu0
    %v4339 = vadd.f32 %v2555, %v4338
    %4340 = vmatprep.mubr.bf16.mxu0 0
    %4341 = vmatmul.mubr.bf16.gmra.mrb[0].mxu0 %v2409
    %v4342 = vpop.f32.mrb[0].mxu0
    %v4343 = vadd.f32 %v2551, %v4342
    %v4344 = vpop.f32.mrb[0].mxu0
    %v4345 = vadd.f32 %v2555, %v4344
    %v4346 = vpop.f32.mrb[0].mxu0
    %v4347 = vadd.f32 %v2551, %v4346
    %v4348 = vpop.f32.mrb[0].mxu0
    %v4349 = vadd.f32 %v2555, %v4348
    %4350 = vmatprep.mubr.bf16.mxu0 0
    %4351 = vmatmul.mubr.bf16.gmra.mrb[0].mxu0 %v2410
    %v4352 = vpop.f32.mrb[0].mxu0
    %v4353 = vadd.f32 %v2551, %v4352
    %v4354 = vpop.f32.mrb[0].mxu0
    %v4355 = vadd.f32 %v2555, %v4354
    %v4356 = vpop.f32.mrb[0].mxu0
    %v4357 = vadd.f32 %v2551, %v4356
    %v4358 = vpop.f32.mrb[0].mxu0
    %v4359 = vadd.f32 %v2555, %v4358
    %4360 = vmatprep.mubr.bf16.mxu0 0
    %4361 = vmatmul.mubr.bf16.gmra.mrb[0].mxu0 %v2411
    %v4362 = vpop.f32.mrb[0].mxu0
    %v4363 = vadd.f32 %v2551, %v4362
    %v4364 = vpop.f32.mrb[0].mxu0
    %v4365 = vadd.f32 %v2555, %v4364
    %v4366 = vpop.f32.mrb[0].mxu0
    %v4367 = vadd.f32 %v2551, %v4366
    %v4368 = vpop.f32.mrb[0].mxu0
    %v4369 = vadd.f32 %v2555, %v4368
    %4370 = vmatprep.mubr.bf16.mxu0 0
    %4371 = vmatmul.mubr.bf16.gmra.mrb[0].mxu0 %v2412
    %v4372 = vpop.f32.mrb[0].mxu0
    %v4373 = vadd.f32 %v2551, %v4372
    %v4374 = vpop.f32.mrb[0].mxu0
    %v4375 = vadd.f32 %v2555, %v4374
    %v4376 = vpop.f32.mrb[0].mxu0
    %v4377 = vadd.f32 %v2551, %v4376
    %v4378 = vpop.f32.mrb[0].mxu0
    %v4379 = vadd.f32 %v2555, %v4378
    %4380 = vmatprep.mubr.bf16.mxu0 0
    %4381 = vmatmul.mubr.bf16.gmra.mrb[0].mxu0 %v2413
    %v4382 = vpop.f32.mrb[0].mxu0
    %v4383 = vadd.f32 %v2551, %v4382
    %v4384 = vpop.f32.mrb[0].mxu0
    %v4385 = vadd.f32 %v2555, %v4384
    %v4386 = vpop.f32.mrb[0].mxu0
    %v4387 = vadd.f32 %v2551, %v4386
    %v4388 = vpop.f32.mrb[0].mxu0
    %v4389 = vadd.f32 %v2555, %v4388
    %4390 = vmatprep.mubr.bf16.mxu0 0
    %4391 = vmatmul.mubr.bf16.gmra.mrb[0].mxu0 %v2414
    %v4392 = vpop.f32.mrb[0].mxu0
    %v4393 = vadd.f32 %v2551, %v4392
    %v4394 = vpop.f32.mrb[0].mxu0
    %v4395 = vadd.f32 %v2555, %v4394
    %v4396 = vpop.f32.mrb[0].mxu0
    %v4397 = vadd.f32 %v2551, %v4396
    %v4398 = vpop.f32.mrb[0].mxu0
    %v4399 = vadd.f32 %v2555, %v4398
    %4400 = vmatprep.mubr.bf16.mxu0 0
    %4401 = vmatmul.mubr.bf16.gmra.mrb[0].mxu0 %v2415
    %v4402 = vpop.f32.mrb[0].mxu0
    %v4403 = vadd.f32 %v2551, %v4402
    %v4404 = vpop.f32.mrb[0].mxu0
    %v4405 = vadd.f32 %v2555, %v4404
    %v4406 = vpop.f32.mrb[0].mxu0
    %v4407 = vadd.f32 %v2551, %v4406
    %v4408 = vpop.f32.mrb[0].mxu0
    %v4409 = vadd.f32 %v2555, %v4408
    %4410 = vmatprep.mubr.bf16.mxu0 0
    %4411 = vmatmul.mubr.bf16.gmra.mrb[0].mxu0 %v2416
    %v4412 = vpop.f32.mrb[0].mxu0
    %v4413 = vadd.f32 %v2551, %v4412
    %v4414 = vpop.f32.mrb[0].mxu0
    %v4415 = vadd.f32 %v2555, %v4414
    %v4416 = vpop.f32.mrb[0].mxu0
    %v4417 = vadd.f32 %v2551, %v4416
    %v4418 = vpop.f32.mrb[0].mxu0
    %v4419 = vadd.f32 %v2555, %v4418
    %4420 = vmatprep.mubr.bf16.mxu0 0
    %4421 = vmatmul.mubr.bf16.gmra.mrb[0].mxu0 %v2417
    %v4422 = vpop.f32.mrb[0].mxu0
    %v4423 = vadd.f32 %v2551, %v4422
    %v4424 = vpop.f32.mrb[0].mxu0
    %v4425 = vadd.f32 %v2555, %v4424
    %v4426 = vpop.f32.mrb[0].mxu0
    %v4427 = vadd.f32 %v2551, %v4426
    %v4428 = vpop.f32.mrb[0].mxu0
    %v4429 = vadd.f32 %v2555, %v4428
    %4430 = vmatprep.mubr.bf16.mxu0 0
    %4431 = vmatmul.mubr.bf16.gmra.mrb[0].mxu0 %v2418
    %v4432 = vpop.f32.mrb[0].mxu0
    %v4433 = vadd.f32 %v2551, %v4432
    %v4434 = vpop.f32.mrb[0].mxu0
    %v4435 = vadd.f32 %v2555, %v4434
    %v4436 = vpop.f32.mrb[0].mxu0
    %v4437 = vadd.f32 %v2551, %v4436
    %v4438 = vpop.f32.mrb[0].mxu0
    %v4439 = vadd.f32 %v2555, %v4438
    %4440 = vmatprep.mubr.bf16.mxu0 0
    %4441 = vmatmul.mubr.bf16.gmra.mrb[0].mxu0 %v2419
    %v4442 = vpop.f32.mrb[0].mxu0
    %v4443 = vadd.f32 %v2551, %v4442
    %v4444 = vpop.f32.mrb[0].mxu0
    %v4445 = vadd.f32 %v2555, %v4444
    %v4446 = vpop.f32.mrb[0].mxu0
    %v4447 = vadd.f32 %v2551, %v4446
    %v4448 = vpop.f32.mrb[0].mxu0
    %v4449 = vadd.f32 %v2555, %v4448
    %4450 = vmatprep.mubr.bf16.mxu0 0
    %4451 = vmatmul.mubr.bf16.gmra.mrb[0].mxu0 %v2420
    %v4452 = vpop.f32.mrb[0].mxu0
    %v4453 = vadd.f32 %v2551, %v4452
    %v4454 = vpop.f32.mrb[0].mxu0
    %v4455 = vadd.f32 %v2555, %v4454
    %v4456 = vpop.f32.mrb[0].mxu0
    %v4457 = vadd.f32 %v2551, %v4456
    %v4458 = vpop.f32.mrb[0].mxu0
    %v4459 = vadd.f32 %v2555, %v4458
    %4460 = vmatprep.mubr.bf16.mxu0 0
    %4461 = vmatmul.mubr.bf16.gmra.mrb[0].mxu0 %v2421
    %v4462 = vpop.f32.mrb[0].mxu0
    %v4463 = vadd.f32 %v2551, %v4462
    %v4464 = vpop.f32.mrb[0].mxu0
    %v4465 = vadd.f32 %v2555, %v4464
    %v4466 = vpop.f32.mrb[0].mxu0
    %v4467 = vadd.f32 %v2551, %v4466
    %v4468 = vpop.f32.mrb[0].mxu0
    %v4469 = vadd.f32 %v2555, %v4468
    %4470 = vmatprep.mubr.bf16.mxu0 0
    %4471 = vmatmul.mubr.bf16.gmra.mrb[0].mxu0 %v2422
    %v4472 = vpop.f32.mrb[0].mxu0
    %v4473 = vadd.f32 %v2551, %v4472
    %v4474 = vpop.f32.mrb[0].mxu0
    %v4475 = vadd.f32 %v2555, %v4474
    %v4476 = vpop.f32.mrb[0].mxu0
    %v4477 = vadd.f32 %v2551, %v4476
    %v4478 = vpop.f32.mrb[0].mxu0
    %v4479 = vadd.f32 %v2555, %v4478
    %4480 = vmatprep.mubr.bf16.mxu0 0
    %4481 = vmatmul.mubr.bf16.gmra.mrb[0].mxu0 %v2423
    %v4482 = vpop.f32.mrb[0].mxu0
    %v4483 = vadd.f32 %v2551, %v4482
    %v4484 = vpop.f32.mrb[0].mxu0
    %v4485 = vadd.f32 %v2555, %v4484
    %v4486 = vpop.f32.mrb[0].mxu0
    %v4487 = vadd.f32 %v2551, %v4486
    %v4488 = vpop.f32.mrb[0].mxu0
    %v4489 = vadd.f32 %v2555, %v4488
    %4490 = vmatprep.mubr.bf16.mxu0 0
    %4491 = vmatmul.mubr.bf16.gmra.mrb[0].mxu0 %v2424
    %v4492 = vpop.f32.mrb[0].mxu0
    %v4493 = vadd.f32 %v2551, %v4492
    %v4494 = vpop.f32.mrb[0].mxu0
    %v4495 = vadd.f32 %v2555, %v4494
    %v4496 = vpop.f32.mrb[0].mxu0
    %v4497 = vadd.f32 %v2551, %v4496
    %v4498 = vpop.f32.mrb[0].mxu0
    %v4499 = vadd.f32 %v2555, %v4498
    %4500 = vmatprep.mubr.bf16.mxu0 0
    %4501 = vmatmul.mubr.bf16.gmra.mrb[0].mxu0 %v2425
    %v4502 = vpop.f32.mrb[0].mxu0
    %v4503 = vadd.f32 %v2551, %v4502
    %v4504 = vpop.f32.mrb[0].mxu0
    %v4505 = vadd.f32 %v2555, %v4504
    %v4506 = vpop.f32.mrb[0].mxu0
    %v4507 = vadd.f32 %v2551, %v4506
    %v4508 = vpop.f32.mrb[0].mxu0
    %v4509 = vadd.f32 %v2555, %v4508
    %4510 = vmatprep.mubr.bf16.mxu0 0
    %4511 = vmatmul.mubr.bf16.gmra.mrb[0].mxu0 %v2426
    %v4512 = vpop.f32.mrb[0].mxu0
    %v4513 = vadd.f32 %v2551, %v4512
    %v4514 = vpop.f32.mrb[0].mxu0
    %v4515 = vadd.f32 %v2555, %v4514
    %v4516 = vpop.f32.mrb[0].mxu0
    %v4517 = vadd.f32 %v2551, %v4516
    %v4518 = vpop.f32.mrb[0].mxu0
    %v4519 = vadd.f32 %v2555, %v4518
    %4520 = vmatprep.mubr.bf16.mxu0 0
    %4521 = vmatmul.mubr.bf16.gmra.mrb[0].mxu0 %v2427
    %v4522 = vpop.f32.mrb[0].mxu0
    %v4523 = vadd.f32 %v2551, %v4522
    %v4524 = vpop.f32.mrb[0].mxu0
    %v4525 = vadd.f32 %v2555, %v4524
    %v4526 = vpop.f32.mrb[0].mxu0
    %v4527 = vadd.f32 %v2551, %v4526
    %v4528 = vpop.f32.mrb[0].mxu0
    %v4529 = vadd.f32 %v2555, %v4528
    %4530 = vmatprep.mubr.bf16.mxu0 0
    %4531 = vmatmul.mubr.bf16.gmra.mrb[0].mxu0 %v2428
    %v4532 = vpop.f32.mrb[0].mxu0
    %v4533 = vadd.f32 %v2551, %v4532
    %v4534 = vpop.f32.mrb[0].mxu0
    %v4535 = vadd.f32 %v2555, %v4534
    %v4536 = vpop.f32.mrb[0].mxu0
    %v4537 = vadd.f32 %v2551, %v4536
    %v4538 = vpop.f32.mrb[0].mxu0
    %v4539 = vadd.f32 %v2555, %v4538
    %4540 = vmatprep.mubr.bf16.mxu0 0
    %4541 = vmatmul.mubr.bf16.gmra.mrb[0].mxu0 %v2429
    %v4542 = vpop.f32.mrb[0].mxu0
    %v4543 = vadd.f32 %v2551, %v4542
    %v4544 = vpop.f32.mrb[0].mxu0
    %v4545 = vadd.f32 %v2555, %v4544
    %v4546 = vpop.f32.mrb[0].mxu0
    %v4547 = vadd.f32 %v2551, %v4546
    %v4548 = vpop.f32.mrb[0].mxu0
    %v4549 = vadd.f32 %v2555, %v4548
    %4550 = vmatprep.mubr.bf16.mxu0 0
    %4551 = vmatmul.mubr.bf16.gmra.mrb[0].mxu0 %v2430
    %v4552 = vpop.f32.mrb[0].mxu0
    %v4553 = vadd.f32 %v2551, %v4552
    %v4554 = vpop.f32.mrb[0].mxu0
    %v4555 = vadd.f32 %v2555, %v4554
    %v4556 = vpop.f32.mrb[0].mxu0
    %v4557 = vadd.f32 %v2551, %v4556
    %v4558 = vpop.f32.mrb[0].mxu0
    %v4559 = vadd.f32 %v2555, %v4558
    %4560 = vmatprep.mubr.bf16.mxu0 0
    %4561 = vmatmul.mubr.bf16.gmra.mrb[0].mxu0 %v2431
    %v4562 = vpop.f32.mrb[0].mxu0
    %v4563 = vadd.f32 %v2551, %v4562
    %v4564 = vpop.f32.mrb[0].mxu0
    %v4565 = vadd.f32 %v2555, %v4564
    %v4566 = vpop.f32.mrb[0].mxu0
    %v4567 = vadd.f32 %v2551, %v4566
    %v4568 = vpop.f32.mrb[0].mxu0
    %v4569 = vadd.f32 %v2555, %v4568
    %4570 = vmatprep.mubr.bf16.mxu0 0
    %4571 = vmatmul.mubr.bf16.gmra.mrb[0].mxu0 %v2432
    %v4572 = vpop.f32.mrb[0].mxu0
    %v4573 = vadd.f32 %v2551, %v4572
    %v4574 = vpop.f32.mrb[0].mxu0
    %v4575 = vadd.f32 %v2555, %v4574
    %v4576 = vpop.f32.mrb[0].mxu0
    %v4577 = vadd.f32 %v2551, %v4576
    %v4578 = vpop.f32.mrb[0].mxu0
    %v4579 = vadd.f32 %v2555, %v4578
    %4580 = vmatprep.mubr.bf16.mxu0 0
    %4581 = vmatmul.mubr.bf16.gmra.mrb[0].mxu0 %v2433
    %v4582 = vpop.f32.mrb[0].mxu0
    %v4583 = vadd.f32 %v2551, %v4582
    %v4584 = vpop.f32.mrb[0].mxu0
    %v4585 = vadd.f32 %v2555, %v4584
    %v4586 = vpop.f32.mrb[0].mxu0
    %v4587 = vadd.f32 %v2551, %v4586
    %v4588 = vpop.f32.mrb[0].mxu0
    %v4589 = vadd.f32 %v2555, %v4588
    %4590 = vmatprep.mubr.bf16.mxu0 0
    %4591 = vmatmul.mubr.bf16.gmra.mrb[0].mxu0 %v2434
    %v4592 = vpop.f32.mrb[0].mxu0
    %v4593 = vadd.f32 %v2551, %v4592
    %v4594 = vpop.f32.mrb[0].mxu0
    %v4595 = vadd.f32 %v2555, %v4594
    %v4596 = vpop.f32.mrb[0].mxu0
    %v4597 = vadd.f32 %v2551, %v4596
    %v4598 = vpop.f32.mrb[0].mxu0
    %v4599 = vadd.f32 %v2555, %v4598
    %4600 = vmatprep.mubr.bf16.mxu0 0
    %4601 = vmatmul.mubr.bf16.gmra.mrb[0].mxu0 %v2435
    %v4602 = vpop.f32.mrb[0].mxu0
    %v4603 = vadd.f32 %v2551, %v4602
    %v4604 = vpop.f32.mrb[0].mxu0
    %v4605 = vadd.f32 %v2555, %v4604
    %v4606 = vpop.f32.mrb[0].mxu0
    %v4607 = vadd.f32 %v2551, %v4606
    %v4608 = vpop.f32.mrb[0].mxu0
    %v4609 = vadd.f32 %v2555, %v4608
    %4610 = vmatprep.mubr.bf16.mxu0 0
    %4611 = vmatmul.mubr.bf16.gmra.mrb[0].mxu0 %v2436
    %v4612 = vpop.f32.mrb[0].mxu0
    %v4613 = vadd.f32 %v2551, %v4612
    %v4614 = vpop.f32.mrb[0].mxu0
    %v4615 = vadd.f32 %v2555, %v4614
    %v4616 = vpop.f32.mrb[0].mxu0
    %v4617 = vadd.f32 %v2551, %v4616
    %v4618 = vpop.f32.mrb[0].mxu0
    %v4619 = vadd.f32 %v2555, %v4618
    %4620 = vmatprep.mubr.bf16.mxu0 0
    %4621 = vmatmul.mubr.bf16.gmra.mrb[0].mxu0 %v2437
    %v4622 = vpop.f32.mrb[0].mxu0
    %v4623 = vadd.f32 %v2551, %v4622
    %v4624 = vpop.f32.mrb[0].mxu0
    %v4625 = vadd.f32 %v2555, %v4624
    %v4626 = vpop.f32.mrb[0].mxu0
    %v4627 = vadd.f32 %v2551, %v4626
    %v4628 = vpop.f32.mrb[0].mxu0
    %v4629 = vadd.f32 %v2555, %v4628
    %4630 = vmatprep.mubr.bf16.mxu0 0
    %4631 = vmatmul.mubr.bf16.gmra.mrb[0].mxu0 %v2438
    %v4632 = vpop.f32.mrb[0].mxu0
    %v4633 = vadd.f32 %v2551, %v4632
    %v4634 = vpop.f32.mrb[0].mxu0
    %v4635 = vadd.f32 %v2555, %v4634
    %v4636 = vpop.f32.mrb[0].mxu0
    %v4637 = vadd.f32 %v2551, %v4636
    %v4638 = vpop.f32.mrb[0].mxu0
    %v4639 = vadd.f32 %v2555, %v4638
    %4640 = vmatprep.mubr.bf16.mxu0 0
    %4641 = vmatmul.mubr.bf16.gmra.mrb[0].mxu0 %v2439
    %v4642 = vpop.f32.mrb[0].mxu0
    %v4643 = vadd.f32 %v2551, %v4642
    %v4644 = vpop.f32.mrb[0].mxu0
    %v4645 = vadd.f32 %v2555, %v4644
    %v4646 = vpop.f32.mrb[0].mxu0
    %v4647 = vadd.f32 %v2551, %v4646
    %v4648 = vpop.f32.mrb[0].mxu0
    %v4649 = vadd.f32 %v2555, %v4648
    %4650 = vmatprep.mubr.bf16.mxu0 0
    %4651 = vmatmul.mubr.bf16.gmra.mrb[0].mxu0 %v2440
    %v4652 = vpop.f32.mrb[0].mxu0
    %v4653 = vadd.f32 %v2551, %v4652
    %v4654 = vpop.f32.mrb[0].mxu0
    %v4655 = vadd.f32 %v2555, %v4654
    %v4656 = vpop.f32.mrb[0].mxu0
    %v4657 = vadd.f32 %v2551, %v4656
    %v4658 = vpop.f32.mrb[0].mxu0
    %v4659 = vadd.f32 %v2555, %v4658
    %4660 = vmatprep.mubr.bf16.mxu0 0
    %4661 = vmatmul.mubr.bf16.gmra.mrb[0].mxu0 %v2441
    %v4662 = vpop.f32.mrb[0].mxu0
    %v4663 = vadd.f32 %v2551, %v4662
    %v4664 = vpop.f32.mrb[0].mxu0
    %v4665 = vadd.f32 %v2555, %v4664
    %v4666 = vpop.f32.mrb[0].mxu0
    %v4667 = vadd.f32 %v2551, %v4666
    %v4668 = vpop.f32.mrb[0].mxu0
    %v4669 = vadd.f32 %v2555, %v4668
    %4670 = vmatprep.mubr.bf16.mxu0 0
    %4671 = vmatmul.mubr.bf16.gmra.mrb[0].mxu0 %v2442
    %v4672 = vpop.f32.mrb[0].mxu0
    %v4673 = vadd.f32 %v2551, %v4672
    %v4674 = vpop.f32.mrb[0].mxu0
    %v4675 = vadd.f32 %v2555, %v4674
    %v4676 = vpop.f32.mrb[0].mxu0
    %v4677 = vadd.f32 %v2551, %v4676
    %v4678 = vpop.f32.mrb[0].mxu0
    %v4679 = vadd.f32 %v2555, %v4678
    %4680 = vmatprep.mubr.bf16.mxu0 0
    %4681 = vmatmul.mubr.bf16.gmra.mrb[0].mxu0 %v2443
    %v4682 = vpop.f32.mrb[0].mxu0
    %v4683 = vadd.f32 %v2551, %v4682
    %v4684 = vpop.f32.mrb[0].mxu0
    %v4685 = vadd.f32 %v2555, %v4684
    %v4686 = vpop.f32.mrb[0].mxu0
    %v4687 = vadd.f32 %v2551, %v4686
    %v4688 = vpop.f32.mrb[0].mxu0
    %v4689 = vadd.f32 %v2555, %v4688
    %4690 = vmatprep.mubr.bf16.mxu0 0
    %4691 = vmatmul.mubr.bf16.gmra.mrb[0].mxu0 %v2444
    %v4692 = vpop.f32.mrb[0].mxu0
    %v4693 = vadd.f32 %v2551, %v4692
    %v4694 = vpop.f32.mrb[0].mxu0
    %v4695 = vadd.f32 %v2555, %v4694
    %v4696 = vpop.f32.mrb[0].mxu0
    %v4697 = vadd.f32 %v2551, %v4696
    %v4698 = vpop.f32.mrb[0].mxu0
    %v4699 = vadd.f32 %v2555, %v4698
    %4700 = vmatprep.mubr.bf16.mxu0 0
    %4701 = vmatmul.mubr.bf16.gmra.mrb[0].mxu0 %v2445
    %v4702 = vpop.f32.mrb[0].mxu0
    %v4703 = vadd.f32 %v2551, %v4702
    %v4704 = vpop.f32.mrb[0].mxu0
    %v4705 = vadd.f32 %v2555, %v4704
    %v4706 = vpop.f32.mrb[0].mxu0
    %v4707 = vadd.f32 %v2551, %v4706
    %v4708 = vpop.f32.mrb[0].mxu0
    %v4709 = vadd.f32 %v2555, %v4708
    %4710 = vmatprep.mubr.bf16.mxu0 0
    %4711 = vmatmul.mubr.bf16.gmra.mrb[0].mxu0 %v2446
    %v4712 = vpop.f32.mrb[0].mxu0
    %v4713 = vadd.f32 %v2551, %v4712
    %v4714 = vpop.f32.mrb[0].mxu0
    %v4715 = vadd.f32 %v2555, %v4714
    %v4716 = vpop.f32.mrb[0].mxu0
    %v4717 = vadd.f32 %v2551, %v4716
    %v4718 = vpop.f32.mrb[0].mxu0
    %v4719 = vadd.f32 %v2555, %v4718
    %4720 = vmatprep.mubr.bf16.mxu0 0
    %4721 = vmatmul.mubr.bf16.gmra.mrb[0].mxu0 %v2447
    %v4722 = vpop.f32.mrb[0].mxu0
    %v4723 = vadd.f32 %v2551, %v4722
    %v4724 = vpop.f32.mrb[0].mxu0
    %v4725 = vadd.f32 %v2555, %v4724
    %v4726 = vpop.f32.mrb[0].mxu0
    %v4727 = vadd.f32 %v2551, %v4726
    %v4728 = vpop.f32.mrb[0].mxu0
    %v4729 = vadd.f32 %v2555, %v4728
    %4730 = vmatprep.mubr.bf16.mxu0 0
    %4731 = vmatmul.mubr.bf16.gmra.mrb[0].mxu0 %v2448
    %v4732 = vpop.f32.mrb[0].mxu0
    %v4733 = vadd.f32 %v2551, %v4732
    %v4734 = vpop.f32.mrb[0].mxu0
    %v4735 = vadd.f32 %v2555, %v4734
    %v4736 = vpop.f32.mrb[0].mxu0
    %v4737 = vadd.f32 %v2551, %v4736
    %v4738 = vpop.f32.mrb[0].mxu0
    %v4739 = vadd.f32 %v2555, %v4738
    %4740 = vmatprep.mubr.bf16.mxu0 0
    %4741 = vmatmul.mubr.bf16.gmra.mrb[0].mxu0 %v2449
    %v4742 = vpop.f32.mrb[0].mxu0
    %v4743 = vadd.f32 %v2551, %v4742
    %v4744 = vpop.f32.mrb[0].mxu0
    %v4745 = vadd.f32 %v2555, %v4744
    %v4746 = vpop.f32.mrb[0].mxu0
    %v4747 = vadd.f32 %v2551, %v4746
    %v4748 = vpop.f32.mrb[0].mxu0
    %v4749 = vadd.f32 %v2555, %v4748
    %4750 = vmatprep.mubr.bf16.mxu0 0
    %4751 = vmatmul.mubr.bf16.gmra.mrb[0].mxu0 %v2450
    %v4752 = vpop.f32.mrb[0].mxu0
    %v4753 = vadd.f32 %v2551, %v4752
    %v4754 = vpop.f32.mrb[0].mxu0
    %v4755 = vadd.f32 %v2555, %v4754
    %v4756 = vpop.f32.mrb[0].mxu0
    %v4757 = vadd.f32 %v2551, %v4756
    %v4758 = vpop.f32.mrb[0].mxu0
    %v4759 = vadd.f32 %v2555, %v4758
    %4760 = vmatprep.mubr.bf16.mxu0 0
    %4761 = vmatmul.mubr.bf16.gmra.mrb[0].mxu0 %v2451
    %v4762 = vpop.f32.mrb[0].mxu0
    %v4763 = vadd.f32 %v2551, %v4762
    %v4764 = vpop.f32.mrb[0].mxu0
    %v4765 = vadd.f32 %v2555, %v4764
    %v4766 = vpop.f32.mrb[0].mxu0
    %v4767 = vadd.f32 %v2551, %v4766
    %v4768 = vpop.f32.mrb[0].mxu0
    %v4769 = vadd.f32 %v2555, %v4768
    %4770 = vmatprep.mubr.bf16.mxu0 0
    %4771 = vmatmul.mubr.bf16.gmra.mrb[0].mxu0 %v2452
    %v4772 = vpop.f32.mrb[0].mxu0
    %v4773 = vadd.f32 %v2551, %v4772
    %v4774 = vpop.f32.mrb[0].mxu0
    %v4775 = vadd.f32 %v2555, %v4774
    %v4776 = vpop.f32.mrb[0].mxu0
    %v4777 = vadd.f32 %v2551, %v4776
    %v4778 = vpop.f32.mrb[0].mxu0
    %v4779 = vadd.f32 %v2555, %v4778
    %4780 = vmatprep.mubr.bf16.mxu0 0
    %4781 = vmatmul.mubr.bf16.gmra.mrb[0].mxu0 %v2453
    %v4782 = vpop.f32.mrb[0].mxu0
    %v4783 = vadd.f32 %v2551, %v4782
    %v4784 = vpop.f32.mrb[0].mxu0
    %v4785 = vadd.f32 %v2555, %v4784
    %v4786 = vpop.f32.mrb[0].mxu0
    %v4787 = vadd.f32 %v2551, %v4786
    %v4788 = vpop.f32.mrb[0].mxu0
    %v4789 = vadd.f32 %v2555, %v4788
    %4790 = vmatprep.mubr.bf16.mxu0 0
    %4791 = vmatmul.mubr.bf16.gmra.mrb[0].mxu0 %v2454
    %v4792 = vpop.f32.mrb[0].mxu0
    %v4793 = vadd.f32 %v2551, %v4792
    %v4794 = vpop.f32.mrb[0].mxu0
    %v4795 = vadd.f32 %v2555, %v4794
    %v4796 = vpop.f32.mrb[0].mxu0
    %v4797 = vadd.f32 %v2551, %v4796
    %v4798 = vpop.f32.mrb[0].mxu0
    %v4799 = vadd.f32 %v2555, %v4798
    %4800 = vmatprep.mubr.bf16.mxu0 0
    %4801 = vmatmul.mubr.bf16.gmra.mrb[0].mxu0 %v2455
    %v4802 = vpop.f32.mrb[0].mxu0
    %v4803 = vadd.f32 %v2551, %v4802
    %v4804 = vpop.f32.mrb[0].mxu0
    %v4805 = vadd.f32 %v2555, %v4804
    %v4806 = vpop.f32.mrb[0].mxu0
    %v4807 = vadd.f32 %v2551, %v4806
    %v4808 = vpop.f32.mrb[0].mxu0
    %v4809 = vadd.f32 %v2555, %v4808
    %4810 = vmatprep.mubr.bf16.mxu0 0
    %4811 = vmatmul.mubr.bf16.gmra.mrb[0].mxu0 %v2456
    %v4812 = vpop.f32.mrb[0].mxu0
    %v4813 = vadd.f32 %v2551, %v4812
    %v4814 = vpop.f32.mrb[0].mxu0
    %v4815 = vadd.f32 %v2555, %v4814
    %v4816 = vpop.f32.mrb[0].mxu0
    %v4817 = vadd.f32 %v2551, %v4816
    %v4818 = vpop.f32.mrb[0].mxu0
    %v4819 = vadd.f32 %v2555, %v4818
    %4820 = vmatprep.mubr.bf16.mxu0 0
    %4821 = vmatmul.mubr.bf16.gmra.mrb[0].mxu0 %v2457
    %v4822 = vpop.f32.mrb[0].mxu0
    %v4823 = vadd.f32 %v2551, %v4822
    %v4824 = vpop.f32.mrb[0].mxu0
    %v4825 = vadd.f32 %v2555, %v4824
    %v4826 = vpop.f32.mrb[0].mxu0
    %v4827 = vadd.f32 %v2551, %v4826
    %v4828 = vpop.f32.mrb[0].mxu0
    %v4829 = vadd.f32 %v2555, %v4828
    %4830 = vmatprep.mubr.bf16.mxu0 0
    %4831 = vmatmul.mubr.bf16.gmra.mrb[0].mxu0 %v2458
    %v4832 = vpop.f32.mrb[0].mxu0
    %v4833 = vadd.f32 %v2551, %v4832
    %v4834 = vpop.f32.mrb[0].mxu0
    %v4835 = vadd.f32 %v2555, %v4834
    %v4836 = vpop.f32.mrb[0].mxu0
    %v4837 = vadd.f32 %v2551, %v4836
    %v4838 = vpop.f32.mrb[0].mxu0
    %v4839 = vadd.f32 %v2555, %v4838
    %4840 = vmatprep.mubr.bf16.mxu0 0
    %4841 = vmatmul.mubr.bf16.gmra.mrb[0].mxu0 %v2459
    %v4842 = vpop.f32.mrb[0].mxu0
    %v4843 = vadd.f32 %v2551, %v4842
    %v4844 = vpop.f32.mrb[0].mxu0
    %v4845 = vadd.f32 %v2555, %v4844
    %v4846 = vpop.f32.mrb[0].mxu0
    %v4847 = vadd.f32 %v2551, %v4846
    %v4848 = vpop.f32.mrb[0].mxu0
    %v4849 = vadd.f32 %v2555, %v4848
    %4850 = vmatprep.mubr.bf16.mxu0 0
    %4851 = vmatmul.mubr.bf16.gmra.mrb[0].mxu0 %v2460
    %v4852 = vpop.f32.mrb[0].mxu0
    %v4853 = vadd.f32 %v2551, %v4852
    %v4854 = vpop.f32.mrb[0].mxu0
    %v4855 = vadd.f32 %v2555, %v4854
    %v4856 = vpop.f32.mrb[0].mxu0
    %v4857 = vadd.f32 %v2551, %v4856
    %v4858 = vpop.f32.mrb[0].mxu0
    %v4859 = vadd.f32 %v2555, %v4858
    %4860 = vmatprep.mubr.bf16.mxu0 0
    %4861 = vmatmul.mubr.bf16.gmra.mrb[0].mxu0 %v2461
    %v4862 = vpop.f32.mrb[0].mxu0
    %v4863 = vadd.f32 %v2551, %v4862
    %v4864 = vpop.f32.mrb[0].mxu0
    %v4865 = vadd.f32 %v2555, %v4864
    %v4866 = vpop.f32.mrb[0].mxu0
    %v4867 = vadd.f32 %v2551, %v4866
    %v4868 = vpop.f32.mrb[0].mxu0
    %v4869 = vadd.f32 %v2555, %v4868
    %4870 = vmatprep.mubr.bf16.mxu0 0
    %4871 = vmatmul.mubr.bf16.gmra.mrb[0].mxu0 %v2462
    %v4872 = vpop.f32.mrb[0].mxu0
    %v4873 = vadd.f32 %v2551, %v4872
    %v4874 = vpop.f32.mrb[0].mxu0
    %v4875 = vadd.f32 %v2555, %v4874
    %v4876 = vpop.f32.mrb[0].mxu0
    %v4877 = vadd.f32 %v2551, %v4876
    %v4878 = vpop.f32.mrb[0].mxu0
    %v4879 = vadd.f32 %v2555, %v4878
    %4880 = vmatprep.mubr.bf16.mxu0 0
    %4881 = vmatmul.mubr.bf16.gmra.mrb[0].mxu0 %v2463
    %v4882 = vpop.f32.mrb[0].mxu0
    %v4883 = vadd.f32 %v2551, %v4882
    %v4884 = vpop.f32.mrb[0].mxu0
    %v4885 = vadd.f32 %v2555, %v4884
    %v4886 = vpop.f32.mrb[0].mxu0
    %v4887 = vadd.f32 %v2551, %v4886
    %v4888 = vpop.f32.mrb[0].mxu0
    %v4889 = vadd.f32 %v2555, %v4888
    %4890 = vmatprep.mubr.bf16.mxu0 0
    %4891 = vmatmul.mubr.bf16.gmra.mrb[0].mxu0 %v2464
    %v4892 = vpop.f32.mrb[0].mxu0
    %v4893 = vadd.f32 %v2551, %v4892
    %v4894 = vpop.f32.mrb[0].mxu0
    %v4895 = vadd.f32 %v2555, %v4894
    %v4896 = vpop.f32.mrb[0].mxu0
    %v4897 = vadd.f32 %v2551, %v4896
    %v4898 = vpop.f32.mrb[0].mxu0
    %v4899 = vadd.f32 %v2555, %v4898
    %4900 = vmatprep.mubr.bf16.mxu0 0
    %4901 = vmatmul.mubr.bf16.gmra.mrb[0].mxu0 %v2465
    %v4902 = vpop.f32.mrb[0].mxu0
    %v4903 = vadd.f32 %v2551, %v4902
    %v4904 = vpop.f32.mrb[0].mxu0
    %v4905 = vadd.f32 %v2555, %v4904
    %v4906 = vpop.f32.mrb[0].mxu0
    %v4907 = vadd.f32 %v2551, %v4906
    %v4908 = vpop.f32.mrb[0].mxu0
    %v4909 = vadd.f32 %v2555, %v4908
    %4910 = vdwg.mxu0
    %4911 = vmatprep.subr.bf16.mxu0 %v2771
    %4912 = vmatpush1.bf16.msra.mxu0 %v2770
    %4913 = vmatprep.subr.bf16.mxu0 %v2779
    %4914 = vmatpush1.bf16.msra.mxu0 %v2778
    %4915 = vmatprep.subr.bf16.mxu0 %v2787
    %4916 = vmatpush1.bf16.msra.mxu0 %v2786
    %4917 = vmatprep.subr.bf16.mxu0 %v2795
    %4918 = vmatpush1.bf16.msra.mxu0 %v2794
    %4919 = vmatprep.subr.bf16.mxu0 %v2803
    %4920 = vmatpush1.bf16.msra.mxu0 %v2802
    %4921 = vmatprep.subr.bf16.mxu0 %v2811
    %4922 = vmatpush1.bf16.msra.mxu0 %v2810
    %4923 = vmatprep.subr.bf16.mxu0 %v2819
    %4924 = vmatpush1.bf16.msra.mxu0 %v2818
    %4925 = vmatprep.subr.bf16.mxu0 %v2827
    %4926 = vmatpush1.bf16.msra.mxu0 %v2826
    %4927 = vmatprep.subr.bf16.mxu0 0
    %4928 = vmatpush1.bf16.msra.mxu0 0
    %4929 = vmatprep.subr.bf16.mxu0 0
    %4930 = vmatpush1.bf16.msra.mxu0 0
    %4931 = vmatprep.subr.bf16.mxu0 0
    %4932 = vmatpush1.bf16.msra.mxu0 0
    %4933 = vmatprep.subr.bf16.mxu0 0
    %4934 = vmatpush1.bf16.msra.mxu0 0
    %4935 = vmatprep.subr.bf16.mxu0 0
    %4936 = vmatpush1.bf16.msra.mxu0 0
    %4937 = vmatprep.subr.bf16.mxu0 0
    %4938 = vmatpush1.bf16.msra.mxu0 0
    %4939 = vmatprep.subr.bf16.mxu0 0
    %4940 = vmatpush1.bf16.msra.mxu0 0
    %4941 = vmatprep.subr.bf16.mxu0 0
    %4942 = vmatpush1.bf16.msra.mxu0 0
    %4943 = vmatprep.mubr.bf16.mxu0 0
    %4944 = vmatmul.mubr.bf16.gmra.mrb[0].mxu0 %v2402
    %v4945 = vpop.f32.mrb[0].mxu0
    %v4946 = vadd.f32 %v2559, %v4945
    %v4947 = vpop.f32.mrb[0].mxu0
    %v4948 = vadd.f32 %v2563, %v4947
    %v4949 = vpop.f32.mrb[0].mxu0
    %v4950 = vadd.f32 %v2559, %v4949
    %v4951 = vpop.f32.mrb[0].mxu0
    %v4952 = vadd.f32 %v2563, %v4951
    %4953 = vmatprep.mubr.bf16.mxu0 0
    %4954 = vmatmul.mubr.bf16.gmra.mrb[0].mxu0 %v2403
    %v4955 = vpop.f32.mrb[0].mxu0
    %v4956 = vadd.f32 %v2559, %v4955
    %v4957 = vpop.f32.mrb[0].mxu0
    %v4958 = vadd.f32 %v2563, %v4957
    %v4959 = vpop.f32.mrb[0].mxu0
    %v4960 = vadd.f32 %v2559, %v4959
    %v4961 = vpop.f32.mrb[0].mxu0
    %v4962 = vadd.f32 %v2563, %v4961
    %4963 = vmatprep.mubr.bf16.mxu0 0
    %4964 = vmatmul.mubr.bf16.gmra.mrb[0].mxu0 %v2404
    %v4965 = vpop.f32.mrb[0].mxu0
    %v4966 = vadd.f32 %v2559, %v4965
    %v4967 = vpop.f32.mrb[0].mxu0
    %v4968 = vadd.f32 %v2563, %v4967
    %v4969 = vpop.f32.mrb[0].mxu0
    %v4970 = vadd.f32 %v2559, %v4969
    %v4971 = vpop.f32.mrb[0].mxu0
    %v4972 = vadd.f32 %v2563, %v4971
    %4973 = vmatprep.mubr.bf16.mxu0 0
    %4974 = vmatmul.mubr.bf16.gmra.mrb[0].mxu0 %v2405
    %v4975 = vpop.f32.mrb[0].mxu0
    %v4976 = vadd.f32 %v2559, %v4975
    %v4977 = vpop.f32.mrb[0].mxu0
    %v4978 = vadd.f32 %v2563, %v4977
    %v4979 = vpop.f32.mrb[0].mxu0
    %v4980 = vadd.f32 %v2559, %v4979
    %v4981 = vpop.f32.mrb[0].mxu0
    %v4982 = vadd.f32 %v2563, %v4981
    %4983 = vmatprep.mubr.bf16.mxu0 0
    %4984 = vmatmul.mubr.bf16.gmra.mrb[0].mxu0 %v2406
    %v4985 = vpop.f32.mrb[0].mxu0
    %v4986 = vadd.f32 %v2559, %v4985
    %v4987 = vpop.f32.mrb[0].mxu0
    %v4988 = vadd.f32 %v2563, %v4987
    %v4989 = vpop.f32.mrb[0].mxu0
    %v4990 = vadd.f32 %v2559, %v4989
    %v4991 = vpop.f32.mrb[0].mxu0
    %v4992 = vadd.f32 %v2563, %v4991
    %4993 = vmatprep.mubr.bf16.mxu0 0
    %4994 = vmatmul.mubr.bf16.gmra.mrb[0].mxu0 %v2407
    %v4995 = vpop.f32.mrb[0].mxu0
    %v4996 = vadd.f32 %v2559, %v4995
    %v4997 = vpop.f32.mrb[0].mxu0
    %v4998 = vadd.f32 %v2563, %v4997
    %v4999 = vpop.f32.mrb[0].mxu0
    %v5000 = vadd.f32 %v2559, %v4999
    %v5001 = vpop.f32.mrb[0].mxu0
    %v5002 = vadd.f32 %v2563, %v5001
    %5003 = vmatprep.mubr.bf16.mxu0 0
    %5004 = vmatmul.mubr.bf16.gmra.mrb[0].mxu0 %v2408
    %v5005 = vpop.f32.mrb[0].mxu0
    %v5006 = vadd.f32 %v2559, %v5005
    %v5007 = vpop.f32.mrb[0].mxu0
    %v5008 = vadd.f32 %v2563, %v5007
    %v5009 = vpop.f32.mrb[0].mxu0
    %v5010 = vadd.f32 %v2559, %v5009
    %v5011 = vpop.f32.mrb[0].mxu0
    %v5012 = vadd.f32 %v2563, %v5011
    %5013 = vmatprep.mubr.bf16.mxu0 0
    %5014 = vmatmul.mubr.bf16.gmra.mrb[0].mxu0 %v2409
    %v5015 = vpop.f32.mrb[0].mxu0
    %v5016 = vadd.f32 %v2559, %v5015
    %v5017 = vpop.f32.mrb[0].mxu0
    %v5018 = vadd.f32 %v2563, %v5017
    %v5019 = vpop.f32.mrb[0].mxu0
    %v5020 = vadd.f32 %v2559, %v5019
    %v5021 = vpop.f32.mrb[0].mxu0
    %v5022 = vadd.f32 %v2563, %v5021
    %5023 = vmatprep.mubr.bf16.mxu0 0
    %5024 = vmatmul.mubr.bf16.gmra.mrb[0].mxu0 %v2410
    %v5025 = vpop.f32.mrb[0].mxu0
    %v5026 = vadd.f32 %v2559, %v5025
    %v5027 = vpop.f32.mrb[0].mxu0
    %v5028 = vadd.f32 %v2563, %v5027
    %v5029 = vpop.f32.mrb[0].mxu0
    %v5030 = vadd.f32 %v2559, %v5029
    %v5031 = vpop.f32.mrb[0].mxu0
    %v5032 = vadd.f32 %v2563, %v5031
    %5033 = vmatprep.mubr.bf16.mxu0 0
    %5034 = vmatmul.mubr.bf16.gmra.mrb[0].mxu0 %v2411
    %v5035 = vpop.f32.mrb[0].mxu0
    %v5036 = vadd.f32 %v2559, %v5035
    %v5037 = vpop.f32.mrb[0].mxu0
    %v5038 = vadd.f32 %v2563, %v5037
    %v5039 = vpop.f32.mrb[0].mxu0
    %v5040 = vadd.f32 %v2559, %v5039
    %v5041 = vpop.f32.mrb[0].mxu0
    %v5042 = vadd.f32 %v2563, %v5041
    %5043 = vmatprep.mubr.bf16.mxu0 0
    %5044 = vmatmul.mubr.bf16.gmra.mrb[0].mxu0 %v2412
    %v5045 = vpop.f32.mrb[0].mxu0
    %v5046 = vadd.f32 %v2559, %v5045
    %v5047 = vpop.f32.mrb[0].mxu0
    %v5048 = vadd.f32 %v2563, %v5047
    %v5049 = vpop.f32.mrb[0].mxu0
    %v5050 = vadd.f32 %v2559, %v5049
    %v5051 = vpop.f32.mrb[0].mxu0
    %v5052 = vadd.f32 %v2563, %v5051
    %5053 = vmatprep.mubr.bf16.mxu0 0
    %5054 = vmatmul.mubr.bf16.gmra.mrb[0].mxu0 %v2413
    %v5055 = vpop.f32.mrb[0].mxu0
    %v5056 = vadd.f32 %v2559, %v5055
    %v5057 = vpop.f32.mrb[0].mxu0
    %v5058 = vadd.f32 %v2563, %v5057
    %v5059 = vpop.f32.mrb[0].mxu0
    %v5060 = vadd.f32 %v2559, %v5059
    %v5061 = vpop.f32.mrb[0].mxu0
    %v5062 = vadd.f32 %v2563, %v5061
    %5063 = vmatprep.mubr.bf16.mxu0 0
    %5064 = vmatmul.mubr.bf16.gmra.mrb[0].mxu0 %v2414
    %v5065 = vpop.f32.mrb[0].mxu0
    %v5066 = vadd.f32 %v2559, %v5065
    %v5067 = vpop.f32.mrb[0].mxu0
    %v5068 = vadd.f32 %v2563, %v5067
    %v5069 = vpop.f32.mrb[0].mxu0
    %v5070 = vadd.f32 %v2559, %v5069
    %v5071 = vpop.f32.mrb[0].mxu0
    %v5072 = vadd.f32 %v2563, %v5071
    %5073 = vmatprep.mubr.bf16.mxu0 0
    %5074 = vmatmul.mubr.bf16.gmra.mrb[0].mxu0 %v2415
    %v5075 = vpop.f32.mrb[0].mxu0
    %v5076 = vadd.f32 %v2559, %v5075
    %v5077 = vpop.f32.mrb[0].mxu0
    %v5078 = vadd.f32 %v2563, %v5077
    %v5079 = vpop.f32.mrb[0].mxu0
    %v5080 = vadd.f32 %v2559, %v5079
    %v5081 = vpop.f32.mrb[0].mxu0
    %v5082 = vadd.f32 %v2563, %v5081
    %5083 = vmatprep.mubr.bf16.mxu0 0
    %5084 = vmatmul.mubr.bf16.gmra.mrb[0].mxu0 %v2416
    %v5085 = vpop.f32.mrb[0].mxu0
    %v5086 = vadd.f32 %v2559, %v5085
    %v5087 = vpop.f32.mrb[0].mxu0
    %v5088 = vadd.f32 %v2563, %v5087
    %v5089 = vpop.f32.mrb[0].mxu0
    %v5090 = vadd.f32 %v2559, %v5089
    %v5091 = vpop.f32.mrb[0].mxu0
    %v5092 = vadd.f32 %v2563, %v5091
    %5093 = vmatprep.mubr.bf16.mxu0 0
    %5094 = vmatmul.mubr.bf16.gmra.mrb[0].mxu0 %v2417
    %v5095 = vpop.f32.mrb[0].mxu0
    %v5096 = vadd.f32 %v2559, %v5095
    %v5097 = vpop.f32.mrb[0].mxu0
    %v5098 = vadd.f32 %v2563, %v5097
    %v5099 = vpop.f32.mrb[0].mxu0
    %v5100 = vadd.f32 %v2559, %v5099
    %v5101 = vpop.f32.mrb[0].mxu0
    %v5102 = vadd.f32 %v2563, %v5101
    %5103 = vmatprep.mubr.bf16.mxu0 0
    %5104 = vmatmul.mubr.bf16.gmra.mrb[0].mxu0 %v2418
    %v5105 = vpop.f32.mrb[0].mxu0
    %v5106 = vadd.f32 %v2559, %v5105
    %v5107 = vpop.f32.mrb[0].mxu0
    %v5108 = vadd.f32 %v2563, %v5107
    %v5109 = vpop.f32.mrb[0].mxu0
    %v5110 = vadd.f32 %v2559, %v5109
    %v5111 = vpop.f32.mrb[0].mxu0
    %v5112 = vadd.f32 %v2563, %v5111
    %5113 = vmatprep.mubr.bf16.mxu0 0
    %5114 = vmatmul.mubr.bf16.gmra.mrb[0].mxu0 %v2419
    %v5115 = vpop.f32.mrb[0].mxu0
    %v5116 = vadd.f32 %v2559, %v5115
    %v5117 = vpop.f32.mrb[0].mxu0
    %v5118 = vadd.f32 %v2563, %v5117
    %v5119 = vpop.f32.mrb[0].mxu0
    %v5120 = vadd.f32 %v2559, %v5119
    %v5121 = vpop.f32.mrb[0].mxu0
    %v5122 = vadd.f32 %v2563, %v5121
    %5123 = vmatprep.mubr.bf16.mxu0 0
    %5124 = vmatmul.mubr.bf16.gmra.mrb[0].mxu0 %v2420
    %v5125 = vpop.f32.mrb[0].mxu0
    %v5126 = vadd.f32 %v2559, %v5125
    %v5127 = vpop.f32.mrb[0].mxu0
    %v5128 = vadd.f32 %v2563, %v5127
    %v5129 = vpop.f32.mrb[0].mxu0
    %v5130 = vadd.f32 %v2559, %v5129
    %v5131 = vpop.f32.mrb[0].mxu0
    %v5132 = vadd.f32 %v2563, %v5131
    %5133 = vmatprep.mubr.bf16.mxu0 0
    %5134 = vmatmul.mubr.bf16.gmra.mrb[0].mxu0 %v2421
    %v5135 = vpop.f32.mrb[0].mxu0
    %v5136 = vadd.f32 %v2559, %v5135
    %v5137 = vpop.f32.mrb[0].mxu0
    %v5138 = vadd.f32 %v2563, %v5137
    %v5139 = vpop.f32.mrb[0].mxu0
    %v5140 = vadd.f32 %v2559, %v5139
    %v5141 = vpop.f32.mrb[0].mxu0
    %v5142 = vadd.f32 %v2563, %v5141
    %5143 = vmatprep.mubr.bf16.mxu0 0
    %5144 = vmatmul.mubr.bf16.gmra.mrb[0].mxu0 %v2422
    %v5145 = vpop.f32.mrb[0].mxu0
    %v5146 = vadd.f32 %v2559, %v5145
    %v5147 = vpop.f32.mrb[0].mxu0
    %v5148 = vadd.f32 %v2563, %v5147
    %v5149 = vpop.f32.mrb[0].mxu0
    %v5150 = vadd.f32 %v2559, %v5149
    %v5151 = vpop.f32.mrb[0].mxu0
    %v5152 = vadd.f32 %v2563, %v5151
    %5153 = vmatprep.mubr.bf16.mxu0 0
    %5154 = vmatmul.mubr.bf16.gmra.mrb[0].mxu0 %v2423
    %v5155 = vpop.f32.mrb[0].mxu0
    %v5156 = vadd.f32 %v2559, %v5155
    %v5157 = vpop.f32.mrb[0].mxu0
    %v5158 = vadd.f32 %v2563, %v5157
    %v5159 = vpop.f32.mrb[0].mxu0
    %v5160 = vadd.f32 %v2559, %v5159
    %v5161 = vpop.f32.mrb[0].mxu0
    %v5162 = vadd.f32 %v2563, %v5161
    %5163 = vmatprep.mubr.bf16.mxu0 0
    %5164 = vmatmul.mubr.bf16.gmra.mrb[0].mxu0 %v2424
    %v5165 = vpop.f32.mrb[0].mxu0
    %v5166 = vadd.f32 %v2559, %v5165
    %v5167 = vpop.f32.mrb[0].mxu0
    %v5168 = vadd.f32 %v2563, %v5167
    %v5169 = vpop.f32.mrb[0].mxu0
    %v5170 = vadd.f32 %v2559, %v5169
    %v5171 = vpop.f32.mrb[0].mxu0
    %v5172 = vadd.f32 %v2563, %v5171
    %5173 = vmatprep.mubr.bf16.mxu0 0
    %5174 = vmatmul.mubr.bf16.gmra.mrb[0].mxu0 %v2425
    %v5175 = vpop.f32.mrb[0].mxu0
    %v5176 = vadd.f32 %v2559, %v5175
    %v5177 = vpop.f32.mrb[0].mxu0
    %v5178 = vadd.f32 %v2563, %v5177
    %v5179 = vpop.f32.mrb[0].mxu0
    %v5180 = vadd.f32 %v2559, %v5179
    %v5181 = vpop.f32.mrb[0].mxu0
    %v5182 = vadd.f32 %v2563, %v5181
    %5183 = vmatprep.mubr.bf16.mxu0 0
    %5184 = vmatmul.mubr.bf16.gmra.mrb[0].mxu0 %v2426
    %v5185 = vpop.f32.mrb[0].mxu0
    %v5186 = vadd.f32 %v2559, %v5185
    %v5187 = vpop.f32.mrb[0].mxu0
    %v5188 = vadd.f32 %v2563, %v5187
    %v5189 = vpop.f32.mrb[0].mxu0
    %v5190 = vadd.f32 %v2559, %v5189
    %v5191 = vpop.f32.mrb[0].mxu0
    %v5192 = vadd.f32 %v2563, %v5191
    %5193 = vmatprep.mubr.bf16.mxu0 0
    %5194 = vmatmul.mubr.bf16.gmra.mrb[0].mxu0 %v2427
    %v5195 = vpop.f32.mrb[0].mxu0
    %v5196 = vadd.f32 %v2559, %v5195
    %v5197 = vpop.f32.mrb[0].mxu0
    %v5198 = vadd.f32 %v2563, %v5197
    %v5199 = vpop.f32.mrb[0].mxu0
    %v5200 = vadd.f32 %v2559, %v5199
    %v5201 = vpop.f32.mrb[0].mxu0
    %v5202 = vadd.f32 %v2563, %v5201
    %5203 = vmatprep.mubr.bf16.mxu0 0
    %5204 = vmatmul.mubr.bf16.gmra.mrb[0].mxu0 %v2428
    %v5205 = vpop.f32.mrb[0].mxu0
    %v5206 = vadd.f32 %v2559, %v5205
    %v5207 = vpop.f32.mrb[0].mxu0
    %v5208 = vadd.f32 %v2563, %v5207
    %v5209 = vpop.f32.mrb[0].mxu0
    %v5210 = vadd.f32 %v2559, %v5209
    %v5211 = vpop.f32.mrb[0].mxu0
    %v5212 = vadd.f32 %v2563, %v5211
    %5213 = vmatprep.mubr.bf16.mxu0 0
    %5214 = vmatmul.mubr.bf16.gmra.mrb[0].mxu0 %v2429
    %v5215 = vpop.f32.mrb[0].mxu0
    %v5216 = vadd.f32 %v2559, %v5215
    %v5217 = vpop.f32.mrb[0].mxu0
    %v5218 = vadd.f32 %v2563, %v5217
    %v5219 = vpop.f32.mrb[0].mxu0
    %v5220 = vadd.f32 %v2559, %v5219
    %v5221 = vpop.f32.mrb[0].mxu0
    %v5222 = vadd.f32 %v2563, %v5221
    %5223 = vmatprep.mubr.bf16.mxu0 0
    %5224 = vmatmul.mubr.bf16.gmra.mrb[0].mxu0 %v2430
    %v5225 = vpop.f32.mrb[0].mxu0
    %v5226 = vadd.f32 %v2559, %v5225
    %v5227 = vpop.f32.mrb[0].mxu0
    %v5228 = vadd.f32 %v2563, %v5227
    %v5229 = vpop.f32.mrb[0].mxu0
    %v5230 = vadd.f32 %v2559, %v5229
    %v5231 = vpop.f32.mrb[0].mxu0
    %v5232 = vadd.f32 %v2563, %v5231
    %5233 = vmatprep.mubr.bf16.mxu0 0
    %5234 = vmatmul.mubr.bf16.gmra.mrb[0].mxu0 %v2431
    %v5235 = vpop.f32.mrb[0].mxu0
    %v5236 = vadd.f32 %v2559, %v5235
    %v5237 = vpop.f32.mrb[0].mxu0
    %v5238 = vadd.f32 %v2563, %v5237
    %v5239 = vpop.f32.mrb[0].mxu0
    %v5240 = vadd.f32 %v2559, %v5239
    %v5241 = vpop.f32.mrb[0].mxu0
    %v5242 = vadd.f32 %v2563, %v5241
    %5243 = vmatprep.mubr.bf16.mxu0 0
    %5244 = vmatmul.mubr.bf16.gmra.mrb[0].mxu0 %v2432
    %v5245 = vpop.f32.mrb[0].mxu0
    %v5246 = vadd.f32 %v2559, %v5245
    %v5247 = vpop.f32.mrb[0].mxu0
    %v5248 = vadd.f32 %v2563, %v5247
    %v5249 = vpop.f32.mrb[0].mxu0
    %v5250 = vadd.f32 %v2559, %v5249
    %v5251 = vpop.f32.mrb[0].mxu0
    %v5252 = vadd.f32 %v2563, %v5251
    %5253 = vmatprep.mubr.bf16.mxu0 0
    %5254 = vmatmul.mubr.bf16.gmra.mrb[0].mxu0 %v2433
    %v5255 = vpop.f32.mrb[0].mxu0
    %v5256 = vadd.f32 %v2559, %v5255
    %v5257 = vpop.f32.mrb[0].mxu0
    %v5258 = vadd.f32 %v2563, %v5257
    %v5259 = vpop.f32.mrb[0].mxu0
    %v5260 = vadd.f32 %v2559, %v5259
    %v5261 = vpop.f32.mrb[0].mxu0
    %v5262 = vadd.f32 %v2563, %v5261
    %5263 = vmatprep.mubr.bf16.mxu0 0
    %5264 = vmatmul.mubr.bf16.gmra.mrb[0].mxu0 %v2434
    %v5265 = vpop.f32.mrb[0].mxu0
    %v5266 = vadd.f32 %v2559, %v5265
    %v5267 = vpop.f32.mrb[0].mxu0
    %v5268 = vadd.f32 %v2563, %v5267
    %v5269 = vpop.f32.mrb[0].mxu0
    %v5270 = vadd.f32 %v2559, %v5269
    %v5271 = vpop.f32.mrb[0].mxu0
    %v5272 = vadd.f32 %v2563, %v5271
    %5273 = vmatprep.mubr.bf16.mxu0 0
    %5274 = vmatmul.mubr.bf16.gmra.mrb[0].mxu0 %v2435
    %v5275 = vpop.f32.mrb[0].mxu0
    %v5276 = vadd.f32 %v2559, %v5275
    %v5277 = vpop.f32.mrb[0].mxu0
    %v5278 = vadd.f32 %v2563, %v5277
    %v5279 = vpop.f32.mrb[0].mxu0
    %v5280 = vadd.f32 %v2559, %v5279
    %v5281 = vpop.f32.mrb[0].mxu0
    %v5282 = vadd.f32 %v2563, %v5281
    %5283 = vmatprep.mubr.bf16.mxu0 0
    %5284 = vmatmul.mubr.bf16.gmra.mrb[0].mxu0 %v2436
    %v5285 = vpop.f32.mrb[0].mxu0
    %v5286 = vadd.f32 %v2559, %v5285
    %v5287 = vpop.f32.mrb[0].mxu0
    %v5288 = vadd.f32 %v2563, %v5287
    %v5289 = vpop.f32.mrb[0].mxu0
    %v5290 = vadd.f32 %v2559, %v5289
    %v5291 = vpop.f32.mrb[0].mxu0
    %v5292 = vadd.f32 %v2563, %v5291
    %5293 = vmatprep.mubr.bf16.mxu0 0
    %5294 = vmatmul.mubr.bf16.gmra.mrb[0].mxu0 %v2437
    %v5295 = vpop.f32.mrb[0].mxu0
    %v5296 = vadd.f32 %v2559, %v5295
    %v5297 = vpop.f32.mrb[0].mxu0
    %v5298 = vadd.f32 %v2563, %v5297
    %v5299 = vpop.f32.mrb[0].mxu0
    %v5300 = vadd.f32 %v2559, %v5299
    %v5301 = vpop.f32.mrb[0].mxu0
    %v5302 = vadd.f32 %v2563, %v5301
    %5303 = vmatprep.mubr.bf16.mxu0 0
    %5304 = vmatmul.mubr.bf16.gmra.mrb[0].mxu0 %v2438
    %v5305 = vpop.f32.mrb[0].mxu0
    %v5306 = vadd.f32 %v2559, %v5305
    %v5307 = vpop.f32.mrb[0].mxu0
    %v5308 = vadd.f32 %v2563, %v5307
    %v5309 = vpop.f32.mrb[0].mxu0
    %v5310 = vadd.f32 %v2559, %v5309
    %v5311 = vpop.f32.mrb[0].mxu0
    %v5312 = vadd.f32 %v2563, %v5311
    %5313 = vmatprep.mubr.bf16.mxu0 0
    %5314 = vmatmul.mubr.bf16.gmra.mrb[0].mxu0 %v2439
    %v5315 = vpop.f32.mrb[0].mxu0
    %v5316 = vadd.f32 %v2559, %v5315
    %v5317 = vpop.f32.mrb[0].mxu0
    %v5318 = vadd.f32 %v2563, %v5317
    %v5319 = vpop.f32.mrb[0].mxu0
    %v5320 = vadd.f32 %v2559, %v5319
    %v5321 = vpop.f32.mrb[0].mxu0
    %v5322 = vadd.f32 %v2563, %v5321
    %5323 = vmatprep.mubr.bf16.mxu0 0
    %5324 = vmatmul.mubr.bf16.gmra.mrb[0].mxu0 %v2440
    %v5325 = vpop.f32.mrb[0].mxu0
    %v5326 = vadd.f32 %v2559, %v5325
    %v5327 = vpop.f32.mrb[0].mxu0
    %v5328 = vadd.f32 %v2563, %v5327
    %v5329 = vpop.f32.mrb[0].mxu0
    %v5330 = vadd.f32 %v2559, %v5329
    %v5331 = vpop.f32.mrb[0].mxu0
    %v5332 = vadd.f32 %v2563, %v5331
    %5333 = vmatprep.mubr.bf16.mxu0 0
    %5334 = vmatmul.mubr.bf16.gmra.mrb[0].mxu0 %v2441
    %v5335 = vpop.f32.mrb[0].mxu0
    %v5336 = vadd.f32 %v2559, %v5335
    %v5337 = vpop.f32.mrb[0].mxu0
    %v5338 = vadd.f32 %v2563, %v5337
    %v5339 = vpop.f32.mrb[0].mxu0
    %v5340 = vadd.f32 %v2559, %v5339
    %v5341 = vpop.f32.mrb[0].mxu0
    %v5342 = vadd.f32 %v2563, %v5341
    %5343 = vmatprep.mubr.bf16.mxu0 0
    %5344 = vmatmul.mubr.bf16.gmra.mrb[0].mxu0 %v2442
    %v5345 = vpop.f32.mrb[0].mxu0
    %v5346 = vadd.f32 %v2559, %v5345
    %v5347 = vpop.f32.mrb[0].mxu0
    %v5348 = vadd.f32 %v2563, %v5347
    %v5349 = vpop.f32.mrb[0].mxu0
    %v5350 = vadd.f32 %v2559, %v5349
    %v5351 = vpop.f32.mrb[0].mxu0
    %v5352 = vadd.f32 %v2563, %v5351
    %5353 = vmatprep.mubr.bf16.mxu0 0
    %5354 = vmatmul.mubr.bf16.gmra.mrb[0].mxu0 %v2443
    %v5355 = vpop.f32.mrb[0].mxu0
    %v5356 = vadd.f32 %v2559, %v5355
    %v5357 = vpop.f32.mrb[0].mxu0
    %v5358 = vadd.f32 %v2563, %v5357
    %v5359 = vpop.f32.mrb[0].mxu0
    %v5360 = vadd.f32 %v2559, %v5359
    %v5361 = vpop.f32.mrb[0].mxu0
    %v5362 = vadd.f32 %v2563, %v5361
    %5363 = vmatprep.mubr.bf16.mxu0 0
    %5364 = vmatmul.mubr.bf16.gmra.mrb[0].mxu0 %v2444
    %v5365 = vpop.f32.mrb[0].mxu0
    %v5366 = vadd.f32 %v2559, %v5365
    %v5367 = vpop.f32.mrb[0].mxu0
    %v5368 = vadd.f32 %v2563, %v5367
    %v5369 = vpop.f32.mrb[0].mxu0
    %v5370 = vadd.f32 %v2559, %v5369
    %v5371 = vpop.f32.mrb[0].mxu0
    %v5372 = vadd.f32 %v2563, %v5371
    %5373 = vmatprep.mubr.bf16.mxu0 0
    %5374 = vmatmul.mubr.bf16.gmra.mrb[0].mxu0 %v2445
    %v5375 = vpop.f32.mrb[0].mxu0
    %v5376 = vadd.f32 %v2559, %v5375
    %v5377 = vpop.f32.mrb[0].mxu0
    %v5378 = vadd.f32 %v2563, %v5377
    %v5379 = vpop.f32.mrb[0].mxu0
    %v5380 = vadd.f32 %v2559, %v5379
    %v5381 = vpop.f32.mrb[0].mxu0
    %v5382 = vadd.f32 %v2563, %v5381
    %5383 = vmatprep.mubr.bf16.mxu0 0
    %5384 = vmatmul.mubr.bf16.gmra.mrb[0].mxu0 %v2446
    %v5385 = vpop.f32.mrb[0].mxu0
    %v5386 = vadd.f32 %v2559, %v5385
    %v5387 = vpop.f32.mrb[0].mxu0
    %v5388 = vadd.f32 %v2563, %v5387
    %v5389 = vpop.f32.mrb[0].mxu0
    %v5390 = vadd.f32 %v2559, %v5389
    %v5391 = vpop.f32.mrb[0].mxu0
    %v5392 = vadd.f32 %v2563, %v5391
    %5393 = vmatprep.mubr.bf16.mxu0 0
    %5394 = vmatmul.mubr.bf16.gmra.mrb[0].mxu0 %v2447
    %v5395 = vpop.f32.mrb[0].mxu0
    %v5396 = vadd.f32 %v2559, %v5395
    %v5397 = vpop.f32.mrb[0].mxu0
    %v5398 = vadd.f32 %v2563, %v5397
    %v5399 = vpop.f32.mrb[0].mxu0
    %v5400 = vadd.f32 %v2559, %v5399
    %v5401 = vpop.f32.mrb[0].mxu0
    %v5402 = vadd.f32 %v2563, %v5401
    %5403 = vmatprep.mubr.bf16.mxu0 0
    %5404 = vmatmul.mubr.bf16.gmra.mrb[0].mxu0 %v2448
    %v5405 = vpop.f32.mrb[0].mxu0
    %v5406 = vadd.f32 %v2559, %v5405
    %v5407 = vpop.f32.mrb[0].mxu0
    %v5408 = vadd.f32 %v2563, %v5407
    %v5409 = vpop.f32.mrb[0].mxu0
    %v5410 = vadd.f32 %v2559, %v5409
    %v5411 = vpop.f32.mrb[0].mxu0
    %v5412 = vadd.f32 %v2563, %v5411
    %5413 = vmatprep.mubr.bf16.mxu0 0
    %5414 = vmatmul.mubr.bf16.gmra.mrb[0].mxu0 %v2449
    %v5415 = vpop.f32.mrb[0].mxu0
    %v5416 = vadd.f32 %v2559, %v5415
    %v5417 = vpop.f32.mrb[0].mxu0
    %v5418 = vadd.f32 %v2563, %v5417
    %v5419 = vpop.f32.mrb[0].mxu0
    %v5420 = vadd.f32 %v2559, %v5419
    %v5421 = vpop.f32.mrb[0].mxu0
    %v5422 = vadd.f32 %v2563, %v5421
    %5423 = vmatprep.mubr.bf16.mxu0 0
    %5424 = vmatmul.mubr.bf16.gmra.mrb[0].mxu0 %v2450
    %v5425 = vpop.f32.mrb[0].mxu0
    %v5426 = vadd.f32 %v2559, %v5425
    %v5427 = vpop.f32.mrb[0].mxu0
    %v5428 = vadd.f32 %v2563, %v5427
    %v5429 = vpop.f32.mrb[0].mxu0
    %v5430 = vadd.f32 %v2559, %v5429
    %v5431 = vpop.f32.mrb[0].mxu0
    %v5432 = vadd.f32 %v2563, %v5431
    %5433 = vmatprep.mubr.bf16.mxu0 0
    %5434 = vmatmul.mubr.bf16.gmra.mrb[0].mxu0 %v2451
    %v5435 = vpop.f32.mrb[0].mxu0
    %v5436 = vadd.f32 %v2559, %v5435
    %v5437 = vpop.f32.mrb[0].mxu0
    %v5438 = vadd.f32 %v2563, %v5437
    %v5439 = vpop.f32.mrb[0].mxu0
    %v5440 = vadd.f32 %v2559, %v5439
    %v5441 = vpop.f32.mrb[0].mxu0
    %v5442 = vadd.f32 %v2563, %v5441
    %5443 = vmatprep.mubr.bf16.mxu0 0
    %5444 = vmatmul.mubr.bf16.gmra.mrb[0].mxu0 %v2452
    %v5445 = vpop.f32.mrb[0].mxu0
    %v5446 = vadd.f32 %v2559, %v5445
    %v5447 = vpop.f32.mrb[0].mxu0
    %v5448 = vadd.f32 %v2563, %v5447
    %v5449 = vpop.f32.mrb[0].mxu0
    %v5450 = vadd.f32 %v2559, %v5449
    %v5451 = vpop.f32.mrb[0].mxu0
    %v5452 = vadd.f32 %v2563, %v5451
    %5453 = vmatprep.mubr.bf16.mxu0 0
    %5454 = vmatmul.mubr.bf16.gmra.mrb[0].mxu0 %v2453
    %v5455 = vpop.f32.mrb[0].mxu0
    %v5456 = vadd.f32 %v2559, %v5455
    %v5457 = vpop.f32.mrb[0].mxu0
    %v5458 = vadd.f32 %v2563, %v5457
    %v5459 = vpop.f32.mrb[0].mxu0
    %v5460 = vadd.f32 %v2559, %v5459
    %v5461 = vpop.f32.mrb[0].mxu0
    %v5462 = vadd.f32 %v2563, %v5461
    %5463 = vmatprep.mubr.bf16.mxu0 0
    %5464 = vmatmul.mubr.bf16.gmra.mrb[0].mxu0 %v2454
    %v5465 = vpop.f32.mrb[0].mxu0
    %v5466 = vadd.f32 %v2559, %v5465
    %v5467 = vpop.f32.mrb[0].mxu0
    %v5468 = vadd.f32 %v2563, %v5467
    %v5469 = vpop.f32.mrb[0].mxu0
    %v5470 = vadd.f32 %v2559, %v5469
    %v5471 = vpop.f32.mrb[0].mxu0
    %v5472 = vadd.f32 %v2563, %v5471
    %5473 = vmatprep.mubr.bf16.mxu0 0
    %5474 = vmatmul.mubr.bf16.gmra.mrb[0].mxu0 %v2455
    %v5475 = vpop.f32.mrb[0].mxu0
    %v5476 = vadd.f32 %v2559, %v5475
    %v5477 = vpop.f32.mrb[0].mxu0
    %v5478 = vadd.f32 %v2563, %v5477
    %v5479 = vpop.f32.mrb[0].mxu0
    %v5480 = vadd.f32 %v2559, %v5479
    %v5481 = vpop.f32.mrb[0].mxu0
    %v5482 = vadd.f32 %v2563, %v5481
    %5483 = vmatprep.mubr.bf16.mxu0 0
    %5484 = vmatmul.mubr.bf16.gmra.mrb[0].mxu0 %v2456
    %v5485 = vpop.f32.mrb[0].mxu0
    %v5486 = vadd.f32 %v2559, %v5485
    %v5487 = vpop.f32.mrb[0].mxu0
    %v5488 = vadd.f32 %v2563, %v5487
    %v5489 = vpop.f32.mrb[0].mxu0
    %v5490 = vadd.f32 %v2559, %v5489
    %v5491 = vpop.f32.mrb[0].mxu0
    %v5492 = vadd.f32 %v2563, %v5491
    %5493 = vmatprep.mubr.bf16.mxu0 0
    %5494 = vmatmul.mubr.bf16.gmra.mrb[0].mxu0 %v2457
    %v5495 = vpop.f32.mrb[0].mxu0
    %v5496 = vadd.f32 %v2559, %v5495
    %v5497 = vpop.f32.mrb[0].mxu0
    %v5498 = vadd.f32 %v2563, %v5497
    %v5499 = vpop.f32.mrb[0].mxu0
    %v5500 = vadd.f32 %v2559, %v5499
    %v5501 = vpop.f32.mrb[0].mxu0
    %v5502 = vadd.f32 %v2563, %v5501
    %5503 = vmatprep.mubr.bf16.mxu0 0
    %5504 = vmatmul.mubr.bf16.gmra.mrb[0].mxu0 %v2458
    %v5505 = vpop.f32.mrb[0].mxu0
    %v5506 = vadd.f32 %v2559, %v5505
    %v5507 = vpop.f32.mrb[0].mxu0
    %v5508 = vadd.f32 %v2563, %v5507
    %v5509 = vpop.f32.mrb[0].mxu0
    %v5510 = vadd.f32 %v2559, %v5509
    %v5511 = vpop.f32.mrb[0].mxu0
    %v5512 = vadd.f32 %v2563, %v5511
    %5513 = vmatprep.mubr.bf16.mxu0 0
    %5514 = vmatmul.mubr.bf16.gmra.mrb[0].mxu0 %v2459
    %v5515 = vpop.f32.mrb[0].mxu0
    %v5516 = vadd.f32 %v2559, %v5515
    %v5517 = vpop.f32.mrb[0].mxu0
    %v5518 = vadd.f32 %v2563, %v5517
    %v5519 = vpop.f32.mrb[0].mxu0
    %v5520 = vadd.f32 %v2559, %v5519
    %v5521 = vpop.f32.mrb[0].mxu0
    %v5522 = vadd.f32 %v2563, %v5521
    %5523 = vmatprep.mubr.bf16.mxu0 0
    %5524 = vmatmul.mubr.bf16.gmra.mrb[0].mxu0 %v2460
    %v5525 = vpop.f32.mrb[0].mxu0
    %v5526 = vadd.f32 %v2559, %v5525
    %v5527 = vpop.f32.mrb[0].mxu0
    %v5528 = vadd.f32 %v2563, %v5527
    %v5529 = vpop.f32.mrb[0].mxu0
    %v5530 = vadd.f32 %v2559, %v5529
    %v5531 = vpop.f32.mrb[0].mxu0
    %v5532 = vadd.f32 %v2563, %v5531
    %5533 = vmatprep.mubr.bf16.mxu0 0
    %5534 = vmatmul.mubr.bf16.gmra.mrb[0].mxu0 %v2461
    %v5535 = vpop.f32.mrb[0].mxu0
    %v5536 = vadd.f32 %v2559, %v5535
    %v5537 = vpop.f32.mrb[0].mxu0
    %v5538 = vadd.f32 %v2563, %v5537
    %v5539 = vpop.f32.mrb[0].mxu0
    %v5540 = vadd.f32 %v2559, %v5539
    %v5541 = vpop.f32.mrb[0].mxu0
    %v5542 = vadd.f32 %v2563, %v5541
    %5543 = vmatprep.mubr.bf16.mxu0 0
    %5544 = vmatmul.mubr.bf16.gmra.mrb[0].mxu0 %v2462
    %v5545 = vpop.f32.mrb[0].mxu0
    %v5546 = vadd.f32 %v2559, %v5545
    %v5547 = vpop.f32.mrb[0].mxu0
    %v5548 = vadd.f32 %v2563, %v5547
    %v5549 = vpop.f32.mrb[0].mxu0
    %v5550 = vadd.f32 %v2559, %v5549
    %v5551 = vpop.f32.mrb[0].mxu0
    %v5552 = vadd.f32 %v2563, %v5551
    %5553 = vmatprep.mubr.bf16.mxu0 0
    %5554 = vmatmul.mubr.bf16.gmra.mrb[0].mxu0 %v2463
    %v5555 = vpop.f32.mrb[0].mxu0
    %v5556 = vadd.f32 %v2559, %v5555
    %v5557 = vpop.f32.mrb[0].mxu0
    %v5558 = vadd.f32 %v2563, %v5557
    %v5559 = vpop.f32.mrb[0].mxu0
    %v5560 = vadd.f32 %v2559, %v5559
    %v5561 = vpop.f32.mrb[0].mxu0
    %v5562 = vadd.f32 %v2563, %v5561
    %5563 = vmatprep.mubr.bf16.mxu0 0
    %5564 = vmatmul.mubr.bf16.gmra.mrb[0].mxu0 %v2464
    %v5565 = vpop.f32.mrb[0].mxu0
    %v5566 = vadd.f32 %v2559, %v5565
    %v5567 = vpop.f32.mrb[0].mxu0
    %v5568 = vadd.f32 %v2563, %v5567
    %v5569 = vpop.f32.mrb[0].mxu0
    %v5570 = vadd.f32 %v2559, %v5569
    %v5571 = vpop.f32.mrb[0].mxu0
    %v5572 = vadd.f32 %v2563, %v5571
    %5573 = vmatprep.mubr.bf16.mxu0 0
    %5574 = vmatmul.mubr.bf16.gmra.mrb[0].mxu0 %v2465
    %v5575 = vpop.f32.mrb[0].mxu0
    %v5576 = vadd.f32 %v2559, %v5575
    %v5577 = vpop.f32.mrb[0].mxu0
    %v5578 = vadd.f32 %v2563, %v5577
    %v5579 = vpop.f32.mrb[0].mxu0
    %v5580 = vadd.f32 %v2559, %v5579
    %v5581 = vpop.f32.mrb[0].mxu0
    %v5582 = vadd.f32 %v2563, %v5581
    %5583 = vdwg.mxu0
    %v5584 = vmax.f32 %v2927, 0.0
    %v5585 = vmax.f32 %v2929, 0.0
    %v5586 = vmax.f32 %v3600, 0.0
    %v5587 = vmax.f32 %v3602, 0.0
    %v5588 = vmax.f32 %v4273, 0.0
    %v5589 = vmax.f32 %v4275, 0.0
    %v5590 = vmax.f32 %v4946, 0.0
    %v5591 = vmax.f32 %v4948, 0.0
    %v5592 = vmax.f32 %v2931, 0.0
    %v5593 = vmax.f32 %v2933, 0.0
    %v5594 = vmax.f32 %v3604, 0.0
    %v5595 = vmax.f32 %v3606, 0.0
    %v5596 = vmax.f32 %v4277, 0.0
    %v5597 = vmax.f32 %v4279, 0.0
    %v5598 = vmax.f32 %v4950, 0.0
    %v5599 = vmax.f32 %v4952, 0.0
    %v5600 = vmax.f32 %v2937, 0.0
    %v5601 = vmax.f32 %v2939, 0.0
    %v5602 = vmax.f32 %v3610, 0.0
    %v5603 = vmax.f32 %v3612, 0.0
    %v5604 = vmax.f32 %v4283, 0.0
    %v5605 = vmax.f32 %v4285, 0.0
    %v5606 = vmax.f32 %v4956, 0.0
    %v5607 = vmax.f32 %v4958, 0.0
    %v5608 = vmax.f32 %v2941, 0.0
    %v5609 = vmax.f32 %v2943, 0.0
    %v5610 = vmax.f32 %v3614, 0.0
    %v5611 = vmax.f32 %v3616, 0.0
    %v5612 = vmax.f32 %v4287, 0.0
    %v5613 = vmax.f32 %v4289, 0.0
    %v5614 = vmax.f32 %v4960, 0.0
    %v5615 = vmax.f32 %v4962, 0.0
    %v5616 = vmax.f32 %v2947, 0.0
    %v5617 = vmax.f32 %v2949, 0.0
    %v5618 = vmax.f32 %v3620, 0.0
    %v5619 = vmax.f32 %v3622, 0.0
    %v5620 = vmax.f32 %v4293, 0.0
    %v5621 = vmax.f32 %v4295, 0.0
    %v5622 = vmax.f32 %v4966, 0.0
    %v5623 = vmax.f32 %v4968, 0.0
    %v5624 = vmax.f32 %v2951, 0.0
    %v5625 = vmax.f32 %v2953, 0.0
    %v5626 = vmax.f32 %v3624, 0.0
    %v5627 = vmax.f32 %v3626, 0.0
    %v5628 = vmax.f32 %v4297, 0.0
    %v5629 = vmax.f32 %v4299, 0.0
    %v5630 = vmax.f32 %v4970, 0.0
    %v5631 = vmax.f32 %v4972, 0.0
    %v5632 = vmax.f32 %v2957, 0.0
    %v5633 = vmax.f32 %v2959, 0.0
    %v5634 = vmax.f32 %v3630, 0.0
    %v5635 = vmax.f32 %v3632, 0.0
    %v5636 = vmax.f32 %v4303, 0.0
    %v5637 = vmax.f32 %v4305, 0.0
    %v5638 = vmax.f32 %v4976, 0.0
    %v5639 = vmax.f32 %v4978, 0.0
    %v5640 = vmax.f32 %v2961, 0.0
    %v5641 = vmax.f32 %v2963, 0.0
    %v5642 = vmax.f32 %v3634, 0.0
    %v5643 = vmax.f32 %v3636, 0.0
    %v5644 = vmax.f32 %v4307, 0.0
    %v5645 = vmax.f32 %v4309, 0.0
    %v5646 = vmax.f32 %v4980, 0.0
    %v5647 = vmax.f32 %v4982, 0.0
    %v5648 = vmax.f32 %v2967, 0.0
    %v5649 = vmax.f32 %v2969, 0.0
    %v5650 = vmax.f32 %v3640, 0.0
    %v5651 = vmax.f32 %v3642, 0.0
    %v5652 = vmax.f32 %v4313, 0.0
    %v5653 = vmax.f32 %v4315, 0.0
    %v5654 = vmax.f32 %v4986, 0.0
    %v5655 = vmax.f32 %v4988, 0.0
    %v5656 = vmax.f32 %v2971, 0.0
    %v5657 = vmax.f32 %v2973, 0.0
    %v5658 = vmax.f32 %v3644, 0.0
    %v5659 = vmax.f32 %v3646, 0.0
    %v5660 = vmax.f32 %v4317, 0.0
    %v5661 = vmax.f32 %v4319, 0.0
    %v5662 = vmax.f32 %v4990, 0.0
    %v5663 = vmax.f32 %v4992, 0.0
    %v5664 = vmax.f32 %v2977, 0.0
    %v5665 = vmax.f32 %v2979, 0.0
    %v5666 = vmax.f32 %v3650, 0.0
    %v5667 = vmax.f32 %v3652, 0.0
    %v5668 = vmax.f32 %v4323, 0.0
    %v5669 = vmax.f32 %v4325, 0.0
    %v5670 = vmax.f32 %v4996, 0.0
    %v5671 = vmax.f32 %v4998, 0.0
    %v5672 = vmax.f32 %v2981, 0.0
    %v5673 = vmax.f32 %v2983, 0.0
    %v5674 = vmax.f32 %v3654, 0.0
    %v5675 = vmax.f32 %v3656, 0.0
    %v5676 = vmax.f32 %v4327, 0.0
    %v5677 = vmax.f32 %v4329, 0.0
    %v5678 = vmax.f32 %v5000, 0.0
    %v5679 = vmax.f32 %v5002, 0.0
    %v5680 = vmax.f32 %v2987, 0.0
    %v5681 = vmax.f32 %v2989, 0.0
    %v5682 = vmax.f32 %v3660, 0.0
    %v5683 = vmax.f32 %v3662, 0.0
    %v5684 = vmax.f32 %v4333, 0.0
    %v5685 = vmax.f32 %v4335, 0.0
    %v5686 = vmax.f32 %v5006, 0.0
    %v5687 = vmax.f32 %v5008, 0.0
    %v5688 = vmax.f32 %v2991, 0.0
    %v5689 = vmax.f32 %v2993, 0.0
    %v5690 = vmax.f32 %v3664, 0.0
    %v5691 = vmax.f32 %v3666, 0.0
    %v5692 = vmax.f32 %v4337, 0.0
    %v5693 = vmax.f32 %v4339, 0.0
    %v5694 = vmax.f32 %v5010, 0.0
    %v5695 = vmax.f32 %v5012, 0.0
    %v5696 = vmax.f32 %v2997, 0.0
    %v5697 = vmax.f32 %v2999, 0.0
    %v5698 = vmax.f32 %v3670, 0.0
    %v5699 = vmax.f32 %v3672, 0.0
    %v5700 = vmax.f32 %v4343, 0.0
    %v5701 = vmax.f32 %v4345, 0.0
    %v5702 = vmax.f32 %v5016, 0.0
    %v5703 = vmax.f32 %v5018, 0.0
    %v5704 = vmax.f32 %v3001, 0.0
    %v5705 = vmax.f32 %v3003, 0.0
    %v5706 = vmax.f32 %v3674, 0.0
    %v5707 = vmax.f32 %v3676, 0.0
    %v5708 = vmax.f32 %v4347, 0.0
    %v5709 = vmax.f32 %v4349, 0.0
    %v5710 = vmax.f32 %v5020, 0.0
    %v5711 = vmax.f32 %v5022, 0.0
    %v5712 = vmax.f32 %v3007, 0.0
    %v5713 = vmax.f32 %v3009, 0.0
    %v5714 = vmax.f32 %v3680, 0.0
    %v5715 = vmax.f32 %v3682, 0.0
    %v5716 = vmax.f32 %v4353, 0.0
    %v5717 = vmax.f32 %v4355, 0.0
    %v5718 = vmax.f32 %v5026, 0.0
    %v5719 = vmax.f32 %v5028, 0.0
    %v5720 = vmax.f32 %v3011, 0.0
    %v5721 = vmax.f32 %v3013, 0.0
    %v5722 = vmax.f32 %v3684, 0.0
    %v5723 = vmax.f32 %v3686, 0.0
    %v5724 = vmax.f32 %v4357, 0.0
    %v5725 = vmax.f32 %v4359, 0.0
    %v5726 = vmax.f32 %v5030, 0.0
    %v5727 = vmax.f32 %v5032, 0.0
    %v5728 = vmax.f32 %v3017, 0.0
    %v5729 = vmax.f32 %v3019, 0.0
    %v5730 = vmax.f32 %v3690, 0.0
    %v5731 = vmax.f32 %v3692, 0.0
    %v5732 = vmax.f32 %v4363, 0.0
    %v5733 = vmax.f32 %v4365, 0.0
    %v5734 = vmax.f32 %v5036, 0.0
    %v5735 = vmax.f32 %v5038, 0.0
    %v5736 = vmax.f32 %v3021, 0.0
    %v5737 = vmax.f32 %v3023, 0.0
    %v5738 = vmax.f32 %v3694, 0.0
    %v5739 = vmax.f32 %v3696, 0.0
    %v5740 = vmax.f32 %v4367, 0.0
    %v5741 = vmax.f32 %v4369, 0.0
    %v5742 = vmax.f32 %v5040, 0.0
    %v5743 = vmax.f32 %v5042, 0.0
    %v5744 = vmax.f32 %v3027, 0.0
    %v5745 = vmax.f32 %v3029, 0.0
    %v5746 = vmax.f32 %v3700, 0.0
    %v5747 = vmax.f32 %v3702, 0.0
    %v5748 = vmax.f32 %v4373, 0.0
    %v5749 = vmax.f32 %v4375, 0.0
    %v5750 = vmax.f32 %v5046, 0.0
    %v5751 = vmax.f32 %v5048, 0.0
    %v5752 = vmax.f32 %v3031, 0.0
    %v5753 = vmax.f32 %v3033, 0.0
    %v5754 = vmax.f32 %v3704, 0.0
    %v5755 = vmax.f32 %v3706, 0.0
    %v5756 = vmax.f32 %v4377, 0.0
    %v5757 = vmax.f32 %v4379, 0.0
    %v5758 = vmax.f32 %v5050, 0.0
    %v5759 = vmax.f32 %v5052, 0.0
    %v5760 = vmax.f32 %v3037, 0.0
    %v5761 = vmax.f32 %v3039, 0.0
    %v5762 = vmax.f32 %v3710, 0.0
    %v5763 = vmax.f32 %v3712, 0.0
    %v5764 = vmax.f32 %v4383, 0.0
    %v5765 = vmax.f32 %v4385, 0.0
    %v5766 = vmax.f32 %v5056, 0.0
    %v5767 = vmax.f32 %v5058, 0.0
    %v5768 = vmax.f32 %v3041, 0.0
    %v5769 = vmax.f32 %v3043, 0.0
    %v5770 = vmax.f32 %v3714, 0.0
    %v5771 = vmax.f32 %v3716, 0.0
    %v5772 = vmax.f32 %v4387, 0.0
    %v5773 = vmax.f32 %v4389, 0.0
    %v5774 = vmax.f32 %v5060, 0.0
    %v5775 = vmax.f32 %v5062, 0.0
    %v5776 = vmax.f32 %v3047, 0.0
    %v5777 = vmax.f32 %v3049, 0.0
    %v5778 = vmax.f32 %v3720, 0.0
    %v5779 = vmax.f32 %v3722, 0.0
    %v5780 = vmax.f32 %v4393, 0.0
    %v5781 = vmax.f32 %v4395, 0.0
    %v5782 = vmax.f32 %v5066, 0.0
    %v5783 = vmax.f32 %v5068, 0.0
    %v5784 = vmax.f32 %v3051, 0.0
    %v5785 = vmax.f32 %v3053, 0.0
    %v5786 = vmax.f32 %v3724, 0.0
    %v5787 = vmax.f32 %v3726, 0.0
    %v5788 = vmax.f32 %v4397, 0.0
    %v5789 = vmax.f32 %v4399, 0.0
    %v5790 = vmax.f32 %v5070, 0.0
    %v5791 = vmax.f32 %v5072, 0.0
    %v5792 = vmax.f32 %v3057, 0.0
    %v5793 = vmax.f32 %v3059, 0.0
    %v5794 = vmax.f32 %v3730, 0.0
    %v5795 = vmax.f32 %v3732, 0.0
    %v5796 = vmax.f32 %v4403, 0.0
    %v5797 = vmax.f32 %v4405, 0.0
    %v5798 = vmax.f32 %v5076, 0.0
    %v5799 = vmax.f32 %v5078, 0.0
    %v5800 = vmax.f32 %v3061, 0.0
    %v5801 = vmax.f32 %v3063, 0.0
    %v5802 = vmax.f32 %v3734, 0.0
    %v5803 = vmax.f32 %v3736, 0.0
    %v5804 = vmax.f32 %v4407, 0.0
    %v5805 = vmax.f32 %v4409, 0.0
    %v5806 = vmax.f32 %v5080, 0.0
    %v5807 = vmax.f32 %v5082, 0.0
    %v5808 = vmax.f32 %v3067, 0.0
    %v5809 = vmax.f32 %v3069, 0.0
    %v5810 = vmax.f32 %v3740, 0.0
    %v5811 = vmax.f32 %v3742, 0.0
    %v5812 = vmax.f32 %v4413, 0.0
    %v5813 = vmax.f32 %v4415, 0.0
    %v5814 = vmax.f32 %v5086, 0.0
    %v5815 = vmax.f32 %v5088, 0.0
    %v5816 = vmax.f32 %v3071, 0.0
    %v5817 = vmax.f32 %v3073, 0.0
    %v5818 = vmax.f32 %v3744, 0.0
    %v5819 = vmax.f32 %v3746, 0.0
    %v5820 = vmax.f32 %v4417, 0.0
    %v5821 = vmax.f32 %v4419, 0.0
    %v5822 = vmax.f32 %v5090, 0.0
    %v5823 = vmax.f32 %v5092, 0.0
    %v5824 = vmax.f32 %v3077, 0.0
    %v5825 = vmax.f32 %v3079, 0.0
    %v5826 = vmax.f32 %v3750, 0.0
    %v5827 = vmax.f32 %v3752, 0.0
    %v5828 = vmax.f32 %v4423, 0.0
    %v5829 = vmax.f32 %v4425, 0.0
    %v5830 = vmax.f32 %v5096, 0.0
    %v5831 = vmax.f32 %v5098, 0.0
    %v5832 = vmax.f32 %v3081, 0.0
    %v5833 = vmax.f32 %v3083, 0.0
    %v5834 = vmax.f32 %v3754, 0.0
    %v5835 = vmax.f32 %v3756, 0.0
    %v5836 = vmax.f32 %v4427, 0.0
    %v5837 = vmax.f32 %v4429, 0.0
    %v5838 = vmax.f32 %v5100, 0.0
    %v5839 = vmax.f32 %v5102, 0.0
    %v5840 = vmax.f32 %v3087, 0.0
    %v5841 = vmax.f32 %v3089, 0.0
    %v5842 = vmax.f32 %v3760, 0.0
    %v5843 = vmax.f32 %v3762, 0.0
    %v5844 = vmax.f32 %v4433, 0.0
    %v5845 = vmax.f32 %v4435, 0.0
    %v5846 = vmax.f32 %v5106, 0.0
    %v5847 = vmax.f32 %v5108, 0.0
    %v5848 = vmax.f32 %v3091, 0.0
    %v5849 = vmax.f32 %v3093, 0.0
    %v5850 = vmax.f32 %v3764, 0.0
    %v5851 = vmax.f32 %v3766, 0.0
    %v5852 = vmax.f32 %v4437, 0.0
    %v5853 = vmax.f32 %v4439, 0.0
    %v5854 = vmax.f32 %v5110, 0.0
    %v5855 = vmax.f32 %v5112, 0.0
    %v5856 = vmax.f32 %v3097, 0.0
    %v5857 = vmax.f32 %v3099, 0.0
    %v5858 = vmax.f32 %v3770, 0.0
    %v5859 = vmax.f32 %v3772, 0.0
    %v5860 = vmax.f32 %v4443, 0.0
    %v5861 = vmax.f32 %v4445, 0.0
    %v5862 = vmax.f32 %v5116, 0.0
    %v5863 = vmax.f32 %v5118, 0.0
    %v5864 = vmax.f32 %v3101, 0.0
    %v5865 = vmax.f32 %v3103, 0.0
    %v5866 = vmax.f32 %v3774, 0.0
    %v5867 = vmax.f32 %v3776, 0.0
    %v5868 = vmax.f32 %v4447, 0.0
    %v5869 = vmax.f32 %v4449, 0.0
    %v5870 = vmax.f32 %v5120, 0.0
    %v5871 = vmax.f32 %v5122, 0.0
    %v5872 = vmax.f32 %v3107, 0.0
    %v5873 = vmax.f32 %v3109, 0.0
    %v5874 = vmax.f32 %v3780, 0.0
    %v5875 = vmax.f32 %v3782, 0.0
    %v5876 = vmax.f32 %v4453, 0.0
    %v5877 = vmax.f32 %v4455, 0.0
    %v5878 = vmax.f32 %v5126, 0.0
    %v5879 = vmax.f32 %v5128, 0.0
    %v5880 = vmax.f32 %v3111, 0.0
    %v5881 = vmax.f32 %v3113, 0.0
    %v5882 = vmax.f32 %v3784, 0.0
    %v5883 = vmax.f32 %v3786, 0.0
    %v5884 = vmax.f32 %v4457, 0.0
    %v5885 = vmax.f32 %v4459, 0.0
    %v5886 = vmax.f32 %v5130, 0.0
    %v5887 = vmax.f32 %v5132, 0.0
    %v5888 = vmax.f32 %v3117, 0.0
    %v5889 = vmax.f32 %v3119, 0.0
    %v5890 = vmax.f32 %v3790, 0.0
    %v5891 = vmax.f32 %v3792, 0.0
    %v5892 = vmax.f32 %v4463, 0.0
    %v5893 = vmax.f32 %v4465, 0.0
    %v5894 = vmax.f32 %v5136, 0.0
    %v5895 = vmax.f32 %v5138, 0.0
    %v5896 = vmax.f32 %v3121, 0.0
    %v5897 = vmax.f32 %v3123, 0.0
    %v5898 = vmax.f32 %v3794, 0.0
    %v5899 = vmax.f32 %v3796, 0.0
    %v5900 = vmax.f32 %v4467, 0.0
    %v5901 = vmax.f32 %v4469, 0.0
    %v5902 = vmax.f32 %v5140, 0.0
    %v5903 = vmax.f32 %v5142, 0.0
    %v5904 = vmax.f32 %v3127, 0.0
    %v5905 = vmax.f32 %v3129, 0.0
    %v5906 = vmax.f32 %v3800, 0.0
    %v5907 = vmax.f32 %v3802, 0.0
    %v5908 = vmax.f32 %v4473, 0.0
    %v5909 = vmax.f32 %v4475, 0.0
    %v5910 = vmax.f32 %v5146, 0.0
    %v5911 = vmax.f32 %v5148, 0.0
    %v5912 = vmax.f32 %v3131, 0.0
    %v5913 = vmax.f32 %v3133, 0.0
    %v5914 = vmax.f32 %v3804, 0.0
    %v5915 = vmax.f32 %v3806, 0.0
    %v5916 = vmax.f32 %v4477, 0.0
    %v5917 = vmax.f32 %v4479, 0.0
    %v5918 = vmax.f32 %v5150, 0.0
    %v5919 = vmax.f32 %v5152, 0.0
    %v5920 = vmax.f32 %v3137, 0.0
    %v5921 = vmax.f32 %v3139, 0.0
    %v5922 = vmax.f32 %v3810, 0.0
    %v5923 = vmax.f32 %v3812, 0.0
    %v5924 = vmax.f32 %v4483, 0.0
    %v5925 = vmax.f32 %v4485, 0.0
    %v5926 = vmax.f32 %v5156, 0.0
    %v5927 = vmax.f32 %v5158, 0.0
    %v5928 = vmax.f32 %v3141, 0.0
    %v5929 = vmax.f32 %v3143, 0.0
    %v5930 = vmax.f32 %v3814, 0.0
    %v5931 = vmax.f32 %v3816, 0.0
    %v5932 = vmax.f32 %v4487, 0.0
    %v5933 = vmax.f32 %v4489, 0.0
    %v5934 = vmax.f32 %v5160, 0.0
    %v5935 = vmax.f32 %v5162, 0.0
    %v5936 = vmax.f32 %v3147, 0.0
    %v5937 = vmax.f32 %v3149, 0.0
    %v5938 = vmax.f32 %v3820, 0.0
    %v5939 = vmax.f32 %v3822, 0.0
    %v5940 = vmax.f32 %v4493, 0.0
    %v5941 = vmax.f32 %v4495, 0.0
    %v5942 = vmax.f32 %v5166, 0.0
    %v5943 = vmax.f32 %v5168, 0.0
    %v5944 = vmax.f32 %v3151, 0.0
    %v5945 = vmax.f32 %v3153, 0.0
    %v5946 = vmax.f32 %v3824, 0.0
    %v5947 = vmax.f32 %v3826, 0.0
    %v5948 = vmax.f32 %v4497, 0.0
    %v5949 = vmax.f32 %v4499, 0.0
    %v5950 = vmax.f32 %v5170, 0.0
    %v5951 = vmax.f32 %v5172, 0.0
    %v5952 = vmax.f32 %v3157, 0.0
    %v5953 = vmax.f32 %v3159, 0.0
    %v5954 = vmax.f32 %v3830, 0.0
    %v5955 = vmax.f32 %v3832, 0.0
    %v5956 = vmax.f32 %v4503, 0.0
    %v5957 = vmax.f32 %v4505, 0.0
    %v5958 = vmax.f32 %v5176, 0.0
    %v5959 = vmax.f32 %v5178, 0.0
    %v5960 = vmax.f32 %v3161, 0.0
    %v5961 = vmax.f32 %v3163, 0.0
    %v5962 = vmax.f32 %v3834, 0.0
    %v5963 = vmax.f32 %v3836, 0.0
    %v5964 = vmax.f32 %v4507, 0.0
    %v5965 = vmax.f32 %v4509, 0.0
    %v5966 = vmax.f32 %v5180, 0.0
    %v5967 = vmax.f32 %v5182, 0.0
    %v5968 = vmax.f32 %v3167, 0.0
    %v5969 = vmax.f32 %v3169, 0.0
    %v5970 = vmax.f32 %v3840, 0.0
    %v5971 = vmax.f32 %v3842, 0.0
    %v5972 = vmax.f32 %v4513, 0.0
    %v5973 = vmax.f32 %v4515, 0.0
    %v5974 = vmax.f32 %v5186, 0.0
    %v5975 = vmax.f32 %v5188, 0.0
    %v5976 = vmax.f32 %v3171, 0.0
    %v5977 = vmax.f32 %v3173, 0.0
    %v5978 = vmax.f32 %v3844, 0.0
    %v5979 = vmax.f32 %v3846, 0.0
    %v5980 = vmax.f32 %v4517, 0.0
    %v5981 = vmax.f32 %v4519, 0.0
    %v5982 = vmax.f32 %v5190, 0.0
    %v5983 = vmax.f32 %v5192, 0.0
    %v5984 = vmax.f32 %v3177, 0.0
    %v5985 = vmax.f32 %v3179, 0.0
    %v5986 = vmax.f32 %v3850, 0.0
    %v5987 = vmax.f32 %v3852, 0.0
    %v5988 = vmax.f32 %v4523, 0.0
    %v5989 = vmax.f32 %v4525, 0.0
    %v5990 = vmax.f32 %v5196, 0.0
    %v5991 = vmax.f32 %v5198, 0.0
    %v5992 = vmax.f32 %v3181, 0.0
    %v5993 = vmax.f32 %v3183, 0.0
    %v5994 = vmax.f32 %v3854, 0.0
    %v5995 = vmax.f32 %v3856, 0.0
    %v5996 = vmax.f32 %v4527, 0.0
    %v5997 = vmax.f32 %v4529, 0.0
    %v5998 = vmax.f32 %v5200, 0.0
    %v5999 = vmax.f32 %v5202, 0.0
    %v6000 = vmax.f32 %v3187, 0.0
    %v6001 = vmax.f32 %v3189, 0.0
    %v6002 = vmax.f32 %v3860, 0.0
    %v6003 = vmax.f32 %v3862, 0.0
    %v6004 = vmax.f32 %v4533, 0.0
    %v6005 = vmax.f32 %v4535, 0.0
    %v6006 = vmax.f32 %v5206, 0.0
    %v6007 = vmax.f32 %v5208, 0.0
    %v6008 = vmax.f32 %v3191, 0.0
    %v6009 = vmax.f32 %v3193, 0.0
    %v6010 = vmax.f32 %v3864, 0.0
    %v6011 = vmax.f32 %v3866, 0.0
    %v6012 = vmax.f32 %v4537, 0.0
    %v6013 = vmax.f32 %v4539, 0.0
    %v6014 = vmax.f32 %v5210, 0.0
    %v6015 = vmax.f32 %v5212, 0.0
    %v6016 = vmax.f32 %v3197, 0.0
    %v6017 = vmax.f32 %v3199, 0.0
    %v6018 = vmax.f32 %v3870, 0.0
    %v6019 = vmax.f32 %v3872, 0.0
    %v6020 = vmax.f32 %v4543, 0.0
    %v6021 = vmax.f32 %v4545, 0.0
    %v6022 = vmax.f32 %v5216, 0.0
    %v6023 = vmax.f32 %v5218, 0.0
    %v6024 = vmax.f32 %v3201, 0.0
    %v6025 = vmax.f32 %v3203, 0.0
    %v6026 = vmax.f32 %v3874, 0.0
    %v6027 = vmax.f32 %v3876, 0.0
    %v6028 = vmax.f32 %v4547, 0.0
    %v6029 = vmax.f32 %v4549, 0.0
    %v6030 = vmax.f32 %v5220, 0.0
    %v6031 = vmax.f32 %v5222, 0.0
    %v6032 = vmax.f32 %v3207, 0.0
    %v6033 = vmax.f32 %v3209, 0.0
    %v6034 = vmax.f32 %v3880, 0.0
    %v6035 = vmax.f32 %v3882, 0.0
    %v6036 = vmax.f32 %v4553, 0.0
    %v6037 = vmax.f32 %v4555, 0.0
    %v6038 = vmax.f32 %v5226, 0.0
    %v6039 = vmax.f32 %v5228, 0.0
    %v6040 = vmax.f32 %v3211, 0.0
    %v6041 = vmax.f32 %v3213, 0.0
    %v6042 = vmax.f32 %v3884, 0.0
    %v6043 = vmax.f32 %v3886, 0.0
    %v6044 = vmax.f32 %v4557, 0.0
    %v6045 = vmax.f32 %v4559, 0.0
    %v6046 = vmax.f32 %v5230, 0.0
    %v6047 = vmax.f32 %v5232, 0.0
    %v6048 = vmax.f32 %v3217, 0.0
    %v6049 = vmax.f32 %v3219, 0.0
    %v6050 = vmax.f32 %v3890, 0.0
    %v6051 = vmax.f32 %v3892, 0.0
    %v6052 = vmax.f32 %v4563, 0.0
    %v6053 = vmax.f32 %v4565, 0.0
    %v6054 = vmax.f32 %v5236, 0.0
    %v6055 = vmax.f32 %v5238, 0.0
    %v6056 = vmax.f32 %v3221, 0.0
    %v6057 = vmax.f32 %v3223, 0.0
    %v6058 = vmax.f32 %v3894, 0.0
    %v6059 = vmax.f32 %v3896, 0.0
    %v6060 = vmax.f32 %v4567, 0.0
    %v6061 = vmax.f32 %v4569, 0.0
    %v6062 = vmax.f32 %v5240, 0.0
    %v6063 = vmax.f32 %v5242, 0.0
    %v6064 = vmax.f32 %v3227, 0.0
    %v6065 = vmax.f32 %v3229, 0.0
    %v6066 = vmax.f32 %v3900, 0.0
    %v6067 = vmax.f32 %v3902, 0.0
    %v6068 = vmax.f32 %v4573, 0.0
    %v6069 = vmax.f32 %v4575, 0.0
    %v6070 = vmax.f32 %v5246, 0.0
    %v6071 = vmax.f32 %v5248, 0.0
    %v6072 = vmax.f32 %v3231, 0.0
    %v6073 = vmax.f32 %v3233, 0.0
    %v6074 = vmax.f32 %v3904, 0.0
    %v6075 = vmax.f32 %v3906, 0.0
    %v6076 = vmax.f32 %v4577, 0.0
    %v6077 = vmax.f32 %v4579, 0.0
    %v6078 = vmax.f32 %v5250, 0.0
    %v6079 = vmax.f32 %v5252, 0.0
    %v6080 = vmax.f32 %v3237, 0.0
    %v6081 = vmax.f32 %v3239, 0.0
    %v6082 = vmax.f32 %v3910, 0.0
    %v6083 = vmax.f32 %v3912, 0.0
    %v6084 = vmax.f32 %v4583, 0.0
    %v6085 = vmax.f32 %v4585, 0.0
    %v6086 = vmax.f32 %v5256, 0.0
    %v6087 = vmax.f32 %v5258, 0.0
    %v6088 = vmax.f32 %v3241, 0.0
    %v6089 = vmax.f32 %v3243, 0.0
    %v6090 = vmax.f32 %v3914, 0.0
    %v6091 = vmax.f32 %v3916, 0.0
    %v6092 = vmax.f32 %v4587, 0.0
    %v6093 = vmax.f32 %v4589, 0.0
    %v6094 = vmax.f32 %v5260, 0.0
    %v6095 = vmax.f32 %v5262, 0.0
    %v6096 = vmax.f32 %v3247, 0.0
    %v6097 = vmax.f32 %v3249, 0.0
    %v6098 = vmax.f32 %v3920, 0.0
    %v6099 = vmax.f32 %v3922, 0.0
    %v6100 = vmax.f32 %v4593, 0.0
    %v6101 = vmax.f32 %v4595, 0.0
    %v6102 = vmax.f32 %v5266, 0.0
    %v6103 = vmax.f32 %v5268, 0.0
    %v6104 = vmax.f32 %v3251, 0.0
    %v6105 = vmax.f32 %v3253, 0.0
    %v6106 = vmax.f32 %v3924, 0.0
    %v6107 = vmax.f32 %v3926, 0.0
    %v6108 = vmax.f32 %v4597, 0.0
    %v6109 = vmax.f32 %v4599, 0.0
    %v6110 = vmax.f32 %v5270, 0.0
    %v6111 = vmax.f32 %v5272, 0.0
    %v6112 = vmax.f32 %v3257, 0.0
    %v6113 = vmax.f32 %v3259, 0.0
    %v6114 = vmax.f32 %v3930, 0.0
    %v6115 = vmax.f32 %v3932, 0.0
    %v6116 = vmax.f32 %v4603, 0.0
    %v6117 = vmax.f32 %v4605, 0.0
    %v6118 = vmax.f32 %v5276, 0.0
    %v6119 = vmax.f32 %v5278, 0.0
    %v6120 = vmax.f32 %v3261, 0.0
    %v6121 = vmax.f32 %v3263, 0.0
    %v6122 = vmax.f32 %v3934, 0.0
    %v6123 = vmax.f32 %v3936, 0.0
    %v6124 = vmax.f32 %v4607, 0.0
    %v6125 = vmax.f32 %v4609, 0.0
    %v6126 = vmax.f32 %v5280, 0.0
    %v6127 = vmax.f32 %v5282, 0.0
    %v6128 = vmax.f32 %v3267, 0.0
    %v6129 = vmax.f32 %v3269, 0.0
    %v6130 = vmax.f32 %v3940, 0.0
    %v6131 = vmax.f32 %v3942, 0.0
    %v6132 = vmax.f32 %v4613, 0.0
    %v6133 = vmax.f32 %v4615, 0.0
    %v6134 = vmax.f32 %v5286, 0.0
    %v6135 = vmax.f32 %v5288, 0.0
    %v6136 = vmax.f32 %v3271, 0.0
    %v6137 = vmax.f32 %v3273, 0.0
    %v6138 = vmax.f32 %v3944, 0.0
    %v6139 = vmax.f32 %v3946, 0.0
    %v6140 = vmax.f32 %v4617, 0.0
    %v6141 = vmax.f32 %v4619, 0.0
    %v6142 = vmax.f32 %v5290, 0.0
    %v6143 = vmax.f32 %v5292, 0.0
    %v6144 = vmax.f32 %v3277, 0.0
    %v6145 = vmax.f32 %v3279, 0.0
    %v6146 = vmax.f32 %v3950, 0.0
    %v6147 = vmax.f32 %v3952, 0.0
    %v6148 = vmax.f32 %v4623, 0.0
    %v6149 = vmax.f32 %v4625, 0.0
    %v6150 = vmax.f32 %v5296, 0.0
    %v6151 = vmax.f32 %v5298, 0.0
    %v6152 = vmax.f32 %v3281, 0.0
    %v6153 = vmax.f32 %v3283, 0.0
    %v6154 = vmax.f32 %v3954, 0.0
    %v6155 = vmax.f32 %v3956, 0.0
    %v6156 = vmax.f32 %v4627, 0.0
    %v6157 = vmax.f32 %v4629, 0.0
    %v6158 = vmax.f32 %v5300, 0.0
    %v6159 = vmax.f32 %v5302, 0.0
    %v6160 = vmax.f32 %v3287, 0.0
    %v6161 = vmax.f32 %v3289, 0.0
    %v6162 = vmax.f32 %v3960, 0.0
    %v6163 = vmax.f32 %v3962, 0.0
    %v6164 = vmax.f32 %v4633, 0.0
    %v6165 = vmax.f32 %v4635, 0.0
    %v6166 = vmax.f32 %v5306, 0.0
    %v6167 = vmax.f32 %v5308, 0.0
    %v6168 = vmax.f32 %v3291, 0.0
    %v6169 = vmax.f32 %v3293, 0.0
    %v6170 = vmax.f32 %v3964, 0.0
    %v6171 = vmax.f32 %v3966, 0.0
    %v6172 = vmax.f32 %v4637, 0.0
    %v6173 = vmax.f32 %v4639, 0.0
    %v6174 = vmax.f32 %v5310, 0.0
    %v6175 = vmax.f32 %v5312, 0.0
    %v6176 = vmax.f32 %v3297, 0.0
    %v6177 = vmax.f32 %v3299, 0.0
    %v6178 = vmax.f32 %v3970, 0.0
    %v6179 = vmax.f32 %v3972, 0.0
    %v6180 = vmax.f32 %v4643, 0.0
    %v6181 = vmax.f32 %v4645, 0.0
    %v6182 = vmax.f32 %v5316, 0.0
    %v6183 = vmax.f32 %v5318, 0.0
    %v6184 = vmax.f32 %v3301, 0.0
    %v6185 = vmax.f32 %v3303, 0.0
    %v6186 = vmax.f32 %v3974, 0.0
    %v6187 = vmax.f32 %v3976, 0.0
    %v6188 = vmax.f32 %v4647, 0.0
    %v6189 = vmax.f32 %v4649, 0.0
    %v6190 = vmax.f32 %v5320, 0.0
    %v6191 = vmax.f32 %v5322, 0.0
    %v6192 = vmax.f32 %v3307, 0.0
    %v6193 = vmax.f32 %v3309, 0.0
    %v6194 = vmax.f32 %v3980, 0.0
    %v6195 = vmax.f32 %v3982, 0.0
    %v6196 = vmax.f32 %v4653, 0.0
    %v6197 = vmax.f32 %v4655, 0.0
    %v6198 = vmax.f32 %v5326, 0.0
    %v6199 = vmax.f32 %v5328, 0.0
    %v6200 = vmax.f32 %v3311, 0.0
    %v6201 = vmax.f32 %v3313, 0.0
    %v6202 = vmax.f32 %v3984, 0.0
    %v6203 = vmax.f32 %v3986, 0.0
    %v6204 = vmax.f32 %v4657, 0.0
    %v6205 = vmax.f32 %v4659, 0.0
    %v6206 = vmax.f32 %v5330, 0.0
    %v6207 = vmax.f32 %v5332, 0.0
    %v6208 = vmax.f32 %v3317, 0.0
    %v6209 = vmax.f32 %v3319, 0.0
    %v6210 = vmax.f32 %v3990, 0.0
    %v6211 = vmax.f32 %v3992, 0.0
    %v6212 = vmax.f32 %v4663, 0.0
    %v6213 = vmax.f32 %v4665, 0.0
    %v6214 = vmax.f32 %v5336, 0.0
    %v6215 = vmax.f32 %v5338, 0.0
    %v6216 = vmax.f32 %v3321, 0.0
    %v6217 = vmax.f32 %v3323, 0.0
    %v6218 = vmax.f32 %v3994, 0.0
    %v6219 = vmax.f32 %v3996, 0.0
    %v6220 = vmax.f32 %v4667, 0.0
    %v6221 = vmax.f32 %v4669, 0.0
    %v6222 = vmax.f32 %v5340, 0.0
    %v6223 = vmax.f32 %v5342, 0.0
    %v6224 = vmax.f32 %v3327, 0.0
    %v6225 = vmax.f32 %v3329, 0.0
    %v6226 = vmax.f32 %v4000, 0.0
    %v6227 = vmax.f32 %v4002, 0.0
    %v6228 = vmax.f32 %v4673, 0.0
    %v6229 = vmax.f32 %v4675, 0.0
    %v6230 = vmax.f32 %v5346, 0.0
    %v6231 = vmax.f32 %v5348, 0.0
    %v6232 = vmax.f32 %v3331, 0.0
    %v6233 = vmax.f32 %v3333, 0.0
    %v6234 = vmax.f32 %v4004, 0.0
    %v6235 = vmax.f32 %v4006, 0.0
    %v6236 = vmax.f32 %v4677, 0.0
    %v6237 = vmax.f32 %v4679, 0.0
    %v6238 = vmax.f32 %v5350, 0.0
    %v6239 = vmax.f32 %v5352, 0.0
    %v6240 = vmax.f32 %v3337, 0.0
    %v6241 = vmax.f32 %v3339, 0.0
    %v6242 = vmax.f32 %v4010, 0.0
    %v6243 = vmax.f32 %v4012, 0.0
    %v6244 = vmax.f32 %v4683, 0.0
    %v6245 = vmax.f32 %v4685, 0.0
    %v6246 = vmax.f32 %v5356, 0.0
    %v6247 = vmax.f32 %v5358, 0.0
    %v6248 = vmax.f32 %v3341, 0.0
    %v6249 = vmax.f32 %v3343, 0.0
    %v6250 = vmax.f32 %v4014, 0.0
    %v6251 = vmax.f32 %v4016, 0.0
    %v6252 = vmax.f32 %v4687, 0.0
    %v6253 = vmax.f32 %v4689, 0.0
    %v6254 = vmax.f32 %v5360, 0.0
    %v6255 = vmax.f32 %v5362, 0.0
    %v6256 = vmax.f32 %v3347, 0.0
    %v6257 = vmax.f32 %v3349, 0.0
    %v6258 = vmax.f32 %v4020, 0.0
    %v6259 = vmax.f32 %v4022, 0.0
    %v6260 = vmax.f32 %v4693, 0.0
    %v6261 = vmax.f32 %v4695, 0.0
    %v6262 = vmax.f32 %v5366, 0.0
    %v6263 = vmax.f32 %v5368, 0.0
    %v6264 = vmax.f32 %v3351, 0.0
    %v6265 = vmax.f32 %v3353, 0.0
    %v6266 = vmax.f32 %v4024, 0.0
    %v6267 = vmax.f32 %v4026, 0.0
    %v6268 = vmax.f32 %v4697, 0.0
    %v6269 = vmax.f32 %v4699, 0.0
    %v6270 = vmax.f32 %v5370, 0.0
    %v6271 = vmax.f32 %v5372, 0.0
    %v6272 = vmax.f32 %v3357, 0.0
    %v6273 = vmax.f32 %v3359, 0.0
    %v6274 = vmax.f32 %v4030, 0.0
    %v6275 = vmax.f32 %v4032, 0.0
    %v6276 = vmax.f32 %v4703, 0.0
    %v6277 = vmax.f32 %v4705, 0.0
    %v6278 = vmax.f32 %v5376, 0.0
    %v6279 = vmax.f32 %v5378, 0.0
    %v6280 = vmax.f32 %v3361, 0.0
    %v6281 = vmax.f32 %v3363, 0.0
    %v6282 = vmax.f32 %v4034, 0.0
    %v6283 = vmax.f32 %v4036, 0.0
    %v6284 = vmax.f32 %v4707, 0.0
    %v6285 = vmax.f32 %v4709, 0.0
    %v6286 = vmax.f32 %v5380, 0.0
    %v6287 = vmax.f32 %v5382, 0.0
    %v6288 = vmax.f32 %v3367, 0.0
    %v6289 = vmax.f32 %v3369, 0.0
    %v6290 = vmax.f32 %v4040, 0.0
    %v6291 = vmax.f32 %v4042, 0.0
    %v6292 = vmax.f32 %v4713, 0.0
    %v6293 = vmax.f32 %v4715, 0.0
    %v6294 = vmax.f32 %v5386, 0.0
    %v6295 = vmax.f32 %v5388, 0.0
    %v6296 = vmax.f32 %v3371, 0.0
    %v6297 = vmax.f32 %v3373, 0.0
    %v6298 = vmax.f32 %v4044, 0.0
    %v6299 = vmax.f32 %v4046, 0.0
    %v6300 = vmax.f32 %v4717, 0.0
    %v6301 = vmax.f32 %v4719, 0.0
    %v6302 = vmax.f32 %v5390, 0.0
    %v6303 = vmax.f32 %v5392, 0.0
    %v6304 = vmax.f32 %v3377, 0.0
    %v6305 = vmax.f32 %v3379, 0.0
    %v6306 = vmax.f32 %v4050, 0.0
    %v6307 = vmax.f32 %v4052, 0.0
    %v6308 = vmax.f32 %v4723, 0.0
    %v6309 = vmax.f32 %v4725, 0.0
    %v6310 = vmax.f32 %v5396, 0.0
    %v6311 = vmax.f32 %v5398, 0.0
    %v6312 = vmax.f32 %v3381, 0.0
    %v6313 = vmax.f32 %v3383, 0.0
    %v6314 = vmax.f32 %v4054, 0.0
    %v6315 = vmax.f32 %v4056, 0.0
    %v6316 = vmax.f32 %v4727, 0.0
    %v6317 = vmax.f32 %v4729, 0.0
    %v6318 = vmax.f32 %v5400, 0.0
    %v6319 = vmax.f32 %v5402, 0.0
    %v6320 = vmax.f32 %v3387, 0.0
    %v6321 = vmax.f32 %v3389, 0.0
    %v6322 = vmax.f32 %v4060, 0.0
    %v6323 = vmax.f32 %v4062, 0.0
    %v6324 = vmax.f32 %v4733, 0.0
    %v6325 = vmax.f32 %v4735, 0.0
    %v6326 = vmax.f32 %v5406, 0.0
    %v6327 = vmax.f32 %v5408, 0.0
    %v6328 = vmax.f32 %v3391, 0.0
    %v6329 = vmax.f32 %v3393, 0.0
    %v6330 = vmax.f32 %v4064, 0.0
    %v6331 = vmax.f32 %v4066, 0.0
    %v6332 = vmax.f32 %v4737, 0.0
    %v6333 = vmax.f32 %v4739, 0.0
    %v6334 = vmax.f32 %v5410, 0.0
    %v6335 = vmax.f32 %v5412, 0.0
    %v6336 = vmax.f32 %v3397, 0.0
    %v6337 = vmax.f32 %v3399, 0.0
    %v6338 = vmax.f32 %v4070, 0.0
    %v6339 = vmax.f32 %v4072, 0.0
    %v6340 = vmax.f32 %v4743, 0.0
    %v6341 = vmax.f32 %v4745, 0.0
    %v6342 = vmax.f32 %v5416, 0.0
    %v6343 = vmax.f32 %v5418, 0.0
    %v6344 = vmax.f32 %v3401, 0.0
    %v6345 = vmax.f32 %v3403, 0.0
    %v6346 = vmax.f32 %v4074, 0.0
    %v6347 = vmax.f32 %v4076, 0.0
    %v6348 = vmax.f32 %v4747, 0.0
    %v6349 = vmax.f32 %v4749, 0.0
    %v6350 = vmax.f32 %v5420, 0.0
    %v6351 = vmax.f32 %v5422, 0.0
    %v6352 = vmax.f32 %v3407, 0.0
    %v6353 = vmax.f32 %v3409, 0.0
    %v6354 = vmax.f32 %v4080, 0.0
    %v6355 = vmax.f32 %v4082, 0.0
    %v6356 = vmax.f32 %v4753, 0.0
    %v6357 = vmax.f32 %v4755, 0.0
    %v6358 = vmax.f32 %v5426, 0.0
    %v6359 = vmax.f32 %v5428, 0.0
    %v6360 = vmax.f32 %v3411, 0.0
    %v6361 = vmax.f32 %v3413, 0.0
    %v6362 = vmax.f32 %v4084, 0.0
    %v6363 = vmax.f32 %v4086, 0.0
    %v6364 = vmax.f32 %v4757, 0.0
    %v6365 = vmax.f32 %v4759, 0.0
    %v6366 = vmax.f32 %v5430, 0.0
    %v6367 = vmax.f32 %v5432, 0.0
    %v6368 = vmax.f32 %v3417, 0.0
    %v6369 = vmax.f32 %v3419, 0.0
    %v6370 = vmax.f32 %v4090, 0.0
    %v6371 = vmax.f32 %v4092, 0.0
    %v6372 = vmax.f32 %v4763, 0.0
    %v6373 = vmax.f32 %v4765, 0.0
    %v6374 = vmax.f32 %v5436, 0.0
    %v6375 = vmax.f32 %v5438, 0.0
    %v6376 = vmax.f32 %v3421, 0.0
    %v6377 = vmax.f32 %v3423, 0.0
    %v6378 = vmax.f32 %v4094, 0.0
    %v6379 = vmax.f32 %v4096, 0.0
    %v6380 = vmax.f32 %v4767, 0.0
    %v6381 = vmax.f32 %v4769, 0.0
    %v6382 = vmax.f32 %v5440, 0.0
    %v6383 = vmax.f32 %v5442, 0.0
    %v6384 = vmax.f32 %v3427, 0.0
    %v6385 = vmax.f32 %v3429, 0.0
    %v6386 = vmax.f32 %v4100, 0.0
    %v6387 = vmax.f32 %v4102, 0.0
    %v6388 = vmax.f32 %v4773, 0.0
    %v6389 = vmax.f32 %v4775, 0.0
    %v6390 = vmax.f32 %v5446, 0.0
    %v6391 = vmax.f32 %v5448, 0.0
    %v6392 = vmax.f32 %v3431, 0.0
    %v6393 = vmax.f32 %v3433, 0.0
    %v6394 = vmax.f32 %v4104, 0.0
    %v6395 = vmax.f32 %v4106, 0.0
    %v6396 = vmax.f32 %v4777, 0.0
    %v6397 = vmax.f32 %v4779, 0.0
    %v6398 = vmax.f32 %v5450, 0.0
    %v6399 = vmax.f32 %v5452, 0.0
    %v6400 = vmax.f32 %v3437, 0.0
    %v6401 = vmax.f32 %v3439, 0.0
    %v6402 = vmax.f32 %v4110, 0.0
    %v6403 = vmax.f32 %v4112, 0.0
    %v6404 = vmax.f32 %v4783, 0.0
    %v6405 = vmax.f32 %v4785, 0.0
    %v6406 = vmax.f32 %v5456, 0.0
    %v6407 = vmax.f32 %v5458, 0.0
    %v6408 = vmax.f32 %v3441, 0.0
    %v6409 = vmax.f32 %v3443, 0.0
    %v6410 = vmax.f32 %v4114, 0.0
    %v6411 = vmax.f32 %v4116, 0.0
    %v6412 = vmax.f32 %v4787, 0.0
    %v6413 = vmax.f32 %v4789, 0.0
    %v6414 = vmax.f32 %v5460, 0.0
    %v6415 = vmax.f32 %v5462, 0.0
    %v6416 = vmax.f32 %v3447, 0.0
    %v6417 = vmax.f32 %v3449, 0.0
    %v6418 = vmax.f32 %v4120, 0.0
    %v6419 = vmax.f32 %v4122, 0.0
    %v6420 = vmax.f32 %v4793, 0.0
    %v6421 = vmax.f32 %v4795, 0.0
    %v6422 = vmax.f32 %v5466, 0.0
    %v6423 = vmax.f32 %v5468, 0.0
    %v6424 = vmax.f32 %v3451, 0.0
    %v6425 = vmax.f32 %v3453, 0.0
    %v6426 = vmax.f32 %v4124, 0.0
    %v6427 = vmax.f32 %v4126, 0.0
    %v6428 = vmax.f32 %v4797, 0.0
    %v6429 = vmax.f32 %v4799, 0.0
    %v6430 = vmax.f32 %v5470, 0.0
    %v6431 = vmax.f32 %v5472, 0.0
    %v6432 = vmax.f32 %v3457, 0.0
    %v6433 = vmax.f32 %v3459, 0.0
    %v6434 = vmax.f32 %v4130, 0.0
    %v6435 = vmax.f32 %v4132, 0.0
    %v6436 = vmax.f32 %v4803, 0.0
    %v6437 = vmax.f32 %v4805, 0.0
    %v6438 = vmax.f32 %v5476, 0.0
    %v6439 = vmax.f32 %v5478, 0.0
    %v6440 = vmax.f32 %v3461, 0.0
    %v6441 = vmax.f32 %v3463, 0.0
    %v6442 = vmax.f32 %v4134, 0.0
    %v6443 = vmax.f32 %v4136, 0.0
    %v6444 = vmax.f32 %v4807, 0.0
    %v6445 = vmax.f32 %v4809, 0.0
    %v6446 = vmax.f32 %v5480, 0.0
    %v6447 = vmax.f32 %v5482, 0.0
    %v6448 = vmax.f32 %v3467, 0.0
    %v6449 = vmax.f32 %v3469, 0.0
    %v6450 = vmax.f32 %v4140, 0.0
    %v6451 = vmax.f32 %v4142, 0.0
    %v6452 = vmax.f32 %v4813, 0.0
    %v6453 = vmax.f32 %v4815, 0.0
    %v6454 = vmax.f32 %v5486, 0.0
    %v6455 = vmax.f32 %v5488, 0.0
    %v6456 = vmax.f32 %v3471, 0.0
    %v6457 = vmax.f32 %v3473, 0.0
    %v6458 = vmax.f32 %v4144, 0.0
    %v6459 = vmax.f32 %v4146, 0.0
    %v6460 = vmax.f32 %v4817, 0.0
    %v6461 = vmax.f32 %v4819, 0.0
    %v6462 = vmax.f32 %v5490, 0.0
    %v6463 = vmax.f32 %v5492, 0.0
    %v6464 = vmax.f32 %v3477, 0.0
    %v6465 = vmax.f32 %v3479, 0.0
    %v6466 = vmax.f32 %v4150, 0.0
    %v6467 = vmax.f32 %v4152, 0.0
    %v6468 = vmax.f32 %v4823, 0.0
    %v6469 = vmax.f32 %v4825, 0.0
    %v6470 = vmax.f32 %v5496, 0.0
    %v6471 = vmax.f32 %v5498, 0.0
    %v6472 = vmax.f32 %v3481, 0.0
    %v6473 = vmax.f32 %v3483, 0.0
    %v6474 = vmax.f32 %v4154, 0.0
    %v6475 = vmax.f32 %v4156, 0.0
    %v6476 = vmax.f32 %v4827, 0.0
    %v6477 = vmax.f32 %v4829, 0.0
    %v6478 = vmax.f32 %v5500, 0.0
    %v6479 = vmax.f32 %v5502, 0.0
    %v6480 = vmax.f32 %v3487, 0.0
    %v6481 = vmax.f32 %v3489, 0.0
    %v6482 = vmax.f32 %v4160, 0.0
    %v6483 = vmax.f32 %v4162, 0.0
    %v6484 = vmax.f32 %v4833, 0.0
    %v6485 = vmax.f32 %v4835, 0.0
    %v6486 = vmax.f32 %v5506, 0.0
    %v6487 = vmax.f32 %v5508, 0.0
    %v6488 = vmax.f32 %v3491, 0.0
    %v6489 = vmax.f32 %v3493, 0.0
    %v6490 = vmax.f32 %v4164, 0.0
    %v6491 = vmax.f32 %v4166, 0.0
    %v6492 = vmax.f32 %v4837, 0.0
    %v6493 = vmax.f32 %v4839, 0.0
    %v6494 = vmax.f32 %v5510, 0.0
    %v6495 = vmax.f32 %v5512, 0.0
    %v6496 = vmax.f32 %v3497, 0.0
    %v6497 = vmax.f32 %v3499, 0.0
    %v6498 = vmax.f32 %v4170, 0.0
    %v6499 = vmax.f32 %v4172, 0.0
    %v6500 = vmax.f32 %v4843, 0.0
    %v6501 = vmax.f32 %v4845, 0.0
    %v6502 = vmax.f32 %v5516, 0.0
    %v6503 = vmax.f32 %v5518, 0.0
    %v6504 = vmax.f32 %v3501, 0.0
    %v6505 = vmax.f32 %v3503, 0.0
    %v6506 = vmax.f32 %v4174, 0.0
    %v6507 = vmax.f32 %v4176, 0.0
    %v6508 = vmax.f32 %v4847, 0.0
    %v6509 = vmax.f32 %v4849, 0.0
    %v6510 = vmax.f32 %v5520, 0.0
    %v6511 = vmax.f32 %v5522, 0.0
    %v6512 = vmax.f32 %v3507, 0.0
    %v6513 = vmax.f32 %v3509, 0.0
    %v6514 = vmax.f32 %v4180, 0.0
    %v6515 = vmax.f32 %v4182, 0.0
    %v6516 = vmax.f32 %v4853, 0.0
    %v6517 = vmax.f32 %v4855, 0.0
    %v6518 = vmax.f32 %v5526, 0.0
    %v6519 = vmax.f32 %v5528, 0.0
    %v6520 = vmax.f32 %v3511, 0.0
    %v6521 = vmax.f32 %v3513, 0.0
    %v6522 = vmax.f32 %v4184, 0.0
    %v6523 = vmax.f32 %v4186, 0.0
    %v6524 = vmax.f32 %v4857, 0.0
    %v6525 = vmax.f32 %v4859, 0.0
    %v6526 = vmax.f32 %v5530, 0.0
    %v6527 = vmax.f32 %v5532, 0.0
    %v6528 = vmax.f32 %v3517, 0.0
    %v6529 = vmax.f32 %v3519, 0.0
    %v6530 = vmax.f32 %v4190, 0.0
    %v6531 = vmax.f32 %v4192, 0.0
    %v6532 = vmax.f32 %v4863, 0.0
    %v6533 = vmax.f32 %v4865, 0.0
    %v6534 = vmax.f32 %v5536, 0.0
    %v6535 = vmax.f32 %v5538, 0.0
    %v6536 = vmax.f32 %v3521, 0.0
    %v6537 = vmax.f32 %v3523, 0.0
    %v6538 = vmax.f32 %v4194, 0.0
    %v6539 = vmax.f32 %v4196, 0.0
    %v6540 = vmax.f32 %v4867, 0.0
    %v6541 = vmax.f32 %v4869, 0.0
    %v6542 = vmax.f32 %v5540, 0.0
    %v6543 = vmax.f32 %v5542, 0.0
    %v6544 = vmax.f32 %v3527, 0.0
    %v6545 = vmax.f32 %v3529, 0.0
    %v6546 = vmax.f32 %v4200, 0.0
    %v6547 = vmax.f32 %v4202, 0.0
    %v6548 = vmax.f32 %v4873, 0.0
    %v6549 = vmax.f32 %v4875, 0.0
    %v6550 = vmax.f32 %v5546, 0.0
    %v6551 = vmax.f32 %v5548, 0.0
    %v6552 = vmax.f32 %v3531, 0.0
    %v6553 = vmax.f32 %v3533, 0.0
    %v6554 = vmax.f32 %v4204, 0.0
    %v6555 = vmax.f32 %v4206, 0.0
    %v6556 = vmax.f32 %v4877, 0.0
    %v6557 = vmax.f32 %v4879, 0.0
    %v6558 = vmax.f32 %v5550, 0.0
    %v6559 = vmax.f32 %v5552, 0.0
    %v6560 = vmax.f32 %v3537, 0.0
    %v6561 = vmax.f32 %v3539, 0.0
    %v6562 = vmax.f32 %v4210, 0.0
    %v6563 = vmax.f32 %v4212, 0.0
    %v6564 = vmax.f32 %v4883, 0.0
    %v6565 = vmax.f32 %v4885, 0.0
    %v6566 = vmax.f32 %v5556, 0.0
    %v6567 = vmax.f32 %v5558, 0.0
    %v6568 = vmax.f32 %v3541, 0.0
    %v6569 = vmax.f32 %v3543, 0.0
    %v6570 = vmax.f32 %v4214, 0.0
    %v6571 = vmax.f32 %v4216, 0.0
    %v6572 = vmax.f32 %v4887, 0.0
    %v6573 = vmax.f32 %v4889, 0.0
    %v6574 = vmax.f32 %v5560, 0.0
    %v6575 = vmax.f32 %v5562, 0.0
    %v6576 = vmax.f32 %v3547, 0.0
    %v6577 = vmax.f32 %v3549, 0.0
    %v6578 = vmax.f32 %v4220, 0.0
    %v6579 = vmax.f32 %v4222, 0.0
    %v6580 = vmax.f32 %v4893, 0.0
    %v6581 = vmax.f32 %v4895, 0.0
    %v6582 = vmax.f32 %v5566, 0.0
    %v6583 = vmax.f32 %v5568, 0.0
    %v6584 = vmax.f32 %v3551, 0.0
    %v6585 = vmax.f32 %v3553, 0.0
    %v6586 = vmax.f32 %v4224, 0.0
    %v6587 = vmax.f32 %v4226, 0.0
    %v6588 = vmax.f32 %v4897, 0.0
    %v6589 = vmax.f32 %v4899, 0.0
    %v6590 = vmax.f32 %v5570, 0.0
    %v6591 = vmax.f32 %v5572, 0.0
    %v6592 = vmax.f32 %v3557, 0.0
    %v6593 = vmax.f32 %v3559, 0.0
    %v6594 = vmax.f32 %v4230, 0.0
    %v6595 = vmax.f32 %v4232, 0.0
    %v6596 = vmax.f32 %v4903, 0.0
    %v6597 = vmax.f32 %v4905, 0.0
    %v6598 = vmax.f32 %v5576, 0.0
    %v6599 = vmax.f32 %v5578, 0.0
    %v6600 = vmax.f32 %v3561, 0.0
    %v6601 = vmax.f32 %v3563, 0.0
    %v6602 = vmax.f32 %v4234, 0.0
    %v6603 = vmax.f32 %v4236, 0.0
    %v6604 = vmax.f32 %v4907, 0.0
    %v6605 = vmax.f32 %v4909, 0.0
    %v6606 = vmax.f32 %v5580, 0.0
    %v6607 = vmax.f32 %v5582, 0.0
    %v6608 = vld [vmem:[%s71] sm:$0xff]
    %v6609 = vld [vmem:[%s71 + $0x8] sm:$0xff]
    %v6610 = vld [vmem:[%s71 + $0x10] sm:$0xff]
    %v6611 = vld [vmem:[%s71 + $0x18] sm:$0xff]
    %v6612 = vld [vmem:[%s71 + $0x20] sm:$0xff]
    %v6613 = vld [vmem:[%s71 + $0x28] sm:$0xff]
    %v6614 = vld [vmem:[%s71 + $0x30] sm:$0xff]
    %v6615 = vld [vmem:[%s71 + $0x38] sm:$0xff]
    %v6616 = vld [vmem:[%s71 + $0x40] sm:$0xff]
    %v6617 = vld [vmem:[%s71 + $0x48] sm:$0xff]
    %v6618 = vld [vmem:[%s71 + $0x50] sm:$0xff]
    %v6619 = vld [vmem:[%s71 + $0x58] sm:$0xff]
    %v6620 = vld [vmem:[%s71 + $0x60] sm:$0xff]
    %v6621 = vld [vmem:[%s71 + $0x68] sm:$0xff]
    %v6622 = vld [vmem:[%s71 + $0x70] sm:$0xff]
    %v6623 = vld [vmem:[%s71 + $0x78] sm:$0xff]
    %v6624 = vld [vmem:[%s71 + $0x80] sm:$0xff]
    %v6625 = vld [vmem:[%s71 + $0x88] sm:$0xff]
    %v6626 = vld [vmem:[%s71 + $0x90] sm:$0xff]
    %v6627 = vld [vmem:[%s71 + $0x98] sm:$0xff]
    %v6628 = vld [vmem:[%s71 + $0xa0] sm:$0xff]
    %v6629 = vld [vmem:[%s71 + $0xa8] sm:$0xff]
    %v6630 = vld [vmem:[%s71 + $0xb0] sm:$0xff]
    %v6631 = vld [vmem:[%s71 + $0xb8] sm:$0xff]
    %v6632 = vld [vmem:[%s71 + $0xc0] sm:$0xff]
    %v6633 = vld [vmem:[%s71 + $0xc8] sm:$0xff]
    %v6634 = vld [vmem:[%s71 + $0xd0] sm:$0xff]
    %v6635 = vld [vmem:[%s71 + $0xd8] sm:$0xff]
    %v6636 = vld [vmem:[%s71 + $0xe0] sm:$0xff]
    %v6637 = vld [vmem:[%s71 + $0xe8] sm:$0xff]
    %v6638 = vld [vmem:[%s71 + $0xf0] sm:$0xff]
    %v6639 = vld [vmem:[%s71 + $0xf8] sm:$0xff]
    %v6640 = vld [vmem:[%s71 + $0x100] sm:$0xff]
    %v6641 = vld [vmem:[%s71 + $0x108] sm:$0xff]
    %v6642 = vld [vmem:[%s71 + $0x110] sm:$0xff]
    %v6643 = vld [vmem:[%s71 + $0x118] sm:$0xff]
    %v6644 = vld [vmem:[%s71 + $0x120] sm:$0xff]
    %v6645 = vld [vmem:[%s71 + $0x128] sm:$0xff]
    %v6646 = vld [vmem:[%s71 + $0x130] sm:$0xff]
    %v6647 = vld [vmem:[%s71 + $0x138] sm:$0xff]
    %v6648 = vld [vmem:[%s71 + $0x140] sm:$0xff]
    %v6649 = vld [vmem:[%s71 + $0x148] sm:$0xff]
    %v6650 = vld [vmem:[%s71 + $0x150] sm:$0xff]
    %v6651 = vld [vmem:[%s71 + $0x158] sm:$0xff]
    %v6652 = vld [vmem:[%s71 + $0x160] sm:$0xff]
    %v6653 = vld [vmem:[%s71 + $0x168] sm:$0xff]
    %v6654 = vld [vmem:[%s71 + $0x170] sm:$0xff]
    %v6655 = vld [vmem:[%s71 + $0x178] sm:$0xff]
    %v6656 = vld [vmem:[%s71 + $0x180] sm:$0xff]
    %v6657 = vld [vmem:[%s71 + $0x188] sm:$0xff]
    %v6658 = vld [vmem:[%s71 + $0x190] sm:$0xff]
    %v6659 = vld [vmem:[%s71 + $0x198] sm:$0xff]
    %v6660 = vld [vmem:[%s71 + $0x1a0] sm:$0xff]
    %v6661 = vld [vmem:[%s71 + $0x1a8] sm:$0xff]
    %v6662 = vld [vmem:[%s71 + $0x1b0] sm:$0xff]
    %v6663 = vld [vmem:[%s71 + $0x1b8] sm:$0xff]
    %v6664 = vld [vmem:[%s71 + $0x1c0] sm:$0xff]
    %v6665 = vld [vmem:[%s71 + $0x1c8] sm:$0xff]
    %v6666 = vld [vmem:[%s71 + $0x1d0] sm:$0xff]
    %v6667 = vld [vmem:[%s71 + $0x1d8] sm:$0xff]
    %v6668 = vld [vmem:[%s71 + $0x1e0] sm:$0xff]
    %v6669 = vld [vmem:[%s71 + $0x1e8] sm:$0xff]
    %v6670 = vld [vmem:[%s71 + $0x1f0] sm:$0xff]
    %v6671 = vld [vmem:[%s71 + $0x1f8] sm:$0xff]
    %v6672 = vld [vmem:[%s71 + $0x200] sm:$0xff]
    %v6673 = vld [vmem:[%s71 + $0x208] sm:$0xff]
    %v6674 = vld [vmem:[%s71 + $0x210] sm:$0xff]
    %v6675 = vld [vmem:[%s71 + $0x218] sm:$0xff]
    %v6676 = vld [vmem:[%s71 + $0x220] sm:$0xff]
    %v6677 = vld [vmem:[%s71 + $0x228] sm:$0xff]
    %v6678 = vld [vmem:[%s71 + $0x230] sm:$0xff]
    %v6679 = vld [vmem:[%s71 + $0x238] sm:$0xff]
    %v6680 = vld [vmem:[%s71 + $0x240] sm:$0xff]
    %v6681 = vld [vmem:[%s71 + $0x248] sm:$0xff]
    %v6682 = vld [vmem:[%s71 + $0x250] sm:$0xff]
    %v6683 = vld [vmem:[%s71 + $0x258] sm:$0xff]
    %v6684 = vld [vmem:[%s71 + $0x260] sm:$0xff]
    %v6685 = vld [vmem:[%s71 + $0x268] sm:$0xff]
    %v6686 = vld [vmem:[%s71 + $0x270] sm:$0xff]
    %v6687 = vld [vmem:[%s71 + $0x278] sm:$0xff]
    %v6688 = vld [vmem:[%s71 + $0x280] sm:$0xff]
    %v6689 = vld [vmem:[%s71 + $0x288] sm:$0xff]
    %v6690 = vld [vmem:[%s71 + $0x290] sm:$0xff]
    %v6691 = vld [vmem:[%s71 + $0x298] sm:$0xff]
    %v6692 = vld [vmem:[%s71 + $0x2a0] sm:$0xff]
    %v6693 = vld [vmem:[%s71 + $0x2a8] sm:$0xff]
    %v6694 = vld [vmem:[%s71 + $0x2b0] sm:$0xff]
    %v6695 = vld [vmem:[%s71 + $0x2b8] sm:$0xff]
    %v6696 = vld [vmem:[%s71 + $0x2c0] sm:$0xff]
    %v6697 = vld [vmem:[%s71 + $0x2c8] sm:$0xff]
    %v6698 = vld [vmem:[%s71 + $0x2d0] sm:$0xff]
    %v6699 = vld [vmem:[%s71 + $0x2d8] sm:$0xff]
    %v6700 = vld [vmem:[%s71 + $0x2e0] sm:$0xff]
    %v6701 = vld [vmem:[%s71 + $0x2e8] sm:$0xff]
    %v6702 = vld [vmem:[%s71 + $0x2f0] sm:$0xff]
    %v6703 = vld [vmem:[%s71 + $0x2f8] sm:$0xff]
    %v6704 = vld [vmem:[%s71 + $0x300] sm:$0xff]
    %v6705 = vld [vmem:[%s71 + $0x308] sm:$0xff]
    %v6706 = vld [vmem:[%s71 + $0x310] sm:$0xff]
    %v6707 = vld [vmem:[%s71 + $0x318] sm:$0xff]
    %v6708 = vld [vmem:[%s71 + $0x320] sm:$0xff]
    %v6709 = vld [vmem:[%s71 + $0x328] sm:$0xff]
    %v6710 = vld [vmem:[%s71 + $0x330] sm:$0xff]
    %v6711 = vld [vmem:[%s71 + $0x338] sm:$0xff]
    %v6712 = vld [vmem:[%s71 + $0x340] sm:$0xff]
    %v6713 = vld [vmem:[%s71 + $0x348] sm:$0xff]
    %v6714 = vld [vmem:[%s71 + $0x350] sm:$0xff]
    %v6715 = vld [vmem:[%s71 + $0x358] sm:$0xff]
    %v6716 = vld [vmem:[%s71 + $0x360] sm:$0xff]
    %v6717 = vld [vmem:[%s71 + $0x368] sm:$0xff]
    %v6718 = vld [vmem:[%s71 + $0x370] sm:$0xff]
    %v6719 = vld [vmem:[%s71 + $0x378] sm:$0xff]
    %v6720 = vld [vmem:[%s71 + $0x380] sm:$0xff]
    %v6721 = vld [vmem:[%s71 + $0x388] sm:$0xff]
    %v6722 = vld [vmem:[%s71 + $0x390] sm:$0xff]
    %v6723 = vld [vmem:[%s71 + $0x398] sm:$0xff]
    %v6724 = vld [vmem:[%s71 + $0x3a0] sm:$0xff]
    %v6725 = vld [vmem:[%s71 + $0x3a8] sm:$0xff]
    %v6726 = vld [vmem:[%s71 + $0x3b0] sm:$0xff]
    %v6727 = vld [vmem:[%s71 + $0x3b8] sm:$0xff]
    %v6728 = vld [vmem:[%s71 + $0x3c0] sm:$0xff]
    %v6729 = vld [vmem:[%s71 + $0x3c8] sm:$0xff]
    %v6730 = vld [vmem:[%s71 + $0x3d0] sm:$0xff]
    %v6731 = vld [vmem:[%s71 + $0x3d8] sm:$0xff]
    %v6732 = vld [vmem:[%s71 + $0x3e0] sm:$0xff]
    %v6733 = vld [vmem:[%s71 + $0x3e8] sm:$0xff]
    %v6734 = vld [vmem:[%s71 + $0x3f0] sm:$0xff]
    %v6735 = vld [vmem:[%s71 + $0x3f8] sm:$0xff]
    %vm6736 = vcmp.eq.s32.totalorder %v6608, 0
    %vm6737 = vcmp.eq.s32.totalorder %v6609, 0
    %vm6738 = vcmp.eq.s32.totalorder %v6610, 0
    %vm6739 = vcmp.eq.s32.totalorder %v6611, 0
    %vm6740 = vcmp.eq.s32.totalorder %v6612, 0
    %vm6741 = vcmp.eq.s32.totalorder %v6613, 0
    %vm6742 = vcmp.eq.s32.totalorder %v6614, 0
    %vm6743 = vcmp.eq.s32.totalorder %v6615, 0
    %vm6744 = vcmp.eq.s32.totalorder %v6616, 0
    %vm6745 = vcmp.eq.s32.totalorder %v6617, 0
    %vm6746 = vcmp.eq.s32.totalorder %v6618, 0
    %vm6747 = vcmp.eq.s32.totalorder %v6619, 0
    %vm6748 = vcmp.eq.s32.totalorder %v6620, 0
    %vm6749 = vcmp.eq.s32.totalorder %v6621, 0
    %vm6750 = vcmp.eq.s32.totalorder %v6622, 0
    %vm6751 = vcmp.eq.s32.totalorder %v6623, 0
    %vm6752 = vcmp.eq.s32.totalorder %v6624, 0
    %vm6753 = vcmp.eq.s32.totalorder %v6625, 0
    %vm6754 = vcmp.eq.s32.totalorder %v6626, 0
    %vm6755 = vcmp.eq.s32.totalorder %v6627, 0
    %vm6756 = vcmp.eq.s32.totalorder %v6628, 0
    %vm6757 = vcmp.eq.s32.totalorder %v6629, 0
    %vm6758 = vcmp.eq.s32.totalorder %v6630, 0
    %vm6759 = vcmp.eq.s32.totalorder %v6631, 0
    %vm6760 = vcmp.eq.s32.totalorder %v6632, 0
    %vm6761 = vcmp.eq.s32.totalorder %v6633, 0
    %vm6762 = vcmp.eq.s32.totalorder %v6634, 0
    %vm6763 = vcmp.eq.s32.totalorder %v6635, 0
    %vm6764 = vcmp.eq.s32.totalorder %v6636, 0
    %vm6765 = vcmp.eq.s32.totalorder %v6637, 0
    %vm6766 = vcmp.eq.s32.totalorder %v6638, 0
    %vm6767 = vcmp.eq.s32.totalorder %v6639, 0
    %vm6768 = vcmp.eq.s32.totalorder %v6640, 0
    %vm6769 = vcmp.eq.s32.totalorder %v6641, 0
    %vm6770 = vcmp.eq.s32.totalorder %v6642, 0
    %vm6771 = vcmp.eq.s32.totalorder %v6643, 0
    %vm6772 = vcmp.eq.s32.totalorder %v6644, 0
    %vm6773 = vcmp.eq.s32.totalorder %v6645, 0
    %vm6774 = vcmp.eq.s32.totalorder %v6646, 0
    %vm6775 = vcmp.eq.s32.totalorder %v6647, 0
    %vm6776 = vcmp.eq.s32.totalorder %v6648, 0
    %vm6777 = vcmp.eq.s32.totalorder %v6649, 0
    %vm6778 = vcmp.eq.s32.totalorder %v6650, 0
    %vm6779 = vcmp.eq.s32.totalorder %v6651, 0
    %vm6780 = vcmp.eq.s32.totalorder %v6652, 0
    %vm6781 = vcmp.eq.s32.totalorder %v6653, 0
    %vm6782 = vcmp.eq.s32.totalorder %v6654, 0
    %vm6783 = vcmp.eq.s32.totalorder %v6655, 0
    %vm6784 = vcmp.eq.s32.totalorder %v6656, 0
    %vm6785 = vcmp.eq.s32.totalorder %v6657, 0
    %vm6786 = vcmp.eq.s32.totalorder %v6658, 0
    %vm6787 = vcmp.eq.s32.totalorder %v6659, 0
    %vm6788 = vcmp.eq.s32.totalorder %v6660, 0
    %vm6789 = vcmp.eq.s32.totalorder %v6661, 0
    %vm6790 = vcmp.eq.s32.totalorder %v6662, 0
    %vm6791 = vcmp.eq.s32.totalorder %v6663, 0
    %vm6792 = vcmp.eq.s32.totalorder %v6664, 0
    %vm6793 = vcmp.eq.s32.totalorder %v6665, 0
    %vm6794 = vcmp.eq.s32.totalorder %v6666, 0
    %vm6795 = vcmp.eq.s32.totalorder %v6667, 0
    %vm6796 = vcmp.eq.s32.totalorder %v6668, 0
    %vm6797 = vcmp.eq.s32.totalorder %v6669, 0
    %vm6798 = vcmp.eq.s32.totalorder %v6670, 0
    %vm6799 = vcmp.eq.s32.totalorder %v6671, 0
    %vm6800 = vcmp.eq.s32.totalorder %v6672, 0
    %vm6801 = vcmp.eq.s32.totalorder %v6673, 0
    %vm6802 = vcmp.eq.s32.totalorder %v6674, 0
    %vm6803 = vcmp.eq.s32.totalorder %v6675, 0
    %vm6804 = vcmp.eq.s32.totalorder %v6676, 0
    %vm6805 = vcmp.eq.s32.totalorder %v6677, 0
    %vm6806 = vcmp.eq.s32.totalorder %v6678, 0
    %vm6807 = vcmp.eq.s32.totalorder %v6679, 0
    %vm6808 = vcmp.eq.s32.totalorder %v6680, 0
    %vm6809 = vcmp.eq.s32.totalorder %v6681, 0
    %vm6810 = vcmp.eq.s32.totalorder %v6682, 0
    %vm6811 = vcmp.eq.s32.totalorder %v6683, 0
    %vm6812 = vcmp.eq.s32.totalorder %v6684, 0
    %vm6813 = vcmp.eq.s32.totalorder %v6685, 0
    %vm6814 = vcmp.eq.s32.totalorder %v6686, 0
    %vm6815 = vcmp.eq.s32.totalorder %v6687, 0
    %vm6816 = vcmp.eq.s32.totalorder %v6688, 0
    %vm6817 = vcmp.eq.s32.totalorder %v6689, 0
    %vm6818 = vcmp.eq.s32.totalorder %v6690, 0
    %vm6819 = vcmp.eq.s32.totalorder %v6691, 0
    %vm6820 = vcmp.eq.s32.totalorder %v6692, 0
    %vm6821 = vcmp.eq.s32.totalorder %v6693, 0
    %vm6822 = vcmp.eq.s32.totalorder %v6694, 0
    %vm6823 = vcmp.eq.s32.totalorder %v6695, 0
    %vm6824 = vcmp.eq.s32.totalorder %v6696, 0
    %vm6825 = vcmp.eq.s32.totalorder %v6697, 0
    %vm6826 = vcmp.eq.s32.totalorder %v6698, 0
    %vm6827 = vcmp.eq.s32.totalorder %v6699, 0
    %vm6828 = vcmp.eq.s32.totalorder %v6700, 0
    %vm6829 = vcmp.eq.s32.totalorder %v6701, 0
    %vm6830 = vcmp.eq.s32.totalorder %v6702, 0
    %vm6831 = vcmp.eq.s32.totalorder %v6703, 0
    %vm6832 = vcmp.eq.s32.totalorder %v6704, 0
    %vm6833 = vcmp.eq.s32.totalorder %v6705, 0
    %vm6834 = vcmp.eq.s32.totalorder %v6706, 0
    %vm6835 = vcmp.eq.s32.totalorder %v6707, 0
    %vm6836 = vcmp.eq.s32.totalorder %v6708, 0
    %vm6837 = vcmp.eq.s32.totalorder %v6709, 0
    %vm6838 = vcmp.eq.s32.totalorder %v6710, 0
    %vm6839 = vcmp.eq.s32.totalorder %v6711, 0
    %vm6840 = vcmp.eq.s32.totalorder %v6712, 0
    %vm6841 = vcmp.eq.s32.totalorder %v6713, 0
    %vm6842 = vcmp.eq.s32.totalorder %v6714, 0
    %vm6843 = vcmp.eq.s32.totalorder %v6715, 0
    %vm6844 = vcmp.eq.s32.totalorder %v6716, 0
    %vm6845 = vcmp.eq.s32.totalorder %v6717, 0
    %vm6846 = vcmp.eq.s32.totalorder %v6718, 0
    %vm6847 = vcmp.eq.s32.totalorder %v6719, 0
    %vm6848 = vcmp.eq.s32.totalorder %v6720, 0
    %vm6849 = vcmp.eq.s32.totalorder %v6721, 0
    %vm6850 = vcmp.eq.s32.totalorder %v6722, 0
    %vm6851 = vcmp.eq.s32.totalorder %v6723, 0
    %vm6852 = vcmp.eq.s32.totalorder %v6724, 0
    %vm6853 = vcmp.eq.s32.totalorder %v6725, 0
    %vm6854 = vcmp.eq.s32.totalorder %v6726, 0
    %vm6855 = vcmp.eq.s32.totalorder %v6727, 0
    %vm6856 = vcmp.eq.s32.totalorder %v6728, 0
    %vm6857 = vcmp.eq.s32.totalorder %v6729, 0
    %vm6858 = vcmp.eq.s32.totalorder %v6730, 0
    %vm6859 = vcmp.eq.s32.totalorder %v6731, 0
    %vm6860 = vcmp.eq.s32.totalorder %v6732, 0
    %vm6861 = vcmp.eq.s32.totalorder %v6733, 0
    %vm6862 = vcmp.eq.s32.totalorder %v6734, 0
    %vm6863 = vcmp.eq.s32.totalorder %v6735, 0
    %v6864 = vsel %vm6736, 1, 0
    %v6865 = vsel %vm6737, 1, 0
    %v6866 = vsel %vm6738, 1, 0
    %v6867 = vsel %vm6739, 1, 0
    %v6868 = vsel %vm6740, 1, 0
    %v6869 = vsel %vm6741, 1, 0
    %v6870 = vsel %vm6742, 1, 0
    %v6871 = vsel %vm6743, 1, 0
    %v6872 = vsel %vm6744, 1, 0
    %v6873 = vsel %vm6745, 1, 0
    %v6874 = vsel %vm6746, 1, 0
    %v6875 = vsel %vm6747, 1, 0
    %v6876 = vsel %vm6748, 1, 0
    %v6877 = vsel %vm6749, 1, 0
    %v6878 = vsel %vm6750, 1, 0
    %v6879 = vsel %vm6751, 1, 0
    %v6880 = vsel %vm6752, 1, 0
    %v6881 = vsel %vm6753, 1, 0
    %v6882 = vsel %vm6754, 1, 0
    %v6883 = vsel %vm6755, 1, 0
    %v6884 = vsel %vm6756, 1, 0
    %v6885 = vsel %vm6757, 1, 0
    %v6886 = vsel %vm6758, 1, 0
    %v6887 = vsel %vm6759, 1, 0
    %v6888 = vsel %vm6760, 1, 0
    %v6889 = vsel %vm6761, 1, 0
    %v6890 = vsel %vm6762, 1, 0
    %v6891 = vsel %vm6763, 1, 0
    %v6892 = vsel %vm6764, 1, 0
    %v6893 = vsel %vm6765, 1, 0
    %v6894 = vsel %vm6766, 1, 0
    %v6895 = vsel %vm6767, 1, 0
    %v6896 = vsel %vm6768, 1, 0
    %v6897 = vsel %vm6769, 1, 0
    %v6898 = vsel %vm6770, 1, 0
    %v6899 = vsel %vm6771, 1, 0
    %v6900 = vsel %vm6772, 1, 0
    %v6901 = vsel %vm6773, 1, 0
    %v6902 = vsel %vm6774, 1, 0
    %v6903 = vsel %vm6775, 1, 0
    %v6904 = vsel %vm6776, 1, 0
    %v6905 = vsel %vm6777, 1, 0
    %v6906 = vsel %vm6778, 1, 0
    %v6907 = vsel %vm6779, 1, 0
    %v6908 = vsel %vm6780, 1, 0
    %v6909 = vsel %vm6781, 1, 0
    %v6910 = vsel %vm6782, 1, 0
    %v6911 = vsel %vm6783, 1, 0
    %v6912 = vsel %vm6784, 1, 0
    %v6913 = vsel %vm6785, 1, 0
    %v6914 = vsel %vm6786, 1, 0
    %v6915 = vsel %vm6787, 1, 0
    %v6916 = vsel %vm6788, 1, 0
    %v6917 = vsel %vm6789, 1, 0
    %v6918 = vsel %vm6790, 1, 0
    %v6919 = vsel %vm6791, 1, 0
    %v6920 = vsel %vm6792, 1, 0
    %v6921 = vsel %vm6793, 1, 0
    %v6922 = vsel %vm6794, 1, 0
    %v6923 = vsel %vm6795, 1, 0
    %v6924 = vsel %vm6796, 1, 0
    %v6925 = vsel %vm6797, 1, 0
    %v6926 = vsel %vm6798, 1, 0
    %v6927 = vsel %vm6799, 1, 0
    %v6928 = vsel %vm6800, 1, 0
    %v6929 = vsel %vm6801, 1, 0
    %v6930 = vsel %vm6802, 1, 0
    %v6931 = vsel %vm6803, 1, 0
    %v6932 = vsel %vm6804, 1, 0
    %v6933 = vsel %vm6805, 1, 0
    %v6934 = vsel %vm6806, 1, 0
    %v6935 = vsel %vm6807, 1, 0
    %v6936 = vsel %vm6808, 1, 0
    %v6937 = vsel %vm6809, 1, 0
    %v6938 = vsel %vm6810, 1, 0
    %v6939 = vsel %vm6811, 1, 0
    %v6940 = vsel %vm6812, 1, 0
    %v6941 = vsel %vm6813, 1, 0
    %v6942 = vsel %vm6814, 1, 0
    %v6943 = vsel %vm6815, 1, 0
    %v6944 = vsel %vm6816, 1, 0
    %v6945 = vsel %vm6817, 1, 0
    %v6946 = vsel %vm6818, 1, 0
    %v6947 = vsel %vm6819, 1, 0
    %v6948 = vsel %vm6820, 1, 0
    %v6949 = vsel %vm6821, 1, 0
    %v6950 = vsel %vm6822, 1, 0
    %v6951 = vsel %vm6823, 1, 0
    %v6952 = vsel %vm6824, 1, 0
    %v6953 = vsel %vm6825, 1, 0
    %v6954 = vsel %vm6826, 1, 0
    %v6955 = vsel %vm6827, 1, 0
    %v6956 = vsel %vm6828, 1, 0
    %v6957 = vsel %vm6829, 1, 0
    %v6958 = vsel %vm6830, 1, 0
    %v6959 = vsel %vm6831, 1, 0
    %v6960 = vsel %vm6832, 1, 0
    %v6961 = vsel %vm6833, 1, 0
    %v6962 = vsel %vm6834, 1, 0
    %v6963 = vsel %vm6835, 1, 0
    %v6964 = vsel %vm6836, 1, 0
    %v6965 = vsel %vm6837, 1, 0
    %v6966 = vsel %vm6838, 1, 0
    %v6967 = vsel %vm6839, 1, 0
    %v6968 = vsel %vm6840, 1, 0
    %v6969 = vsel %vm6841, 1, 0
    %v6970 = vsel %vm6842, 1, 0
    %v6971 = vsel %vm6843, 1, 0
    %v6972 = vsel %vm6844, 1, 0
    %v6973 = vsel %vm6845, 1, 0
    %v6974 = vsel %vm6846, 1, 0
    %v6975 = vsel %vm6847, 1, 0
    %v6976 = vsel %vm6848, 1, 0
    %v6977 = vsel %vm6849, 1, 0
    %v6978 = vsel %vm6850, 1, 0
    %v6979 = vsel %vm6851, 1, 0
    %v6980 = vsel %vm6852, 1, 0
    %v6981 = vsel %vm6853, 1, 0
    %v6982 = vsel %vm6854, 1, 0
    %v6983 = vsel %vm6855, 1, 0
    %v6984 = vsel %vm6856, 1, 0
    %v6985 = vsel %vm6857, 1, 0
    %v6986 = vsel %vm6858, 1, 0
    %v6987 = vsel %vm6859, 1, 0
    %v6988 = vsel %vm6860, 1, 0
    %v6989 = vsel %vm6861, 1, 0
    %v6990 = vsel %vm6862, 1, 0
    %v6991 = vsel %vm6863, 1, 0
    %6992 = vset.pattern.permute.xlu0 0
    %6993 = vperm.xlu0 %6992, %v6864
    %v6994 = vpop.permute.xlu0 %6993
    %6995 = vset.pattern.permute.xlu0 0
    %6996 = vperm.xlu0 %6995, %v6865
    %v6997 = vpop.permute.xlu0 %6996
    %6998 = vset.pattern.permute.xlu0 0
    %6999 = vperm.xlu0 %6998, %v6866
    %v7000 = vpop.permute.xlu0 %6999
    %7001 = vset.pattern.permute.xlu0 0
    %7002 = vperm.xlu0 %7001, %v6867
    %v7003 = vpop.permute.xlu0 %7002
    %7004 = vset.pattern.permute.xlu0 0
    %7005 = vperm.xlu0 %7004, %v6868
    %v7006 = vpop.permute.xlu0 %7005
    %7007 = vset.pattern.permute.xlu0 0
    %7008 = vperm.xlu0 %7007, %v6869
    %v7009 = vpop.permute.xlu0 %7008
    %7010 = vset.pattern.permute.xlu0 0
    %7011 = vperm.xlu0 %7010, %v6870
    %v7012 = vpop.permute.xlu0 %7011
    %7013 = vset.pattern.permute.xlu0 0
    %7014 = vperm.xlu0 %7013, %v6871
    %v7015 = vpop.permute.xlu0 %7014
    %7016 = vset.pattern.permute.xlu0 0
    %7017 = vperm.xlu0 %7016, %v6872
    %v7018 = vpop.permute.xlu0 %7017
    %7019 = vset.pattern.permute.xlu0 0
    %7020 = vperm.xlu0 %7019, %v6873
    %v7021 = vpop.permute.xlu0 %7020
    %7022 = vset.pattern.permute.xlu0 0
    %7023 = vperm.xlu0 %7022, %v6874
    %v7024 = vpop.permute.xlu0 %7023
    %7025 = vset.pattern.permute.xlu0 0
    %7026 = vperm.xlu0 %7025, %v6875
    %v7027 = vpop.permute.xlu0 %7026
    %7028 = vset.pattern.permute.xlu0 0
    %7029 = vperm.xlu0 %7028, %v6876
    %v7030 = vpop.permute.xlu0 %7029
    %7031 = vset.pattern.permute.xlu0 0
    %7032 = vperm.xlu0 %7031, %v6877
    %v7033 = vpop.permute.xlu0 %7032
    %7034 = vset.pattern.permute.xlu0 0
    %7035 = vperm.xlu0 %7034, %v6878
    %v7036 = vpop.permute.xlu0 %7035
    %7037 = vset.pattern.permute.xlu0 0
    %7038 = vperm.xlu0 %7037, %v6879
    %v7039 = vpop.permute.xlu0 %7038
    %7040 = vset.pattern.permute.xlu0 0
    %7041 = vperm.xlu0 %7040, %v6880
    %v7042 = vpop.permute.xlu0 %7041
    %7043 = vset.pattern.permute.xlu0 0
    %7044 = vperm.xlu0 %7043, %v6881
    %v7045 = vpop.permute.xlu0 %7044
    %7046 = vset.pattern.permute.xlu0 0
    %7047 = vperm.xlu0 %7046, %v6882
    %v7048 = vpop.permute.xlu0 %7047
    %7049 = vset.pattern.permute.xlu0 0
    %7050 = vperm.xlu0 %7049, %v6883
    %v7051 = vpop.permute.xlu0 %7050
    %7052 = vset.pattern.permute.xlu0 0
    %7053 = vperm.xlu0 %7052, %v6884
    %v7054 = vpop.permute.xlu0 %7053
    %7055 = vset.pattern.permute.xlu0 0
    %7056 = vperm.xlu0 %7055, %v6885
    %v7057 = vpop.permute.xlu0 %7056
    %7058 = vset.pattern.permute.xlu0 0
    %7059 = vperm.xlu0 %7058, %v6886
    %v7060 = vpop.permute.xlu0 %7059
    %7061 = vset.pattern.permute.xlu0 0
    %7062 = vperm.xlu0 %7061, %v6887
    %v7063 = vpop.permute.xlu0 %7062
    %7064 = vset.pattern.permute.xlu0 0
    %7065 = vperm.xlu0 %7064, %v6888
    %v7066 = vpop.permute.xlu0 %7065
    %7067 = vset.pattern.permute.xlu0 0
    %7068 = vperm.xlu0 %7067, %v6889
    %v7069 = vpop.permute.xlu0 %7068
    %7070 = vset.pattern.permute.xlu0 0
    %7071 = vperm.xlu0 %7070, %v6890
    %v7072 = vpop.permute.xlu0 %7071
    %7073 = vset.pattern.permute.xlu0 0
    %7074 = vperm.xlu0 %7073, %v6891
    %v7075 = vpop.permute.xlu0 %7074
    %7076 = vset.pattern.permute.xlu0 0
    %7077 = vperm.xlu0 %7076, %v6892
    %v7078 = vpop.permute.xlu0 %7077
    %7079 = vset.pattern.permute.xlu0 0
    %7080 = vperm.xlu0 %7079, %v6893
    %v7081 = vpop.permute.xlu0 %7080
    %7082 = vset.pattern.permute.xlu0 0
    %7083 = vperm.xlu0 %7082, %v6894
    %v7084 = vpop.permute.xlu0 %7083
    %7085 = vset.pattern.permute.xlu0 0
    %7086 = vperm.xlu0 %7085, %v6895
    %v7087 = vpop.permute.xlu0 %7086
    %7088 = vset.pattern.permute.xlu0 0
    %7089 = vperm.xlu0 %7088, %v6896
    %v7090 = vpop.permute.xlu0 %7089
    %7091 = vset.pattern.permute.xlu0 0
    %7092 = vperm.xlu0 %7091, %v6897
    %v7093 = vpop.permute.xlu0 %7092
    %7094 = vset.pattern.permute.xlu0 0
    %7095 = vperm.xlu0 %7094, %v6898
    %v7096 = vpop.permute.xlu0 %7095
    %7097 = vset.pattern.permute.xlu0 0
    %7098 = vperm.xlu0 %7097, %v6899
    %v7099 = vpop.permute.xlu0 %7098
    %7100 = vset.pattern.permute.xlu0 0
    %7101 = vperm.xlu0 %7100, %v6900
    %v7102 = vpop.permute.xlu0 %7101
    %7103 = vset.pattern.permute.xlu0 0
    %7104 = vperm.xlu0 %7103, %v6901
    %v7105 = vpop.permute.xlu0 %7104
    %7106 = vset.pattern.permute.xlu0 0
    %7107 = vperm.xlu0 %7106, %v6902
    %v7108 = vpop.permute.xlu0 %7107
    %7109 = vset.pattern.permute.xlu0 0
    %7110 = vperm.xlu0 %7109, %v6903
    %v7111 = vpop.permute.xlu0 %7110
    %7112 = vset.pattern.permute.xlu0 0
    %7113 = vperm.xlu0 %7112, %v6904
    %v7114 = vpop.permute.xlu0 %7113
    %7115 = vset.pattern.permute.xlu0 0
    %7116 = vperm.xlu0 %7115, %v6905
    %v7117 = vpop.permute.xlu0 %7116
    %7118 = vset.pattern.permute.xlu0 0
    %7119 = vperm.xlu0 %7118, %v6906
    %v7120 = vpop.permute.xlu0 %7119
    %7121 = vset.pattern.permute.xlu0 0
    %7122 = vperm.xlu0 %7121, %v6907
    %v7123 = vpop.permute.xlu0 %7122
    %7124 = vset.pattern.permute.xlu0 0
    %7125 = vperm.xlu0 %7124, %v6908
    %v7126 = vpop.permute.xlu0 %7125
    %7127 = vset.pattern.permute.xlu0 0
    %7128 = vperm.xlu0 %7127, %v6909
    %v7129 = vpop.permute.xlu0 %7128
    %7130 = vset.pattern.permute.xlu0 0
    %7131 = vperm.xlu0 %7130, %v6910
    %v7132 = vpop.permute.xlu0 %7131
    %7133 = vset.pattern.permute.xlu0 0
    %7134 = vperm.xlu0 %7133, %v6911
    %v7135 = vpop.permute.xlu0 %7134
    %7136 = vset.pattern.permute.xlu0 0
    %7137 = vperm.xlu0 %7136, %v6912
    %v7138 = vpop.permute.xlu0 %7137
    %7139 = vset.pattern.permute.xlu0 0
    %7140 = vperm.xlu0 %7139, %v6913
    %v7141 = vpop.permute.xlu0 %7140
    %7142 = vset.pattern.permute.xlu0 0
    %7143 = vperm.xlu0 %7142, %v6914
    %v7144 = vpop.permute.xlu0 %7143
    %7145 = vset.pattern.permute.xlu0 0
    %7146 = vperm.xlu0 %7145, %v6915
    %v7147 = vpop.permute.xlu0 %7146
    %7148 = vset.pattern.permute.xlu0 0
    %7149 = vperm.xlu0 %7148, %v6916
    %v7150 = vpop.permute.xlu0 %7149
    %7151 = vset.pattern.permute.xlu0 0
    %7152 = vperm.xlu0 %7151, %v6917
    %v7153 = vpop.permute.xlu0 %7152
    %7154 = vset.pattern.permute.xlu0 0
    %7155 = vperm.xlu0 %7154, %v6918
    %v7156 = vpop.permute.xlu0 %7155
    %7157 = vset.pattern.permute.xlu0 0
    %7158 = vperm.xlu0 %7157, %v6919
    %v7159 = vpop.permute.xlu0 %7158
    %7160 = vset.pattern.permute.xlu0 0
    %7161 = vperm.xlu0 %7160, %v6920
    %v7162 = vpop.permute.xlu0 %7161
    %7163 = vset.pattern.permute.xlu0 0
    %7164 = vperm.xlu0 %7163, %v6921
    %v7165 = vpop.permute.xlu0 %7164
    %7166 = vset.pattern.permute.xlu0 0
    %7167 = vperm.xlu0 %7166, %v6922
    %v7168 = vpop.permute.xlu0 %7167
    %7169 = vset.pattern.permute.xlu0 0
    %7170 = vperm.xlu0 %7169, %v6923
    %v7171 = vpop.permute.xlu0 %7170
    %7172 = vset.pattern.permute.xlu0 0
    %7173 = vperm.xlu0 %7172, %v6924
    %v7174 = vpop.permute.xlu0 %7173
    %7175 = vset.pattern.permute.xlu0 0
    %7176 = vperm.xlu0 %7175, %v6925
    %v7177 = vpop.permute.xlu0 %7176
    %7178 = vset.pattern.permute.xlu0 0
    %7179 = vperm.xlu0 %7178, %v6926
    %v7180 = vpop.permute.xlu0 %7179
    %7181 = vset.pattern.permute.xlu0 0
    %7182 = vperm.xlu0 %7181, %v6927
    %v7183 = vpop.permute.xlu0 %7182
    %7184 = vset.pattern.permute.xlu0 0
    %7185 = vperm.xlu0 %7184, %v6928
    %v7186 = vpop.permute.xlu0 %7185
    %7187 = vset.pattern.permute.xlu0 0
    %7188 = vperm.xlu0 %7187, %v6929
    %v7189 = vpop.permute.xlu0 %7188
    %7190 = vset.pattern.permute.xlu0 0
    %7191 = vperm.xlu0 %7190, %v6930
    %v7192 = vpop.permute.xlu0 %7191
    %7193 = vset.pattern.permute.xlu0 0
    %7194 = vperm.xlu0 %7193, %v6931
    %v7195 = vpop.permute.xlu0 %7194
    %7196 = vset.pattern.permute.xlu0 0
    %7197 = vperm.xlu0 %7196, %v6932
    %v7198 = vpop.permute.xlu0 %7197
    %7199 = vset.pattern.permute.xlu0 0
    %7200 = vperm.xlu0 %7199, %v6933
    %v7201 = vpop.permute.xlu0 %7200
    %7202 = vset.pattern.permute.xlu0 0
    %7203 = vperm.xlu0 %7202, %v6934
    %v7204 = vpop.permute.xlu0 %7203
    %7205 = vset.pattern.permute.xlu0 0
    %7206 = vperm.xlu0 %7205, %v6935
    %v7207 = vpop.permute.xlu0 %7206
    %7208 = vset.pattern.permute.xlu0 0
    %7209 = vperm.xlu0 %7208, %v6936
    %v7210 = vpop.permute.xlu0 %7209
    %7211 = vset.pattern.permute.xlu0 0
    %7212 = vperm.xlu0 %7211, %v6937
    %v7213 = vpop.permute.xlu0 %7212
    %7214 = vset.pattern.permute.xlu0 0
    %7215 = vperm.xlu0 %7214, %v6938
    %v7216 = vpop.permute.xlu0 %7215
    %7217 = vset.pattern.permute.xlu0 0
    %7218 = vperm.xlu0 %7217, %v6939
    %v7219 = vpop.permute.xlu0 %7218
    %7220 = vset.pattern.permute.xlu0 0
    %7221 = vperm.xlu0 %7220, %v6940
    %v7222 = vpop.permute.xlu0 %7221
    %7223 = vset.pattern.permute.xlu0 0
    %7224 = vperm.xlu0 %7223, %v6941
    %v7225 = vpop.permute.xlu0 %7224
    %7226 = vset.pattern.permute.xlu0 0
    %7227 = vperm.xlu0 %7226, %v6942
    %v7228 = vpop.permute.xlu0 %7227
    %7229 = vset.pattern.permute.xlu0 0
    %7230 = vperm.xlu0 %7229, %v6943
    %v7231 = vpop.permute.xlu0 %7230
    %7232 = vset.pattern.permute.xlu0 0
    %7233 = vperm.xlu0 %7232, %v6944
    %v7234 = vpop.permute.xlu0 %7233
    %7235 = vset.pattern.permute.xlu0 0
    %7236 = vperm.xlu0 %7235, %v6945
    %v7237 = vpop.permute.xlu0 %7236
    %7238 = vset.pattern.permute.xlu0 0
    %7239 = vperm.xlu0 %7238, %v6946
    %v7240 = vpop.permute.xlu0 %7239
    %7241 = vset.pattern.permute.xlu0 0
    %7242 = vperm.xlu0 %7241, %v6947
    %v7243 = vpop.permute.xlu0 %7242
    %7244 = vset.pattern.permute.xlu0 0
    %7245 = vperm.xlu0 %7244, %v6948
    %v7246 = vpop.permute.xlu0 %7245
    %7247 = vset.pattern.permute.xlu0 0
    %7248 = vperm.xlu0 %7247, %v6949
    %v7249 = vpop.permute.xlu0 %7248
    %7250 = vset.pattern.permute.xlu0 0
    %7251 = vperm.xlu0 %7250, %v6950
    %v7252 = vpop.permute.xlu0 %7251
    %7253 = vset.pattern.permute.xlu0 0
    %7254 = vperm.xlu0 %7253, %v6951
    %v7255 = vpop.permute.xlu0 %7254
    %7256 = vset.pattern.permute.xlu0 0
    %7257 = vperm.xlu0 %7256, %v6952
    %v7258 = vpop.permute.xlu0 %7257
    %7259 = vset.pattern.permute.xlu0 0
    %7260 = vperm.xlu0 %7259, %v6953
    %v7261 = vpop.permute.xlu0 %7260
    %7262 = vset.pattern.permute.xlu0 0
    %7263 = vperm.xlu0 %7262, %v6954
    %v7264 = vpop.permute.xlu0 %7263
    %7265 = vset.pattern.permute.xlu0 0
    %7266 = vperm.xlu0 %7265, %v6955
    %v7267 = vpop.permute.xlu0 %7266
    %7268 = vset.pattern.permute.xlu0 0
    %7269 = vperm.xlu0 %7268, %v6956
    %v7270 = vpop.permute.xlu0 %7269
    %7271 = vset.pattern.permute.xlu0 0
    %7272 = vperm.xlu0 %7271, %v6957
    %v7273 = vpop.permute.xlu0 %7272
    %7274 = vset.pattern.permute.xlu0 0
    %7275 = vperm.xlu0 %7274, %v6958
    %v7276 = vpop.permute.xlu0 %7275
    %7277 = vset.pattern.permute.xlu0 0
    %7278 = vperm.xlu0 %7277, %v6959
    %v7279 = vpop.permute.xlu0 %7278
    %7280 = vset.pattern.permute.xlu0 0
    %7281 = vperm.xlu0 %7280, %v6960
    %v7282 = vpop.permute.xlu0 %7281
    %7283 = vset.pattern.permute.xlu0 0
    %7284 = vperm.xlu0 %7283, %v6961
    %v7285 = vpop.permute.xlu0 %7284
    %7286 = vset.pattern.permute.xlu0 0
    %7287 = vperm.xlu0 %7286, %v6962
    %v7288 = vpop.permute.xlu0 %7287
    %7289 = vset.pattern.permute.xlu0 0
    %7290 = vperm.xlu0 %7289, %v6963
    %v7291 = vpop.permute.xlu0 %7290
    %7292 = vset.pattern.permute.xlu0 0
    %7293 = vperm.xlu0 %7292, %v6964
    %v7294 = vpop.permute.xlu0 %7293
    %7295 = vset.pattern.permute.xlu0 0
    %7296 = vperm.xlu0 %7295, %v6965
    %v7297 = vpop.permute.xlu0 %7296
    %7298 = vset.pattern.permute.xlu0 0
    %7299 = vperm.xlu0 %7298, %v6966
    %v7300 = vpop.permute.xlu0 %7299
    %7301 = vset.pattern.permute.xlu0 0
    %7302 = vperm.xlu0 %7301, %v6967
    %v7303 = vpop.permute.xlu0 %7302
    %7304 = vset.pattern.permute.xlu0 0
    %7305 = vperm.xlu0 %7304, %v6968
    %v7306 = vpop.permute.xlu0 %7305
    %7307 = vset.pattern.permute.xlu0 0
    %7308 = vperm.xlu0 %7307, %v6969
    %v7309 = vpop.permute.xlu0 %7308
    %7310 = vset.pattern.permute.xlu0 0
    %7311 = vperm.xlu0 %7310, %v6970
    %v7312 = vpop.permute.xlu0 %7311
    %7313 = vset.pattern.permute.xlu0 0
    %7314 = vperm.xlu0 %7313, %v6971
    %v7315 = vpop.permute.xlu0 %7314
    %7316 = vset.pattern.permute.xlu0 0
    %7317 = vperm.xlu0 %7316, %v6972
    %v7318 = vpop.permute.xlu0 %7317
    %7319 = vset.pattern.permute.xlu0 0
    %7320 = vperm.xlu0 %7319, %v6973
    %v7321 = vpop.permute.xlu0 %7320
    %7322 = vset.pattern.permute.xlu0 0
    %7323 = vperm.xlu0 %7322, %v6974
    %v7324 = vpop.permute.xlu0 %7323
    %7325 = vset.pattern.permute.xlu0 0
    %7326 = vperm.xlu0 %7325, %v6975
    %v7327 = vpop.permute.xlu0 %7326
    %7328 = vset.pattern.permute.xlu0 0
    %7329 = vperm.xlu0 %7328, %v6976
    %v7330 = vpop.permute.xlu0 %7329
    %7331 = vset.pattern.permute.xlu0 0
    %7332 = vperm.xlu0 %7331, %v6977
    %v7333 = vpop.permute.xlu0 %7332
    %7334 = vset.pattern.permute.xlu0 0
    %7335 = vperm.xlu0 %7334, %v6978
    %v7336 = vpop.permute.xlu0 %7335
    %7337 = vset.pattern.permute.xlu0 0
    %7338 = vperm.xlu0 %7337, %v6979
    %v7339 = vpop.permute.xlu0 %7338
    %7340 = vset.pattern.permute.xlu0 0
    %7341 = vperm.xlu0 %7340, %v6980
    %v7342 = vpop.permute.xlu0 %7341
    %7343 = vset.pattern.permute.xlu0 0
    %7344 = vperm.xlu0 %7343, %v6981
    %v7345 = vpop.permute.xlu0 %7344
    %7346 = vset.pattern.permute.xlu0 0
    %7347 = vperm.xlu0 %7346, %v6982
    %v7348 = vpop.permute.xlu0 %7347
    %7349 = vset.pattern.permute.xlu0 0
    %7350 = vperm.xlu0 %7349, %v6983
    %v7351 = vpop.permute.xlu0 %7350
    %7352 = vset.pattern.permute.xlu0 0
    %7353 = vperm.xlu0 %7352, %v6984
    %v7354 = vpop.permute.xlu0 %7353
    %7355 = vset.pattern.permute.xlu0 0
    %7356 = vperm.xlu0 %7355, %v6985
    %v7357 = vpop.permute.xlu0 %7356
    %7358 = vset.pattern.permute.xlu0 0
    %7359 = vperm.xlu0 %7358, %v6986
    %v7360 = vpop.permute.xlu0 %7359
    %7361 = vset.pattern.permute.xlu0 0
    %7362 = vperm.xlu0 %7361, %v6987
    %v7363 = vpop.permute.xlu0 %7362
    %7364 = vset.pattern.permute.xlu0 0
    %7365 = vperm.xlu0 %7364, %v6988
    %v7366 = vpop.permute.xlu0 %7365
    %7367 = vset.pattern.permute.xlu0 0
    %7368 = vperm.xlu0 %7367, %v6989
    %v7369 = vpop.permute.xlu0 %7368
    %7370 = vset.pattern.permute.xlu0 0
    %7371 = vperm.xlu0 %7370, %v6990
    %v7372 = vpop.permute.xlu0 %7371
    %7373 = vset.pattern.permute.xlu0 0
    %7374 = vperm.xlu0 %7373, %v6991
    %v7375 = vpop.permute.xlu0 %7374
    %vm7376 = vcmp.eq.s32.totalorder %v6994, 1
    %vm7377 = vcmp.eq.s32.totalorder %v6997, 1
    %vm7378 = vcmp.eq.s32.totalorder %v7000, 1
    %vm7379 = vcmp.eq.s32.totalorder %v7003, 1
    %vm7380 = vcmp.eq.s32.totalorder %v7006, 1
    %vm7381 = vcmp.eq.s32.totalorder %v7009, 1
    %vm7382 = vcmp.eq.s32.totalorder %v7012, 1
    %vm7383 = vcmp.eq.s32.totalorder %v7015, 1
    %vm7384 = vcmp.eq.s32.totalorder %v7018, 1
    %vm7385 = vcmp.eq.s32.totalorder %v7021, 1
    %vm7386 = vcmp.eq.s32.totalorder %v7024, 1
    %vm7387 = vcmp.eq.s32.totalorder %v7027, 1
    %vm7388 = vcmp.eq.s32.totalorder %v7030, 1
    %vm7389 = vcmp.eq.s32.totalorder %v7033, 1
    %vm7390 = vcmp.eq.s32.totalorder %v7036, 1
    %vm7391 = vcmp.eq.s32.totalorder %v7039, 1
    %vm7392 = vcmp.eq.s32.totalorder %v7042, 1
    %vm7393 = vcmp.eq.s32.totalorder %v7045, 1
    %vm7394 = vcmp.eq.s32.totalorder %v7048, 1
    %vm7395 = vcmp.eq.s32.totalorder %v7051, 1
    %vm7396 = vcmp.eq.s32.totalorder %v7054, 1
    %vm7397 = vcmp.eq.s32.totalorder %v7057, 1
    %vm7398 = vcmp.eq.s32.totalorder %v7060, 1
    %vm7399 = vcmp.eq.s32.totalorder %v7063, 1
    %vm7400 = vcmp.eq.s32.totalorder %v7066, 1
    %vm7401 = vcmp.eq.s32.totalorder %v7069, 1
    %vm7402 = vcmp.eq.s32.totalorder %v7072, 1
    %vm7403 = vcmp.eq.s32.totalorder %v7075, 1
    %vm7404 = vcmp.eq.s32.totalorder %v7078, 1
    %vm7405 = vcmp.eq.s32.totalorder %v7081, 1
    %vm7406 = vcmp.eq.s32.totalorder %v7084, 1
    %vm7407 = vcmp.eq.s32.totalorder %v7087, 1
    %vm7408 = vcmp.eq.s32.totalorder %v7090, 1
    %vm7409 = vcmp.eq.s32.totalorder %v7093, 1
    %vm7410 = vcmp.eq.s32.totalorder %v7096, 1
    %vm7411 = vcmp.eq.s32.totalorder %v7099, 1
    %vm7412 = vcmp.eq.s32.totalorder %v7102, 1
    %vm7413 = vcmp.eq.s32.totalorder %v7105, 1
    %vm7414 = vcmp.eq.s32.totalorder %v7108, 1
    %vm7415 = vcmp.eq.s32.totalorder %v7111, 1
    %vm7416 = vcmp.eq.s32.totalorder %v7114, 1
    %vm7417 = vcmp.eq.s32.totalorder %v7117, 1
    %vm7418 = vcmp.eq.s32.totalorder %v7120, 1
    %vm7419 = vcmp.eq.s32.totalorder %v7123, 1
    %vm7420 = vcmp.eq.s32.totalorder %v7126, 1
    %vm7421 = vcmp.eq.s32.totalorder %v7129, 1
    %vm7422 = vcmp.eq.s32.totalorder %v7132, 1
    %vm7423 = vcmp.eq.s32.totalorder %v7135, 1
    %vm7424 = vcmp.eq.s32.totalorder %v7138, 1
    %vm7425 = vcmp.eq.s32.totalorder %v7141, 1
    %vm7426 = vcmp.eq.s32.totalorder %v7144, 1
    %vm7427 = vcmp.eq.s32.totalorder %v7147, 1
    %vm7428 = vcmp.eq.s32.totalorder %v7150, 1
    %vm7429 = vcmp.eq.s32.totalorder %v7153, 1
    %vm7430 = vcmp.eq.s32.totalorder %v7156, 1
    %vm7431 = vcmp.eq.s32.totalorder %v7159, 1
    %vm7432 = vcmp.eq.s32.totalorder %v7162, 1
    %vm7433 = vcmp.eq.s32.totalorder %v7165, 1
    %vm7434 = vcmp.eq.s32.totalorder %v7168, 1
    %vm7435 = vcmp.eq.s32.totalorder %v7171, 1
    %vm7436 = vcmp.eq.s32.totalorder %v7174, 1
    %vm7437 = vcmp.eq.s32.totalorder %v7177, 1
    %vm7438 = vcmp.eq.s32.totalorder %v7180, 1
    %vm7439 = vcmp.eq.s32.totalorder %v7183, 1
    %vm7440 = vcmp.eq.s32.totalorder %v7186, 1
    %vm7441 = vcmp.eq.s32.totalorder %v7189, 1
    %vm7442 = vcmp.eq.s32.totalorder %v7192, 1
    %vm7443 = vcmp.eq.s32.totalorder %v7195, 1
    %vm7444 = vcmp.eq.s32.totalorder %v7198, 1
    %vm7445 = vcmp.eq.s32.totalorder %v7201, 1
    %vm7446 = vcmp.eq.s32.totalorder %v7204, 1
    %vm7447 = vcmp.eq.s32.totalorder %v7207, 1
    %vm7448 = vcmp.eq.s32.totalorder %v7210, 1
    %vm7449 = vcmp.eq.s32.totalorder %v7213, 1
    %vm7450 = vcmp.eq.s32.totalorder %v7216, 1
    %vm7451 = vcmp.eq.s32.totalorder %v7219, 1
    %vm7452 = vcmp.eq.s32.totalorder %v7222, 1
    %vm7453 = vcmp.eq.s32.totalorder %v7225, 1
    %vm7454 = vcmp.eq.s32.totalorder %v7228, 1
    %vm7455 = vcmp.eq.s32.totalorder %v7231, 1
    %vm7456 = vcmp.eq.s32.totalorder %v7234, 1
    %vm7457 = vcmp.eq.s32.totalorder %v7237, 1
    %vm7458 = vcmp.eq.s32.totalorder %v7240, 1
    %vm7459 = vcmp.eq.s32.totalorder %v7243, 1
    %vm7460 = vcmp.eq.s32.totalorder %v7246, 1
    %vm7461 = vcmp.eq.s32.totalorder %v7249, 1
    %vm7462 = vcmp.eq.s32.totalorder %v7252, 1
    %vm7463 = vcmp.eq.s32.totalorder %v7255, 1
    %vm7464 = vcmp.eq.s32.totalorder %v7258, 1
    %vm7465 = vcmp.eq.s32.totalorder %v7261, 1
    %vm7466 = vcmp.eq.s32.totalorder %v7264, 1
    %vm7467 = vcmp.eq.s32.totalorder %v7267, 1
    %vm7468 = vcmp.eq.s32.totalorder %v7270, 1
    %vm7469 = vcmp.eq.s32.totalorder %v7273, 1
    %vm7470 = vcmp.eq.s32.totalorder %v7276, 1
    %vm7471 = vcmp.eq.s32.totalorder %v7279, 1
    %vm7472 = vcmp.eq.s32.totalorder %v7282, 1
    %vm7473 = vcmp.eq.s32.totalorder %v7285, 1
    %vm7474 = vcmp.eq.s32.totalorder %v7288, 1
    %vm7475 = vcmp.eq.s32.totalorder %v7291, 1
    %vm7476 = vcmp.eq.s32.totalorder %v7294, 1
    %vm7477 = vcmp.eq.s32.totalorder %v7297, 1
    %vm7478 = vcmp.eq.s32.totalorder %v7300, 1
    %vm7479 = vcmp.eq.s32.totalorder %v7303, 1
    %vm7480 = vcmp.eq.s32.totalorder %v7306, 1
    %vm7481 = vcmp.eq.s32.totalorder %v7309, 1
    %vm7482 = vcmp.eq.s32.totalorder %v7312, 1
    %vm7483 = vcmp.eq.s32.totalorder %v7315, 1
    %vm7484 = vcmp.eq.s32.totalorder %v7318, 1
    %vm7485 = vcmp.eq.s32.totalorder %v7321, 1
    %vm7486 = vcmp.eq.s32.totalorder %v7324, 1
    %vm7487 = vcmp.eq.s32.totalorder %v7327, 1
    %vm7488 = vcmp.eq.s32.totalorder %v7330, 1
    %vm7489 = vcmp.eq.s32.totalorder %v7333, 1
    %vm7490 = vcmp.eq.s32.totalorder %v7336, 1
    %vm7491 = vcmp.eq.s32.totalorder %v7339, 1
    %vm7492 = vcmp.eq.s32.totalorder %v7342, 1
    %vm7493 = vcmp.eq.s32.totalorder %v7345, 1
    %vm7494 = vcmp.eq.s32.totalorder %v7348, 1
    %vm7495 = vcmp.eq.s32.totalorder %v7351, 1
    %vm7496 = vcmp.eq.s32.totalorder %v7354, 1
    %vm7497 = vcmp.eq.s32.totalorder %v7357, 1
    %vm7498 = vcmp.eq.s32.totalorder %v7360, 1
    %vm7499 = vcmp.eq.s32.totalorder %v7363, 1
    %vm7500 = vcmp.eq.s32.totalorder %v7366, 1
    %vm7501 = vcmp.eq.s32.totalorder %v7369, 1
    %vm7502 = vcmp.eq.s32.totalorder %v7372, 1
    %vm7503 = vcmp.eq.s32.totalorder %v7375, 1
    %v7504 = vsel %vm7376, %v5584, -inf
    %v7505 = vsel %vm7376, %v5585, -inf
    %v7506 = vsel %vm7376, %v5586, -inf
    %v7507 = vsel %vm7376, %v5587, -inf
    %v7508 = vsel %vm7376, %v5588, -inf
    %v7509 = vsel %vm7376, %v5589, -inf
    %v7510 = vsel %vm7376, %v5590, -inf
    %v7511 = vsel %vm7376, %v5591, -inf
    %v7512 = vsel %vm7377, %v5592, -inf
    %v7513 = vsel %vm7377, %v5593, -inf
    %v7514 = vsel %vm7377, %v5594, -inf
    %v7515 = vsel %vm7377, %v5595, -inf
    %v7516 = vsel %vm7377, %v5596, -inf
    %v7517 = vsel %vm7377, %v5597, -inf
    %v7518 = vsel %vm7377, %v5598, -inf
    %v7519 = vsel %vm7377, %v5599, -inf
    %v7520 = vsel %vm7378, %v5600, -inf
    %v7521 = vsel %vm7378, %v5601, -inf
    %v7522 = vsel %vm7378, %v5602, -inf
    %v7523 = vsel %vm7378, %v5603, -inf
    %v7524 = vsel %vm7378, %v5604, -inf
    %v7525 = vsel %vm7378, %v5605, -inf
    %v7526 = vsel %vm7378, %v5606, -inf
    %v7527 = vsel %vm7378, %v5607, -inf
    %v7528 = vsel %vm7379, %v5608, -inf
    %v7529 = vsel %vm7379, %v5609, -inf
    %v7530 = vsel %vm7379, %v5610, -inf
    %v7531 = vsel %vm7379, %v5611, -inf
    %v7532 = vsel %vm7379, %v5612, -inf
    %v7533 = vsel %vm7379, %v5613, -inf
    %v7534 = vsel %vm7379, %v5614, -inf
    %v7535 = vsel %vm7379, %v5615, -inf
    %v7536 = vsel %vm7380, %v5616, -inf
    %v7537 = vsel %vm7380, %v5617, -inf
    %v7538 = vsel %vm7380, %v5618, -inf
    %v7539 = vsel %vm7380, %v5619, -inf
    %v7540 = vsel %vm7380, %v5620, -inf
    %v7541 = vsel %vm7380, %v5621, -inf
    %v7542 = vsel %vm7380, %v5622, -inf
    %v7543 = vsel %vm7380, %v5623, -inf
    %v7544 = vsel %vm7381, %v5624, -inf
    %v7545 = vsel %vm7381, %v5625, -inf
    %v7546 = vsel %vm7381, %v5626, -inf
    %v7547 = vsel %vm7381, %v5627, -inf
    %v7548 = vsel %vm7381, %v5628, -inf
    %v7549 = vsel %vm7381, %v5629, -inf
    %v7550 = vsel %vm7381, %v5630, -inf
    %v7551 = vsel %vm7381, %v5631, -inf
    %v7552 = vsel %vm7382, %v5632, -inf
    %v7553 = vsel %vm7382, %v5633, -inf
    %v7554 = vsel %vm7382, %v5634, -inf
    %v7555 = vsel %vm7382, %v5635, -inf
    %v7556 = vsel %vm7382, %v5636, -inf
    %v7557 = vsel %vm7382, %v5637, -inf
    %v7558 = vsel %vm7382, %v5638, -inf
    %v7559 = vsel %vm7382, %v5639, -inf
    %v7560 = vsel %vm7383, %v5640, -inf
    %v7561 = vsel %vm7383, %v5641, -inf
    %v7562 = vsel %vm7383, %v5642, -inf
    %v7563 = vsel %vm7383, %v5643, -inf
    %v7564 = vsel %vm7383, %v5644, -inf
    %v7565 = vsel %vm7383, %v5645, -inf
    %v7566 = vsel %vm7383, %v5646, -inf
    %v7567 = vsel %vm7383, %v5647, -inf
    %v7568 = vsel %vm7384, %v5648, -inf
    %v7569 = vsel %vm7384, %v5649, -inf
    %v7570 = vsel %vm7384, %v5650, -inf
    %v7571 = vsel %vm7384, %v5651, -inf
    %v7572 = vsel %vm7384, %v5652, -inf
    %v7573 = vsel %vm7384, %v5653, -inf
    %v7574 = vsel %vm7384, %v5654, -inf
    %v7575 = vsel %vm7384, %v5655, -inf
    %v7576 = vsel %vm7385, %v5656, -inf
    %v7577 = vsel %vm7385, %v5657, -inf
    %v7578 = vsel %vm7385, %v5658, -inf
    %v7579 = vsel %vm7385, %v5659, -inf
    %v7580 = vsel %vm7385, %v5660, -inf
    %v7581 = vsel %vm7385, %v5661, -inf
    %v7582 = vsel %vm7385, %v5662, -inf
    %v7583 = vsel %vm7385, %v5663, -inf
    %v7584 = vsel %vm7386, %v5664, -inf
    %v7585 = vsel %vm7386, %v5665, -inf
    %v7586 = vsel %vm7386, %v5666, -inf
    %v7587 = vsel %vm7386, %v5667, -inf
    %v7588 = vsel %vm7386, %v5668, -inf
    %v7589 = vsel %vm7386, %v5669, -inf
    %v7590 = vsel %vm7386, %v5670, -inf
    %v7591 = vsel %vm7386, %v5671, -inf
    %v7592 = vsel %vm7387, %v5672, -inf
    %v7593 = vsel %vm7387, %v5673, -inf
    %v7594 = vsel %vm7387, %v5674, -inf
    %v7595 = vsel %vm7387, %v5675, -inf
    %v7596 = vsel %vm7387, %v5676, -inf
    %v7597 = vsel %vm7387, %v5677, -inf
    %v7598 = vsel %vm7387, %v5678, -inf
    %v7599 = vsel %vm7387, %v5679, -inf
    %v7600 = vsel %vm7388, %v5680, -inf
    %v7601 = vsel %vm7388, %v5681, -inf
    %v7602 = vsel %vm7388, %v5682, -inf
    %v7603 = vsel %vm7388, %v5683, -inf
    %v7604 = vsel %vm7388, %v5684, -inf
    %v7605 = vsel %vm7388, %v5685, -inf
    %v7606 = vsel %vm7388, %v5686, -inf
    %v7607 = vsel %vm7388, %v5687, -inf
    %v7608 = vsel %vm7389, %v5688, -inf
    %v7609 = vsel %vm7389, %v5689, -inf
    %v7610 = vsel %vm7389, %v5690, -inf
    %v7611 = vsel %vm7389, %v5691, -inf
    %v7612 = vsel %vm7389, %v5692, -inf
    %v7613 = vsel %vm7389, %v5693, -inf
    %v7614 = vsel %vm7389, %v5694, -inf
    %v7615 = vsel %vm7389, %v5695, -inf
    %v7616 = vsel %vm7390, %v5696, -inf
    %v7617 = vsel %vm7390, %v5697, -inf
    %v7618 = vsel %vm7390, %v5698, -inf
    %v7619 = vsel %vm7390, %v5699, -inf
    %v7620 = vsel %vm7390, %v5700, -inf
    %v7621 = vsel %vm7390, %v5701, -inf
    %v7622 = vsel %vm7390, %v5702, -inf
    %v7623 = vsel %vm7390, %v5703, -inf
    %v7624 = vsel %vm7391, %v5704, -inf
    %v7625 = vsel %vm7391, %v5705, -inf
    %v7626 = vsel %vm7391, %v5706, -inf
    %v7627 = vsel %vm7391, %v5707, -inf
    %v7628 = vsel %vm7391, %v5708, -inf
    %v7629 = vsel %vm7391, %v5709, -inf
    %v7630 = vsel %vm7391, %v5710, -inf
    %v7631 = vsel %vm7391, %v5711, -inf
    %v7632 = vsel %vm7392, %v5712, -inf
    %v7633 = vsel %vm7392, %v5713, -inf
    %v7634 = vsel %vm7392, %v5714, -inf
    %v7635 = vsel %vm7392, %v5715, -inf
    %v7636 = vsel %vm7392, %v5716, -inf
    %v7637 = vsel %vm7392, %v5717, -inf
    %v7638 = vsel %vm7392, %v5718, -inf
    %v7639 = vsel %vm7392, %v5719, -inf
    %v7640 = vsel %vm7393, %v5720, -inf
    %v7641 = vsel %vm7393, %v5721, -inf
    %v7642 = vsel %vm7393, %v5722, -inf
    %v7643 = vsel %vm7393, %v5723, -inf
    %v7644 = vsel %vm7393, %v5724, -inf
    %v7645 = vsel %vm7393, %v5725, -inf
    %v7646 = vsel %vm7393, %v5726, -inf
    %v7647 = vsel %vm7393, %v5727, -inf
    %v7648 = vsel %vm7394, %v5728, -inf
    %v7649 = vsel %vm7394, %v5729, -inf
    %v7650 = vsel %vm7394, %v5730, -inf
    %v7651 = vsel %vm7394, %v5731, -inf
    %v7652 = vsel %vm7394, %v5732, -inf
    %v7653 = vsel %vm7394, %v5733, -inf
    %v7654 = vsel %vm7394, %v5734, -inf
    %v7655 = vsel %vm7394, %v5735, -inf
    %v7656 = vsel %vm7395, %v5736, -inf
    %v7657 = vsel %vm7395, %v5737, -inf
    %v7658 = vsel %vm7395, %v5738, -inf
    %v7659 = vsel %vm7395, %v5739, -inf
    %v7660 = vsel %vm7395, %v5740, -inf
    %v7661 = vsel %vm7395, %v5741, -inf
    %v7662 = vsel %vm7395, %v5742, -inf
    %v7663 = vsel %vm7395, %v5743, -inf
    %v7664 = vsel %vm7396, %v5744, -inf
    %v7665 = vsel %vm7396, %v5745, -inf
    %v7666 = vsel %vm7396, %v5746, -inf
    %v7667 = vsel %vm7396, %v5747, -inf
    %v7668 = vsel %vm7396, %v5748, -inf
    %v7669 = vsel %vm7396, %v5749, -inf
    %v7670 = vsel %vm7396, %v5750, -inf
    %v7671 = vsel %vm7396, %v5751, -inf
    %v7672 = vsel %vm7397, %v5752, -inf
    %v7673 = vsel %vm7397, %v5753, -inf
    %v7674 = vsel %vm7397, %v5754, -inf
    %v7675 = vsel %vm7397, %v5755, -inf
    %v7676 = vsel %vm7397, %v5756, -inf
    %v7677 = vsel %vm7397, %v5757, -inf
    %v7678 = vsel %vm7397, %v5758, -inf
    %v7679 = vsel %vm7397, %v5759, -inf
    %v7680 = vsel %vm7398, %v5760, -inf
    %v7681 = vsel %vm7398, %v5761, -inf
    %v7682 = vsel %vm7398, %v5762, -inf
    %v7683 = vsel %vm7398, %v5763, -inf
    %v7684 = vsel %vm7398, %v5764, -inf
    %v7685 = vsel %vm7398, %v5765, -inf
    %v7686 = vsel %vm7398, %v5766, -inf
    %v7687 = vsel %vm7398, %v5767, -inf
    %v7688 = vsel %vm7399, %v5768, -inf
    %v7689 = vsel %vm7399, %v5769, -inf
    %v7690 = vsel %vm7399, %v5770, -inf
    %v7691 = vsel %vm7399, %v5771, -inf
    %v7692 = vsel %vm7399, %v5772, -inf
    %v7693 = vsel %vm7399, %v5773, -inf
    %v7694 = vsel %vm7399, %v5774, -inf
    %v7695 = vsel %vm7399, %v5775, -inf
    %v7696 = vsel %vm7400, %v5776, -inf
    %v7697 = vsel %vm7400, %v5777, -inf
    %v7698 = vsel %vm7400, %v5778, -inf
    %v7699 = vsel %vm7400, %v5779, -inf
    %v7700 = vsel %vm7400, %v5780, -inf
    %v7701 = vsel %vm7400, %v5781, -inf
    %v7702 = vsel %vm7400, %v5782, -inf
    %v7703 = vsel %vm7400, %v5783, -inf
    %v7704 = vsel %vm7401, %v5784, -inf
    %v7705 = vsel %vm7401, %v5785, -inf
    %v7706 = vsel %vm7401, %v5786, -inf
    %v7707 = vsel %vm7401, %v5787, -inf
    %v7708 = vsel %vm7401, %v5788, -inf
    %v7709 = vsel %vm7401, %v5789, -inf
    %v7710 = vsel %vm7401, %v5790, -inf
    %v7711 = vsel %vm7401, %v5791, -inf
    %v7712 = vsel %vm7402, %v5792, -inf
    %v7713 = vsel %vm7402, %v5793, -inf
    %v7714 = vsel %vm7402, %v5794, -inf
    %v7715 = vsel %vm7402, %v5795, -inf
    %v7716 = vsel %vm7402, %v5796, -inf
    %v7717 = vsel %vm7402, %v5797, -inf
    %v7718 = vsel %vm7402, %v5798, -inf
    %v7719 = vsel %vm7402, %v5799, -inf
    %v7720 = vsel %vm7403, %v5800, -inf
    %v7721 = vsel %vm7403, %v5801, -inf
    %v7722 = vsel %vm7403, %v5802, -inf
    %v7723 = vsel %vm7403, %v5803, -inf
    %v7724 = vsel %vm7403, %v5804, -inf
    %v7725 = vsel %vm7403, %v5805, -inf
    %v7726 = vsel %vm7403, %v5806, -inf
    %v7727 = vsel %vm7403, %v5807, -inf
    %v7728 = vsel %vm7404, %v5808, -inf
    %v7729 = vsel %vm7404, %v5809, -inf
    %v7730 = vsel %vm7404, %v5810, -inf
    %v7731 = vsel %vm7404, %v5811, -inf
    %v7732 = vsel %vm7404, %v5812, -inf
    %v7733 = vsel %vm7404, %v5813, -inf
    %v7734 = vsel %vm7404, %v5814, -inf
    %v7735 = vsel %vm7404, %v5815, -inf
    %v7736 = vsel %vm7405, %v5816, -inf
    %v7737 = vsel %vm7405, %v5817, -inf
    %v7738 = vsel %vm7405, %v5818, -inf
    %v7739 = vsel %vm7405, %v5819, -inf
    %v7740 = vsel %vm7405, %v5820, -inf
    %v7741 = vsel %vm7405, %v5821, -inf
    %v7742 = vsel %vm7405, %v5822, -inf
    %v7743 = vsel %vm7405, %v5823, -inf
    %v7744 = vsel %vm7406, %v5824, -inf
    %v7745 = vsel %vm7406, %v5825, -inf
    %v7746 = vsel %vm7406, %v5826, -inf
    %v7747 = vsel %vm7406, %v5827, -inf
    %v7748 = vsel %vm7406, %v5828, -inf
    %v7749 = vsel %vm7406, %v5829, -inf
    %v7750 = vsel %vm7406, %v5830, -inf
    %v7751 = vsel %vm7406, %v5831, -inf
    %v7752 = vsel %vm7407, %v5832, -inf
    %v7753 = vsel %vm7407, %v5833, -inf
    %v7754 = vsel %vm7407, %v5834, -inf
    %v7755 = vsel %vm7407, %v5835, -inf
    %v7756 = vsel %vm7407, %v5836, -inf
    %v7757 = vsel %vm7407, %v5837, -inf
    %v7758 = vsel %vm7407, %v5838, -inf
    %v7759 = vsel %vm7407, %v5839, -inf
    %v7760 = vsel %vm7408, %v5840, -inf
    %v7761 = vsel %vm7408, %v5841, -inf
    %v7762 = vsel %vm7408, %v5842, -inf
    %v7763 = vsel %vm7408, %v5843, -inf
    %v7764 = vsel %vm7408, %v5844, -inf
    %v7765 = vsel %vm7408, %v5845, -inf
    %v7766 = vsel %vm7408, %v5846, -inf
    %v7767 = vsel %vm7408, %v5847, -inf
    %v7768 = vsel %vm7409, %v5848, -inf
    %v7769 = vsel %vm7409, %v5849, -inf
    %v7770 = vsel %vm7409, %v5850, -inf
    %v7771 = vsel %vm7409, %v5851, -inf
    %v7772 = vsel %vm7409, %v5852, -inf
    %v7773 = vsel %vm7409, %v5853, -inf
    %v7774 = vsel %vm7409, %v5854, -inf
    %v7775 = vsel %vm7409, %v5855, -inf
    %v7776 = vsel %vm7410, %v5856, -inf
    %v7777 = vsel %vm7410, %v5857, -inf
    %v7778 = vsel %vm7410, %v5858, -inf
    %v7779 = vsel %vm7410, %v5859, -inf
    %v7780 = vsel %vm7410, %v5860, -inf
    %v7781 = vsel %vm7410, %v5861, -inf
    %v7782 = vsel %vm7410, %v5862, -inf
    %v7783 = vsel %vm7410, %v5863, -inf
    %v7784 = vsel %vm7411, %v5864, -inf
    %v7785 = vsel %vm7411, %v5865, -inf
    %v7786 = vsel %vm7411, %v5866, -inf
    %v7787 = vsel %vm7411, %v5867, -inf
    %v7788 = vsel %vm7411, %v5868, -inf
    %v7789 = vsel %vm7411, %v5869, -inf
    %v7790 = vsel %vm7411, %v5870, -inf
    %v7791 = vsel %vm7411, %v5871, -inf
    %v7792 = vsel %vm7412, %v5872, -inf
    %v7793 = vsel %vm7412, %v5873, -inf
    %v7794 = vsel %vm7412, %v5874, -inf
    %v7795 = vsel %vm7412, %v5875, -inf
    %v7796 = vsel %vm7412, %v5876, -inf
    %v7797 = vsel %vm7412, %v5877, -inf
    %v7798 = vsel %vm7412, %v5878, -inf
    %v7799 = vsel %vm7412, %v5879, -inf
    %v7800 = vsel %vm7413, %v5880, -inf
    %v7801 = vsel %vm7413, %v5881, -inf
    %v7802 = vsel %vm7413, %v5882, -inf
    %v7803 = vsel %vm7413, %v5883, -inf
    %v7804 = vsel %vm7413, %v5884, -inf
    %v7805 = vsel %vm7413, %v5885, -inf
    %v7806 = vsel %vm7413, %v5886, -inf
    %v7807 = vsel %vm7413, %v5887, -inf
    %v7808 = vsel %vm7414, %v5888, -inf
    %v7809 = vsel %vm7414, %v5889, -inf
    %v7810 = vsel %vm7414, %v5890, -inf
    %v7811 = vsel %vm7414, %v5891, -inf
    %v7812 = vsel %vm7414, %v5892, -inf
    %v7813 = vsel %vm7414, %v5893, -inf
    %v7814 = vsel %vm7414, %v5894, -inf
    %v7815 = vsel %vm7414, %v5895, -inf
    %v7816 = vsel %vm7415, %v5896, -inf
    %v7817 = vsel %vm7415, %v5897, -inf
    %v7818 = vsel %vm7415, %v5898, -inf
    %v7819 = vsel %vm7415, %v5899, -inf
    %v7820 = vsel %vm7415, %v5900, -inf
    %v7821 = vsel %vm7415, %v5901, -inf
    %v7822 = vsel %vm7415, %v5902, -inf
    %v7823 = vsel %vm7415, %v5903, -inf
    %v7824 = vsel %vm7416, %v5904, -inf
    %v7825 = vsel %vm7416, %v5905, -inf
    %v7826 = vsel %vm7416, %v5906, -inf
    %v7827 = vsel %vm7416, %v5907, -inf
    %v7828 = vsel %vm7416, %v5908, -inf
    %v7829 = vsel %vm7416, %v5909, -inf
    %v7830 = vsel %vm7416, %v5910, -inf
    %v7831 = vsel %vm7416, %v5911, -inf
    %v7832 = vsel %vm7417, %v5912, -inf
    %v7833 = vsel %vm7417, %v5913, -inf
    %v7834 = vsel %vm7417, %v5914, -inf
    %v7835 = vsel %vm7417, %v5915, -inf
    %v7836 = vsel %vm7417, %v5916, -inf
    %v7837 = vsel %vm7417, %v5917, -inf
    %v7838 = vsel %vm7417, %v5918, -inf
    %v7839 = vsel %vm7417, %v5919, -inf
    %v7840 = vsel %vm7418, %v5920, -inf
    %v7841 = vsel %vm7418, %v5921, -inf
    %v7842 = vsel %vm7418, %v5922, -inf
    %v7843 = vsel %vm7418, %v5923, -inf
    %v7844 = vsel %vm7418, %v5924, -inf
    %v7845 = vsel %vm7418, %v5925, -inf
    %v7846 = vsel %vm7418, %v5926, -inf
    %v7847 = vsel %vm7418, %v5927, -inf
    %v7848 = vsel %vm7419, %v5928, -inf
    %v7849 = vsel %vm7419, %v5929, -inf
    %v7850 = vsel %vm7419, %v5930, -inf
    %v7851 = vsel %vm7419, %v5931, -inf
    %v7852 = vsel %vm7419, %v5932, -inf
    %v7853 = vsel %vm7419, %v5933, -inf
    %v7854 = vsel %vm7419, %v5934, -inf
    %v7855 = vsel %vm7419, %v5935, -inf
    %v7856 = vsel %vm7420, %v5936, -inf
    %v7857 = vsel %vm7420, %v5937, -inf
    %v7858 = vsel %vm7420, %v5938, -inf
    %v7859 = vsel %vm7420, %v5939, -inf
    %v7860 = vsel %vm7420, %v5940, -inf
    %v7861 = vsel %vm7420, %v5941, -inf
    %v7862 = vsel %vm7420, %v5942, -inf
    %v7863 = vsel %vm7420, %v5943, -inf
    %v7864 = vsel %vm7421, %v5944, -inf
    %v7865 = vsel %vm7421, %v5945, -inf
    %v7866 = vsel %vm7421, %v5946, -inf
    %v7867 = vsel %vm7421, %v5947, -inf
    %v7868 = vsel %vm7421, %v5948, -inf
    %v7869 = vsel %vm7421, %v5949, -inf
    %v7870 = vsel %vm7421, %v5950, -inf
    %v7871 = vsel %vm7421, %v5951, -inf
    %v7872 = vsel %vm7422, %v5952, -inf
    %v7873 = vsel %vm7422, %v5953, -inf
    %v7874 = vsel %vm7422, %v5954, -inf
    %v7875 = vsel %vm7422, %v5955, -inf
    %v7876 = vsel %vm7422, %v5956, -inf
    %v7877 = vsel %vm7422, %v5957, -inf
    %v7878 = vsel %vm7422, %v5958, -inf
    %v7879 = vsel %vm7422, %v5959, -inf
    %v7880 = vsel %vm7423, %v5960, -inf
    %v7881 = vsel %vm7423, %v5961, -inf
    %v7882 = vsel %vm7423, %v5962, -inf
    %v7883 = vsel %vm7423, %v5963, -inf
    %v7884 = vsel %vm7423, %v5964, -inf
    %v7885 = vsel %vm7423, %v5965, -inf
    %v7886 = vsel %vm7423, %v5966, -inf
    %v7887 = vsel %vm7423, %v5967, -inf
    %v7888 = vsel %vm7424, %v5968, -inf
    %v7889 = vsel %vm7424, %v5969, -inf
    %v7890 = vsel %vm7424, %v5970, -inf
    %v7891 = vsel %vm7424, %v5971, -inf
    %v7892 = vsel %vm7424, %v5972, -inf
    %v7893 = vsel %vm7424, %v5973, -inf
    %v7894 = vsel %vm7424, %v5974, -inf
    %v7895 = vsel %vm7424, %v5975, -inf
    %v7896 = vsel %vm7425, %v5976, -inf
    %v7897 = vsel %vm7425, %v5977, -inf
    %v7898 = vsel %vm7425, %v5978, -inf
    %v7899 = vsel %vm7425, %v5979, -inf
    %v7900 = vsel %vm7425, %v5980, -inf
    %v7901 = vsel %vm7425, %v5981, -inf
    %v7902 = vsel %vm7425, %v5982, -inf
    %v7903 = vsel %vm7425, %v5983, -inf
    %v7904 = vsel %vm7426, %v5984, -inf
    %v7905 = vsel %vm7426, %v5985, -inf
    %v7906 = vsel %vm7426, %v5986, -inf
    %v7907 = vsel %vm7426, %v5987, -inf
    %v7908 = vsel %vm7426, %v5988, -inf
    %v7909 = vsel %vm7426, %v5989, -inf
    %v7910 = vsel %vm7426, %v5990, -inf
    %v7911 = vsel %vm7426, %v5991, -inf
    %v7912 = vsel %vm7427, %v5992, -inf
    %v7913 = vsel %vm7427, %v5993, -inf
    %v7914 = vsel %vm7427, %v5994, -inf
    %v7915 = vsel %vm7427, %v5995, -inf
    %v7916 = vsel %vm7427, %v5996, -inf
    %v7917 = vsel %vm7427, %v5997, -inf
    %v7918 = vsel %vm7427, %v5998, -inf
    %v7919 = vsel %vm7427, %v5999, -inf
    %v7920 = vsel %vm7428, %v6000, -inf
    %v7921 = vsel %vm7428, %v6001, -inf
    %v7922 = vsel %vm7428, %v6002, -inf
    %v7923 = vsel %vm7428, %v6003, -inf
    %v7924 = vsel %vm7428, %v6004, -inf
    %v7925 = vsel %vm7428, %v6005, -inf
    %v7926 = vsel %vm7428, %v6006, -inf
    %v7927 = vsel %vm7428, %v6007, -inf
    %v7928 = vsel %vm7429, %v6008, -inf
    %v7929 = vsel %vm7429, %v6009, -inf
    %v7930 = vsel %vm7429, %v6010, -inf
    %v7931 = vsel %vm7429, %v6011, -inf
    %v7932 = vsel %vm7429, %v6012, -inf
    %v7933 = vsel %vm7429, %v6013, -inf
    %v7934 = vsel %vm7429, %v6014, -inf
    %v7935 = vsel %vm7429, %v6015, -inf
    %v7936 = vsel %vm7430, %v6016, -inf
    %v7937 = vsel %vm7430, %v6017, -inf
    %v7938 = vsel %vm7430, %v6018, -inf
    %v7939 = vsel %vm7430, %v6019, -inf
    %v7940 = vsel %vm7430, %v6020, -inf
    %v7941 = vsel %vm7430, %v6021, -inf
    %v7942 = vsel %vm7430, %v6022, -inf
    %v7943 = vsel %vm7430, %v6023, -inf
    %v7944 = vsel %vm7431, %v6024, -inf
    %v7945 = vsel %vm7431, %v6025, -inf
    %v7946 = vsel %vm7431, %v6026, -inf
    %v7947 = vsel %vm7431, %v6027, -inf
    %v7948 = vsel %vm7431, %v6028, -inf
    %v7949 = vsel %vm7431, %v6029, -inf
    %v7950 = vsel %vm7431, %v6030, -inf
    %v7951 = vsel %vm7431, %v6031, -inf
    %v7952 = vsel %vm7432, %v6032, -inf
    %v7953 = vsel %vm7432, %v6033, -inf
    %v7954 = vsel %vm7432, %v6034, -inf
    %v7955 = vsel %vm7432, %v6035, -inf
    %v7956 = vsel %vm7432, %v6036, -inf
    %v7957 = vsel %vm7432, %v6037, -inf
    %v7958 = vsel %vm7432, %v6038, -inf
    %v7959 = vsel %vm7432, %v6039, -inf
    %v7960 = vsel %vm7433, %v6040, -inf
    %v7961 = vsel %vm7433, %v6041, -inf
    %v7962 = vsel %vm7433, %v6042, -inf
    %v7963 = vsel %vm7433, %v6043, -inf
    %v7964 = vsel %vm7433, %v6044, -inf
    %v7965 = vsel %vm7433, %v6045, -inf
    %v7966 = vsel %vm7433, %v6046, -inf
    %v7967 = vsel %vm7433, %v6047, -inf
    %v7968 = vsel %vm7434, %v6048, -inf
    %v7969 = vsel %vm7434, %v6049, -inf
    %v7970 = vsel %vm7434, %v6050, -inf
    %v7971 = vsel %vm7434, %v6051, -inf
    %v7972 = vsel %vm7434, %v6052, -inf
    %v7973 = vsel %vm7434, %v6053, -inf
    %v7974 = vsel %vm7434, %v6054, -inf
    %v7975 = vsel %vm7434, %v6055, -inf
    %v7976 = vsel %vm7435, %v6056, -inf
    %v7977 = vsel %vm7435, %v6057, -inf
    %v7978 = vsel %vm7435, %v6058, -inf
    %v7979 = vsel %vm7435, %v6059, -inf
    %v7980 = vsel %vm7435, %v6060, -inf
    %v7981 = vsel %vm7435, %v6061, -inf
    %v7982 = vsel %vm7435, %v6062, -inf
    %v7983 = vsel %vm7435, %v6063, -inf
    %v7984 = vsel %vm7436, %v6064, -inf
    %v7985 = vsel %vm7436, %v6065, -inf
    %v7986 = vsel %vm7436, %v6066, -inf
    %v7987 = vsel %vm7436, %v6067, -inf
    %v7988 = vsel %vm7436, %v6068, -inf
    %v7989 = vsel %vm7436, %v6069, -inf
    %v7990 = vsel %vm7436, %v6070, -inf
    %v7991 = vsel %vm7436, %v6071, -inf
    %v7992 = vsel %vm7437, %v6072, -inf
    %v7993 = vsel %vm7437, %v6073, -inf
    %v7994 = vsel %vm7437, %v6074, -inf
    %v7995 = vsel %vm7437, %v6075, -inf
    %v7996 = vsel %vm7437, %v6076, -inf
    %v7997 = vsel %vm7437, %v6077, -inf
    %v7998 = vsel %vm7437, %v6078, -inf
    %v7999 = vsel %vm7437, %v6079, -inf
    %v8000 = vsel %vm7438, %v6080, -inf
    %v8001 = vsel %vm7438, %v6081, -inf
    %v8002 = vsel %vm7438, %v6082, -inf
    %v8003 = vsel %vm7438, %v6083, -inf
    %v8004 = vsel %vm7438, %v6084, -inf
    %v8005 = vsel %vm7438, %v6085, -inf
    %v8006 = vsel %vm7438, %v6086, -inf
    %v8007 = vsel %vm7438, %v6087, -inf
    %v8008 = vsel %vm7439, %v6088, -inf
    %v8009 = vsel %vm7439, %v6089, -inf
    %v8010 = vsel %vm7439, %v6090, -inf
    %v8011 = vsel %vm7439, %v6091, -inf
    %v8012 = vsel %vm7439, %v6092, -inf
    %v8013 = vsel %vm7439, %v6093, -inf
    %v8014 = vsel %vm7439, %v6094, -inf
    %v8015 = vsel %vm7439, %v6095, -inf
    %v8016 = vsel %vm7440, %v6096, -inf
    %v8017 = vsel %vm7440, %v6097, -inf
    %v8018 = vsel %vm7440, %v6098, -inf
    %v8019 = vsel %vm7440, %v6099, -inf
    %v8020 = vsel %vm7440, %v6100, -inf
    %v8021 = vsel %vm7440, %v6101, -inf
    %v8022 = vsel %vm7440, %v6102, -inf
    %v8023 = vsel %vm7440, %v6103, -inf
    %v8024 = vsel %vm7441, %v6104, -inf
    %v8025 = vsel %vm7441, %v6105, -inf
    %v8026 = vsel %vm7441, %v6106, -inf
    %v8027 = vsel %vm7441, %v6107, -inf
    %v8028 = vsel %vm7441, %v6108, -inf
    %v8029 = vsel %vm7441, %v6109, -inf
    %v8030 = vsel %vm7441, %v6110, -inf
    %v8031 = vsel %vm7441, %v6111, -inf
    %v8032 = vsel %vm7442, %v6112, -inf
    %v8033 = vsel %vm7442, %v6113, -inf
    %v8034 = vsel %vm7442, %v6114, -inf
    %v8035 = vsel %vm7442, %v6115, -inf
    %v8036 = vsel %vm7442, %v6116, -inf
    %v8037 = vsel %vm7442, %v6117, -inf
    %v8038 = vsel %vm7442, %v6118, -inf
    %v8039 = vsel %vm7442, %v6119, -inf
    %v8040 = vsel %vm7443, %v6120, -inf
    %v8041 = vsel %vm7443, %v6121, -inf
    %v8042 = vsel %vm7443, %v6122, -inf
    %v8043 = vsel %vm7443, %v6123, -inf
    %v8044 = vsel %vm7443, %v6124, -inf
    %v8045 = vsel %vm7443, %v6125, -inf
    %v8046 = vsel %vm7443, %v6126, -inf
    %v8047 = vsel %vm7443, %v6127, -inf
    %v8048 = vsel %vm7444, %v6128, -inf
    %v8049 = vsel %vm7444, %v6129, -inf
    %v8050 = vsel %vm7444, %v6130, -inf
    %v8051 = vsel %vm7444, %v6131, -inf
    %v8052 = vsel %vm7444, %v6132, -inf
    %v8053 = vsel %vm7444, %v6133, -inf
    %v8054 = vsel %vm7444, %v6134, -inf
    %v8055 = vsel %vm7444, %v6135, -inf
    %v8056 = vsel %vm7445, %v6136, -inf
    %v8057 = vsel %vm7445, %v6137, -inf
    %v8058 = vsel %vm7445, %v6138, -inf
    %v8059 = vsel %vm7445, %v6139, -inf
    %v8060 = vsel %vm7445, %v6140, -inf
    %v8061 = vsel %vm7445, %v6141, -inf
    %v8062 = vsel %vm7445, %v6142, -inf
    %v8063 = vsel %vm7445, %v6143, -inf
    %v8064 = vsel %vm7446, %v6144, -inf
    %v8065 = vsel %vm7446, %v6145, -inf
    %v8066 = vsel %vm7446, %v6146, -inf
    %v8067 = vsel %vm7446, %v6147, -inf
    %v8068 = vsel %vm7446, %v6148, -inf
    %v8069 = vsel %vm7446, %v6149, -inf
    %v8070 = vsel %vm7446, %v6150, -inf
    %v8071 = vsel %vm7446, %v6151, -inf
    %v8072 = vsel %vm7447, %v6152, -inf
    %v8073 = vsel %vm7447, %v6153, -inf
    %v8074 = vsel %vm7447, %v6154, -inf
    %v8075 = vsel %vm7447, %v6155, -inf
    %v8076 = vsel %vm7447, %v6156, -inf
    %v8077 = vsel %vm7447, %v6157, -inf
    %v8078 = vsel %vm7447, %v6158, -inf
    %v8079 = vsel %vm7447, %v6159, -inf
    %v8080 = vsel %vm7448, %v6160, -inf
    %v8081 = vsel %vm7448, %v6161, -inf
    %v8082 = vsel %vm7448, %v6162, -inf
    %v8083 = vsel %vm7448, %v6163, -inf
    %v8084 = vsel %vm7448, %v6164, -inf
    %v8085 = vsel %vm7448, %v6165, -inf
    %v8086 = vsel %vm7448, %v6166, -inf
    %v8087 = vsel %vm7448, %v6167, -inf
    %v8088 = vsel %vm7449, %v6168, -inf
    %v8089 = vsel %vm7449, %v6169, -inf
    %v8090 = vsel %vm7449, %v6170, -inf
    %v8091 = vsel %vm7449, %v6171, -inf
    %v8092 = vsel %vm7449, %v6172, -inf
    %v8093 = vsel %vm7449, %v6173, -inf
    %v8094 = vsel %vm7449, %v6174, -inf
    %v8095 = vsel %vm7449, %v6175, -inf
    %v8096 = vsel %vm7450, %v6176, -inf
    %v8097 = vsel %vm7450, %v6177, -inf
    %v8098 = vsel %vm7450, %v6178, -inf
    %v8099 = vsel %vm7450, %v6179, -inf
    %v8100 = vsel %vm7450, %v6180, -inf
    %v8101 = vsel %vm7450, %v6181, -inf
    %v8102 = vsel %vm7450, %v6182, -inf
    %v8103 = vsel %vm7450, %v6183, -inf
    %v8104 = vsel %vm7451, %v6184, -inf
    %v8105 = vsel %vm7451, %v6185, -inf
    %v8106 = vsel %vm7451, %v6186, -inf
    %v8107 = vsel %vm7451, %v6187, -inf
    %v8108 = vsel %vm7451, %v6188, -inf
    %v8109 = vsel %vm7451, %v6189, -inf
    %v8110 = vsel %vm7451, %v6190, -inf
    %v8111 = vsel %vm7451, %v6191, -inf
    %v8112 = vsel %vm7452, %v6192, -inf
    %v8113 = vsel %vm7452, %v6193, -inf
    %v8114 = vsel %vm7452, %v6194, -inf
    %v8115 = vsel %vm7452, %v6195, -inf
    %v8116 = vsel %vm7452, %v6196, -inf
    %v8117 = vsel %vm7452, %v6197, -inf
    %v8118 = vsel %vm7452, %v6198, -inf
    %v8119 = vsel %vm7452, %v6199, -inf
    %v8120 = vsel %vm7453, %v6200, -inf
    %v8121 = vsel %vm7453, %v6201, -inf
    %v8122 = vsel %vm7453, %v6202, -inf
    %v8123 = vsel %vm7453, %v6203, -inf
    %v8124 = vsel %vm7453, %v6204, -inf
    %v8125 = vsel %vm7453, %v6205, -inf
    %v8126 = vsel %vm7453, %v6206, -inf
    %v8127 = vsel %vm7453, %v6207, -inf
    %v8128 = vsel %vm7454, %v6208, -inf
    %v8129 = vsel %vm7454, %v6209, -inf
    %v8130 = vsel %vm7454, %v6210, -inf
    %v8131 = vsel %vm7454, %v6211, -inf
    %v8132 = vsel %vm7454, %v6212, -inf
    %v8133 = vsel %vm7454, %v6213, -inf
    %v8134 = vsel %vm7454, %v6214, -inf
    %v8135 = vsel %vm7454, %v6215, -inf
    %v8136 = vsel %vm7455, %v6216, -inf
    %v8137 = vsel %vm7455, %v6217, -inf
    %v8138 = vsel %vm7455, %v6218, -inf
    %v8139 = vsel %vm7455, %v6219, -inf
    %v8140 = vsel %vm7455, %v6220, -inf
    %v8141 = vsel %vm7455, %v6221, -inf
    %v8142 = vsel %vm7455, %v6222, -inf
    %v8143 = vsel %vm7455, %v6223, -inf
    %v8144 = vsel %vm7456, %v6224, -inf
    %v8145 = vsel %vm7456, %v6225, -inf
    %v8146 = vsel %vm7456, %v6226, -inf
    %v8147 = vsel %vm7456, %v6227, -inf
    %v8148 = vsel %vm7456, %v6228, -inf
    %v8149 = vsel %vm7456, %v6229, -inf
    %v8150 = vsel %vm7456, %v6230, -inf
    %v8151 = vsel %vm7456, %v6231, -inf
    %v8152 = vsel %vm7457, %v6232, -inf
    %v8153 = vsel %vm7457, %v6233, -inf
    %v8154 = vsel %vm7457, %v6234, -inf
    %v8155 = vsel %vm7457, %v6235, -inf
    %v8156 = vsel %vm7457, %v6236, -inf
    %v8157 = vsel %vm7457, %v6237, -inf
    %v8158 = vsel %vm7457, %v6238, -inf
    %v8159 = vsel %vm7457, %v6239, -inf
    %v8160 = vsel %vm7458, %v6240, -inf
    %v8161 = vsel %vm7458, %v6241, -inf
    %v8162 = vsel %vm7458, %v6242, -inf
    %v8163 = vsel %vm7458, %v6243, -inf
    %v8164 = vsel %vm7458, %v6244, -inf
    %v8165 = vsel %vm7458, %v6245, -inf
    %v8166 = vsel %vm7458, %v6246, -inf
    %v8167 = vsel %vm7458, %v6247, -inf
    %v8168 = vsel %vm7459, %v6248, -inf
    %v8169 = vsel %vm7459, %v6249, -inf
    %v8170 = vsel %vm7459, %v6250, -inf
    %v8171 = vsel %vm7459, %v6251, -inf
    %v8172 = vsel %vm7459, %v6252, -inf
    %v8173 = vsel %vm7459, %v6253, -inf
    %v8174 = vsel %vm7459, %v6254, -inf
    %v8175 = vsel %vm7459, %v6255, -inf
    %v8176 = vsel %vm7460, %v6256, -inf
    %v8177 = vsel %vm7460, %v6257, -inf
    %v8178 = vsel %vm7460, %v6258, -inf
    %v8179 = vsel %vm7460, %v6259, -inf
    %v8180 = vsel %vm7460, %v6260, -inf
    %v8181 = vsel %vm7460, %v6261, -inf
    %v8182 = vsel %vm7460, %v6262, -inf
    %v8183 = vsel %vm7460, %v6263, -inf
    %v8184 = vsel %vm7461, %v6264, -inf
    %v8185 = vsel %vm7461, %v6265, -inf
    %v8186 = vsel %vm7461, %v6266, -inf
    %v8187 = vsel %vm7461, %v6267, -inf
    %v8188 = vsel %vm7461, %v6268, -inf
    %v8189 = vsel %vm7461, %v6269, -inf
    %v8190 = vsel %vm7461, %v6270, -inf
    %v8191 = vsel %vm7461, %v6271, -inf
    %v8192 = vsel %vm7462, %v6272, -inf
    %v8193 = vsel %vm7462, %v6273, -inf
    %v8194 = vsel %vm7462, %v6274, -inf
    %v8195 = vsel %vm7462, %v6275, -inf
    %v8196 = vsel %vm7462, %v6276, -inf
    %v8197 = vsel %vm7462, %v6277, -inf
    %v8198 = vsel %vm7462, %v6278, -inf
    %v8199 = vsel %vm7462, %v6279, -inf
    %v8200 = vsel %vm7463, %v6280, -inf
    %v8201 = vsel %vm7463, %v6281, -inf
    %v8202 = vsel %vm7463, %v6282, -inf
    %v8203 = vsel %vm7463, %v6283, -inf
    %v8204 = vsel %vm7463, %v6284, -inf
    %v8205 = vsel %vm7463, %v6285, -inf
    %v8206 = vsel %vm7463, %v6286, -inf
    %v8207 = vsel %vm7463, %v6287, -inf
    %v8208 = vsel %vm7464, %v6288, -inf
    %v8209 = vsel %vm7464, %v6289, -inf
    %v8210 = vsel %vm7464, %v6290, -inf
    %v8211 = vsel %vm7464, %v6291, -inf
    %v8212 = vsel %vm7464, %v6292, -inf
    %v8213 = vsel %vm7464, %v6293, -inf
    %v8214 = vsel %vm7464, %v6294, -inf
    %v8215 = vsel %vm7464, %v6295, -inf
    %v8216 = vsel %vm7465, %v6296, -inf
    %v8217 = vsel %vm7465, %v6297, -inf
    %v8218 = vsel %vm7465, %v6298, -inf
    %v8219 = vsel %vm7465, %v6299, -inf
    %v8220 = vsel %vm7465, %v6300, -inf
    %v8221 = vsel %vm7465, %v6301, -inf
    %v8222 = vsel %vm7465, %v6302, -inf
    %v8223 = vsel %vm7465, %v6303, -inf
    %v8224 = vsel %vm7466, %v6304, -inf
    %v8225 = vsel %vm7466, %v6305, -inf
    %v8226 = vsel %vm7466, %v6306, -inf
    %v8227 = vsel %vm7466, %v6307, -inf
    %v8228 = vsel %vm7466, %v6308, -inf
    %v8229 = vsel %vm7466, %v6309, -inf
    %v8230 = vsel %vm7466, %v6310, -inf
    %v8231 = vsel %vm7466, %v6311, -inf
    %v8232 = vsel %vm7467, %v6312, -inf
    %v8233 = vsel %vm7467, %v6313, -inf
    %v8234 = vsel %vm7467, %v6314, -inf
    %v8235 = vsel %vm7467, %v6315, -inf
    %v8236 = vsel %vm7467, %v6316, -inf
    %v8237 = vsel %vm7467, %v6317, -inf
    %v8238 = vsel %vm7467, %v6318, -inf
    %v8239 = vsel %vm7467, %v6319, -inf
    %v8240 = vsel %vm7468, %v6320, -inf
    %v8241 = vsel %vm7468, %v6321, -inf
    %v8242 = vsel %vm7468, %v6322, -inf
    %v8243 = vsel %vm7468, %v6323, -inf
    %v8244 = vsel %vm7468, %v6324, -inf
    %v8245 = vsel %vm7468, %v6325, -inf
    %v8246 = vsel %vm7468, %v6326, -inf
    %v8247 = vsel %vm7468, %v6327, -inf
    %v8248 = vsel %vm7469, %v6328, -inf
    %v8249 = vsel %vm7469, %v6329, -inf
    %v8250 = vsel %vm7469, %v6330, -inf
    %v8251 = vsel %vm7469, %v6331, -inf
    %v8252 = vsel %vm7469, %v6332, -inf
    %v8253 = vsel %vm7469, %v6333, -inf
    %v8254 = vsel %vm7469, %v6334, -inf
    %v8255 = vsel %vm7469, %v6335, -inf
    %v8256 = vsel %vm7470, %v6336, -inf
    %v8257 = vsel %vm7470, %v6337, -inf
    %v8258 = vsel %vm7470, %v6338, -inf
    %v8259 = vsel %vm7470, %v6339, -inf
    %v8260 = vsel %vm7470, %v6340, -inf
    %v8261 = vsel %vm7470, %v6341, -inf
    %v8262 = vsel %vm7470, %v6342, -inf
    %v8263 = vsel %vm7470, %v6343, -inf
    %v8264 = vsel %vm7471, %v6344, -inf
    %v8265 = vsel %vm7471, %v6345, -inf
    %v8266 = vsel %vm7471, %v6346, -inf
    %v8267 = vsel %vm7471, %v6347, -inf
    %v8268 = vsel %vm7471, %v6348, -inf
    %v8269 = vsel %vm7471, %v6349, -inf
    %v8270 = vsel %vm7471, %v6350, -inf
    %v8271 = vsel %vm7471, %v6351, -inf
    %v8272 = vsel %vm7472, %v6352, -inf
    %v8273 = vsel %vm7472, %v6353, -inf
    %v8274 = vsel %vm7472, %v6354, -inf
    %v8275 = vsel %vm7472, %v6355, -inf
    %v8276 = vsel %vm7472, %v6356, -inf
    %v8277 = vsel %vm7472, %v6357, -inf
    %v8278 = vsel %vm7472, %v6358, -inf
    %v8279 = vsel %vm7472, %v6359, -inf
    %v8280 = vsel %vm7473, %v6360, -inf
    %v8281 = vsel %vm7473, %v6361, -inf
    %v8282 = vsel %vm7473, %v6362, -inf
    %v8283 = vsel %vm7473, %v6363, -inf
    %v8284 = vsel %vm7473, %v6364, -inf
    %v8285 = vsel %vm7473, %v6365, -inf
    %v8286 = vsel %vm7473, %v6366, -inf
    %v8287 = vsel %vm7473, %v6367, -inf
    %v8288 = vsel %vm7474, %v6368, -inf
    %v8289 = vsel %vm7474, %v6369, -inf
    %v8290 = vsel %vm7474, %v6370, -inf
    %v8291 = vsel %vm7474, %v6371, -inf
    %v8292 = vsel %vm7474, %v6372, -inf
    %v8293 = vsel %vm7474, %v6373, -inf
    %v8294 = vsel %vm7474, %v6374, -inf
    %v8295 = vsel %vm7474, %v6375, -inf
    %v8296 = vsel %vm7475, %v6376, -inf
    %v8297 = vsel %vm7475, %v6377, -inf
    %v8298 = vsel %vm7475, %v6378, -inf
    %v8299 = vsel %vm7475, %v6379, -inf
    %v8300 = vsel %vm7475, %v6380, -inf
    %v8301 = vsel %vm7475, %v6381, -inf
    %v8302 = vsel %vm7475, %v6382, -inf
    %v8303 = vsel %vm7475, %v6383, -inf
    %v8304 = vsel %vm7476, %v6384, -inf
    %v8305 = vsel %vm7476, %v6385, -inf
    %v8306 = vsel %vm7476, %v6386, -inf
    %v8307 = vsel %vm7476, %v6387, -inf
    %v8308 = vsel %vm7476, %v6388, -inf
    %v8309 = vsel %vm7476, %v6389, -inf
    %v8310 = vsel %vm7476, %v6390, -inf
    %v8311 = vsel %vm7476, %v6391, -inf
    %v8312 = vsel %vm7477, %v6392, -inf
    %v8313 = vsel %vm7477, %v6393, -inf
    %v8314 = vsel %vm7477, %v6394, -inf
    %v8315 = vsel %vm7477, %v6395, -inf
    %v8316 = vsel %vm7477, %v6396, -inf
    %v8317 = vsel %vm7477, %v6397, -inf
    %v8318 = vsel %vm7477, %v6398, -inf
    %v8319 = vsel %vm7477, %v6399, -inf
    %v8320 = vsel %vm7478, %v6400, -inf
    %v8321 = vsel %vm7478, %v6401, -inf
    %v8322 = vsel %vm7478, %v6402, -inf
    %v8323 = vsel %vm7478, %v6403, -inf
    %v8324 = vsel %vm7478, %v6404, -inf
    %v8325 = vsel %vm7478, %v6405, -inf
    %v8326 = vsel %vm7478, %v6406, -inf
    %v8327 = vsel %vm7478, %v6407, -inf
    %v8328 = vsel %vm7479, %v6408, -inf
    %v8329 = vsel %vm7479, %v6409, -inf
    %v8330 = vsel %vm7479, %v6410, -inf
    %v8331 = vsel %vm7479, %v6411, -inf
    %v8332 = vsel %vm7479, %v6412, -inf
    %v8333 = vsel %vm7479, %v6413, -inf
    %v8334 = vsel %vm7479, %v6414, -inf
    %v8335 = vsel %vm7479, %v6415, -inf
    %v8336 = vsel %vm7480, %v6416, -inf
    %v8337 = vsel %vm7480, %v6417, -inf
    %v8338 = vsel %vm7480, %v6418, -inf
    %v8339 = vsel %vm7480, %v6419, -inf
    %v8340 = vsel %vm7480, %v6420, -inf
    %v8341 = vsel %vm7480, %v6421, -inf
    %v8342 = vsel %vm7480, %v6422, -inf
    %v8343 = vsel %vm7480, %v6423, -inf
    %v8344 = vsel %vm7481, %v6424, -inf
    %v8345 = vsel %vm7481, %v6425, -inf
    %v8346 = vsel %vm7481, %v6426, -inf
    %v8347 = vsel %vm7481, %v6427, -inf
    %v8348 = vsel %vm7481, %v6428, -inf
    %v8349 = vsel %vm7481, %v6429, -inf
    %v8350 = vsel %vm7481, %v6430, -inf
    %v8351 = vsel %vm7481, %v6431, -inf
    %v8352 = vsel %vm7482, %v6432, -inf
    %v8353 = vsel %vm7482, %v6433, -inf
    %v8354 = vsel %vm7482, %v6434, -inf
    %v8355 = vsel %vm7482, %v6435, -inf
    %v8356 = vsel %vm7482, %v6436, -inf
    %v8357 = vsel %vm7482, %v6437, -inf
    %v8358 = vsel %vm7482, %v6438, -inf
    %v8359 = vsel %vm7482, %v6439, -inf
    %v8360 = vsel %vm7483, %v6440, -inf
    %v8361 = vsel %vm7483, %v6441, -inf
    %v8362 = vsel %vm7483, %v6442, -inf
    %v8363 = vsel %vm7483, %v6443, -inf
    %v8364 = vsel %vm7483, %v6444, -inf
    %v8365 = vsel %vm7483, %v6445, -inf
    %v8366 = vsel %vm7483, %v6446, -inf
    %v8367 = vsel %vm7483, %v6447, -inf
    %v8368 = vsel %vm7484, %v6448, -inf
    %v8369 = vsel %vm7484, %v6449, -inf
    %v8370 = vsel %vm7484, %v6450, -inf
    %v8371 = vsel %vm7484, %v6451, -inf
    %v8372 = vsel %vm7484, %v6452, -inf
    %v8373 = vsel %vm7484, %v6453, -inf
    %v8374 = vsel %vm7484, %v6454, -inf
    %v8375 = vsel %vm7484, %v6455, -inf
    %v8376 = vsel %vm7485, %v6456, -inf
    %v8377 = vsel %vm7485, %v6457, -inf
    %v8378 = vsel %vm7485, %v6458, -inf
    %v8379 = vsel %vm7485, %v6459, -inf
    %v8380 = vsel %vm7485, %v6460, -inf
    %v8381 = vsel %vm7485, %v6461, -inf
    %v8382 = vsel %vm7485, %v6462, -inf
    %v8383 = vsel %vm7485, %v6463, -inf
    %v8384 = vsel %vm7486, %v6464, -inf
    %v8385 = vsel %vm7486, %v6465, -inf
    %v8386 = vsel %vm7486, %v6466, -inf
    %v8387 = vsel %vm7486, %v6467, -inf
    %v8388 = vsel %vm7486, %v6468, -inf
    %v8389 = vsel %vm7486, %v6469, -inf
    %v8390 = vsel %vm7486, %v6470, -inf
    %v8391 = vsel %vm7486, %v6471, -inf
    %v8392 = vsel %vm7487, %v6472, -inf
    %v8393 = vsel %vm7487, %v6473, -inf
    %v8394 = vsel %vm7487, %v6474, -inf
    %v8395 = vsel %vm7487, %v6475, -inf
    %v8396 = vsel %vm7487, %v6476, -inf
    %v8397 = vsel %vm7487, %v6477, -inf
    %v8398 = vsel %vm7487, %v6478, -inf
    %v8399 = vsel %vm7487, %v6479, -inf
    %v8400 = vsel %vm7488, %v6480, -inf
    %v8401 = vsel %vm7488, %v6481, -inf
    %v8402 = vsel %vm7488, %v6482, -inf
    %v8403 = vsel %vm7488, %v6483, -inf
    %v8404 = vsel %vm7488, %v6484, -inf
    %v8405 = vsel %vm7488, %v6485, -inf
    %v8406 = vsel %vm7488, %v6486, -inf
    %v8407 = vsel %vm7488, %v6487, -inf
    %v8408 = vsel %vm7489, %v6488, -inf
    %v8409 = vsel %vm7489, %v6489, -inf
    %v8410 = vsel %vm7489, %v6490, -inf
    %v8411 = vsel %vm7489, %v6491, -inf
    %v8412 = vsel %vm7489, %v6492, -inf
    %v8413 = vsel %vm7489, %v6493, -inf
    %v8414 = vsel %vm7489, %v6494, -inf
    %v8415 = vsel %vm7489, %v6495, -inf
    %v8416 = vsel %vm7490, %v6496, -inf
    %v8417 = vsel %vm7490, %v6497, -inf
    %v8418 = vsel %vm7490, %v6498, -inf
    %v8419 = vsel %vm7490, %v6499, -inf
    %v8420 = vsel %vm7490, %v6500, -inf
    %v8421 = vsel %vm7490, %v6501, -inf
    %v8422 = vsel %vm7490, %v6502, -inf
    %v8423 = vsel %vm7490, %v6503, -inf
    %v8424 = vsel %vm7491, %v6504, -inf
    %v8425 = vsel %vm7491, %v6505, -inf
    %v8426 = vsel %vm7491, %v6506, -inf
    %v8427 = vsel %vm7491, %v6507, -inf
    %v8428 = vsel %vm7491, %v6508, -inf
    %v8429 = vsel %vm7491, %v6509, -inf
    %v8430 = vsel %vm7491, %v6510, -inf
    %v8431 = vsel %vm7491, %v6511, -inf
    %v8432 = vsel %vm7492, %v6512, -inf
    %v8433 = vsel %vm7492, %v6513, -inf
    %v8434 = vsel %vm7492, %v6514, -inf
    %v8435 = vsel %vm7492, %v6515, -inf
    %v8436 = vsel %vm7492, %v6516, -inf
    %v8437 = vsel %vm7492, %v6517, -inf
    %v8438 = vsel %vm7492, %v6518, -inf
    %v8439 = vsel %vm7492, %v6519, -inf
    %v8440 = vsel %vm7493, %v6520, -inf
    %v8441 = vsel %vm7493, %v6521, -inf
    %v8442 = vsel %vm7493, %v6522, -inf
    %v8443 = vsel %vm7493, %v6523, -inf
    %v8444 = vsel %vm7493, %v6524, -inf
    %v8445 = vsel %vm7493, %v6525, -inf
    %v8446 = vsel %vm7493, %v6526, -inf
    %v8447 = vsel %vm7493, %v6527, -inf
    %v8448 = vsel %vm7494, %v6528, -inf
    %v8449 = vsel %vm7494, %v6529, -inf
    %v8450 = vsel %vm7494, %v6530, -inf
    %v8451 = vsel %vm7494, %v6531, -inf
    %v8452 = vsel %vm7494, %v6532, -inf
    %v8453 = vsel %vm7494, %v6533, -inf
    %v8454 = vsel %vm7494, %v6534, -inf
    %v8455 = vsel %vm7494, %v6535, -inf
    %v8456 = vsel %vm7495, %v6536, -inf
    %v8457 = vsel %vm7495, %v6537, -inf
    %v8458 = vsel %vm7495, %v6538, -inf
    %v8459 = vsel %vm7495, %v6539, -inf
    %v8460 = vsel %vm7495, %v6540, -inf
    %v8461 = vsel %vm7495, %v6541, -inf
    %v8462 = vsel %vm7495, %v6542, -inf
    %v8463 = vsel %vm7495, %v6543, -inf
    %v8464 = vsel %vm7496, %v6544, -inf
    %v8465 = vsel %vm7496, %v6545, -inf
    %v8466 = vsel %vm7496, %v6546, -inf
    %v8467 = vsel %vm7496, %v6547, -inf
    %v8468 = vsel %vm7496, %v6548, -inf
    %v8469 = vsel %vm7496, %v6549, -inf
    %v8470 = vsel %vm7496, %v6550, -inf
    %v8471 = vsel %vm7496, %v6551, -inf
    %v8472 = vsel %vm7497, %v6552, -inf
    %v8473 = vsel %vm7497, %v6553, -inf
    %v8474 = vsel %vm7497, %v6554, -inf
    %v8475 = vsel %vm7497, %v6555, -inf
    %v8476 = vsel %vm7497, %v6556, -inf
    %v8477 = vsel %vm7497, %v6557, -inf
    %v8478 = vsel %vm7497, %v6558, -inf
    %v8479 = vsel %vm7497, %v6559, -inf
    %v8480 = vsel %vm7498, %v6560, -inf
    %v8481 = vsel %vm7498, %v6561, -inf
    %v8482 = vsel %vm7498, %v6562, -inf
    %v8483 = vsel %vm7498, %v6563, -inf
    %v8484 = vsel %vm7498, %v6564, -inf
    %v8485 = vsel %vm7498, %v6565, -inf
    %v8486 = vsel %vm7498, %v6566, -inf
    %v8487 = vsel %vm7498, %v6567, -inf
    %v8488 = vsel %vm7499, %v6568, -inf
    %v8489 = vsel %vm7499, %v6569, -inf
    %v8490 = vsel %vm7499, %v6570, -inf
    %v8491 = vsel %vm7499, %v6571, -inf
    %v8492 = vsel %vm7499, %v6572, -inf
    %v8493 = vsel %vm7499, %v6573, -inf
    %v8494 = vsel %vm7499, %v6574, -inf
    %v8495 = vsel %vm7499, %v6575, -inf
    %v8496 = vsel %vm7500, %v6576, -inf
    %v8497 = vsel %vm7500, %v6577, -inf
    %v8498 = vsel %vm7500, %v6578, -inf
    %v8499 = vsel %vm7500, %v6579, -inf
    %v8500 = vsel %vm7500, %v6580, -inf
    %v8501 = vsel %vm7500, %v6581, -inf
    %v8502 = vsel %vm7500, %v6582, -inf
    %v8503 = vsel %vm7500, %v6583, -inf
    %v8504 = vsel %vm7501, %v6584, -inf
    %v8505 = vsel %vm7501, %v6585, -inf
    %v8506 = vsel %vm7501, %v6586, -inf
    %v8507 = vsel %vm7501, %v6587, -inf
    %v8508 = vsel %vm7501, %v6588, -inf
    %v8509 = vsel %vm7501, %v6589, -inf
    %v8510 = vsel %vm7501, %v6590, -inf
    %v8511 = vsel %vm7501, %v6591, -inf
    %v8512 = vsel %vm7502, %v6592, -inf
    %v8513 = vsel %vm7502, %v6593, -inf
    %v8514 = vsel %vm7502, %v6594, -inf
    %v8515 = vsel %vm7502, %v6595, -inf
    %v8516 = vsel %vm7502, %v6596, -inf
    %v8517 = vsel %vm7502, %v6597, -inf
    %v8518 = vsel %vm7502, %v6598, -inf
    %v8519 = vsel %vm7502, %v6599, -inf
    %v8520 = vsel %vm7503, %v6600, -inf
    %v8521 = vsel %vm7503, %v6601, -inf
    %v8522 = vsel %vm7503, %v6602, -inf
    %v8523 = vsel %vm7503, %v6603, -inf
    %v8524 = vsel %vm7503, %v6604, -inf
    %v8525 = vsel %vm7503, %v6605, -inf
    %v8526 = vsel %vm7503, %v6606, -inf
    %v8527 = vsel %vm7503, %v6607, -inf
    %v8528 = vmax.f32 %v7504, %v7512
    %v8529 = vmax.f32 %v8528, %v7520
    %v8530 = vmax.f32 %v8529, %v7528
    %v8531 = vmax.f32 %v8530, %v7536
    %v8532 = vmax.f32 %v8531, %v7544
    %v8533 = vmax.f32 %v8532, %v7552
    %v8534 = vmax.f32 %v8533, %v7560
    %v8535 = vmax.f32 %v8534, %v7568
    %v8536 = vmax.f32 %v8535, %v7576
    %v8537 = vmax.f32 %v8536, %v7584
    %v8538 = vmax.f32 %v8537, %v7592
    %v8539 = vmax.f32 %v8538, %v7600
    %v8540 = vmax.f32 %v8539, %v7608
    %v8541 = vmax.f32 %v8540, %v7616
    %v8542 = vmax.f32 %v8541, %v7624
    %v8543 = vmax.f32 %v8542, %v7632
    %v8544 = vmax.f32 %v8543, %v7640
    %v8545 = vmax.f32 %v8544, %v7648
    %v8546 = vmax.f32 %v8545, %v7656
    %v8547 = vmax.f32 %v8546, %v7664
    %v8548 = vmax.f32 %v8547, %v7672
    %v8549 = vmax.f32 %v8548, %v7680
    %v8550 = vmax.f32 %v8549, %v7688
    %v8551 = vmax.f32 %v8550, %v7696
    %v8552 = vmax.f32 %v8551, %v7704
    %v8553 = vmax.f32 %v8552, %v7712
    %v8554 = vmax.f32 %v8553, %v7720
    %v8555 = vmax.f32 %v8554, %v7728
    %v8556 = vmax.f32 %v8555, %v7736
    %v8557 = vmax.f32 %v8556, %v7744
    %v8558 = vmax.f32 %v8557, %v7752
    %v8559 = vmax.f32 %v8558, %v7760
    %v8560 = vmax.f32 %v8559, %v7768
    %v8561 = vmax.f32 %v8560, %v7776
    %v8562 = vmax.f32 %v8561, %v7784
    %v8563 = vmax.f32 %v8562, %v7792
    %v8564 = vmax.f32 %v8563, %v7800
    %v8565 = vmax.f32 %v8564, %v7808
    %v8566 = vmax.f32 %v8565, %v7816
    %v8567 = vmax.f32 %v8566, %v7824
    %v8568 = vmax.f32 %v8567, %v7832
    %v8569 = vmax.f32 %v8568, %v7840
    %v8570 = vmax.f32 %v8569, %v7848
    %v8571 = vmax.f32 %v8570, %v7856
    %v8572 = vmax.f32 %v8571, %v7864
    %v8573 = vmax.f32 %v8572, %v7872
    %v8574 = vmax.f32 %v8573, %v7880
    %v8575 = vmax.f32 %v8574, %v7888
    %v8576 = vmax.f32 %v8575, %v7896
    %v8577 = vmax.f32 %v8576, %v7904
    %v8578 = vmax.f32 %v8577, %v7912
    %v8579 = vmax.f32 %v8578, %v7920
    %v8580 = vmax.f32 %v8579, %v7928
    %v8581 = vmax.f32 %v8580, %v7936
    %v8582 = vmax.f32 %v8581, %v7944
    %v8583 = vmax.f32 %v8582, %v7952
    %v8584 = vmax.f32 %v8583, %v7960
    %v8585 = vmax.f32 %v8584, %v7968
    %v8586 = vmax.f32 %v8585, %v7976
    %v8587 = vmax.f32 %v8586, %v7984
    %v8588 = vmax.f32 %v8587, %v7992
    %v8589 = vmax.f32 %v8588, %v8000
    %v8590 = vmax.f32 %v8589, %v8008
    %v8591 = vmax.f32 %v8590, %v8016
    %v8592 = vmax.f32 %v8591, %v8024
    %v8593 = vmax.f32 %v8592, %v8032
    %v8594 = vmax.f32 %v8593, %v8040
    %v8595 = vmax.f32 %v8594, %v8048
    %v8596 = vmax.f32 %v8595, %v8056
    %v8597 = vmax.f32 %v8596, %v8064
    %v8598 = vmax.f32 %v8597, %v8072
    %v8599 = vmax.f32 %v8598, %v8080
    %v8600 = vmax.f32 %v8599, %v8088
    %v8601 = vmax.f32 %v8600, %v8096
    %v8602 = vmax.f32 %v8601, %v8104
    %v8603 = vmax.f32 %v8602, %v8112
    %v8604 = vmax.f32 %v8603, %v8120
    %v8605 = vmax.f32 %v8604, %v8128
    %v8606 = vmax.f32 %v8605, %v8136
    %v8607 = vmax.f32 %v8606, %v8144
    %v8608 = vmax.f32 %v8607, %v8152
    %v8609 = vmax.f32 %v8608, %v8160
    %v8610 = vmax.f32 %v8609, %v8168
    %v8611 = vmax.f32 %v8610, %v8176
    %v8612 = vmax.f32 %v8611, %v8184
    %v8613 = vmax.f32 %v8612, %v8192
    %v8614 = vmax.f32 %v8613, %v8200
    %v8615 = vmax.f32 %v8614, %v8208
    %v8616 = vmax.f32 %v8615, %v8216
    %v8617 = vmax.f32 %v8616, %v8224
    %v8618 = vmax.f32 %v8617, %v8232
    %v8619 = vmax.f32 %v8618, %v8240
    %v8620 = vmax.f32 %v8619, %v8248
    %v8621 = vmax.f32 %v8620, %v8256
    %v8622 = vmax.f32 %v8621, %v8264
    %v8623 = vmax.f32 %v8622, %v8272
    %v8624 = vmax.f32 %v8623, %v8280
    %v8625 = vmax.f32 %v8624, %v8288
    %v8626 = vmax.f32 %v8625, %v8296
    %v8627 = vmax.f32 %v8626, %v8304
    %v8628 = vmax.f32 %v8627, %v8312
    %v8629 = vmax.f32 %v8628, %v8320
    %v8630 = vmax.f32 %v8629, %v8328
    %v8631 = vmax.f32 %v8630, %v8336
    %v8632 = vmax.f32 %v8631, %v8344
    %v8633 = vmax.f32 %v8632, %v8352
    %v8634 = vmax.f32 %v8633, %v8360
    %v8635 = vmax.f32 %v8634, %v8368
    %v8636 = vmax.f32 %v8635, %v8376
    %v8637 = vmax.f32 %v8636, %v8384
    %v8638 = vmax.f32 %v8637, %v8392
    %v8639 = vmax.f32 %v8638, %v8400
    %v8640 = vmax.f32 %v8639, %v8408
    %v8641 = vmax.f32 %v8640, %v8416
    %v8642 = vmax.f32 %v8641, %v8424
    %v8643 = vmax.f32 %v8642, %v8432
    %v8644 = vmax.f32 %v8643, %v8440
    %v8645 = vmax.f32 %v8644, %v8448
    %v8646 = vmax.f32 %v8645, %v8456
    %v8647 = vmax.f32 %v8646, %v8464
    %v8648 = vmax.f32 %v8647, %v8472
    %v8649 = vmax.f32 %v8648, %v8480
    %v8650 = vmax.f32 %v8649, %v8488
    %v8651 = vmax.f32 %v8650, %v8496
    %v8652 = vmax.f32 %v8651, %v8504
    %v8653 = vmax.f32 %v8652, %v8512
    %v8654 = vmax.f32 %v8653, %v8520
    %v8655 = vrot.slane %v8654, 4
    %v8656 = vmax.f32 %v8654, %v8655
    %v8657 = vrot.slane %v8656, 2
    %v8658 = vmax.f32 %v8656, %v8657
    %v8659 = vrot.slane %v8658, 1
    %v8660 = vmax.f32 %v8658, %v8659
    %v8661 = vmax.f32 %v7505, %v7513
    %v8662 = vmax.f32 %v8661, %v7521
    %v8663 = vmax.f32 %v8662, %v7529
    %v8664 = vmax.f32 %v8663, %v7537
    %v8665 = vmax.f32 %v8664, %v7545
    %v8666 = vmax.f32 %v8665, %v7553
    %v8667 = vmax.f32 %v8666, %v7561
    %v8668 = vmax.f32 %v8667, %v7569
    %v8669 = vmax.f32 %v8668, %v7577
    %v8670 = vmax.f32 %v8669, %v7585
    %v8671 = vmax.f32 %v8670, %v7593
    %v8672 = vmax.f32 %v8671, %v7601
    %v8673 = vmax.f32 %v8672, %v7609
    %v8674 = vmax.f32 %v8673, %v7617
    %v8675 = vmax.f32 %v8674, %v7625
    %v8676 = vmax.f32 %v8675, %v7633
    %v8677 = vmax.f32 %v8676, %v7641
    %v8678 = vmax.f32 %v8677, %v7649
    %v8679 = vmax.f32 %v8678, %v7657
    %v8680 = vmax.f32 %v8679, %v7665
    %v8681 = vmax.f32 %v8680, %v7673
    %v8682 = vmax.f32 %v8681, %v7681
    %v8683 = vmax.f32 %v8682, %v7689
    %v8684 = vmax.f32 %v8683, %v7697
    %v8685 = vmax.f32 %v8684, %v7705
    %v8686 = vmax.f32 %v8685, %v7713
    %v8687 = vmax.f32 %v8686, %v7721
    %v8688 = vmax.f32 %v8687, %v7729
    %v8689 = vmax.f32 %v8688, %v7737
    %v8690 = vmax.f32 %v8689, %v7745
    %v8691 = vmax.f32 %v8690, %v7753
    %v8692 = vmax.f32 %v8691, %v7761
    %v8693 = vmax.f32 %v8692, %v7769
    %v8694 = vmax.f32 %v8693, %v7777
    %v8695 = vmax.f32 %v8694, %v7785
    %v8696 = vmax.f32 %v8695, %v7793
    %v8697 = vmax.f32 %v8696, %v7801
    %v8698 = vmax.f32 %v8697, %v7809
    %v8699 = vmax.f32 %v8698, %v7817
    %v8700 = vmax.f32 %v8699, %v7825
    %v8701 = vmax.f32 %v8700, %v7833
    %v8702 = vmax.f32 %v8701, %v7841
    %v8703 = vmax.f32 %v8702, %v7849
    %v8704 = vmax.f32 %v8703, %v7857
    %v8705 = vmax.f32 %v8704, %v7865
    %v8706 = vmax.f32 %v8705, %v7873
    %v8707 = vmax.f32 %v8706, %v7881
    %v8708 = vmax.f32 %v8707, %v7889
    %v8709 = vmax.f32 %v8708, %v7897
    %v8710 = vmax.f32 %v8709, %v7905
    %v8711 = vmax.f32 %v8710, %v7913
    %v8712 = vmax.f32 %v8711, %v7921
    %v8713 = vmax.f32 %v8712, %v7929
    %v8714 = vmax.f32 %v8713, %v7937
    %v8715 = vmax.f32 %v8714, %v7945
    %v8716 = vmax.f32 %v8715, %v7953
    %v8717 = vmax.f32 %v8716, %v7961
    %v8718 = vmax.f32 %v8717, %v7969
    %v8719 = vmax.f32 %v8718, %v7977
    %v8720 = vmax.f32 %v8719, %v7985
    %v8721 = vmax.f32 %v8720, %v7993
    %v8722 = vmax.f32 %v8721, %v8001
    %v8723 = vmax.f32 %v8722, %v8009
    %v8724 = vmax.f32 %v8723, %v8017
    %v8725 = vmax.f32 %v8724, %v8025
    %v8726 = vmax.f32 %v8725, %v8033
    %v8727 = vmax.f32 %v8726, %v8041
    %v8728 = vmax.f32 %v8727, %v8049
    %v8729 = vmax.f32 %v8728, %v8057
    %v8730 = vmax.f32 %v8729, %v8065
    %v8731 = vmax.f32 %v8730, %v8073
    %v8732 = vmax.f32 %v8731, %v8081
    %v8733 = vmax.f32 %v8732, %v8089
    %v8734 = vmax.f32 %v8733, %v8097
    %v8735 = vmax.f32 %v8734, %v8105
    %v8736 = vmax.f32 %v8735, %v8113
    %v8737 = vmax.f32 %v8736, %v8121
    %v8738 = vmax.f32 %v8737, %v8129
    %v8739 = vmax.f32 %v8738, %v8137
    %v8740 = vmax.f32 %v8739, %v8145
    %v8741 = vmax.f32 %v8740, %v8153
    %v8742 = vmax.f32 %v8741, %v8161
    %v8743 = vmax.f32 %v8742, %v8169
    %v8744 = vmax.f32 %v8743, %v8177
    %v8745 = vmax.f32 %v8744, %v8185
    %v8746 = vmax.f32 %v8745, %v8193
    %v8747 = vmax.f32 %v8746, %v8201
    %v8748 = vmax.f32 %v8747, %v8209
    %v8749 = vmax.f32 %v8748, %v8217
    %v8750 = vmax.f32 %v8749, %v8225
    %v8751 = vmax.f32 %v8750, %v8233
    %v8752 = vmax.f32 %v8751, %v8241
    %v8753 = vmax.f32 %v8752, %v8249
    %v8754 = vmax.f32 %v8753, %v8257
    %v8755 = vmax.f32 %v8754, %v8265
    %v8756 = vmax.f32 %v8755, %v8273
    %v8757 = vmax.f32 %v8756, %v8281
    %v8758 = vmax.f32 %v8757, %v8289
    %v8759 = vmax.f32 %v8758, %v8297
    %v8760 = vmax.f32 %v8759, %v8305
    %v8761 = vmax.f32 %v8760, %v8313
    %v8762 = vmax.f32 %v8761, %v8321
    %v8763 = vmax.f32 %v8762, %v8329
    %v8764 = vmax.f32 %v8763, %v8337
    %v8765 = vmax.f32 %v8764, %v8345
    %v8766 = vmax.f32 %v8765, %v8353
    %v8767 = vmax.f32 %v8766, %v8361
    %v8768 = vmax.f32 %v8767, %v8369
    %v8769 = vmax.f32 %v8768, %v8377
    %v8770 = vmax.f32 %v8769, %v8385
    %v8771 = vmax.f32 %v8770, %v8393
    %v8772 = vmax.f32 %v8771, %v8401
    %v8773 = vmax.f32 %v8772, %v8409
    %v8774 = vmax.f32 %v8773, %v8417
    %v8775 = vmax.f32 %v8774, %v8425
    %v8776 = vmax.f32 %v8775, %v8433
    %v8777 = vmax.f32 %v8776, %v8441
    %v8778 = vmax.f32 %v8777, %v8449
    %v8779 = vmax.f32 %v8778, %v8457
    %v8780 = vmax.f32 %v8779, %v8465
    %v8781 = vmax.f32 %v8780, %v8473
    %v8782 = vmax.f32 %v8781, %v8481
    %v8783 = vmax.f32 %v8782, %v8489
    %v8784 = vmax.f32 %v8783, %v8497
    %v8785 = vmax.f32 %v8784, %v8505
    %v8786 = vmax.f32 %v8785, %v8513
    %v8787 = vmax.f32 %v8786, %v8521
    %v8788 = vrot.slane %v8787, 4
    %v8789 = vmax.f32 %v8787, %v8788
    %v8790 = vrot.slane %v8789, 2
    %v8791 = vmax.f32 %v8789, %v8790
    %v8792 = vrot.slane %v8791, 1
    %v8793 = vmax.f32 %v8791, %v8792
    %v8794 = vmax.f32 %v7506, %v7514
    %v8795 = vmax.f32 %v8794, %v7522
    %v8796 = vmax.f32 %v8795, %v7530
    %v8797 = vmax.f32 %v8796, %v7538
    %v8798 = vmax.f32 %v8797, %v7546
    %v8799 = vmax.f32 %v8798, %v7554
    %v8800 = vmax.f32 %v8799, %v7562
    %v8801 = vmax.f32 %v8800, %v7570
    %v8802 = vmax.f32 %v8801, %v7578
    %v8803 = vmax.f32 %v8802, %v7586
    %v8804 = vmax.f32 %v8803, %v7594
    %v8805 = vmax.f32 %v8804, %v7602
    %v8806 = vmax.f32 %v8805, %v7610
    %v8807 = vmax.f32 %v8806, %v7618
    %v8808 = vmax.f32 %v8807, %v7626
    %v8809 = vmax.f32 %v8808, %v7634
    %v8810 = vmax.f32 %v8809, %v7642
    %v8811 = vmax.f32 %v8810, %v7650
    %v8812 = vmax.f32 %v8811, %v7658
    %v8813 = vmax.f32 %v8812, %v7666
    %v8814 = vmax.f32 %v8813, %v7674
    %v8815 = vmax.f32 %v8814, %v7682
    %v8816 = vmax.f32 %v8815, %v7690
    %v8817 = vmax.f32 %v8816, %v7698
    %v8818 = vmax.f32 %v8817, %v7706
    %v8819 = vmax.f32 %v8818, %v7714
    %v8820 = vmax.f32 %v8819, %v7722
    %v8821 = vmax.f32 %v8820, %v7730
    %v8822 = vmax.f32 %v8821, %v7738
    %v8823 = vmax.f32 %v8822, %v7746
    %v8824 = vmax.f32 %v8823, %v7754
    %v8825 = vmax.f32 %v8824, %v7762
    %v8826 = vmax.f32 %v8825, %v7770
    %v8827 = vmax.f32 %v8826, %v7778
    %v8828 = vmax.f32 %v8827, %v7786
    %v8829 = vmax.f32 %v8828, %v7794
    %v8830 = vmax.f32 %v8829, %v7802
    %v8831 = vmax.f32 %v8830, %v7810
    %v8832 = vmax.f32 %v8831, %v7818
    %v8833 = vmax.f32 %v8832, %v7826
    %v8834 = vmax.f32 %v8833, %v7834
    %v8835 = vmax.f32 %v8834, %v7842
    %v8836 = vmax.f32 %v8835, %v7850
    %v8837 = vmax.f32 %v8836, %v7858
    %v8838 = vmax.f32 %v8837, %v7866
    %v8839 = vmax.f32 %v8838, %v7874
    %v8840 = vmax.f32 %v8839, %v7882
    %v8841 = vmax.f32 %v8840, %v7890
    %v8842 = vmax.f32 %v8841, %v7898
    %v8843 = vmax.f32 %v8842, %v7906
    %v8844 = vmax.f32 %v8843, %v7914
    %v8845 = vmax.f32 %v8844, %v7922
    %v8846 = vmax.f32 %v8845, %v7930
    %v8847 = vmax.f32 %v8846, %v7938
    %v8848 = vmax.f32 %v8847, %v7946
    %v8849 = vmax.f32 %v8848, %v7954
    %v8850 = vmax.f32 %v8849, %v7962
    %v8851 = vmax.f32 %v8850, %v7970
    %v8852 = vmax.f32 %v8851, %v7978
    %v8853 = vmax.f32 %v8852, %v7986
    %v8854 = vmax.f32 %v8853, %v7994
    %v8855 = vmax.f32 %v8854, %v8002
    %v8856 = vmax.f32 %v8855, %v8010
    %v8857 = vmax.f32 %v8856, %v8018
    %v8858 = vmax.f32 %v8857, %v8026
    %v8859 = vmax.f32 %v8858, %v8034
    %v8860 = vmax.f32 %v8859, %v8042
    %v8861 = vmax.f32 %v8860, %v8050
    %v8862 = vmax.f32 %v8861, %v8058
    %v8863 = vmax.f32 %v8862, %v8066
    %v8864 = vmax.f32 %v8863, %v8074
    %v8865 = vmax.f32 %v8864, %v8082
    %v8866 = vmax.f32 %v8865, %v8090
    %v8867 = vmax.f32 %v8866, %v8098
    %v8868 = vmax.f32 %v8867, %v8106
    %v8869 = vmax.f32 %v8868, %v8114
    %v8870 = vmax.f32 %v8869, %v8122
    %v8871 = vmax.f32 %v8870, %v8130
    %v8872 = vmax.f32 %v8871, %v8138
    %v8873 = vmax.f32 %v8872, %v8146
    %v8874 = vmax.f32 %v8873, %v8154
    %v8875 = vmax.f32 %v8874, %v8162
    %v8876 = vmax.f32 %v8875, %v8170
    %v8877 = vmax.f32 %v8876, %v8178
    %v8878 = vmax.f32 %v8877, %v8186
    %v8879 = vmax.f32 %v8878, %v8194
    %v8880 = vmax.f32 %v8879, %v8202
    %v8881 = vmax.f32 %v8880, %v8210
    %v8882 = vmax.f32 %v8881, %v8218
    %v8883 = vmax.f32 %v8882, %v8226
    %v8884 = vmax.f32 %v8883, %v8234
    %v8885 = vmax.f32 %v8884, %v8242
    %v8886 = vmax.f32 %v8885, %v8250
    %v8887 = vmax.f32 %v8886, %v8258
    %v8888 = vmax.f32 %v8887, %v8266
    %v8889 = vmax.f32 %v8888, %v8274
    %v8890 = vmax.f32 %v8889, %v8282
    %v8891 = vmax.f32 %v8890, %v8290
    %v8892 = vmax.f32 %v8891, %v8298
    %v8893 = vmax.f32 %v8892, %v8306
    %v8894 = vmax.f32 %v8893, %v8314
    %v8895 = vmax.f32 %v8894, %v8322
    %v8896 = vmax.f32 %v8895, %v8330
    %v8897 = vmax.f32 %v8896, %v8338
    %v8898 = vmax.f32 %v8897, %v8346
    %v8899 = vmax.f32 %v8898, %v8354
    %v8900 = vmax.f32 %v8899, %v8362
    %v8901 = vmax.f32 %v8900, %v8370
    %v8902 = vmax.f32 %v8901, %v8378
    %v8903 = vmax.f32 %v8902, %v8386
    %v8904 = vmax.f32 %v8903, %v8394
    %v8905 = vmax.f32 %v8904, %v8402
    %v8906 = vmax.f32 %v8905, %v8410
    %v8907 = vmax.f32 %v8906, %v8418
    %v8908 = vmax.f32 %v8907, %v8426
    %v8909 = vmax.f32 %v8908, %v8434
    %v8910 = vmax.f32 %v8909, %v8442
    %v8911 = vmax.f32 %v8910, %v8450
    %v8912 = vmax.f32 %v8911, %v8458
    %v8913 = vmax.f32 %v8912, %v8466
    %v8914 = vmax.f32 %v8913, %v8474
    %v8915 = vmax.f32 %v8914, %v8482
    %v8916 = vmax.f32 %v8915, %v8490
    %v8917 = vmax.f32 %v8916, %v8498
    %v8918 = vmax.f32 %v8917, %v8506
    %v8919 = vmax.f32 %v8918, %v8514
    %v8920 = vmax.f32 %v8919, %v8522
    %v8921 = vrot.slane %v8920, 4
    %v8922 = vmax.f32 %v8920, %v8921
    %v8923 = vrot.slane %v8922, 2
    %v8924 = vmax.f32 %v8922, %v8923
    %v8925 = vrot.slane %v8924, 1
    %v8926 = vmax.f32 %v8924, %v8925
    %v8927 = vmax.f32 %v7507, %v7515
    %v8928 = vmax.f32 %v8927, %v7523
    %v8929 = vmax.f32 %v8928, %v7531
    %v8930 = vmax.f32 %v8929, %v7539
    %v8931 = vmax.f32 %v8930, %v7547
    %v8932 = vmax.f32 %v8931, %v7555
    %v8933 = vmax.f32 %v8932, %v7563
    %v8934 = vmax.f32 %v8933, %v7571
    %v8935 = vmax.f32 %v8934, %v7579
    %v8936 = vmax.f32 %v8935, %v7587
    %v8937 = vmax.f32 %v8936, %v7595
    %v8938 = vmax.f32 %v8937, %v7603
    %v8939 = vmax.f32 %v8938, %v7611
    %v8940 = vmax.f32 %v8939, %v7619
    %v8941 = vmax.f32 %v8940, %v7627
    %v8942 = vmax.f32 %v8941, %v7635
    %v8943 = vmax.f32 %v8942, %v7643
    %v8944 = vmax.f32 %v8943, %v7651
    %v8945 = vmax.f32 %v8944, %v7659
    %v8946 = vmax.f32 %v8945, %v7667
    %v8947 = vmax.f32 %v8946, %v7675
    %v8948 = vmax.f32 %v8947, %v7683
    %v8949 = vmax.f32 %v8948, %v7691
    %v8950 = vmax.f32 %v8949, %v7699
    %v8951 = vmax.f32 %v8950, %v7707
    %v8952 = vmax.f32 %v8951, %v7715
    %v8953 = vmax.f32 %v8952, %v7723
    %v8954 = vmax.f32 %v8953, %v7731
    %v8955 = vmax.f32 %v8954, %v7739
    %v8956 = vmax.f32 %v8955, %v7747
    %v8957 = vmax.f32 %v8956, %v7755
    %v8958 = vmax.f32 %v8957, %v7763
    %v8959 = vmax.f32 %v8958, %v7771
    %v8960 = vmax.f32 %v8959, %v7779
    %v8961 = vmax.f32 %v8960, %v7787
    %v8962 = vmax.f32 %v8961, %v7795
    %v8963 = vmax.f32 %v8962, %v7803
    %v8964 = vmax.f32 %v8963, %v7811
    %v8965 = vmax.f32 %v8964, %v7819
    %v8966 = vmax.f32 %v8965, %v7827
    %v8967 = vmax.f32 %v8966, %v7835
    %v8968 = vmax.f32 %v8967, %v7843
    %v8969 = vmax.f32 %v8968, %v7851
    %v8970 = vmax.f32 %v8969, %v7859
    %v8971 = vmax.f32 %v8970, %v7867
    %v8972 = vmax.f32 %v8971, %v7875
    %v8973 = vmax.f32 %v8972, %v7883
    %v8974 = vmax.f32 %v8973, %v7891
    %v8975 = vmax.f32 %v8974, %v7899
    %v8976 = vmax.f32 %v8975, %v7907
    %v8977 = vmax.f32 %v8976, %v7915
    %v8978 = vmax.f32 %v8977, %v7923
    %v8979 = vmax.f32 %v8978, %v7931
    %v8980 = vmax.f32 %v8979, %v7939
    %v8981 = vmax.f32 %v8980, %v7947
    %v8982 = vmax.f32 %v8981, %v7955
    %v8983 = vmax.f32 %v8982, %v7963
    %v8984 = vmax.f32 %v8983, %v7971
    %v8985 = vmax.f32 %v8984, %v7979
    %v8986 = vmax.f32 %v8985, %v7987
    %v8987 = vmax.f32 %v8986, %v7995
    %v8988 = vmax.f32 %v8987, %v8003
    %v8989 = vmax.f32 %v8988, %v8011
    %v8990 = vmax.f32 %v8989, %v8019
    %v8991 = vmax.f32 %v8990, %v8027
    %v8992 = vmax.f32 %v8991, %v8035
    %v8993 = vmax.f32 %v8992, %v8043
    %v8994 = vmax.f32 %v8993, %v8051
    %v8995 = vmax.f32 %v8994, %v8059
    %v8996 = vmax.f32 %v8995, %v8067
    %v8997 = vmax.f32 %v8996, %v8075
    %v8998 = vmax.f32 %v8997, %v8083
    %v8999 = vmax.f32 %v8998, %v8091
    %v9000 = vmax.f32 %v8999, %v8099
    %v9001 = vmax.f32 %v9000, %v8107
    %v9002 = vmax.f32 %v9001, %v8115
    %v9003 = vmax.f32 %v9002, %v8123
    %v9004 = vmax.f32 %v9003, %v8131
    %v9005 = vmax.f32 %v9004, %v8139
    %v9006 = vmax.f32 %v9005, %v8147
    %v9007 = vmax.f32 %v9006, %v8155
    %v9008 = vmax.f32 %v9007, %v8163
    %v9009 = vmax.f32 %v9008, %v8171
    %v9010 = vmax.f32 %v9009, %v8179
    %v9011 = vmax.f32 %v9010, %v8187
    %v9012 = vmax.f32 %v9011, %v8195
    %v9013 = vmax.f32 %v9012, %v8203
    %v9014 = vmax.f32 %v9013, %v8211
    %v9015 = vmax.f32 %v9014, %v8219
    %v9016 = vmax.f32 %v9015, %v8227
    %v9017 = vmax.f32 %v9016, %v8235
    %v9018 = vmax.f32 %v9017, %v8243
    %v9019 = vmax.f32 %v9018, %v8251
    %v9020 = vmax.f32 %v9019, %v8259
    %v9021 = vmax.f32 %v9020, %v8267
    %v9022 = vmax.f32 %v9021, %v8275
    %v9023 = vmax.f32 %v9022, %v8283
    %v9024 = vmax.f32 %v9023, %v8291
    %v9025 = vmax.f32 %v9024, %v8299
    %v9026 = vmax.f32 %v9025, %v8307
    %v9027 = vmax.f32 %v9026, %v8315
    %v9028 = vmax.f32 %v9027, %v8323
    %v9029 = vmax.f32 %v9028, %v8331
    %v9030 = vmax.f32 %v9029, %v8339
    %v9031 = vmax.f32 %v9030, %v8347
    %v9032 = vmax.f32 %v9031, %v8355
    %v9033 = vmax.f32 %v9032, %v8363
    %v9034 = vmax.f32 %v9033, %v8371
    %v9035 = vmax.f32 %v9034, %v8379
    %v9036 = vmax.f32 %v9035, %v8387
    %v9037 = vmax.f32 %v9036, %v8395
    %v9038 = vmax.f32 %v9037, %v8403
    %v9039 = vmax.f32 %v9038, %v8411
    %v9040 = vmax.f32 %v9039, %v8419
    %v9041 = vmax.f32 %v9040, %v8427
    %v9042 = vmax.f32 %v9041, %v8435
    %v9043 = vmax.f32 %v9042, %v8443
    %v9044 = vmax.f32 %v9043, %v8451
    %v9045 = vmax.f32 %v9044, %v8459
    %v9046 = vmax.f32 %v9045, %v8467
    %v9047 = vmax.f32 %v9046, %v8475
    %v9048 = vmax.f32 %v9047, %v8483
    %v9049 = vmax.f32 %v9048, %v8491
    %v9050 = vmax.f32 %v9049, %v8499
    %v9051 = vmax.f32 %v9050, %v8507
    %v9052 = vmax.f32 %v9051, %v8515
    %v9053 = vmax.f32 %v9052, %v8523
    %v9054 = vrot.slane %v9053, 4
    %v9055 = vmax.f32 %v9053, %v9054
    %v9056 = vrot.slane %v9055, 2
    %v9057 = vmax.f32 %v9055, %v9056
    %v9058 = vrot.slane %v9057, 1
    %v9059 = vmax.f32 %v9057, %v9058
    %v9060 = vmax.f32 %v7508, %v7516
    %v9061 = vmax.f32 %v9060, %v7524
    %v9062 = vmax.f32 %v9061, %v7532
    %v9063 = vmax.f32 %v9062, %v7540
    %v9064 = vmax.f32 %v9063, %v7548
    %v9065 = vmax.f32 %v9064, %v7556
    %v9066 = vmax.f32 %v9065, %v7564
    %v9067 = vmax.f32 %v9066, %v7572
    %v9068 = vmax.f32 %v9067, %v7580
    %v9069 = vmax.f32 %v9068, %v7588
    %v9070 = vmax.f32 %v9069, %v7596
    %v9071 = vmax.f32 %v9070, %v7604
    %v9072 = vmax.f32 %v9071, %v7612
    %v9073 = vmax.f32 %v9072, %v7620
    %v9074 = vmax.f32 %v9073, %v7628
    %v9075 = vmax.f32 %v9074, %v7636
    %v9076 = vmax.f32 %v9075, %v7644
    %v9077 = vmax.f32 %v9076, %v7652
    %v9078 = vmax.f32 %v9077, %v7660
    %v9079 = vmax.f32 %v9078, %v7668
    %v9080 = vmax.f32 %v9079, %v7676
    %v9081 = vmax.f32 %v9080, %v7684
    %v9082 = vmax.f32 %v9081, %v7692
    %v9083 = vmax.f32 %v9082, %v7700
    %v9084 = vmax.f32 %v9083, %v7708
    %v9085 = vmax.f32 %v9084, %v7716
    %v9086 = vmax.f32 %v9085, %v7724
    %v9087 = vmax.f32 %v9086, %v7732
    %v9088 = vmax.f32 %v9087, %v7740
    %v9089 = vmax.f32 %v9088, %v7748
    %v9090 = vmax.f32 %v9089, %v7756
    %v9091 = vmax.f32 %v9090, %v7764
    %v9092 = vmax.f32 %v9091, %v7772
    %v9093 = vmax.f32 %v9092, %v7780
    %v9094 = vmax.f32 %v9093, %v7788
    %v9095 = vmax.f32 %v9094, %v7796
    %v9096 = vmax.f32 %v9095, %v7804
    %v9097 = vmax.f32 %v9096, %v7812
    %v9098 = vmax.f32 %v9097, %v7820
    %v9099 = vmax.f32 %v9098, %v7828
    %v9100 = vmax.f32 %v9099, %v7836
    %v9101 = vmax.f32 %v9100, %v7844
    %v9102 = vmax.f32 %v9101, %v7852
    %v9103 = vmax.f32 %v9102, %v7860
    %v9104 = vmax.f32 %v9103, %v7868
    %v9105 = vmax.f32 %v9104, %v7876
    %v9106 = vmax.f32 %v9105, %v7884
    %v9107 = vmax.f32 %v9106, %v7892
    %v9108 = vmax.f32 %v9107, %v7900
    %v9109 = vmax.f32 %v9108, %v7908
    %v9110 = vmax.f32 %v9109, %v7916
    %v9111 = vmax.f32 %v9110, %v7924
    %v9112 = vmax.f32 %v9111, %v7932
    %v9113 = vmax.f32 %v9112, %v7940
    %v9114 = vmax.f32 %v9113, %v7948
    %v9115 = vmax.f32 %v9114, %v7956
    %v9116 = vmax.f32 %v9115, %v7964
    %v9117 = vmax.f32 %v9116, %v7972
    %v9118 = vmax.f32 %v9117, %v7980
    %v9119 = vmax.f32 %v9118, %v7988
    %v9120 = vmax.f32 %v9119, %v7996
    %v9121 = vmax.f32 %v9120, %v8004
    %v9122 = vmax.f32 %v9121, %v8012
    %v9123 = vmax.f32 %v9122, %v8020
    %v9124 = vmax.f32 %v9123, %v8028
    %v9125 = vmax.f32 %v9124, %v8036
    %v9126 = vmax.f32 %v9125, %v8044
    %v9127 = vmax.f32 %v9126, %v8052
    %v9128 = vmax.f32 %v9127, %v8060
    %v9129 = vmax.f32 %v9128, %v8068
    %v9130 = vmax.f32 %v9129, %v8076
    %v9131 = vmax.f32 %v9130, %v8084
    %v9132 = vmax.f32 %v9131, %v8092
    %v9133 = vmax.f32 %v9132, %v8100
    %v9134 = vmax.f32 %v9133, %v8108
    %v9135 = vmax.f32 %v9134, %v8116
    %v9136 = vmax.f32 %v9135, %v8124
    %v9137 = vmax.f32 %v9136, %v8132
    %v9138 = vmax.f32 %v9137, %v8140
    %v9139 = vmax.f32 %v9138, %v8148
    %v9140 = vmax.f32 %v9139, %v8156
    %v9141 = vmax.f32 %v9140, %v8164
    %v9142 = vmax.f32 %v9141, %v8172
    %v9143 = vmax.f32 %v9142, %v8180
    %v9144 = vmax.f32 %v9143, %v8188
    %v9145 = vmax.f32 %v9144, %v8196
    %v9146 = vmax.f32 %v9145, %v8204
    %v9147 = vmax.f32 %v9146, %v8212
    %v9148 = vmax.f32 %v9147, %v8220
    %v9149 = vmax.f32 %v9148, %v8228
    %v9150 = vmax.f32 %v9149, %v8236
    %v9151 = vmax.f32 %v9150, %v8244
    %v9152 = vmax.f32 %v9151, %v8252
    %v9153 = vmax.f32 %v9152, %v8260
    %v9154 = vmax.f32 %v9153, %v8268
    %v9155 = vmax.f32 %v9154, %v8276
    %v9156 = vmax.f32 %v9155, %v8284
    %v9157 = vmax.f32 %v9156, %v8292
    %v9158 = vmax.f32 %v9157, %v8300
    %v9159 = vmax.f32 %v9158, %v8308
    %v9160 = vmax.f32 %v9159, %v8316
    %v9161 = vmax.f32 %v9160, %v8324
    %v9162 = vmax.f32 %v9161, %v8332
    %v9163 = vmax.f32 %v9162, %v8340
    %v9164 = vmax.f32 %v9163, %v8348
    %v9165 = vmax.f32 %v9164, %v8356
    %v9166 = vmax.f32 %v9165, %v8364
    %v9167 = vmax.f32 %v9166, %v8372
    %v9168 = vmax.f32 %v9167, %v8380
    %v9169 = vmax.f32 %v9168, %v8388
    %v9170 = vmax.f32 %v9169, %v8396
    %v9171 = vmax.f32 %v9170, %v8404
    %v9172 = vmax.f32 %v9171, %v8412
    %v9173 = vmax.f32 %v9172, %v8420
    %v9174 = vmax.f32 %v9173, %v8428
    %v9175 = vmax.f32 %v9174, %v8436
    %v9176 = vmax.f32 %v9175, %v8444
    %v9177 = vmax.f32 %v9176, %v8452
    %v9178 = vmax.f32 %v9177, %v8460
    %v9179 = vmax.f32 %v9178, %v8468
    %v9180 = vmax.f32 %v9179, %v8476
    %v9181 = vmax.f32 %v9180, %v8484
    %v9182 = vmax.f32 %v9181, %v8492
    %v9183 = vmax.f32 %v9182, %v8500
    %v9184 = vmax.f32 %v9183, %v8508
    %v9185 = vmax.f32 %v9184, %v8516
    %v9186 = vmax.f32 %v9185, %v8524
    %v9187 = vrot.slane %v9186, 4
    %v9188 = vmax.f32 %v9186, %v9187
    %v9189 = vrot.slane %v9188, 2
    %v9190 = vmax.f32 %v9188, %v9189
    %v9191 = vrot.slane %v9190, 1
    %v9192 = vmax.f32 %v9190, %v9191
    %v9193 = vmax.f32 %v7509, %v7517
    %v9194 = vmax.f32 %v9193, %v7525
    %v9195 = vmax.f32 %v9194, %v7533
    %v9196 = vmax.f32 %v9195, %v7541
    %v9197 = vmax.f32 %v9196, %v7549
    %v9198 = vmax.f32 %v9197, %v7557
    %v9199 = vmax.f32 %v9198, %v7565
    %v9200 = vmax.f32 %v9199, %v7573
    %v9201 = vmax.f32 %v9200, %v7581
    %v9202 = vmax.f32 %v9201, %v7589
    %v9203 = vmax.f32 %v9202, %v7597
    %v9204 = vmax.f32 %v9203, %v7605
    %v9205 = vmax.f32 %v9204, %v7613
    %v9206 = vmax.f32 %v9205, %v7621
    %v9207 = vmax.f32 %v9206, %v7629
    %v9208 = vmax.f32 %v9207, %v7637
    %v9209 = vmax.f32 %v9208, %v7645
    %v9210 = vmax.f32 %v9209, %v7653
    %v9211 = vmax.f32 %v9210, %v7661
    %v9212 = vmax.f32 %v9211, %v7669
    %v9213 = vmax.f32 %v9212, %v7677
    %v9214 = vmax.f32 %v9213, %v7685
    %v9215 = vmax.f32 %v9214, %v7693
    %v9216 = vmax.f32 %v9215, %v7701
    %v9217 = vmax.f32 %v9216, %v7709
    %v9218 = vmax.f32 %v9217, %v7717
    %v9219 = vmax.f32 %v9218, %v7725
    %v9220 = vmax.f32 %v9219, %v7733
    %v9221 = vmax.f32 %v9220, %v7741
    %v9222 = vmax.f32 %v9221, %v7749
    %v9223 = vmax.f32 %v9222, %v7757
    %v9224 = vmax.f32 %v9223, %v7765
    %v9225 = vmax.f32 %v9224, %v7773
    %v9226 = vmax.f32 %v9225, %v7781
    %v9227 = vmax.f32 %v9226, %v7789
    %v9228 = vmax.f32 %v9227, %v7797
    %v9229 = vmax.f32 %v9228, %v7805
    %v9230 = vmax.f32 %v9229, %v7813
    %v9231 = vmax.f32 %v9230, %v7821
    %v9232 = vmax.f32 %v9231, %v7829
    %v9233 = vmax.f32 %v9232, %v7837
    %v9234 = vmax.f32 %v9233, %v7845
    %v9235 = vmax.f32 %v9234, %v7853
    %v9236 = vmax.f32 %v9235, %v7861
    %v9237 = vmax.f32 %v9236, %v7869
    %v9238 = vmax.f32 %v9237, %v7877
    %v9239 = vmax.f32 %v9238, %v7885
    %v9240 = vmax.f32 %v9239, %v7893
    %v9241 = vmax.f32 %v9240, %v7901
    %v9242 = vmax.f32 %v9241, %v7909
    %v9243 = vmax.f32 %v9242, %v7917
    %v9244 = vmax.f32 %v9243, %v7925
    %v9245 = vmax.f32 %v9244, %v7933
    %v9246 = vmax.f32 %v9245, %v7941
    %v9247 = vmax.f32 %v9246, %v7949
    %v9248 = vmax.f32 %v9247, %v7957
    %v9249 = vmax.f32 %v9248, %v7965
    %v9250 = vmax.f32 %v9249, %v7973
    %v9251 = vmax.f32 %v9250, %v7981
    %v9252 = vmax.f32 %v9251, %v7989
    %v9253 = vmax.f32 %v9252, %v7997
    %v9254 = vmax.f32 %v9253, %v8005
    %v9255 = vmax.f32 %v9254, %v8013
    %v9256 = vmax.f32 %v9255, %v8021
    %v9257 = vmax.f32 %v9256, %v8029
    %v9258 = vmax.f32 %v9257, %v8037
    %v9259 = vmax.f32 %v9258, %v8045
    %v9260 = vmax.f32 %v9259, %v8053
    %v9261 = vmax.f32 %v9260, %v8061
    %v9262 = vmax.f32 %v9261, %v8069
    %v9263 = vmax.f32 %v9262, %v8077
    %v9264 = vmax.f32 %v9263, %v8085
    %v9265 = vmax.f32 %v9264, %v8093
    %v9266 = vmax.f32 %v9265, %v8101
    %v9267 = vmax.f32 %v9266, %v8109
    %v9268 = vmax.f32 %v9267, %v8117
    %v9269 = vmax.f32 %v9268, %v8125
    %v9270 = vmax.f32 %v9269, %v8133
    %v9271 = vmax.f32 %v9270, %v8141
    %v9272 = vmax.f32 %v9271, %v8149
    %v9273 = vmax.f32 %v9272, %v8157
    %v9274 = vmax.f32 %v9273, %v8165
    %v9275 = vmax.f32 %v9274, %v8173
    %v9276 = vmax.f32 %v9275, %v8181
    %v9277 = vmax.f32 %v9276, %v8189
    %v9278 = vmax.f32 %v9277, %v8197
    %v9279 = vmax.f32 %v9278, %v8205
    %v9280 = vmax.f32 %v9279, %v8213
    %v9281 = vmax.f32 %v9280, %v8221
    %v9282 = vmax.f32 %v9281, %v8229
    %v9283 = vmax.f32 %v9282, %v8237
    %v9284 = vmax.f32 %v9283, %v8245
    %v9285 = vmax.f32 %v9284, %v8253
    %v9286 = vmax.f32 %v9285, %v8261
    %v9287 = vmax.f32 %v9286, %v8269
    %v9288 = vmax.f32 %v9287, %v8277
    %v9289 = vmax.f32 %v9288, %v8285
    %v9290 = vmax.f32 %v9289, %v8293
    %v9291 = vmax.f32 %v9290, %v8301
    %v9292 = vmax.f32 %v9291, %v8309
    %v9293 = vmax.f32 %v9292, %v8317
    %v9294 = vmax.f32 %v9293, %v8325
    %v9295 = vmax.f32 %v9294, %v8333
    %v9296 = vmax.f32 %v9295, %v8341
    %v9297 = vmax.f32 %v9296, %v8349
    %v9298 = vmax.f32 %v9297, %v8357
    %v9299 = vmax.f32 %v9298, %v8365
    %v9300 = vmax.f32 %v9299, %v8373
    %v9301 = vmax.f32 %v9300, %v8381
    %v9302 = vmax.f32 %v9301, %v8389
    %v9303 = vmax.f32 %v9302, %v8397
    %v9304 = vmax.f32 %v9303, %v8405
    %v9305 = vmax.f32 %v9304, %v8413
    %v9306 = vmax.f32 %v9305, %v8421
    %v9307 = vmax.f32 %v9306, %v8429
    %v9308 = vmax.f32 %v9307, %v8437
    %v9309 = vmax.f32 %v9308, %v8445
    %v9310 = vmax.f32 %v9309, %v8453
    %v9311 = vmax.f32 %v9310, %v8461
    %v9312 = vmax.f32 %v9311, %v8469
    %v9313 = vmax.f32 %v9312, %v8477
    %v9314 = vmax.f32 %v9313, %v8485
    %v9315 = vmax.f32 %v9314, %v8493
    %v9316 = vmax.f32 %v9315, %v8501
    %v9317 = vmax.f32 %v9316, %v8509
    %v9318 = vmax.f32 %v9317, %v8517
    %v9319 = vmax.f32 %v9318, %v8525
    %v9320 = vrot.slane %v9319, 4
    %v9321 = vmax.f32 %v9319, %v9320
    %v9322 = vrot.slane %v9321, 2
    %v9323 = vmax.f32 %v9321, %v9322
    %v9324 = vrot.slane %v9323, 1
    %v9325 = vmax.f32 %v9323, %v9324
    %v9326 = vmax.f32 %v7510, %v7518
    %v9327 = vmax.f32 %v9326, %v7526
    %v9328 = vmax.f32 %v9327, %v7534
    %v9329 = vmax.f32 %v9328, %v7542
    %v9330 = vmax.f32 %v9329, %v7550
    %v9331 = vmax.f32 %v9330, %v7558
    %v9332 = vmax.f32 %v9331, %v7566
    %v9333 = vmax.f32 %v9332, %v7574
    %v9334 = vmax.f32 %v9333, %v7582
    %v9335 = vmax.f32 %v9334, %v7590
    %v9336 = vmax.f32 %v9335, %v7598
    %v9337 = vmax.f32 %v9336, %v7606
    %v9338 = vmax.f32 %v9337, %v7614
    %v9339 = vmax.f32 %v9338, %v7622
    %v9340 = vmax.f32 %v9339, %v7630
    %v9341 = vmax.f32 %v9340, %v7638
    %v9342 = vmax.f32 %v9341, %v7646
    %v9343 = vmax.f32 %v9342, %v7654
    %v9344 = vmax.f32 %v9343, %v7662
    %v9345 = vmax.f32 %v9344, %v7670
    %v9346 = vmax.f32 %v9345, %v7678
    %v9347 = vmax.f32 %v9346, %v7686
    %v9348 = vmax.f32 %v9347, %v7694
    %v9349 = vmax.f32 %v9348, %v7702
    %v9350 = vmax.f32 %v9349, %v7710
    %v9351 = vmax.f32 %v9350, %v7718
    %v9352 = vmax.f32 %v9351, %v7726
    %v9353 = vmax.f32 %v9352, %v7734
    %v9354 = vmax.f32 %v9353, %v7742
    %v9355 = vmax.f32 %v9354, %v7750
    %v9356 = vmax.f32 %v9355, %v7758
    %v9357 = vmax.f32 %v9356, %v7766
    %v9358 = vmax.f32 %v9357, %v7774
    %v9359 = vmax.f32 %v9358, %v7782
    %v9360 = vmax.f32 %v9359, %v7790
    %v9361 = vmax.f32 %v9360, %v7798
    %v9362 = vmax.f32 %v9361, %v7806
    %v9363 = vmax.f32 %v9362, %v7814
    %v9364 = vmax.f32 %v9363, %v7822
    %v9365 = vmax.f32 %v9364, %v7830
    %v9366 = vmax.f32 %v9365, %v7838
    %v9367 = vmax.f32 %v9366, %v7846
    %v9368 = vmax.f32 %v9367, %v7854
    %v9369 = vmax.f32 %v9368, %v7862
    %v9370 = vmax.f32 %v9369, %v7870
    %v9371 = vmax.f32 %v9370, %v7878
    %v9372 = vmax.f32 %v9371, %v7886
    %v9373 = vmax.f32 %v9372, %v7894
    %v9374 = vmax.f32 %v9373, %v7902
    %v9375 = vmax.f32 %v9374, %v7910
    %v9376 = vmax.f32 %v9375, %v7918
    %v9377 = vmax.f32 %v9376, %v7926
    %v9378 = vmax.f32 %v9377, %v7934
    %v9379 = vmax.f32 %v9378, %v7942
    %v9380 = vmax.f32 %v9379, %v7950
    %v9381 = vmax.f32 %v9380, %v7958
    %v9382 = vmax.f32 %v9381, %v7966
    %v9383 = vmax.f32 %v9382, %v7974
    %v9384 = vmax.f32 %v9383, %v7982
    %v9385 = vmax.f32 %v9384, %v7990
    %v9386 = vmax.f32 %v9385, %v7998
    %v9387 = vmax.f32 %v9386, %v8006
    %v9388 = vmax.f32 %v9387, %v8014
    %v9389 = vmax.f32 %v9388, %v8022
    %v9390 = vmax.f32 %v9389, %v8030
    %v9391 = vmax.f32 %v9390, %v8038
    %v9392 = vmax.f32 %v9391, %v8046
    %v9393 = vmax.f32 %v9392, %v8054
    %v9394 = vmax.f32 %v9393, %v8062
    %v9395 = vmax.f32 %v9394, %v8070
    %v9396 = vmax.f32 %v9395, %v8078
    %v9397 = vmax.f32 %v9396, %v8086
    %v9398 = vmax.f32 %v9397, %v8094
    %v9399 = vmax.f32 %v9398, %v8102
    %v9400 = vmax.f32 %v9399, %v8110
    %v9401 = vmax.f32 %v9400, %v8118
    %v9402 = vmax.f32 %v9401, %v8126
    %v9403 = vmax.f32 %v9402, %v8134
    %v9404 = vmax.f32 %v9403, %v8142
    %v9405 = vmax.f32 %v9404, %v8150
    %v9406 = vmax.f32 %v9405, %v8158
    %v9407 = vmax.f32 %v9406, %v8166
    %v9408 = vmax.f32 %v9407, %v8174
    %v9409 = vmax.f32 %v9408, %v8182
    %v9410 = vmax.f32 %v9409, %v8190
    %v9411 = vmax.f32 %v9410, %v8198
    %v9412 = vmax.f32 %v9411, %v8206
    %v9413 = vmax.f32 %v9412, %v8214
    %v9414 = vmax.f32 %v9413, %v8222
    %v9415 = vmax.f32 %v9414, %v8230
    %v9416 = vmax.f32 %v9415, %v8238
    %v9417 = vmax.f32 %v9416, %v8246
    %v9418 = vmax.f32 %v9417, %v8254
    %v9419 = vmax.f32 %v9418, %v8262
    %v9420 = vmax.f32 %v9419, %v8270
    %v9421 = vmax.f32 %v9420, %v8278
    %v9422 = vmax.f32 %v9421, %v8286
    %v9423 = vmax.f32 %v9422, %v8294
    %v9424 = vmax.f32 %v9423, %v8302
    %v9425 = vmax.f32 %v9424, %v8310
    %v9426 = vmax.f32 %v9425, %v8318
    %v9427 = vmax.f32 %v9426, %v8326
    %v9428 = vmax.f32 %v9427, %v8334
    %v9429 = vmax.f32 %v9428, %v8342
    %v9430 = vmax.f32 %v9429, %v8350
    %v9431 = vmax.f32 %v9430, %v8358
    %v9432 = vmax.f32 %v9431, %v8366
    %v9433 = vmax.f32 %v9432, %v8374
    %v9434 = vmax.f32 %v9433, %v8382
    %v9435 = vmax.f32 %v9434, %v8390
    %v9436 = vmax.f32 %v9435, %v8398
    %v9437 = vmax.f32 %v9436, %v8406
    %v9438 = vmax.f32 %v9437, %v8414
    %v9439 = vmax.f32 %v9438, %v8422
    %v9440 = vmax.f32 %v9439, %v8430
    %v9441 = vmax.f32 %v9440, %v8438
    %v9442 = vmax.f32 %v9441, %v8446
    %v9443 = vmax.f32 %v9442, %v8454
    %v9444 = vmax.f32 %v9443, %v8462
    %v9445 = vmax.f32 %v9444, %v8470
    %v9446 = vmax.f32 %v9445, %v8478
    %v9447 = vmax.f32 %v9446, %v8486
    %v9448 = vmax.f32 %v9447, %v8494
    %v9449 = vmax.f32 %v9448, %v8502
    %v9450 = vmax.f32 %v9449, %v8510
    %v9451 = vmax.f32 %v9450, %v8518
    %v9452 = vmax.f32 %v9451, %v8526
    %v9453 = vrot.slane %v9452, 4
    %v9454 = vmax.f32 %v9452, %v9453
    %v9455 = vrot.slane %v9454, 2
    %v9456 = vmax.f32 %v9454, %v9455
    %v9457 = vrot.slane %v9456, 1
    %v9458 = vmax.f32 %v9456, %v9457
    %v9459 = vmax.f32 %v7511, %v7519
    %v9460 = vmax.f32 %v9459, %v7527
    %v9461 = vmax.f32 %v9460, %v7535
    %v9462 = vmax.f32 %v9461, %v7543
    %v9463 = vmax.f32 %v9462, %v7551
    %v9464 = vmax.f32 %v9463, %v7559
    %v9465 = vmax.f32 %v9464, %v7567
    %v9466 = vmax.f32 %v9465, %v7575
    %v9467 = vmax.f32 %v9466, %v7583
    %v9468 = vmax.f32 %v9467, %v7591
    %v9469 = vmax.f32 %v9468, %v7599
    %v9470 = vmax.f32 %v9469, %v7607
    %v9471 = vmax.f32 %v9470, %v7615
    %v9472 = vmax.f32 %v9471, %v7623
    %v9473 = vmax.f32 %v9472, %v7631
    %v9474 = vmax.f32 %v9473, %v7639
    %v9475 = vmax.f32 %v9474, %v7647
    %v9476 = vmax.f32 %v9475, %v7655
    %v9477 = vmax.f32 %v9476, %v7663
    %v9478 = vmax.f32 %v9477, %v7671
    %v9479 = vmax.f32 %v9478, %v7679
    %v9480 = vmax.f32 %v9479, %v7687
    %v9481 = vmax.f32 %v9480, %v7695
    %v9482 = vmax.f32 %v9481, %v7703
    %v9483 = vmax.f32 %v9482, %v7711
    %v9484 = vmax.f32 %v9483, %v7719
    %v9485 = vmax.f32 %v9484, %v7727
    %v9486 = vmax.f32 %v9485, %v7735
    %v9487 = vmax.f32 %v9486, %v7743
    %v9488 = vmax.f32 %v9487, %v7751
    %v9489 = vmax.f32 %v9488, %v7759
    %v9490 = vmax.f32 %v9489, %v7767
    %v9491 = vmax.f32 %v9490, %v7775
    %v9492 = vmax.f32 %v9491, %v7783
    %v9493 = vmax.f32 %v9492, %v7791
    %v9494 = vmax.f32 %v9493, %v7799
    %v9495 = vmax.f32 %v9494, %v7807
    %v9496 = vmax.f32 %v9495, %v7815
    %v9497 = vmax.f32 %v9496, %v7823
    %v9498 = vmax.f32 %v9497, %v7831
    %v9499 = vmax.f32 %v9498, %v7839
    %v9500 = vmax.f32 %v9499, %v7847
    %v9501 = vmax.f32 %v9500, %v7855
    %v9502 = vmax.f32 %v9501, %v7863
    %v9503 = vmax.f32 %v9502, %v7871
    %v9504 = vmax.f32 %v9503, %v7879
    %v9505 = vmax.f32 %v9504, %v7887
    %v9506 = vmax.f32 %v9505, %v7895
    %v9507 = vmax.f32 %v9506, %v7903
    %v9508 = vmax.f32 %v9507, %v7911
    %v9509 = vmax.f32 %v9508, %v7919
    %v9510 = vmax.f32 %v9509, %v7927
    %v9511 = vmax.f32 %v9510, %v7935
    %v9512 = vmax.f32 %v9511, %v7943
    %v9513 = vmax.f32 %v9512, %v7951
    %v9514 = vmax.f32 %v9513, %v7959
    %v9515 = vmax.f32 %v9514, %v7967
    %v9516 = vmax.f32 %v9515, %v7975
    %v9517 = vmax.f32 %v9516, %v7983
    %v9518 = vmax.f32 %v9517, %v7991
    %v9519 = vmax.f32 %v9518, %v7999
    %v9520 = vmax.f32 %v9519, %v8007
    %v9521 = vmax.f32 %v9520, %v8015
    %v9522 = vmax.f32 %v9521, %v8023
    %v9523 = vmax.f32 %v9522, %v8031
    %v9524 = vmax.f32 %v9523, %v8039
    %v9525 = vmax.f32 %v9524, %v8047
    %v9526 = vmax.f32 %v9525, %v8055
    %v9527 = vmax.f32 %v9526, %v8063
    %v9528 = vmax.f32 %v9527, %v8071
    %v9529 = vmax.f32 %v9528, %v8079
    %v9530 = vmax.f32 %v9529, %v8087
    %v9531 = vmax.f32 %v9530, %v8095
    %v9532 = vmax.f32 %v9531, %v8103
    %v9533 = vmax.f32 %v9532, %v8111
    %v9534 = vmax.f32 %v9533, %v8119
    %v9535 = vmax.f32 %v9534, %v8127
    %v9536 = vmax.f32 %v9535, %v8135
    %v9537 = vmax.f32 %v9536, %v8143
    %v9538 = vmax.f32 %v9537, %v8151
    %v9539 = vmax.f32 %v9538, %v8159
    %v9540 = vmax.f32 %v9539, %v8167
    %v9541 = vmax.f32 %v9540, %v8175
    %v9542 = vmax.f32 %v9541, %v8183
    %v9543 = vmax.f32 %v9542, %v8191
    %v9544 = vmax.f32 %v9543, %v8199
    %v9545 = vmax.f32 %v9544, %v8207
    %v9546 = vmax.f32 %v9545, %v8215
    %v9547 = vmax.f32 %v9546, %v8223
    %v9548 = vmax.f32 %v9547, %v8231
    %v9549 = vmax.f32 %v9548, %v8239
    %v9550 = vmax.f32 %v9549, %v8247
    %v9551 = vmax.f32 %v9550, %v8255
    %v9552 = vmax.f32 %v9551, %v8263
    %v9553 = vmax.f32 %v9552, %v8271
    %v9554 = vmax.f32 %v9553, %v8279
    %v9555 = vmax.f32 %v9554, %v8287
    %v9556 = vmax.f32 %v9555, %v8295
    %v9557 = vmax.f32 %v9556, %v8303
    %v9558 = vmax.f32 %v9557, %v8311
    %v9559 = vmax.f32 %v9558, %v8319
    %v9560 = vmax.f32 %v9559, %v8327
    %v9561 = vmax.f32 %v9560, %v8335
    %v9562 = vmax.f32 %v9561, %v8343
    %v9563 = vmax.f32 %v9562, %v8351
    %v9564 = vmax.f32 %v9563, %v8359
    %v9565 = vmax.f32 %v9564, %v8367
    %v9566 = vmax.f32 %v9565, %v8375
    %v9567 = vmax.f32 %v9566, %v8383
    %v9568 = vmax.f32 %v9567, %v8391
    %v9569 = vmax.f32 %v9568, %v8399
    %v9570 = vmax.f32 %v9569, %v8407
    %v9571 = vmax.f32 %v9570, %v8415
    %v9572 = vmax.f32 %v9571, %v8423
    %v9573 = vmax.f32 %v9572, %v8431
    %v9574 = vmax.f32 %v9573, %v8439
    %v9575 = vmax.f32 %v9574, %v8447
    %v9576 = vmax.f32 %v9575, %v8455
    %v9577 = vmax.f32 %v9576, %v8463
    %v9578 = vmax.f32 %v9577, %v8471
    %v9579 = vmax.f32 %v9578, %v8479
    %v9580 = vmax.f32 %v9579, %v8487
    %v9581 = vmax.f32 %v9580, %v8495
    %v9582 = vmax.f32 %v9581, %v8503
    %v9583 = vmax.f32 %v9582, %v8511
    %v9584 = vmax.f32 %v9583, %v8519
    %v9585 = vmax.f32 %v9584, %v8527
    %v9586 = vrot.slane %v9585, 4
    %v9587 = vmax.f32 %v9585, %v9586
    %v9588 = vrot.slane %v9587, 2
    %v9589 = vmax.f32 %v9587, %v9588
    %v9590 = vrot.slane %v9589, 1
    %v9591 = vmax.f32 %v9589, %v9590
    %vm9592 = vcmp.eq.s32.totalorder %v6608, 1
    %vm9593 = vcmp.eq.s32.totalorder %v6609, 1
    %vm9594 = vcmp.eq.s32.totalorder %v6610, 1
    %vm9595 = vcmp.eq.s32.totalorder %v6611, 1
    %vm9596 = vcmp.eq.s32.totalorder %v6612, 1
    %vm9597 = vcmp.eq.s32.totalorder %v6613, 1
    %vm9598 = vcmp.eq.s32.totalorder %v6614, 1
    %vm9599 = vcmp.eq.s32.totalorder %v6615, 1
    %vm9600 = vcmp.eq.s32.totalorder %v6616, 1
    %vm9601 = vcmp.eq.s32.totalorder %v6617, 1
    %vm9602 = vcmp.eq.s32.totalorder %v6618, 1
    %vm9603 = vcmp.eq.s32.totalorder %v6619, 1
    %vm9604 = vcmp.eq.s32.totalorder %v6620, 1
    %vm9605 = vcmp.eq.s32.totalorder %v6621, 1
    %vm9606 = vcmp.eq.s32.totalorder %v6622, 1
    %vm9607 = vcmp.eq.s32.totalorder %v6623, 1
    %vm9608 = vcmp.eq.s32.totalorder %v6624, 1
    %vm9609 = vcmp.eq.s32.totalorder %v6625, 1
    %vm9610 = vcmp.eq.s32.totalorder %v6626, 1
    %vm9611 = vcmp.eq.s32.totalorder %v6627, 1
    %vm9612 = vcmp.eq.s32.totalorder %v6628, 1
    %vm9613 = vcmp.eq.s32.totalorder %v6629, 1
    %vm9614 = vcmp.eq.s32.totalorder %v6630, 1
    %vm9615 = vcmp.eq.s32.totalorder %v6631, 1
    %vm9616 = vcmp.eq.s32.totalorder %v6632, 1
    %vm9617 = vcmp.eq.s32.totalorder %v6633, 1
    %vm9618 = vcmp.eq.s32.totalorder %v6634, 1
    %vm9619 = vcmp.eq.s32.totalorder %v6635, 1
    %vm9620 = vcmp.eq.s32.totalorder %v6636, 1
    %vm9621 = vcmp.eq.s32.totalorder %v6637, 1
    %vm9622 = vcmp.eq.s32.totalorder %v6638, 1
    %vm9623 = vcmp.eq.s32.totalorder %v6639, 1
    %vm9624 = vcmp.eq.s32.totalorder %v6640, 1
    %vm9625 = vcmp.eq.s32.totalorder %v6641, 1
    %vm9626 = vcmp.eq.s32.totalorder %v6642, 1
    %vm9627 = vcmp.eq.s32.totalorder %v6643, 1
    %vm9628 = vcmp.eq.s32.totalorder %v6644, 1
    %vm9629 = vcmp.eq.s32.totalorder %v6645, 1
    %vm9630 = vcmp.eq.s32.totalorder %v6646, 1
    %vm9631 = vcmp.eq.s32.totalorder %v6647, 1
    %vm9632 = vcmp.eq.s32.totalorder %v6648, 1
    %vm9633 = vcmp.eq.s32.totalorder %v6649, 1
    %vm9634 = vcmp.eq.s32.totalorder %v6650, 1
    %vm9635 = vcmp.eq.s32.totalorder %v6651, 1
    %vm9636 = vcmp.eq.s32.totalorder %v6652, 1
    %vm9637 = vcmp.eq.s32.totalorder %v6653, 1
    %vm9638 = vcmp.eq.s32.totalorder %v6654, 1
    %vm9639 = vcmp.eq.s32.totalorder %v6655, 1
    %vm9640 = vcmp.eq.s32.totalorder %v6656, 1
    %vm9641 = vcmp.eq.s32.totalorder %v6657, 1
    %vm9642 = vcmp.eq.s32.totalorder %v6658, 1
    %vm9643 = vcmp.eq.s32.totalorder %v6659, 1
    %vm9644 = vcmp.eq.s32.totalorder %v6660, 1
    %vm9645 = vcmp.eq.s32.totalorder %v6661, 1
    %vm9646 = vcmp.eq.s32.totalorder %v6662, 1
    %vm9647 = vcmp.eq.s32.totalorder %v6663, 1
    %vm9648 = vcmp.eq.s32.totalorder %v6664, 1
    %vm9649 = vcmp.eq.s32.totalorder %v6665, 1
    %vm9650 = vcmp.eq.s32.totalorder %v6666, 1
    %vm9651 = vcmp.eq.s32.totalorder %v6667, 1
    %vm9652 = vcmp.eq.s32.totalorder %v6668, 1
    %vm9653 = vcmp.eq.s32.totalorder %v6669, 1
    %vm9654 = vcmp.eq.s32.totalorder %v6670, 1
    %vm9655 = vcmp.eq.s32.totalorder %v6671, 1
    %vm9656 = vcmp.eq.s32.totalorder %v6672, 1
    %vm9657 = vcmp.eq.s32.totalorder %v6673, 1
    %vm9658 = vcmp.eq.s32.totalorder %v6674, 1
    %vm9659 = vcmp.eq.s32.totalorder %v6675, 1
    %vm9660 = vcmp.eq.s32.totalorder %v6676, 1
    %vm9661 = vcmp.eq.s32.totalorder %v6677, 1
    %vm9662 = vcmp.eq.s32.totalorder %v6678, 1
    %vm9663 = vcmp.eq.s32.totalorder %v6679, 1
    %vm9664 = vcmp.eq.s32.totalorder %v6680, 1
    %vm9665 = vcmp.eq.s32.totalorder %v6681, 1
    %vm9666 = vcmp.eq.s32.totalorder %v6682, 1
    %vm9667 = vcmp.eq.s32.totalorder %v6683, 1
    %vm9668 = vcmp.eq.s32.totalorder %v6684, 1
    %vm9669 = vcmp.eq.s32.totalorder %v6685, 1
    %vm9670 = vcmp.eq.s32.totalorder %v6686, 1
    %vm9671 = vcmp.eq.s32.totalorder %v6687, 1
    %vm9672 = vcmp.eq.s32.totalorder %v6688, 1
    %vm9673 = vcmp.eq.s32.totalorder %v6689, 1
    %vm9674 = vcmp.eq.s32.totalorder %v6690, 1
    %vm9675 = vcmp.eq.s32.totalorder %v6691, 1
    %vm9676 = vcmp.eq.s32.totalorder %v6692, 1
    %vm9677 = vcmp.eq.s32.totalorder %v6693, 1
    %vm9678 = vcmp.eq.s32.totalorder %v6694, 1
    %vm9679 = vcmp.eq.s32.totalorder %v6695, 1
    %vm9680 = vcmp.eq.s32.totalorder %v6696, 1
    %vm9681 = vcmp.eq.s32.totalorder %v6697, 1
    %vm9682 = vcmp.eq.s32.totalorder %v6698, 1
    %vm9683 = vcmp.eq.s32.totalorder %v6699, 1
    %vm9684 = vcmp.eq.s32.totalorder %v6700, 1
    %vm9685 = vcmp.eq.s32.totalorder %v6701, 1
    %vm9686 = vcmp.eq.s32.totalorder %v6702, 1
    %vm9687 = vcmp.eq.s32.totalorder %v6703, 1
    %vm9688 = vcmp.eq.s32.totalorder %v6704, 1
    %vm9689 = vcmp.eq.s32.totalorder %v6705, 1
    %vm9690 = vcmp.eq.s32.totalorder %v6706, 1
    %vm9691 = vcmp.eq.s32.totalorder %v6707, 1
    %vm9692 = vcmp.eq.s32.totalorder %v6708, 1
    %vm9693 = vcmp.eq.s32.totalorder %v6709, 1
    %vm9694 = vcmp.eq.s32.totalorder %v6710, 1
    %vm9695 = vcmp.eq.s32.totalorder %v6711, 1
    %vm9696 = vcmp.eq.s32.totalorder %v6712, 1
    %vm9697 = vcmp.eq.s32.totalorder %v6713, 1
    %vm9698 = vcmp.eq.s32.totalorder %v6714, 1
    %vm9699 = vcmp.eq.s32.totalorder %v6715, 1
    %vm9700 = vcmp.eq.s32.totalorder %v6716, 1
    %vm9701 = vcmp.eq.s32.totalorder %v6717, 1
    %vm9702 = vcmp.eq.s32.totalorder %v6718, 1
    %vm9703 = vcmp.eq.s32.totalorder %v6719, 1
    %vm9704 = vcmp.eq.s32.totalorder %v6720, 1
    %vm9705 = vcmp.eq.s32.totalorder %v6721, 1
    %vm9706 = vcmp.eq.s32.totalorder %v6722, 1
    %vm9707 = vcmp.eq.s32.totalorder %v6723, 1
    %vm9708 = vcmp.eq.s32.totalorder %v6724, 1
    %vm9709 = vcmp.eq.s32.totalorder %v6725, 1
    %vm9710 = vcmp.eq.s32.totalorder %v6726, 1
    %vm9711 = vcmp.eq.s32.totalorder %v6727, 1
    %vm9712 = vcmp.eq.s32.totalorder %v6728, 1
    %vm9713 = vcmp.eq.s32.totalorder %v6729, 1
    %vm9714 = vcmp.eq.s32.totalorder %v6730, 1
    %vm9715 = vcmp.eq.s32.totalorder %v6731, 1
    %vm9716 = vcmp.eq.s32.totalorder %v6732, 1
    %vm9717 = vcmp.eq.s32.totalorder %v6733, 1
    %vm9718 = vcmp.eq.s32.totalorder %v6734, 1
    %vm9719 = vcmp.eq.s32.totalorder %v6735, 1
    %v9720 = vsel %vm9592, 1, 0
    %v9721 = vsel %vm9593, 1, 0
    %v9722 = vsel %vm9594, 1, 0
    %v9723 = vsel %vm9595, 1, 0
    %v9724 = vsel %vm9596, 1, 0
    %v9725 = vsel %vm9597, 1, 0
    %v9726 = vsel %vm9598, 1, 0
    %v9727 = vsel %vm9599, 1, 0
    %v9728 = vsel %vm9600, 1, 0
    %v9729 = vsel %vm9601, 1, 0
    %v9730 = vsel %vm9602, 1, 0
    %v9731 = vsel %vm9603, 1, 0
    %v9732 = vsel %vm9604, 1, 0
    %v9733 = vsel %vm9605, 1, 0
    %v9734 = vsel %vm9606, 1, 0
    %v9735 = vsel %vm9607, 1, 0
    %v9736 = vsel %vm9608, 1, 0
    %v9737 = vsel %vm9609, 1, 0
    %v9738 = vsel %vm9610, 1, 0
    %v9739 = vsel %vm9611, 1, 0
    %v9740 = vsel %vm9612, 1, 0
    %v9741 = vsel %vm9613, 1, 0
    %v9742 = vsel %vm9614, 1, 0
    %v9743 = vsel %vm9615, 1, 0
    %v9744 = vsel %vm9616, 1, 0
    %v9745 = vsel %vm9617, 1, 0
    %v9746 = vsel %vm9618, 1, 0
    %v9747 = vsel %vm9619, 1, 0
    %v9748 = vsel %vm9620, 1, 0
    %v9749 = vsel %vm9621, 1, 0
    %v9750 = vsel %vm9622, 1, 0
    %v9751 = vsel %vm9623, 1, 0
    %v9752 = vsel %vm9624, 1, 0
    %v9753 = vsel %vm9625, 1, 0
    %v9754 = vsel %vm9626, 1, 0
    %v9755 = vsel %vm9627, 1, 0
    %v9756 = vsel %vm9628, 1, 0
    %v9757 = vsel %vm9629, 1, 0
    %v9758 = vsel %vm9630, 1, 0
    %v9759 = vsel %vm9631, 1, 0
    %v9760 = vsel %vm9632, 1, 0
    %v9761 = vsel %vm9633, 1, 0
    %v9762 = vsel %vm9634, 1, 0
    %v9763 = vsel %vm9635, 1, 0
    %v9764 = vsel %vm9636, 1, 0
    %v9765 = vsel %vm9637, 1, 0
    %v9766 = vsel %vm9638, 1, 0
    %v9767 = vsel %vm9639, 1, 0
    %v9768 = vsel %vm9640, 1, 0
    %v9769 = vsel %vm9641, 1, 0
    %v9770 = vsel %vm9642, 1, 0
    %v9771 = vsel %vm9643, 1, 0
    %v9772 = vsel %vm9644, 1, 0
    %v9773 = vsel %vm9645, 1, 0
    %v9774 = vsel %vm9646, 1, 0
    %v9775 = vsel %vm9647, 1, 0
    %v9776 = vsel %vm9648, 1, 0
    %v9777 = vsel %vm9649, 1, 0
    %v9778 = vsel %vm9650, 1, 0
    %v9779 = vsel %vm9651, 1, 0
    %v9780 = vsel %vm9652, 1, 0
    %v9781 = vsel %vm9653, 1, 0
    %v9782 = vsel %vm9654, 1, 0
    %v9783 = vsel %vm9655, 1, 0
    %v9784 = vsel %vm9656, 1, 0
    %v9785 = vsel %vm9657, 1, 0
    %v9786 = vsel %vm9658, 1, 0
    %v9787 = vsel %vm9659, 1, 0
    %v9788 = vsel %vm9660, 1, 0
    %v9789 = vsel %vm9661, 1, 0
    %v9790 = vsel %vm9662, 1, 0
    %v9791 = vsel %vm9663, 1, 0
    %v9792 = vsel %vm9664, 1, 0
    %v9793 = vsel %vm9665, 1, 0
    %v9794 = vsel %vm9666, 1, 0
    %v9795 = vsel %vm9667, 1, 0
    %v9796 = vsel %vm9668, 1, 0
    %v9797 = vsel %vm9669, 1, 0
    %v9798 = vsel %vm9670, 1, 0
    %v9799 = vsel %vm9671, 1, 0
    %v9800 = vsel %vm9672, 1, 0
    %v9801 = vsel %vm9673, 1, 0
    %v9802 = vsel %vm9674, 1, 0
    %v9803 = vsel %vm9675, 1, 0
    %v9804 = vsel %vm9676, 1, 0
    %v9805 = vsel %vm9677, 1, 0
    %v9806 = vsel %vm9678, 1, 0
    %v9807 = vsel %vm9679, 1, 0
    %v9808 = vsel %vm9680, 1, 0
    %v9809 = vsel %vm9681, 1, 0
    %v9810 = vsel %vm9682, 1, 0
    %v9811 = vsel %vm9683, 1, 0
    %v9812 = vsel %vm9684, 1, 0
    %v9813 = vsel %vm9685, 1, 0
    %v9814 = vsel %vm9686, 1, 0
    %v9815 = vsel %vm9687, 1, 0
    %v9816 = vsel %vm9688, 1, 0
    %v9817 = vsel %vm9689, 1, 0
    %v9818 = vsel %vm9690, 1, 0
    %v9819 = vsel %vm9691, 1, 0
    %v9820 = vsel %vm9692, 1, 0
    %v9821 = vsel %vm9693, 1, 0
    %v9822 = vsel %vm9694, 1, 0
    %v9823 = vsel %vm9695, 1, 0
    %v9824 = vsel %vm9696, 1, 0
    %v9825 = vsel %vm9697, 1, 0
    %v9826 = vsel %vm9698, 1, 0
    %v9827 = vsel %vm9699, 1, 0
    %v9828 = vsel %vm9700, 1, 0
    %v9829 = vsel %vm9701, 1, 0
    %v9830 = vsel %vm9702, 1, 0
    %v9831 = vsel %vm9703, 1, 0
    %v9832 = vsel %vm9704, 1, 0
    %v9833 = vsel %vm9705, 1, 0
    %v9834 = vsel %vm9706, 1, 0
    %v9835 = vsel %vm9707, 1, 0
    %v9836 = vsel %vm9708, 1, 0
    %v9837 = vsel %vm9709, 1, 0
    %v9838 = vsel %vm9710, 1, 0
    %v9839 = vsel %vm9711, 1, 0
    %v9840 = vsel %vm9712, 1, 0
    %v9841 = vsel %vm9713, 1, 0
    %v9842 = vsel %vm9714, 1, 0
    %v9843 = vsel %vm9715, 1, 0
    %v9844 = vsel %vm9716, 1, 0
    %v9845 = vsel %vm9717, 1, 0
    %v9846 = vsel %vm9718, 1, 0
    %v9847 = vsel %vm9719, 1, 0
    %9848 = vset.pattern.permute.xlu0 0
    %9849 = vperm.xlu0 %9848, %v9720
    %v9850 = vpop.permute.xlu0 %9849
    %9851 = vset.pattern.permute.xlu0 0
    %9852 = vperm.xlu0 %9851, %v9721
    %v9853 = vpop.permute.xlu0 %9852
    %9854 = vset.pattern.permute.xlu0 0
    %9855 = vperm.xlu0 %9854, %v9722
    %v9856 = vpop.permute.xlu0 %9855
    %9857 = vset.pattern.permute.xlu0 0
    %9858 = vperm.xlu0 %9857, %v9723
    %v9859 = vpop.permute.xlu0 %9858
    %9860 = vset.pattern.permute.xlu0 0
    %9861 = vperm.xlu0 %9860, %v9724
    %v9862 = vpop.permute.xlu0 %9861
    %9863 = vset.pattern.permute.xlu0 0
    %9864 = vperm.xlu0 %9863, %v9725
    %v9865 = vpop.permute.xlu0 %9864
    %9866 = vset.pattern.permute.xlu0 0
    %9867 = vperm.xlu0 %9866, %v9726
    %v9868 = vpop.permute.xlu0 %9867
    %9869 = vset.pattern.permute.xlu0 0
    %9870 = vperm.xlu0 %9869, %v9727
    %v9871 = vpop.permute.xlu0 %9870
    %9872 = vset.pattern.permute.xlu0 0
    %9873 = vperm.xlu0 %9872, %v9728
    %v9874 = vpop.permute.xlu0 %9873
    %9875 = vset.pattern.permute.xlu0 0
    %9876 = vperm.xlu0 %9875, %v9729
    %v9877 = vpop.permute.xlu0 %9876
    %9878 = vset.pattern.permute.xlu0 0
    %9879 = vperm.xlu0 %9878, %v9730
    %v9880 = vpop.permute.xlu0 %9879
    %9881 = vset.pattern.permute.xlu0 0
    %9882 = vperm.xlu0 %9881, %v9731
    %v9883 = vpop.permute.xlu0 %9882
    %9884 = vset.pattern.permute.xlu0 0
    %9885 = vperm.xlu0 %9884, %v9732
    %v9886 = vpop.permute.xlu0 %9885
    %9887 = vset.pattern.permute.xlu0 0
    %9888 = vperm.xlu0 %9887, %v9733
    %v9889 = vpop.permute.xlu0 %9888
    %9890 = vset.pattern.permute.xlu0 0
    %9891 = vperm.xlu0 %9890, %v9734
    %v9892 = vpop.permute.xlu0 %9891
    %9893 = vset.pattern.permute.xlu0 0
    %9894 = vperm.xlu0 %9893, %v9735
    %v9895 = vpop.permute.xlu0 %9894
    %9896 = vset.pattern.permute.xlu0 0
    %9897 = vperm.xlu0 %9896, %v9736
    %v9898 = vpop.permute.xlu0 %9897
    %9899 = vset.pattern.permute.xlu0 0
    %9900 = vperm.xlu0 %9899, %v9737
    %v9901 = vpop.permute.xlu0 %9900
    %9902 = vset.pattern.permute.xlu0 0
    %9903 = vperm.xlu0 %9902, %v9738
    %v9904 = vpop.permute.xlu0 %9903
    %9905 = vset.pattern.permute.xlu0 0
    %9906 = vperm.xlu0 %9905, %v9739
    %v9907 = vpop.permute.xlu0 %9906
    %9908 = vset.pattern.permute.xlu0 0
    %9909 = vperm.xlu0 %9908, %v9740
    %v9910 = vpop.permute.xlu0 %9909
    %9911 = vset.pattern.permute.xlu0 0
    %9912 = vperm.xlu0 %9911, %v9741
    %v9913 = vpop.permute.xlu0 %9912
    %9914 = vset.pattern.permute.xlu0 0
    %9915 = vperm.xlu0 %9914, %v9742
    %v9916 = vpop.permute.xlu0 %9915
    %9917 = vset.pattern.permute.xlu0 0
    %9918 = vperm.xlu0 %9917, %v9743
    %v9919 = vpop.permute.xlu0 %9918
    %9920 = vset.pattern.permute.xlu0 0
    %9921 = vperm.xlu0 %9920, %v9744
    %v9922 = vpop.permute.xlu0 %9921
    %9923 = vset.pattern.permute.xlu0 0
    %9924 = vperm.xlu0 %9923, %v9745
    %v9925 = vpop.permute.xlu0 %9924
    %9926 = vset.pattern.permute.xlu0 0
    %9927 = vperm.xlu0 %9926, %v9746
    %v9928 = vpop.permute.xlu0 %9927
    %9929 = vset.pattern.permute.xlu0 0
    %9930 = vperm.xlu0 %9929, %v9747
    %v9931 = vpop.permute.xlu0 %9930
    %9932 = vset.pattern.permute.xlu0 0
    %9933 = vperm.xlu0 %9932, %v9748
    %v9934 = vpop.permute.xlu0 %9933
    %9935 = vset.pattern.permute.xlu0 0
    %9936 = vperm.xlu0 %9935, %v9749
    %v9937 = vpop.permute.xlu0 %9936
    %9938 = vset.pattern.permute.xlu0 0
    %9939 = vperm.xlu0 %9938, %v9750
    %v9940 = vpop.permute.xlu0 %9939
    %9941 = vset.pattern.permute.xlu0 0
    %9942 = vperm.xlu0 %9941, %v9751
    %v9943 = vpop.permute.xlu0 %9942
    %9944 = vset.pattern.permute.xlu0 0
    %9945 = vperm.xlu0 %9944, %v9752
    %v9946 = vpop.permute.xlu0 %9945
    %9947 = vset.pattern.permute.xlu0 0
    %9948 = vperm.xlu0 %9947, %v9753
    %v9949 = vpop.permute.xlu0 %9948
    %9950 = vset.pattern.permute.xlu0 0
    %9951 = vperm.xlu0 %9950, %v9754
    %v9952 = vpop.permute.xlu0 %9951
    %9953 = vset.pattern.permute.xlu0 0
    %9954 = vperm.xlu0 %9953, %v9755
    %v9955 = vpop.permute.xlu0 %9954
    %9956 = vset.pattern.permute.xlu0 0
    %9957 = vperm.xlu0 %9956, %v9756
    %v9958 = vpop.permute.xlu0 %9957
    %9959 = vset.pattern.permute.xlu0 0
    %9960 = vperm.xlu0 %9959, %v9757
    %v9961 = vpop.permute.xlu0 %9960
    %9962 = vset.pattern.permute.xlu0 0
    %9963 = vperm.xlu0 %9962, %v9758
    %v9964 = vpop.permute.xlu0 %9963
    %9965 = vset.pattern.permute.xlu0 0
    %9966 = vperm.xlu0 %9965, %v9759
    %v9967 = vpop.permute.xlu0 %9966
    %9968 = vset.pattern.permute.xlu0 0
    %9969 = vperm.xlu0 %9968, %v9760
    %v9970 = vpop.permute.xlu0 %9969
    %9971 = vset.pattern.permute.xlu0 0
    %9972 = vperm.xlu0 %9971, %v9761
    %v9973 = vpop.permute.xlu0 %9972
    %9974 = vset.pattern.permute.xlu0 0
    %9975 = vperm.xlu0 %9974, %v9762
    %v9976 = vpop.permute.xlu0 %9975
    %9977 = vset.pattern.permute.xlu0 0
    %9978 = vperm.xlu0 %9977, %v9763
    %v9979 = vpop.permute.xlu0 %9978
    %9980 = vset.pattern.permute.xlu0 0
    %9981 = vperm.xlu0 %9980, %v9764
    %v9982 = vpop.permute.xlu0 %9981
    %9983 = vset.pattern.permute.xlu0 0
    %9984 = vperm.xlu0 %9983, %v9765
    %v9985 = vpop.permute.xlu0 %9984
    %9986 = vset.pattern.permute.xlu0 0
    %9987 = vperm.xlu0 %9986, %v9766
    %v9988 = vpop.permute.xlu0 %9987
    %9989 = vset.pattern.permute.xlu0 0
    %9990 = vperm.xlu0 %9989, %v9767
    %v9991 = vpop.permute.xlu0 %9990
    %9992 = vset.pattern.permute.xlu0 0
    %9993 = vperm.xlu0 %9992, %v9768
    %v9994 = vpop.permute.xlu0 %9993
    %9995 = vset.pattern.permute.xlu0 0
    %9996 = vperm.xlu0 %9995, %v9769
    %v9997 = vpop.permute.xlu0 %9996
    %9998 = vset.pattern.permute.xlu0 0
    %9999 = vperm.xlu0 %9998, %v9770
    %v10000 = vpop.permute.xlu0 %9999
    %10001 = vset.pattern.permute.xlu0 0
    %10002 = vperm.xlu0 %10001, %v9771
    %v10003 = vpop.permute.xlu0 %10002
    %10004 = vset.pattern.permute.xlu0 0
    %10005 = vperm.xlu0 %10004, %v9772
    %v10006 = vpop.permute.xlu0 %10005
    %10007 = vset.pattern.permute.xlu0 0
    %10008 = vperm.xlu0 %10007, %v9773
    %v10009 = vpop.permute.xlu0 %10008
    %10010 = vset.pattern.permute.xlu0 0
    %10011 = vperm.xlu0 %10010, %v9774
    %v10012 = vpop.permute.xlu0 %10011
    %10013 = vset.pattern.permute.xlu0 0
    %10014 = vperm.xlu0 %10013, %v9775
    %v10015 = vpop.permute.xlu0 %10014
    %10016 = vset.pattern.permute.xlu0 0
    %10017 = vperm.xlu0 %10016, %v9776
    %v10018 = vpop.permute.xlu0 %10017
    %10019 = vset.pattern.permute.xlu0 0
    %10020 = vperm.xlu0 %10019, %v9777
    %v10021 = vpop.permute.xlu0 %10020
    %10022 = vset.pattern.permute.xlu0 0
    %10023 = vperm.xlu0 %10022, %v9778
    %v10024 = vpop.permute.xlu0 %10023
    %10025 = vset.pattern.permute.xlu0 0
    %10026 = vperm.xlu0 %10025, %v9779
    %v10027 = vpop.permute.xlu0 %10026
    %10028 = vset.pattern.permute.xlu0 0
    %10029 = vperm.xlu0 %10028, %v9780
    %v10030 = vpop.permute.xlu0 %10029
    %10031 = vset.pattern.permute.xlu0 0
    %10032 = vperm.xlu0 %10031, %v9781
    %v10033 = vpop.permute.xlu0 %10032
    %10034 = vset.pattern.permute.xlu0 0
    %10035 = vperm.xlu0 %10034, %v9782
    %v10036 = vpop.permute.xlu0 %10035
    %10037 = vset.pattern.permute.xlu0 0
    %10038 = vperm.xlu0 %10037, %v9783
    %v10039 = vpop.permute.xlu0 %10038
    %10040 = vset.pattern.permute.xlu0 0
    %10041 = vperm.xlu0 %10040, %v9784
    %v10042 = vpop.permute.xlu0 %10041
    %10043 = vset.pattern.permute.xlu0 0
    %10044 = vperm.xlu0 %10043, %v9785
    %v10045 = vpop.permute.xlu0 %10044
    %10046 = vset.pattern.permute.xlu0 0
    %10047 = vperm.xlu0 %10046, %v9786
    %v10048 = vpop.permute.xlu0 %10047
    %10049 = vset.pattern.permute.xlu0 0
    %10050 = vperm.xlu0 %10049, %v9787
    %v10051 = vpop.permute.xlu0 %10050
    %10052 = vset.pattern.permute.xlu0 0
    %10053 = vperm.xlu0 %10052, %v9788
    %v10054 = vpop.permute.xlu0 %10053
    %10055 = vset.pattern.permute.xlu0 0
    %10056 = vperm.xlu0 %10055, %v9789
    %v10057 = vpop.permute.xlu0 %10056
    %10058 = vset.pattern.permute.xlu0 0
    %10059 = vperm.xlu0 %10058, %v9790
    %v10060 = vpop.permute.xlu0 %10059
    %10061 = vset.pattern.permute.xlu0 0
    %10062 = vperm.xlu0 %10061, %v9791
    %v10063 = vpop.permute.xlu0 %10062
    %10064 = vset.pattern.permute.xlu0 0
    %10065 = vperm.xlu0 %10064, %v9792
    %v10066 = vpop.permute.xlu0 %10065
    %10067 = vset.pattern.permute.xlu0 0
    %10068 = vperm.xlu0 %10067, %v9793
    %v10069 = vpop.permute.xlu0 %10068
    %10070 = vset.pattern.permute.xlu0 0
    %10071 = vperm.xlu0 %10070, %v9794
    %v10072 = vpop.permute.xlu0 %10071
    %10073 = vset.pattern.permute.xlu0 0
    %10074 = vperm.xlu0 %10073, %v9795
    %v10075 = vpop.permute.xlu0 %10074
    %10076 = vset.pattern.permute.xlu0 0
    %10077 = vperm.xlu0 %10076, %v9796
    %v10078 = vpop.permute.xlu0 %10077
    %10079 = vset.pattern.permute.xlu0 0
    %10080 = vperm.xlu0 %10079, %v9797
    %v10081 = vpop.permute.xlu0 %10080
    %10082 = vset.pattern.permute.xlu0 0
    %10083 = vperm.xlu0 %10082, %v9798
    %v10084 = vpop.permute.xlu0 %10083
    %10085 = vset.pattern.permute.xlu0 0
    %10086 = vperm.xlu0 %10085, %v9799
    %v10087 = vpop.permute.xlu0 %10086
    %10088 = vset.pattern.permute.xlu0 0
    %10089 = vperm.xlu0 %10088, %v9800
    %v10090 = vpop.permute.xlu0 %10089
    %10091 = vset.pattern.permute.xlu0 0
    %10092 = vperm.xlu0 %10091, %v9801
    %v10093 = vpop.permute.xlu0 %10092
    %10094 = vset.pattern.permute.xlu0 0
    %10095 = vperm.xlu0 %10094, %v9802
    %v10096 = vpop.permute.xlu0 %10095
    %10097 = vset.pattern.permute.xlu0 0
    %10098 = vperm.xlu0 %10097, %v9803
    %v10099 = vpop.permute.xlu0 %10098
    %10100 = vset.pattern.permute.xlu0 0
    %10101 = vperm.xlu0 %10100, %v9804
    %v10102 = vpop.permute.xlu0 %10101
    %10103 = vset.pattern.permute.xlu0 0
    %10104 = vperm.xlu0 %10103, %v9805
    %v10105 = vpop.permute.xlu0 %10104
    %10106 = vset.pattern.permute.xlu0 0
    %10107 = vperm.xlu0 %10106, %v9806
    %v10108 = vpop.permute.xlu0 %10107
    %10109 = vset.pattern.permute.xlu0 0
    %10110 = vperm.xlu0 %10109, %v9807
    %v10111 = vpop.permute.xlu0 %10110
    %10112 = vset.pattern.permute.xlu0 0
    %10113 = vperm.xlu0 %10112, %v9808
    %v10114 = vpop.permute.xlu0 %10113
    %10115 = vset.pattern.permute.xlu0 0
    %10116 = vperm.xlu0 %10115, %v9809
    %v10117 = vpop.permute.xlu0 %10116
    %10118 = vset.pattern.permute.xlu0 0
    %10119 = vperm.xlu0 %10118, %v9810
    %v10120 = vpop.permute.xlu0 %10119
    %10121 = vset.pattern.permute.xlu0 0
    %10122 = vperm.xlu0 %10121, %v9811
    %v10123 = vpop.permute.xlu0 %10122
    %10124 = vset.pattern.permute.xlu0 0
    %10125 = vperm.xlu0 %10124, %v9812
    %v10126 = vpop.permute.xlu0 %10125
    %10127 = vset.pattern.permute.xlu0 0
    %10128 = vperm.xlu0 %10127, %v9813
    %v10129 = vpop.permute.xlu0 %10128
    %10130 = vset.pattern.permute.xlu0 0
    %10131 = vperm.xlu0 %10130, %v9814
    %v10132 = vpop.permute.xlu0 %10131
    %10133 = vset.pattern.permute.xlu0 0
    %10134 = vperm.xlu0 %10133, %v9815
    %v10135 = vpop.permute.xlu0 %10134
    %10136 = vset.pattern.permute.xlu0 0
    %10137 = vperm.xlu0 %10136, %v9816
    %v10138 = vpop.permute.xlu0 %10137
    %10139 = vset.pattern.permute.xlu0 0
    %10140 = vperm.xlu0 %10139, %v9817
    %v10141 = vpop.permute.xlu0 %10140
    %10142 = vset.pattern.permute.xlu0 0
    %10143 = vperm.xlu0 %10142, %v9818
    %v10144 = vpop.permute.xlu0 %10143
    %10145 = vset.pattern.permute.xlu0 0
    %10146 = vperm.xlu0 %10145, %v9819
    %v10147 = vpop.permute.xlu0 %10146
    %10148 = vset.pattern.permute.xlu0 0
    %10149 = vperm.xlu0 %10148, %v9820
    %v10150 = vpop.permute.xlu0 %10149
    %10151 = vset.pattern.permute.xlu0 0
    %10152 = vperm.xlu0 %10151, %v9821
    %v10153 = vpop.permute.xlu0 %10152
    %10154 = vset.pattern.permute.xlu0 0
    %10155 = vperm.xlu0 %10154, %v9822
    %v10156 = vpop.permute.xlu0 %10155
    %10157 = vset.pattern.permute.xlu0 0
    %10158 = vperm.xlu0 %10157, %v9823
    %v10159 = vpop.permute.xlu0 %10158
    %10160 = vset.pattern.permute.xlu0 0
    %10161 = vperm.xlu0 %10160, %v9824
    %v10162 = vpop.permute.xlu0 %10161
    %10163 = vset.pattern.permute.xlu0 0
    %10164 = vperm.xlu0 %10163, %v9825
    %v10165 = vpop.permute.xlu0 %10164
    %10166 = vset.pattern.permute.xlu0 0
    %10167 = vperm.xlu0 %10166, %v9826
    %v10168 = vpop.permute.xlu0 %10167
    %10169 = vset.pattern.permute.xlu0 0
    %10170 = vperm.xlu0 %10169, %v9827
    %v10171 = vpop.permute.xlu0 %10170
    %10172 = vset.pattern.permute.xlu0 0
    %10173 = vperm.xlu0 %10172, %v9828
    %v10174 = vpop.permute.xlu0 %10173
    %10175 = vset.pattern.permute.xlu0 0
    %10176 = vperm.xlu0 %10175, %v9829
    %v10177 = vpop.permute.xlu0 %10176
    %10178 = vset.pattern.permute.xlu0 0
    %10179 = vperm.xlu0 %10178, %v9830
    %v10180 = vpop.permute.xlu0 %10179
    %10181 = vset.pattern.permute.xlu0 0
    %10182 = vperm.xlu0 %10181, %v9831
    %v10183 = vpop.permute.xlu0 %10182
    %10184 = vset.pattern.permute.xlu0 0
    %10185 = vperm.xlu0 %10184, %v9832
    %v10186 = vpop.permute.xlu0 %10185
    %10187 = vset.pattern.permute.xlu0 0
    %10188 = vperm.xlu0 %10187, %v9833
    %v10189 = vpop.permute.xlu0 %10188
    %10190 = vset.pattern.permute.xlu0 0
    %10191 = vperm.xlu0 %10190, %v9834
    %v10192 = vpop.permute.xlu0 %10191
    %10193 = vset.pattern.permute.xlu0 0
    %10194 = vperm.xlu0 %10193, %v9835
    %v10195 = vpop.permute.xlu0 %10194
    %10196 = vset.pattern.permute.xlu0 0
    %10197 = vperm.xlu0 %10196, %v9836
    %v10198 = vpop.permute.xlu0 %10197
    %10199 = vset.pattern.permute.xlu0 0
    %10200 = vperm.xlu0 %10199, %v9837
    %v10201 = vpop.permute.xlu0 %10200
    %10202 = vset.pattern.permute.xlu0 0
    %10203 = vperm.xlu0 %10202, %v9838
    %v10204 = vpop.permute.xlu0 %10203
    %10205 = vset.pattern.permute.xlu0 0
    %10206 = vperm.xlu0 %10205, %v9839
    %v10207 = vpop.permute.xlu0 %10206
    %10208 = vset.pattern.permute.xlu0 0
    %10209 = vperm.xlu0 %10208, %v9840
    %v10210 = vpop.permute.xlu0 %10209
    %10211 = vset.pattern.permute.xlu0 0
    %10212 = vperm.xlu0 %10211, %v9841
    %v10213 = vpop.permute.xlu0 %10212
    %10214 = vset.pattern.permute.xlu0 0
    %10215 = vperm.xlu0 %10214, %v9842
    %v10216 = vpop.permute.xlu0 %10215
    %10217 = vset.pattern.permute.xlu0 0
    %10218 = vperm.xlu0 %10217, %v9843
    %v10219 = vpop.permute.xlu0 %10218
    %10220 = vset.pattern.permute.xlu0 0
    %10221 = vperm.xlu0 %10220, %v9844
    %v10222 = vpop.permute.xlu0 %10221
    %10223 = vset.pattern.permute.xlu0 0
    %10224 = vperm.xlu0 %10223, %v9845
    %v10225 = vpop.permute.xlu0 %10224
    %10226 = vset.pattern.permute.xlu0 0
    %10227 = vperm.xlu0 %10226, %v9846
    %v10228 = vpop.permute.xlu0 %10227
    %10229 = vset.pattern.permute.xlu0 0
    %10230 = vperm.xlu0 %10229, %v9847
    %v10231 = vpop.permute.xlu0 %10230
    %vm10232 = vcmp.eq.s32.totalorder %v9850, 1
    %vm10233 = vcmp.eq.s32.totalorder %v9853, 1
    %vm10234 = vcmp.eq.s32.totalorder %v9856, 1
    %vm10235 = vcmp.eq.s32.totalorder %v9859, 1
    %vm10236 = vcmp.eq.s32.totalorder %v9862, 1
    %vm10237 = vcmp.eq.s32.totalorder %v9865, 1
    %vm10238 = vcmp.eq.s32.totalorder %v9868, 1
    %vm10239 = vcmp.eq.s32.totalorder %v9871, 1
    %vm10240 = vcmp.eq.s32.totalorder %v9874, 1
    %vm10241 = vcmp.eq.s32.totalorder %v9877, 1
    %vm10242 = vcmp.eq.s32.totalorder %v9880, 1
    %vm10243 = vcmp.eq.s32.totalorder %v9883, 1
    %vm10244 = vcmp.eq.s32.totalorder %v9886, 1
    %vm10245 = vcmp.eq.s32.totalorder %v9889, 1
    %vm10246 = vcmp.eq.s32.totalorder %v9892, 1
    %vm10247 = vcmp.eq.s32.totalorder %v9895, 1
    %vm10248 = vcmp.eq.s32.totalorder %v9898, 1
    %vm10249 = vcmp.eq.s32.totalorder %v9901, 1
    %vm10250 = vcmp.eq.s32.totalorder %v9904, 1
    %vm10251 = vcmp.eq.s32.totalorder %v9907, 1
    %vm10252 = vcmp.eq.s32.totalorder %v9910, 1
    %vm10253 = vcmp.eq.s32.totalorder %v9913, 1
    %vm10254 = vcmp.eq.s32.totalorder %v9916, 1
    %vm10255 = vcmp.eq.s32.totalorder %v9919, 1
    %vm10256 = vcmp.eq.s32.totalorder %v9922, 1
    %vm10257 = vcmp.eq.s32.totalorder %v9925, 1
    %vm10258 = vcmp.eq.s32.totalorder %v9928, 1
    %vm10259 = vcmp.eq.s32.totalorder %v9931, 1
    %vm10260 = vcmp.eq.s32.totalorder %v9934, 1
    %vm10261 = vcmp.eq.s32.totalorder %v9937, 1
    %vm10262 = vcmp.eq.s32.totalorder %v9940, 1
    %vm10263 = vcmp.eq.s32.totalorder %v9943, 1
    %vm10264 = vcmp.eq.s32.totalorder %v9946, 1
    %vm10265 = vcmp.eq.s32.totalorder %v9949, 1
    %vm10266 = vcmp.eq.s32.totalorder %v9952, 1
    %vm10267 = vcmp.eq.s32.totalorder %v9955, 1
    %vm10268 = vcmp.eq.s32.totalorder %v9958, 1
    %vm10269 = vcmp.eq.s32.totalorder %v9961, 1
    %vm10270 = vcmp.eq.s32.totalorder %v9964, 1
    %vm10271 = vcmp.eq.s32.totalorder %v9967, 1
    %vm10272 = vcmp.eq.s32.totalorder %v9970, 1
    %vm10273 = vcmp.eq.s32.totalorder %v9973, 1
    %vm10274 = vcmp.eq.s32.totalorder %v9976, 1
    %vm10275 = vcmp.eq.s32.totalorder %v9979, 1
    %vm10276 = vcmp.eq.s32.totalorder %v9982, 1
    %vm10277 = vcmp.eq.s32.totalorder %v9985, 1
    %vm10278 = vcmp.eq.s32.totalorder %v9988, 1
    %vm10279 = vcmp.eq.s32.totalorder %v9991, 1
    %vm10280 = vcmp.eq.s32.totalorder %v9994, 1
    %vm10281 = vcmp.eq.s32.totalorder %v9997, 1
    %vm10282 = vcmp.eq.s32.totalorder %v10000, 1
    %vm10283 = vcmp.eq.s32.totalorder %v10003, 1
    %vm10284 = vcmp.eq.s32.totalorder %v10006, 1
    %vm10285 = vcmp.eq.s32.totalorder %v10009, 1
    %vm10286 = vcmp.eq.s32.totalorder %v10012, 1
    %vm10287 = vcmp.eq.s32.totalorder %v10015, 1
    %vm10288 = vcmp.eq.s32.totalorder %v10018, 1
    %vm10289 = vcmp.eq.s32.totalorder %v10021, 1
    %vm10290 = vcmp.eq.s32.totalorder %v10024, 1
    %vm10291 = vcmp.eq.s32.totalorder %v10027, 1
    %vm10292 = vcmp.eq.s32.totalorder %v10030, 1
    %vm10293 = vcmp.eq.s32.totalorder %v10033, 1
    %vm10294 = vcmp.eq.s32.totalorder %v10036, 1
    %vm10295 = vcmp.eq.s32.totalorder %v10039, 1
    %vm10296 = vcmp.eq.s32.totalorder %v10042, 1
    %vm10297 = vcmp.eq.s32.totalorder %v10045, 1
    %vm10298 = vcmp.eq.s32.totalorder %v10048, 1
    %vm10299 = vcmp.eq.s32.totalorder %v10051, 1
    %vm10300 = vcmp.eq.s32.totalorder %v10054, 1
    %vm10301 = vcmp.eq.s32.totalorder %v10057, 1
    %vm10302 = vcmp.eq.s32.totalorder %v10060, 1
    %vm10303 = vcmp.eq.s32.totalorder %v10063, 1
    %vm10304 = vcmp.eq.s32.totalorder %v10066, 1
    %vm10305 = vcmp.eq.s32.totalorder %v10069, 1
    %vm10306 = vcmp.eq.s32.totalorder %v10072, 1
    %vm10307 = vcmp.eq.s32.totalorder %v10075, 1
    %vm10308 = vcmp.eq.s32.totalorder %v10078, 1
    %vm10309 = vcmp.eq.s32.totalorder %v10081, 1
    %vm10310 = vcmp.eq.s32.totalorder %v10084, 1
    %vm10311 = vcmp.eq.s32.totalorder %v10087, 1
    %vm10312 = vcmp.eq.s32.totalorder %v10090, 1
    %vm10313 = vcmp.eq.s32.totalorder %v10093, 1
    %vm10314 = vcmp.eq.s32.totalorder %v10096, 1
    %vm10315 = vcmp.eq.s32.totalorder %v10099, 1
    %vm10316 = vcmp.eq.s32.totalorder %v10102, 1
    %vm10317 = vcmp.eq.s32.totalorder %v10105, 1
    %vm10318 = vcmp.eq.s32.totalorder %v10108, 1
    %vm10319 = vcmp.eq.s32.totalorder %v10111, 1
    %vm10320 = vcmp.eq.s32.totalorder %v10114, 1
    %vm10321 = vcmp.eq.s32.totalorder %v10117, 1
    %vm10322 = vcmp.eq.s32.totalorder %v10120, 1
    %vm10323 = vcmp.eq.s32.totalorder %v10123, 1
    %vm10324 = vcmp.eq.s32.totalorder %v10126, 1
    %vm10325 = vcmp.eq.s32.totalorder %v10129, 1
    %vm10326 = vcmp.eq.s32.totalorder %v10132, 1
    %vm10327 = vcmp.eq.s32.totalorder %v10135, 1
    %vm10328 = vcmp.eq.s32.totalorder %v10138, 1
    %vm10329 = vcmp.eq.s32.totalorder %v10141, 1
    %vm10330 = vcmp.eq.s32.totalorder %v10144, 1
    %vm10331 = vcmp.eq.s32.totalorder %v10147, 1
    %vm10332 = vcmp.eq.s32.totalorder %v10150, 1
    %vm10333 = vcmp.eq.s32.totalorder %v10153, 1
    %vm10334 = vcmp.eq.s32.totalorder %v10156, 1
    %vm10335 = vcmp.eq.s32.totalorder %v10159, 1
    %vm10336 = vcmp.eq.s32.totalorder %v10162, 1
    %vm10337 = vcmp.eq.s32.totalorder %v10165, 1
    %vm10338 = vcmp.eq.s32.totalorder %v10168, 1
    %vm10339 = vcmp.eq.s32.totalorder %v10171, 1
    %vm10340 = vcmp.eq.s32.totalorder %v10174, 1
    %vm10341 = vcmp.eq.s32.totalorder %v10177, 1
    %vm10342 = vcmp.eq.s32.totalorder %v10180, 1
    %vm10343 = vcmp.eq.s32.totalorder %v10183, 1
    %vm10344 = vcmp.eq.s32.totalorder %v10186, 1
    %vm10345 = vcmp.eq.s32.totalorder %v10189, 1
    %vm10346 = vcmp.eq.s32.totalorder %v10192, 1
    %vm10347 = vcmp.eq.s32.totalorder %v10195, 1
    %vm10348 = vcmp.eq.s32.totalorder %v10198, 1
    %vm10349 = vcmp.eq.s32.totalorder %v10201, 1
    %vm10350 = vcmp.eq.s32.totalorder %v10204, 1
    %vm10351 = vcmp.eq.s32.totalorder %v10207, 1
    %vm10352 = vcmp.eq.s32.totalorder %v10210, 1
    %vm10353 = vcmp.eq.s32.totalorder %v10213, 1
    %vm10354 = vcmp.eq.s32.totalorder %v10216, 1
    %vm10355 = vcmp.eq.s32.totalorder %v10219, 1
    %vm10356 = vcmp.eq.s32.totalorder %v10222, 1
    %vm10357 = vcmp.eq.s32.totalorder %v10225, 1
    %vm10358 = vcmp.eq.s32.totalorder %v10228, 1
    %vm10359 = vcmp.eq.s32.totalorder %v10231, 1
    %v10360 = vsel %vm10232, %v5584, -inf
    %v10361 = vsel %vm10232, %v5585, -inf
    %v10362 = vsel %vm10232, %v5586, -inf
    %v10363 = vsel %vm10232, %v5587, -inf
    %v10364 = vsel %vm10232, %v5588, -inf
    %v10365 = vsel %vm10232, %v5589, -inf
    %v10366 = vsel %vm10232, %v5590, -inf
    %v10367 = vsel %vm10232, %v5591, -inf
    %v10368 = vsel %vm10233, %v5592, -inf
    %v10369 = vsel %vm10233, %v5593, -inf
    %v10370 = vsel %vm10233, %v5594, -inf
    %v10371 = vsel %vm10233, %v5595, -inf
    %v10372 = vsel %vm10233, %v5596, -inf
    %v10373 = vsel %vm10233, %v5597, -inf
    %v10374 = vsel %vm10233, %v5598, -inf
    %v10375 = vsel %vm10233, %v5599, -inf
    %v10376 = vsel %vm10234, %v5600, -inf
    %v10377 = vsel %vm10234, %v5601, -inf
    %v10378 = vsel %vm10234, %v5602, -inf
    %v10379 = vsel %vm10234, %v5603, -inf
    %v10380 = vsel %vm10234, %v5604, -inf
    %v10381 = vsel %vm10234, %v5605, -inf
    %v10382 = vsel %vm10234, %v5606, -inf
    %v10383 = vsel %vm10234, %v5607, -inf
    %v10384 = vsel %vm10235, %v5608, -inf
    %v10385 = vsel %vm10235, %v5609, -inf
    %v10386 = vsel %vm10235, %v5610, -inf
    %v10387 = vsel %vm10235, %v5611, -inf
    %v10388 = vsel %vm10235, %v5612, -inf
    %v10389 = vsel %vm10235, %v5613, -inf
    %v10390 = vsel %vm10235, %v5614, -inf
    %v10391 = vsel %vm10235, %v5615, -inf
    %v10392 = vsel %vm10236, %v5616, -inf
    %v10393 = vsel %vm10236, %v5617, -inf
    %v10394 = vsel %vm10236, %v5618, -inf
    %v10395 = vsel %vm10236, %v5619, -inf
    %v10396 = vsel %vm10236, %v5620, -inf
    %v10397 = vsel %vm10236, %v5621, -inf
    %v10398 = vsel %vm10236, %v5622, -inf
    %v10399 = vsel %vm10236, %v5623, -inf
    %v10400 = vsel %vm10237, %v5624, -inf
    %v10401 = vsel %vm10237, %v5625, -inf
    %v10402 = vsel %vm10237, %v5626, -inf
    %v10403 = vsel %vm10237, %v5627, -inf
    %v10404 = vsel %vm10237, %v5628, -inf
    %v10405 = vsel %vm10237, %v5629, -inf
    %v10406 = vsel %vm10237, %v5630, -inf
    %v10407 = vsel %vm10237, %v5631, -inf
    %v10408 = vsel %vm10238, %v5632, -inf
    %v10409 = vsel %vm10238, %v5633, -inf
    %v10410 = vsel %vm10238, %v5634, -inf
    %v10411 = vsel %vm10238, %v5635, -inf
    %v10412 = vsel %vm10238, %v5636, -inf
    %v10413 = vsel %vm10238, %v5637, -inf
    %v10414 = vsel %vm10238, %v5638, -inf
    %v10415 = vsel %vm10238, %v5639, -inf
    %v10416 = vsel %vm10239, %v5640, -inf
    %v10417 = vsel %vm10239, %v5641, -inf
    %v10418 = vsel %vm10239, %v5642, -inf
    %v10419 = vsel %vm10239, %v5643, -inf
    %v10420 = vsel %vm10239, %v5644, -inf
    %v10421 = vsel %vm10239, %v5645, -inf
    %v10422 = vsel %vm10239, %v5646, -inf
    %v10423 = vsel %vm10239, %v5647, -inf
    %v10424 = vsel %vm10240, %v5648, -inf
    %v10425 = vsel %vm10240, %v5649, -inf
    %v10426 = vsel %vm10240, %v5650, -inf
    %v10427 = vsel %vm10240, %v5651, -inf
    %v10428 = vsel %vm10240, %v5652, -inf
    %v10429 = vsel %vm10240, %v5653, -inf
    %v10430 = vsel %vm10240, %v5654, -inf
    %v10431 = vsel %vm10240, %v5655, -inf
    %v10432 = vsel %vm10241, %v5656, -inf
    %v10433 = vsel %vm10241, %v5657, -inf
    %v10434 = vsel %vm10241, %v5658, -inf
    %v10435 = vsel %vm10241, %v5659, -inf
    %v10436 = vsel %vm10241, %v5660, -inf
    %v10437 = vsel %vm10241, %v5661, -inf
    %v10438 = vsel %vm10241, %v5662, -inf
    %v10439 = vsel %vm10241, %v5663, -inf
    %v10440 = vsel %vm10242, %v5664, -inf
    %v10441 = vsel %vm10242, %v5665, -inf
    %v10442 = vsel %vm10242, %v5666, -inf
    %v10443 = vsel %vm10242, %v5667, -inf
    %v10444 = vsel %vm10242, %v5668, -inf
    %v10445 = vsel %vm10242, %v5669, -inf
    %v10446 = vsel %vm10242, %v5670, -inf
    %v10447 = vsel %vm10242, %v5671, -inf
    %v10448 = vsel %vm10243, %v5672, -inf
    %v10449 = vsel %vm10243, %v5673, -inf
    %v10450 = vsel %vm10243, %v5674, -inf
    %v10451 = vsel %vm10243, %v5675, -inf
    %v10452 = vsel %vm10243, %v5676, -inf
    %v10453 = vsel %vm10243, %v5677, -inf
    %v10454 = vsel %vm10243, %v5678, -inf
    %v10455 = vsel %vm10243, %v5679, -inf
    %v10456 = vsel %vm10244, %v5680, -inf
    %v10457 = vsel %vm10244, %v5681, -inf
    %v10458 = vsel %vm10244, %v5682, -inf
    %v10459 = vsel %vm10244, %v5683, -inf
    %v10460 = vsel %vm10244, %v5684, -inf
    %v10461 = vsel %vm10244, %v5685, -inf
    %v10462 = vsel %vm10244, %v5686, -inf
    %v10463 = vsel %vm10244, %v5687, -inf
    %v10464 = vsel %vm10245, %v5688, -inf
    %v10465 = vsel %vm10245, %v5689, -inf
    %v10466 = vsel %vm10245, %v5690, -inf
    %v10467 = vsel %vm10245, %v5691, -inf
    %v10468 = vsel %vm10245, %v5692, -inf
    %v10469 = vsel %vm10245, %v5693, -inf
    %v10470 = vsel %vm10245, %v5694, -inf
    %v10471 = vsel %vm10245, %v5695, -inf
    %v10472 = vsel %vm10246, %v5696, -inf
    %v10473 = vsel %vm10246, %v5697, -inf
    %v10474 = vsel %vm10246, %v5698, -inf
    %v10475 = vsel %vm10246, %v5699, -inf
    %v10476 = vsel %vm10246, %v5700, -inf
    %v10477 = vsel %vm10246, %v5701, -inf
    %v10478 = vsel %vm10246, %v5702, -inf
    %v10479 = vsel %vm10246, %v5703, -inf
    %v10480 = vsel %vm10247, %v5704, -inf
    %v10481 = vsel %vm10247, %v5705, -inf
    %v10482 = vsel %vm10247, %v5706, -inf
    %v10483 = vsel %vm10247, %v5707, -inf
    %v10484 = vsel %vm10247, %v5708, -inf
    %v10485 = vsel %vm10247, %v5709, -inf
    %v10486 = vsel %vm10247, %v5710, -inf
    %v10487 = vsel %vm10247, %v5711, -inf
    %v10488 = vsel %vm10248, %v5712, -inf
    %v10489 = vsel %vm10248, %v5713, -inf
    %v10490 = vsel %vm10248, %v5714, -inf
    %v10491 = vsel %vm10248, %v5715, -inf
    %v10492 = vsel %vm10248, %v5716, -inf
    %v10493 = vsel %vm10248, %v5717, -inf
    %v10494 = vsel %vm10248, %v5718, -inf
    %v10495 = vsel %vm10248, %v5719, -inf
    %v10496 = vsel %vm10249, %v5720, -inf
    %v10497 = vsel %vm10249, %v5721, -inf
    %v10498 = vsel %vm10249, %v5722, -inf
    %v10499 = vsel %vm10249, %v5723, -inf
    %v10500 = vsel %vm10249, %v5724, -inf
    %v10501 = vsel %vm10249, %v5725, -inf
    %v10502 = vsel %vm10249, %v5726, -inf
    %v10503 = vsel %vm10249, %v5727, -inf
    %v10504 = vsel %vm10250, %v5728, -inf
    %v10505 = vsel %vm10250, %v5729, -inf
    %v10506 = vsel %vm10250, %v5730, -inf
    %v10507 = vsel %vm10250, %v5731, -inf
    %v10508 = vsel %vm10250, %v5732, -inf
    %v10509 = vsel %vm10250, %v5733, -inf
    %v10510 = vsel %vm10250, %v5734, -inf
    %v10511 = vsel %vm10250, %v5735, -inf
    %v10512 = vsel %vm10251, %v5736, -inf
    %v10513 = vsel %vm10251, %v5737, -inf
    %v10514 = vsel %vm10251, %v5738, -inf
    %v10515 = vsel %vm10251, %v5739, -inf
    %v10516 = vsel %vm10251, %v5740, -inf
    %v10517 = vsel %vm10251, %v5741, -inf
    %v10518 = vsel %vm10251, %v5742, -inf
    %v10519 = vsel %vm10251, %v5743, -inf
    %v10520 = vsel %vm10252, %v5744, -inf
    %v10521 = vsel %vm10252, %v5745, -inf
    %v10522 = vsel %vm10252, %v5746, -inf
    %v10523 = vsel %vm10252, %v5747, -inf
    %v10524 = vsel %vm10252, %v5748, -inf
    %v10525 = vsel %vm10252, %v5749, -inf
    %v10526 = vsel %vm10252, %v5750, -inf
    %v10527 = vsel %vm10252, %v5751, -inf
    %v10528 = vsel %vm10253, %v5752, -inf
    %v10529 = vsel %vm10253, %v5753, -inf
    %v10530 = vsel %vm10253, %v5754, -inf
    %v10531 = vsel %vm10253, %v5755, -inf
    %v10532 = vsel %vm10253, %v5756, -inf
    %v10533 = vsel %vm10253, %v5757, -inf
    %v10534 = vsel %vm10253, %v5758, -inf
    %v10535 = vsel %vm10253, %v5759, -inf
    %v10536 = vsel %vm10254, %v5760, -inf
    %v10537 = vsel %vm10254, %v5761, -inf
    %v10538 = vsel %vm10254, %v5762, -inf
    %v10539 = vsel %vm10254, %v5763, -inf
    %v10540 = vsel %vm10254, %v5764, -inf
    %v10541 = vsel %vm10254, %v5765, -inf
    %v10542 = vsel %vm10254, %v5766, -inf
    %v10543 = vsel %vm10254, %v5767, -inf
    %v10544 = vsel %vm10255, %v5768, -inf
    %v10545 = vsel %vm10255, %v5769, -inf
    %v10546 = vsel %vm10255, %v5770, -inf
    %v10547 = vsel %vm10255, %v5771, -inf
    %v10548 = vsel %vm10255, %v5772, -inf
    %v10549 = vsel %vm10255, %v5773, -inf
    %v10550 = vsel %vm10255, %v5774, -inf
    %v10551 = vsel %vm10255, %v5775, -inf
    %v10552 = vsel %vm10256, %v5776, -inf
    %v10553 = vsel %vm10256, %v5777, -inf
    %v10554 = vsel %vm10256, %v5778, -inf
    %v10555 = vsel %vm10256, %v5779, -inf
    %v10556 = vsel %vm10256, %v5780, -inf
    %v10557 = vsel %vm10256, %v5781, -inf
    %v10558 = vsel %vm10256, %v5782, -inf
    %v10559 = vsel %vm10256, %v5783, -inf
    %v10560 = vsel %vm10257, %v5784, -inf
    %v10561 = vsel %vm10257, %v5785, -inf
    %v10562 = vsel %vm10257, %v5786, -inf
    %v10563 = vsel %vm10257, %v5787, -inf
    %v10564 = vsel %vm10257, %v5788, -inf
    %v10565 = vsel %vm10257, %v5789, -inf
    %v10566 = vsel %vm10257, %v5790, -inf
    %v10567 = vsel %vm10257, %v5791, -inf
    %v10568 = vsel %vm10258, %v5792, -inf
    %v10569 = vsel %vm10258, %v5793, -inf
    %v10570 = vsel %vm10258, %v5794, -inf
    %v10571 = vsel %vm10258, %v5795, -inf
    %v10572 = vsel %vm10258, %v5796, -inf
    %v10573 = vsel %vm10258, %v5797, -inf
    %v10574 = vsel %vm10258, %v5798, -inf
    %v10575 = vsel %vm10258, %v5799, -inf
    %v10576 = vsel %vm10259, %v5800, -inf
    %v10577 = vsel %vm10259, %v5801, -inf
    %v10578 = vsel %vm10259, %v5802, -inf
    %v10579 = vsel %vm10259, %v5803, -inf
    %v10580 = vsel %vm10259, %v5804, -inf
    %v10581 = vsel %vm10259, %v5805, -inf
    %v10582 = vsel %vm10259, %v5806, -inf
    %v10583 = vsel %vm10259, %v5807, -inf
    %v10584 = vsel %vm10260, %v5808, -inf
    %v10585 = vsel %vm10260, %v5809, -inf
    %v10586 = vsel %vm10260, %v5810, -inf
    %v10587 = vsel %vm10260, %v5811, -inf
    %v10588 = vsel %vm10260, %v5812, -inf
    %v10589 = vsel %vm10260, %v5813, -inf
    %v10590 = vsel %vm10260, %v5814, -inf
    %v10591 = vsel %vm10260, %v5815, -inf
    %v10592 = vsel %vm10261, %v5816, -inf
    %v10593 = vsel %vm10261, %v5817, -inf
    %v10594 = vsel %vm10261, %v5818, -inf
    %v10595 = vsel %vm10261, %v5819, -inf
    %v10596 = vsel %vm10261, %v5820, -inf
    %v10597 = vsel %vm10261, %v5821, -inf
    %v10598 = vsel %vm10261, %v5822, -inf
    %v10599 = vsel %vm10261, %v5823, -inf
    %v10600 = vsel %vm10262, %v5824, -inf
    %v10601 = vsel %vm10262, %v5825, -inf
    %v10602 = vsel %vm10262, %v5826, -inf
    %v10603 = vsel %vm10262, %v5827, -inf
    %v10604 = vsel %vm10262, %v5828, -inf
    %v10605 = vsel %vm10262, %v5829, -inf
    %v10606 = vsel %vm10262, %v5830, -inf
    %v10607 = vsel %vm10262, %v5831, -inf
    %v10608 = vsel %vm10263, %v5832, -inf
    %v10609 = vsel %vm10263, %v5833, -inf
    %v10610 = vsel %vm10263, %v5834, -inf
    %v10611 = vsel %vm10263, %v5835, -inf
    %v10612 = vsel %vm10263, %v5836, -inf
    %v10613 = vsel %vm10263, %v5837, -inf
    %v10614 = vsel %vm10263, %v5838, -inf
    %v10615 = vsel %vm10263, %v5839, -inf
    %v10616 = vsel %vm10264, %v5840, -inf
    %v10617 = vsel %vm10264, %v5841, -inf
    %v10618 = vsel %vm10264, %v5842, -inf
    %v10619 = vsel %vm10264, %v5843, -inf
    %v10620 = vsel %vm10264, %v5844, -inf
    %v10621 = vsel %vm10264, %v5845, -inf
    %v10622 = vsel %vm10264, %v5846, -inf
    %v10623 = vsel %vm10264, %v5847, -inf
    %v10624 = vsel %vm10265, %v5848, -inf
    %v10625 = vsel %vm10265, %v5849, -inf
    %v10626 = vsel %vm10265, %v5850, -inf
    %v10627 = vsel %vm10265, %v5851, -inf
    %v10628 = vsel %vm10265, %v5852, -inf
    %v10629 = vsel %vm10265, %v5853, -inf
    %v10630 = vsel %vm10265, %v5854, -inf
    %v10631 = vsel %vm10265, %v5855, -inf
    %v10632 = vsel %vm10266, %v5856, -inf
    %v10633 = vsel %vm10266, %v5857, -inf
    %v10634 = vsel %vm10266, %v5858, -inf
    %v10635 = vsel %vm10266, %v5859, -inf
    %v10636 = vsel %vm10266, %v5860, -inf
    %v10637 = vsel %vm10266, %v5861, -inf
    %v10638 = vsel %vm10266, %v5862, -inf
    %v10639 = vsel %vm10266, %v5863, -inf
    %v10640 = vsel %vm10267, %v5864, -inf
    %v10641 = vsel %vm10267, %v5865, -inf
    %v10642 = vsel %vm10267, %v5866, -inf
    %v10643 = vsel %vm10267, %v5867, -inf
    %v10644 = vsel %vm10267, %v5868, -inf
    %v10645 = vsel %vm10267, %v5869, -inf
    %v10646 = vsel %vm10267, %v5870, -inf
    %v10647 = vsel %vm10267, %v5871, -inf
    %v10648 = vsel %vm10268, %v5872, -inf
    %v10649 = vsel %vm10268, %v5873, -inf
    %v10650 = vsel %vm10268, %v5874, -inf
    %v10651 = vsel %vm10268, %v5875, -inf
    %v10652 = vsel %vm10268, %v5876, -inf
    %v10653 = vsel %vm10268, %v5877, -inf
    %v10654 = vsel %vm10268, %v5878, -inf
    %v10655 = vsel %vm10268, %v5879, -inf
    %v10656 = vsel %vm10269, %v5880, -inf
    %v10657 = vsel %vm10269, %v5881, -inf
    %v10658 = vsel %vm10269, %v5882, -inf
    %v10659 = vsel %vm10269, %v5883, -inf
    %v10660 = vsel %vm10269, %v5884, -inf
    %v10661 = vsel %vm10269, %v5885, -inf
    %v10662 = vsel %vm10269, %v5886, -inf
    %v10663 = vsel %vm10269, %v5887, -inf
    %v10664 = vsel %vm10270, %v5888, -inf
    %v10665 = vsel %vm10270, %v5889, -inf
    %v10666 = vsel %vm10270, %v5890, -inf
    %v10667 = vsel %vm10270, %v5891, -inf
    %v10668 = vsel %vm10270, %v5892, -inf
    %v10669 = vsel %vm10270, %v5893, -inf
    %v10670 = vsel %vm10270, %v5894, -inf
    %v10671 = vsel %vm10270, %v5895, -inf
    %v10672 = vsel %vm10271, %v5896, -inf
    %v10673 = vsel %vm10271, %v5897, -inf
    %v10674 = vsel %vm10271, %v5898, -inf
    %v10675 = vsel %vm10271, %v5899, -inf
    %v10676 = vsel %vm10271, %v5900, -inf
    %v10677 = vsel %vm10271, %v5901, -inf
    %v10678 = vsel %vm10271, %v5902, -inf
    %v10679 = vsel %vm10271, %v5903, -inf
    %v10680 = vsel %vm10272, %v5904, -inf
    %v10681 = vsel %vm10272, %v5905, -inf
    %v10682 = vsel %vm10272, %v5906, -inf
    %v10683 = vsel %vm10272, %v5907, -inf
    %v10684 = vsel %vm10272, %v5908, -inf
    %v10685 = vsel %vm10272, %v5909, -inf
    %v10686 = vsel %vm10272, %v5910, -inf
    %v10687 = vsel %vm10272, %v5911, -inf
    %v10688 = vsel %vm10273, %v5912, -inf
    %v10689 = vsel %vm10273, %v5913, -inf
    %v10690 = vsel %vm10273, %v5914, -inf
    %v10691 = vsel %vm10273, %v5915, -inf
    %v10692 = vsel %vm10273, %v5916, -inf
    %v10693 = vsel %vm10273, %v5917, -inf
    %v10694 = vsel %vm10273, %v5918, -inf
    %v10695 = vsel %vm10273, %v5919, -inf
    %v10696 = vsel %vm10274, %v5920, -inf
    %v10697 = vsel %vm10274, %v5921, -inf
    %v10698 = vsel %vm10274, %v5922, -inf
    %v10699 = vsel %vm10274, %v5923, -inf
    %v10700 = vsel %vm10274, %v5924, -inf
    %v10701 = vsel %vm10274, %v5925, -inf
    %v10702 = vsel %vm10274, %v5926, -inf
    %v10703 = vsel %vm10274, %v5927, -inf
    %v10704 = vsel %vm10275, %v5928, -inf
    %v10705 = vsel %vm10275, %v5929, -inf
    %v10706 = vsel %vm10275, %v5930, -inf
    %v10707 = vsel %vm10275, %v5931, -inf
    %v10708 = vsel %vm10275, %v5932, -inf
    %v10709 = vsel %vm10275, %v5933, -inf
    %v10710 = vsel %vm10275, %v5934, -inf
    %v10711 = vsel %vm10275, %v5935, -inf
    %v10712 = vsel %vm10276, %v5936, -inf
    %v10713 = vsel %vm10276, %v5937, -inf
    %v10714 = vsel %vm10276, %v5938, -inf
    %v10715 = vsel %vm10276, %v5939, -inf
    %v10716 = vsel %vm10276, %v5940, -inf
    %v10717 = vsel %vm10276, %v5941, -inf
    %v10718 = vsel %vm10276, %v5942, -inf
    %v10719 = vsel %vm10276, %v5943, -inf
    %v10720 = vsel %vm10277, %v5944, -inf
    %v10721 = vsel %vm10277, %v5945, -inf
    %v10722 = vsel %vm10277, %v5946, -inf
    %v10723 = vsel %vm10277, %v5947, -inf
    %v10724 = vsel %vm10277, %v5948, -inf
    %v10725 = vsel %vm10277, %v5949, -inf
    %v10726 = vsel %vm10277, %v5950, -inf
    %v10727 = vsel %vm10277, %v5951, -inf
    %v10728 = vsel %vm10278, %v5952, -inf
    %v10729 = vsel %vm10278, %v5953, -inf
    %v10730 = vsel %vm10278, %v5954, -inf
    %v10731 = vsel %vm10278, %v5955, -inf
    %v10732 = vsel %vm10278, %v5956, -inf
    %v10733 = vsel %vm10278, %v5957, -inf
    %v10734 = vsel %vm10278, %v5958, -inf
    %v10735 = vsel %vm10278, %v5959, -inf
    %v10736 = vsel %vm10279, %v5960, -inf
    %v10737 = vsel %vm10279, %v5961, -inf
    %v10738 = vsel %vm10279, %v5962, -inf
    %v10739 = vsel %vm10279, %v5963, -inf
    %v10740 = vsel %vm10279, %v5964, -inf
    %v10741 = vsel %vm10279, %v5965, -inf
    %v10742 = vsel %vm10279, %v5966, -inf
    %v10743 = vsel %vm10279, %v5967, -inf
    %v10744 = vsel %vm10280, %v5968, -inf
    %v10745 = vsel %vm10280, %v5969, -inf
    %v10746 = vsel %vm10280, %v5970, -inf
    %v10747 = vsel %vm10280, %v5971, -inf
    %v10748 = vsel %vm10280, %v5972, -inf
    %v10749 = vsel %vm10280, %v5973, -inf
    %v10750 = vsel %vm10280, %v5974, -inf
    %v10751 = vsel %vm10280, %v5975, -inf
    %v10752 = vsel %vm10281, %v5976, -inf
    %v10753 = vsel %vm10281, %v5977, -inf
    %v10754 = vsel %vm10281, %v5978, -inf
    %v10755 = vsel %vm10281, %v5979, -inf
    %v10756 = vsel %vm10281, %v5980, -inf
    %v10757 = vsel %vm10281, %v5981, -inf
    %v10758 = vsel %vm10281, %v5982, -inf
    %v10759 = vsel %vm10281, %v5983, -inf
    %v10760 = vsel %vm10282, %v5984, -inf
    %v10761 = vsel %vm10282, %v5985, -inf
    %v10762 = vsel %vm10282, %v5986, -inf
    %v10763 = vsel %vm10282, %v5987, -inf
    %v10764 = vsel %vm10282, %v5988, -inf
    %v10765 = vsel %vm10282, %v5989, -inf
    %v10766 = vsel %vm10282, %v5990, -inf
    %v10767 = vsel %vm10282, %v5991, -inf
    %v10768 = vsel %vm10283, %v5992, -inf
    %v10769 = vsel %vm10283, %v5993, -inf
    %v10770 = vsel %vm10283, %v5994, -inf
    %v10771 = vsel %vm10283, %v5995, -inf
    %v10772 = vsel %vm10283, %v5996, -inf
    %v10773 = vsel %vm10283, %v5997, -inf
    %v10774 = vsel %vm10283, %v5998, -inf
    %v10775 = vsel %vm10283, %v5999, -inf
    %v10776 = vsel %vm10284, %v6000, -inf
    %v10777 = vsel %vm10284, %v6001, -inf
    %v10778 = vsel %vm10284, %v6002, -inf
    %v10779 = vsel %vm10284, %v6003, -inf
    %v10780 = vsel %vm10284, %v6004, -inf
    %v10781 = vsel %vm10284, %v6005, -inf
    %v10782 = vsel %vm10284, %v6006, -inf
    %v10783 = vsel %vm10284, %v6007, -inf
    %v10784 = vsel %vm10285, %v6008, -inf
    %v10785 = vsel %vm10285, %v6009, -inf
    %v10786 = vsel %vm10285, %v6010, -inf
    %v10787 = vsel %vm10285, %v6011, -inf
    %v10788 = vsel %vm10285, %v6012, -inf
    %v10789 = vsel %vm10285, %v6013, -inf
    %v10790 = vsel %vm10285, %v6014, -inf
    %v10791 = vsel %vm10285, %v6015, -inf
    %v10792 = vsel %vm10286, %v6016, -inf
    %v10793 = vsel %vm10286, %v6017, -inf
    %v10794 = vsel %vm10286, %v6018, -inf
    %v10795 = vsel %vm10286, %v6019, -inf
    %v10796 = vsel %vm10286, %v6020, -inf
    %v10797 = vsel %vm10286, %v6021, -inf
    %v10798 = vsel %vm10286, %v6022, -inf
    %v10799 = vsel %vm10286, %v6023, -inf
    %v10800 = vsel %vm10287, %v6024, -inf
    %v10801 = vsel %vm10287, %v6025, -inf
    %v10802 = vsel %vm10287, %v6026, -inf
    %v10803 = vsel %vm10287, %v6027, -inf
    %v10804 = vsel %vm10287, %v6028, -inf
    %v10805 = vsel %vm10287, %v6029, -inf
    %v10806 = vsel %vm10287, %v6030, -inf
    %v10807 = vsel %vm10287, %v6031, -inf
    %v10808 = vsel %vm10288, %v6032, -inf
    %v10809 = vsel %vm10288, %v6033, -inf
    %v10810 = vsel %vm10288, %v6034, -inf
    %v10811 = vsel %vm10288, %v6035, -inf
    %v10812 = vsel %vm10288, %v6036, -inf
    %v10813 = vsel %vm10288, %v6037, -inf
    %v10814 = vsel %vm10288, %v6038, -inf
    %v10815 = vsel %vm10288, %v6039, -inf
    %v10816 = vsel %vm10289, %v6040, -inf
    %v10817 = vsel %vm10289, %v6041, -inf
    %v10818 = vsel %vm10289, %v6042, -inf
    %v10819 = vsel %vm10289, %v6043, -inf
    %v10820 = vsel %vm10289, %v6044, -inf
    %v10821 = vsel %vm10289, %v6045, -inf
    %v10822 = vsel %vm10289, %v6046, -inf
    %v10823 = vsel %vm10289, %v6047, -inf
    %v10824 = vsel %vm10290, %v6048, -inf
    %v10825 = vsel %vm10290, %v6049, -inf
    %v10826 = vsel %vm10290, %v6050, -inf
    %v10827 = vsel %vm10290, %v6051, -inf
    %v10828 = vsel %vm10290, %v6052, -inf
    %v10829 = vsel %vm10290, %v6053, -inf
    %v10830 = vsel %vm10290, %v6054, -inf
    %v10831 = vsel %vm10290, %v6055, -inf
    %v10832 = vsel %vm10291, %v6056, -inf
    %v10833 = vsel %vm10291, %v6057, -inf
    %v10834 = vsel %vm10291, %v6058, -inf
    %v10835 = vsel %vm10291, %v6059, -inf
    %v10836 = vsel %vm10291, %v6060, -inf
    %v10837 = vsel %vm10291, %v6061, -inf
    %v10838 = vsel %vm10291, %v6062, -inf
    %v10839 = vsel %vm10291, %v6063, -inf
    %v10840 = vsel %vm10292, %v6064, -inf
    %v10841 = vsel %vm10292, %v6065, -inf
    %v10842 = vsel %vm10292, %v6066, -inf
    %v10843 = vsel %vm10292, %v6067, -inf
    %v10844 = vsel %vm10292, %v6068, -inf
    %v10845 = vsel %vm10292, %v6069, -inf
    %v10846 = vsel %vm10292, %v6070, -inf
    %v10847 = vsel %vm10292, %v6071, -inf
    %v10848 = vsel %vm10293, %v6072, -inf
    %v10849 = vsel %vm10293, %v6073, -inf
    %v10850 = vsel %vm10293, %v6074, -inf
    %v10851 = vsel %vm10293, %v6075, -inf
    %v10852 = vsel %vm10293, %v6076, -inf
    %v10853 = vsel %vm10293, %v6077, -inf
    %v10854 = vsel %vm10293, %v6078, -inf
    %v10855 = vsel %vm10293, %v6079, -inf
    %v10856 = vsel %vm10294, %v6080, -inf
    %v10857 = vsel %vm10294, %v6081, -inf
    %v10858 = vsel %vm10294, %v6082, -inf
    %v10859 = vsel %vm10294, %v6083, -inf
    %v10860 = vsel %vm10294, %v6084, -inf
    %v10861 = vsel %vm10294, %v6085, -inf
    %v10862 = vsel %vm10294, %v6086, -inf
    %v10863 = vsel %vm10294, %v6087, -inf
    %v10864 = vsel %vm10295, %v6088, -inf
    %v10865 = vsel %vm10295, %v6089, -inf
    %v10866 = vsel %vm10295, %v6090, -inf
    %v10867 = vsel %vm10295, %v6091, -inf
    %v10868 = vsel %vm10295, %v6092, -inf
    %v10869 = vsel %vm10295, %v6093, -inf
    %v10870 = vsel %vm10295, %v6094, -inf
    %v10871 = vsel %vm10295, %v6095, -inf
    %v10872 = vsel %vm10296, %v6096, -inf
    %v10873 = vsel %vm10296, %v6097, -inf
    %v10874 = vsel %vm10296, %v6098, -inf
    %v10875 = vsel %vm10296, %v6099, -inf
    %v10876 = vsel %vm10296, %v6100, -inf
    %v10877 = vsel %vm10296, %v6101, -inf
    %v10878 = vsel %vm10296, %v6102, -inf
    %v10879 = vsel %vm10296, %v6103, -inf
    %v10880 = vsel %vm10297, %v6104, -inf
    %v10881 = vsel %vm10297, %v6105, -inf
    %v10882 = vsel %vm10297, %v6106, -inf
    %v10883 = vsel %vm10297, %v6107, -inf
    %v10884 = vsel %vm10297, %v6108, -inf
    %v10885 = vsel %vm10297, %v6109, -inf
    %v10886 = vsel %vm10297, %v6110, -inf
    %v10887 = vsel %vm10297, %v6111, -inf
    %v10888 = vsel %vm10298, %v6112, -inf
    %v10889 = vsel %vm10298, %v6113, -inf
    %v10890 = vsel %vm10298, %v6114, -inf
    %v10891 = vsel %vm10298, %v6115, -inf
    %v10892 = vsel %vm10298, %v6116, -inf
    %v10893 = vsel %vm10298, %v6117, -inf
    %v10894 = vsel %vm10298, %v6118, -inf
    %v10895 = vsel %vm10298, %v6119, -inf
    %v10896 = vsel %vm10299, %v6120, -inf
    %v10897 = vsel %vm10299, %v6121, -inf
    %v10898 = vsel %vm10299, %v6122, -inf
    %v10899 = vsel %vm10299, %v6123, -inf
    %v10900 = vsel %vm10299, %v6124, -inf
    %v10901 = vsel %vm10299, %v6125, -inf
    %v10902 = vsel %vm10299, %v6126, -inf
    %v10903 = vsel %vm10299, %v6127, -inf
    %v10904 = vsel %vm10300, %v6128, -inf
    %v10905 = vsel %vm10300, %v6129, -inf
    %v10906 = vsel %vm10300, %v6130, -inf
    %v10907 = vsel %vm10300, %v6131, -inf
    %v10908 = vsel %vm10300, %v6132, -inf
    %v10909 = vsel %vm10300, %v6133, -inf
    %v10910 = vsel %vm10300, %v6134, -inf
    %v10911 = vsel %vm10300, %v6135, -inf
    %v10912 = vsel %vm10301, %v6136, -inf
    %v10913 = vsel %vm10301, %v6137, -inf
    %v10914 = vsel %vm10301, %v6138, -inf
    %v10915 = vsel %vm10301, %v6139, -inf
    %v10916 = vsel %vm10301, %v6140, -inf
    %v10917 = vsel %vm10301, %v6141, -inf
    %v10918 = vsel %vm10301, %v6142, -inf
    %v10919 = vsel %vm10301, %v6143, -inf
    %v10920 = vsel %vm10302, %v6144, -inf
    %v10921 = vsel %vm10302, %v6145, -inf
    %v10922 = vsel %vm10302, %v6146, -inf
    %v10923 = vsel %vm10302, %v6147, -inf
    %v10924 = vsel %vm10302, %v6148, -inf
    %v10925 = vsel %vm10302, %v6149, -inf
    %v10926 = vsel %vm10302, %v6150, -inf
    %v10927 = vsel %vm10302, %v6151, -inf
    %v10928 = vsel %vm10303, %v6152, -inf
    %v10929 = vsel %vm10303, %v6153, -inf
    %v10930 = vsel %vm10303, %v6154, -inf
    %v10931 = vsel %vm10303, %v6155, -inf
    %v10932 = vsel %vm10303, %v6156, -inf
    %v10933 = vsel %vm10303, %v6157, -inf
    %v10934 = vsel %vm10303, %v6158, -inf
    %v10935 = vsel %vm10303, %v6159, -inf
    %v10936 = vsel %vm10304, %v6160, -inf
    %v10937 = vsel %vm10304, %v6161, -inf
    %v10938 = vsel %vm10304, %v6162, -inf
    %v10939 = vsel %vm10304, %v6163, -inf
    %v10940 = vsel %vm10304, %v6164, -inf
    %v10941 = vsel %vm10304, %v6165, -inf
    %v10942 = vsel %vm10304, %v6166, -inf
    %v10943 = vsel %vm10304, %v6167, -inf
    %v10944 = vsel %vm10305, %v6168, -inf
    %v10945 = vsel %vm10305, %v6169, -inf
    %v10946 = vsel %vm10305, %v6170, -inf
    %v10947 = vsel %vm10305, %v6171, -inf
    %v10948 = vsel %vm10305, %v6172, -inf
    %v10949 = vsel %vm10305, %v6173, -inf
    %v10950 = vsel %vm10305, %v6174, -inf
    %v10951 = vsel %vm10305, %v6175, -inf
    %v10952 = vsel %vm10306, %v6176, -inf
    %v10953 = vsel %vm10306, %v6177, -inf
    %v10954 = vsel %vm10306, %v6178, -inf
    %v10955 = vsel %vm10306, %v6179, -inf
    %v10956 = vsel %vm10306, %v6180, -inf
    %v10957 = vsel %vm10306, %v6181, -inf
    %v10958 = vsel %vm10306, %v6182, -inf
    %v10959 = vsel %vm10306, %v6183, -inf
    %v10960 = vsel %vm10307, %v6184, -inf
    %v10961 = vsel %vm10307, %v6185, -inf
    %v10962 = vsel %vm10307, %v6186, -inf
    %v10963 = vsel %vm10307, %v6187, -inf
    %v10964 = vsel %vm10307, %v6188, -inf
    %v10965 = vsel %vm10307, %v6189, -inf
    %v10966 = vsel %vm10307, %v6190, -inf
    %v10967 = vsel %vm10307, %v6191, -inf
    %v10968 = vsel %vm10308, %v6192, -inf
    %v10969 = vsel %vm10308, %v6193, -inf
    %v10970 = vsel %vm10308, %v6194, -inf
    %v10971 = vsel %vm10308, %v6195, -inf
    %v10972 = vsel %vm10308, %v6196, -inf
    %v10973 = vsel %vm10308, %v6197, -inf
    %v10974 = vsel %vm10308, %v6198, -inf
    %v10975 = vsel %vm10308, %v6199, -inf
    %v10976 = vsel %vm10309, %v6200, -inf
    %v10977 = vsel %vm10309, %v6201, -inf
    %v10978 = vsel %vm10309, %v6202, -inf
    %v10979 = vsel %vm10309, %v6203, -inf
    %v10980 = vsel %vm10309, %v6204, -inf
    %v10981 = vsel %vm10309, %v6205, -inf
    %v10982 = vsel %vm10309, %v6206, -inf
    %v10983 = vsel %vm10309, %v6207, -inf
    %v10984 = vsel %vm10310, %v6208, -inf
    %v10985 = vsel %vm10310, %v6209, -inf
    %v10986 = vsel %vm10310, %v6210, -inf
    %v10987 = vsel %vm10310, %v6211, -inf
    %v10988 = vsel %vm10310, %v6212, -inf
    %v10989 = vsel %vm10310, %v6213, -inf
    %v10990 = vsel %vm10310, %v6214, -inf
    %v10991 = vsel %vm10310, %v6215, -inf
    %v10992 = vsel %vm10311, %v6216, -inf
    %v10993 = vsel %vm10311, %v6217, -inf
    %v10994 = vsel %vm10311, %v6218, -inf
    %v10995 = vsel %vm10311, %v6219, -inf
    %v10996 = vsel %vm10311, %v6220, -inf
    %v10997 = vsel %vm10311, %v6221, -inf
    %v10998 = vsel %vm10311, %v6222, -inf
    %v10999 = vsel %vm10311, %v6223, -inf
    %v11000 = vsel %vm10312, %v6224, -inf
    %v11001 = vsel %vm10312, %v6225, -inf
    %v11002 = vsel %vm10312, %v6226, -inf
    %v11003 = vsel %vm10312, %v6227, -inf
    %v11004 = vsel %vm10312, %v6228, -inf
    %v11005 = vsel %vm10312, %v6229, -inf
    %v11006 = vsel %vm10312, %v6230, -inf
    %v11007 = vsel %vm10312, %v6231, -inf
    %v11008 = vsel %vm10313, %v6232, -inf
    %v11009 = vsel %vm10313, %v6233, -inf
    %v11010 = vsel %vm10313, %v6234, -inf
    %v11011 = vsel %vm10313, %v6235, -inf
    %v11012 = vsel %vm10313, %v6236, -inf
    %v11013 = vsel %vm10313, %v6237, -inf
    %v11014 = vsel %vm10313, %v6238, -inf
    %v11015 = vsel %vm10313, %v6239, -inf
    %v11016 = vsel %vm10314, %v6240, -inf
    %v11017 = vsel %vm10314, %v6241, -inf
    %v11018 = vsel %vm10314, %v6242, -inf
    %v11019 = vsel %vm10314, %v6243, -inf
    %v11020 = vsel %vm10314, %v6244, -inf
    %v11021 = vsel %vm10314, %v6245, -inf
    %v11022 = vsel %vm10314, %v6246, -inf
    %v11023 = vsel %vm10314, %v6247, -inf
    %v11024 = vsel %vm10315, %v6248, -inf
    %v11025 = vsel %vm10315, %v6249, -inf
    %v11026 = vsel %vm10315, %v6250, -inf
    %v11027 = vsel %vm10315, %v6251, -inf
    %v11028 = vsel %vm10315, %v6252, -inf
    %v11029 = vsel %vm10315, %v6253, -inf
    %v11030 = vsel %vm10315, %v6254, -inf
    %v11031 = vsel %vm10315, %v6255, -inf
    %v11032 = vsel %vm10316, %v6256, -inf
    %v11033 = vsel %vm10316, %v6257, -inf
    %v11034 = vsel %vm10316, %v6258, -inf
    %v11035 = vsel %vm10316, %v6259, -inf
    %v11036 = vsel %vm10316, %v6260, -inf
    %v11037 = vsel %vm10316, %v6261, -inf
    %v11038 = vsel %vm10316, %v6262, -inf
    %v11039 = vsel %vm10316, %v6263, -inf
    %v11040 = vsel %vm10317, %v6264, -inf
    %v11041 = vsel %vm10317, %v6265, -inf
    %v11042 = vsel %vm10317, %v6266, -inf
    %v11043 = vsel %vm10317, %v6267, -inf
    %v11044 = vsel %vm10317, %v6268, -inf
    %v11045 = vsel %vm10317, %v6269, -inf
    %v11046 = vsel %vm10317, %v6270, -inf
    %v11047 = vsel %vm10317, %v6271, -inf
    %v11048 = vsel %vm10318, %v6272, -inf
    %v11049 = vsel %vm10318, %v6273, -inf
    %v11050 = vsel %vm10318, %v6274, -inf
    %v11051 = vsel %vm10318, %v6275, -inf
    %v11052 = vsel %vm10318, %v6276, -inf
    %v11053 = vsel %vm10318, %v6277, -inf
    %v11054 = vsel %vm10318, %v6278, -inf
    %v11055 = vsel %vm10318, %v6279, -inf
    %v11056 = vsel %vm10319, %v6280, -inf
    %v11057 = vsel %vm10319, %v6281, -inf
    %v11058 = vsel %vm10319, %v6282, -inf
    %v11059 = vsel %vm10319, %v6283, -inf
    %v11060 = vsel %vm10319, %v6284, -inf
    %v11061 = vsel %vm10319, %v6285, -inf
    %v11062 = vsel %vm10319, %v6286, -inf
    %v11063 = vsel %vm10319, %v6287, -inf
    %v11064 = vsel %vm10320, %v6288, -inf
    %v11065 = vsel %vm10320, %v6289, -inf
    %v11066 = vsel %vm10320, %v6290, -inf
    %v11067 = vsel %vm10320, %v6291, -inf
    %v11068 = vsel %vm10320, %v6292, -inf
    %v11069 = vsel %vm10320, %v6293, -inf
    %v11070 = vsel %vm10320, %v6294, -inf
    %v11071 = vsel %vm10320, %v6295, -inf
    %v11072 = vsel %vm10321, %v6296, -inf
    %v11073 = vsel %vm10321, %v6297, -inf
    %v11074 = vsel %vm10321, %v6298, -inf
    %v11075 = vsel %vm10321, %v6299, -inf
    %v11076 = vsel %vm10321, %v6300, -inf
    %v11077 = vsel %vm10321, %v6301, -inf
    %v11078 = vsel %vm10321, %v6302, -inf
    %v11079 = vsel %vm10321, %v6303, -inf
    %v11080 = vsel %vm10322, %v6304, -inf
    %v11081 = vsel %vm10322, %v6305, -inf
    %v11082 = vsel %vm10322, %v6306, -inf
    %v11083 = vsel %vm10322, %v6307, -inf
    %v11084 = vsel %vm10322, %v6308, -inf
    %v11085 = vsel %vm10322, %v6309, -inf
    %v11086 = vsel %vm10322, %v6310, -inf
    %v11087 = vsel %vm10322, %v6311, -inf
    %v11088 = vsel %vm10323, %v6312, -inf
    %v11089 = vsel %vm10323, %v6313, -inf
    %v11090 = vsel %vm10323, %v6314, -inf
    %v11091 = vsel %vm10323, %v6315, -inf
    %v11092 = vsel %vm10323, %v6316, -inf
    %v11093 = vsel %vm10323, %v6317, -inf
    %v11094 = vsel %vm10323, %v6318, -inf
    %v11095 = vsel %vm10323, %v6319, -inf
    %v11096 = vsel %vm10324, %v6320, -inf
    %v11097 = vsel %vm10324, %v6321, -inf
    %v11098 = vsel %vm10324, %v6322, -inf
    %v11099 = vsel %vm10324, %v6323, -inf
    %v11100 = vsel %vm10324, %v6324, -inf
    %v11101 = vsel %vm10324, %v6325, -inf
    %v11102 = vsel %vm10324, %v6326, -inf
    %v11103 = vsel %vm10324, %v6327, -inf
    %v11104 = vsel %vm10325, %v6328, -inf
    %v11105 = vsel %vm10325, %v6329, -inf
    %v11106 = vsel %vm10325, %v6330, -inf
    %v11107 = vsel %vm10325, %v6331, -inf
    %v11108 = vsel %vm10325, %v6332, -inf
    %v11109 = vsel %vm10325, %v6333, -inf
    %v11110 = vsel %vm10325, %v6334, -inf
    %v11111 = vsel %vm10325, %v6335, -inf
    %v11112 = vsel %vm10326, %v6336, -inf
    %v11113 = vsel %vm10326, %v6337, -inf
    %v11114 = vsel %vm10326, %v6338, -inf
    %v11115 = vsel %vm10326, %v6339, -inf
    %v11116 = vsel %vm10326, %v6340, -inf
    %v11117 = vsel %vm10326, %v6341, -inf
    %v11118 = vsel %vm10326, %v6342, -inf
    %v11119 = vsel %vm10326, %v6343, -inf
    %v11120 = vsel %vm10327, %v6344, -inf
    %v11121 = vsel %vm10327, %v6345, -inf
    %v11122 = vsel %vm10327, %v6346, -inf
    %v11123 = vsel %vm10327, %v6347, -inf
    %v11124 = vsel %vm10327, %v6348, -inf
    %v11125 = vsel %vm10327, %v6349, -inf
    %v11126 = vsel %vm10327, %v6350, -inf
    %v11127 = vsel %vm10327, %v6351, -inf
    %v11128 = vsel %vm10328, %v6352, -inf
    %v11129 = vsel %vm10328, %v6353, -inf
    %v11130 = vsel %vm10328, %v6354, -inf
    %v11131 = vsel %vm10328, %v6355, -inf
    %v11132 = vsel %vm10328, %v6356, -inf
    %v11133 = vsel %vm10328, %v6357, -inf
    %v11134 = vsel %vm10328, %v6358, -inf
    %v11135 = vsel %vm10328, %v6359, -inf
    %v11136 = vsel %vm10329, %v6360, -inf
    %v11137 = vsel %vm10329, %v6361, -inf
    %v11138 = vsel %vm10329, %v6362, -inf
    %v11139 = vsel %vm10329, %v6363, -inf
    %v11140 = vsel %vm10329, %v6364, -inf
    %v11141 = vsel %vm10329, %v6365, -inf
    %v11142 = vsel %vm10329, %v6366, -inf
    %v11143 = vsel %vm10329, %v6367, -inf
    %v11144 = vsel %vm10330, %v6368, -inf
    %v11145 = vsel %vm10330, %v6369, -inf
    %v11146 = vsel %vm10330, %v6370, -inf
    %v11147 = vsel %vm10330, %v6371, -inf
    %v11148 = vsel %vm10330, %v6372, -inf
    %v11149 = vsel %vm10330, %v6373, -inf
    %v11150 = vsel %vm10330, %v6374, -inf
    %v11151 = vsel %vm10330, %v6375, -inf
    %v11152 = vsel %vm10331, %v6376, -inf
    %v11153 = vsel %vm10331, %v6377, -inf
    %v11154 = vsel %vm10331, %v6378, -inf
    %v11155 = vsel %vm10331, %v6379, -inf
    %v11156 = vsel %vm10331, %v6380, -inf
    %v11157 = vsel %vm10331, %v6381, -inf
    %v11158 = vsel %vm10331, %v6382, -inf
    %v11159 = vsel %vm10331, %v6383, -inf
    %v11160 = vsel %vm10332, %v6384, -inf
    %v11161 = vsel %vm10332, %v6385, -inf
    %v11162 = vsel %vm10332, %v6386, -inf
    %v11163 = vsel %vm10332, %v6387, -inf
    %v11164 = vsel %vm10332, %v6388, -inf
    %v11165 = vsel %vm10332, %v6389, -inf
    %v11166 = vsel %vm10332, %v6390, -inf
    %v11167 = vsel %vm10332, %v6391, -inf
    %v11168 = vsel %vm10333, %v6392, -inf
    %v11169 = vsel %vm10333, %v6393, -inf
    %v11170 = vsel %vm10333, %v6394, -inf
    %v11171 = vsel %vm10333, %v6395, -inf
    %v11172 = vsel %vm10333, %v6396, -inf
    %v11173 = vsel %vm10333, %v6397, -inf
    %v11174 = vsel %vm10333, %v6398, -inf
    %v11175 = vsel %vm10333, %v6399, -inf
    %v11176 = vsel %vm10334, %v6400, -inf
    %v11177 = vsel %vm10334, %v6401, -inf
    %v11178 = vsel %vm10334, %v6402, -inf
    %v11179 = vsel %vm10334, %v6403, -inf
    %v11180 = vsel %vm10334, %v6404, -inf
    %v11181 = vsel %vm10334, %v6405, -inf
    %v11182 = vsel %vm10334, %v6406, -inf
    %v11183 = vsel %vm10334, %v6407, -inf
    %v11184 = vsel %vm10335, %v6408, -inf
    %v11185 = vsel %vm10335, %v6409, -inf
    %v11186 = vsel %vm10335, %v6410, -inf
    %v11187 = vsel %vm10335, %v6411, -inf
    %v11188 = vsel %vm10335, %v6412, -inf
    %v11189 = vsel %vm10335, %v6413, -inf
    %v11190 = vsel %vm10335, %v6414, -inf
    %v11191 = vsel %vm10335, %v6415, -inf
    %v11192 = vsel %vm10336, %v6416, -inf
    %v11193 = vsel %vm10336, %v6417, -inf
    %v11194 = vsel %vm10336, %v6418, -inf
    %v11195 = vsel %vm10336, %v6419, -inf
    %v11196 = vsel %vm10336, %v6420, -inf
    %v11197 = vsel %vm10336, %v6421, -inf
    %v11198 = vsel %vm10336, %v6422, -inf
    %v11199 = vsel %vm10336, %v6423, -inf
    %v11200 = vsel %vm10337, %v6424, -inf
    %v11201 = vsel %vm10337, %v6425, -inf
    %v11202 = vsel %vm10337, %v6426, -inf
    %v11203 = vsel %vm10337, %v6427, -inf
    %v11204 = vsel %vm10337, %v6428, -inf
    %v11205 = vsel %vm10337, %v6429, -inf
    %v11206 = vsel %vm10337, %v6430, -inf
    %v11207 = vsel %vm10337, %v6431, -inf
    %v11208 = vsel %vm10338, %v6432, -inf
    %v11209 = vsel %vm10338, %v6433, -inf
    %v11210 = vsel %vm10338, %v6434, -inf
    %v11211 = vsel %vm10338, %v6435, -inf
    %v11212 = vsel %vm10338, %v6436, -inf
    %v11213 = vsel %vm10338, %v6437, -inf
    %v11214 = vsel %vm10338, %v6438, -inf
    %v11215 = vsel %vm10338, %v6439, -inf
    %v11216 = vsel %vm10339, %v6440, -inf
    %v11217 = vsel %vm10339, %v6441, -inf
    %v11218 = vsel %vm10339, %v6442, -inf
    %v11219 = vsel %vm10339, %v6443, -inf
    %v11220 = vsel %vm10339, %v6444, -inf
    %v11221 = vsel %vm10339, %v6445, -inf
    %v11222 = vsel %vm10339, %v6446, -inf
    %v11223 = vsel %vm10339, %v6447, -inf
    %v11224 = vsel %vm10340, %v6448, -inf
    %v11225 = vsel %vm10340, %v6449, -inf
    %v11226 = vsel %vm10340, %v6450, -inf
    %v11227 = vsel %vm10340, %v6451, -inf
    %v11228 = vsel %vm10340, %v6452, -inf
    %v11229 = vsel %vm10340, %v6453, -inf
    %v11230 = vsel %vm10340, %v6454, -inf
    %v11231 = vsel %vm10340, %v6455, -inf
    %v11232 = vsel %vm10341, %v6456, -inf
    %v11233 = vsel %vm10341, %v6457, -inf
    %v11234 = vsel %vm10341, %v6458, -inf
    %v11235 = vsel %vm10341, %v6459, -inf
    %v11236 = vsel %vm10341, %v6460, -inf
    %v11237 = vsel %vm10341, %v6461, -inf
    %v11238 = vsel %vm10341, %v6462, -inf
    %v11239 = vsel %vm10341, %v6463, -inf
    %v11240 = vsel %vm10342, %v6464, -inf
    %v11241 = vsel %vm10342, %v6465, -inf
    %v11242 = vsel %vm10342, %v6466, -inf
    %v11243 = vsel %vm10342, %v6467, -inf
    %v11244 = vsel %vm10342, %v6468, -inf
    %v11245 = vsel %vm10342, %v6469, -inf
    %v11246 = vsel %vm10342, %v6470, -inf
    %v11247 = vsel %vm10342, %v6471, -inf
    %v11248 = vsel %vm10343, %v6472, -inf
    %v11249 = vsel %vm10343, %v6473, -inf
    %v11250 = vsel %vm10343, %v6474, -inf
    %v11251 = vsel %vm10343, %v6475, -inf
    %v11252 = vsel %vm10343, %v6476, -inf
    %v11253 = vsel %vm10343, %v6477, -inf
    %v11254 = vsel %vm10343, %v6478, -inf
    %v11255 = vsel %vm10343, %v6479, -inf
    %v11256 = vsel %vm10344, %v6480, -inf
    %v11257 = vsel %vm10344, %v6481, -inf
    %v11258 = vsel %vm10344, %v6482, -inf
    %v11259 = vsel %vm10344, %v6483, -inf
    %v11260 = vsel %vm10344, %v6484, -inf
    %v11261 = vsel %vm10344, %v6485, -inf
    %v11262 = vsel %vm10344, %v6486, -inf
    %v11263 = vsel %vm10344, %v6487, -inf
    %v11264 = vsel %vm10345, %v6488, -inf
    %v11265 = vsel %vm10345, %v6489, -inf
    %v11266 = vsel %vm10345, %v6490, -inf
    %v11267 = vsel %vm10345, %v6491, -inf
    %v11268 = vsel %vm10345, %v6492, -inf
    %v11269 = vsel %vm10345, %v6493, -inf
    %v11270 = vsel %vm10345, %v6494, -inf
    %v11271 = vsel %vm10345, %v6495, -inf
    %v11272 = vsel %vm10346, %v6496, -inf
    %v11273 = vsel %vm10346, %v6497, -inf
    %v11274 = vsel %vm10346, %v6498, -inf
    %v11275 = vsel %vm10346, %v6499, -inf
    %v11276 = vsel %vm10346, %v6500, -inf
    %v11277 = vsel %vm10346, %v6501, -inf
    %v11278 = vsel %vm10346, %v6502, -inf
    %v11279 = vsel %vm10346, %v6503, -inf
    %v11280 = vsel %vm10347, %v6504, -inf
    %v11281 = vsel %vm10347, %v6505, -inf
    %v11282 = vsel %vm10347, %v6506, -inf
    %v11283 = vsel %vm10347, %v6507, -inf
    %v11284 = vsel %vm10347, %v6508, -inf
    %v11285 = vsel %vm10347, %v6509, -inf
    %v11286 = vsel %vm10347, %v6510, -inf
    %v11287 = vsel %vm10347, %v6511, -inf
    %v11288 = vsel %vm10348, %v6512, -inf
    %v11289 = vsel %vm10348, %v6513, -inf
    %v11290 = vsel %vm10348, %v6514, -inf
    %v11291 = vsel %vm10348, %v6515, -inf
    %v11292 = vsel %vm10348, %v6516, -inf
    %v11293 = vsel %vm10348, %v6517, -inf
    %v11294 = vsel %vm10348, %v6518, -inf
    %v11295 = vsel %vm10348, %v6519, -inf
    %v11296 = vsel %vm10349, %v6520, -inf
    %v11297 = vsel %vm10349, %v6521, -inf
    %v11298 = vsel %vm10349, %v6522, -inf
    %v11299 = vsel %vm10349, %v6523, -inf
    %v11300 = vsel %vm10349, %v6524, -inf
    %v11301 = vsel %vm10349, %v6525, -inf
    %v11302 = vsel %vm10349, %v6526, -inf
    %v11303 = vsel %vm10349, %v6527, -inf
    %v11304 = vsel %vm10350, %v6528, -inf
    %v11305 = vsel %vm10350, %v6529, -inf
    %v11306 = vsel %vm10350, %v6530, -inf
    %v11307 = vsel %vm10350, %v6531, -inf
    %v11308 = vsel %vm10350, %v6532, -inf
    %v11309 = vsel %vm10350, %v6533, -inf
    %v11310 = vsel %vm10350, %v6534, -inf
    %v11311 = vsel %vm10350, %v6535, -inf
    %v11312 = vsel %vm10351, %v6536, -inf
    %v11313 = vsel %vm10351, %v6537, -inf
    %v11314 = vsel %vm10351, %v6538, -inf
    %v11315 = vsel %vm10351, %v6539, -inf
    %v11316 = vsel %vm10351, %v6540, -inf
    %v11317 = vsel %vm10351, %v6541, -inf
    %v11318 = vsel %vm10351, %v6542, -inf
    %v11319 = vsel %vm10351, %v6543, -inf
    %v11320 = vsel %vm10352, %v6544, -inf
    %v11321 = vsel %vm10352, %v6545, -inf
    %v11322 = vsel %vm10352, %v6546, -inf
    %v11323 = vsel %vm10352, %v6547, -inf
    %v11324 = vsel %vm10352, %v6548, -inf
    %v11325 = vsel %vm10352, %v6549, -inf
    %v11326 = vsel %vm10352, %v6550, -inf
    %v11327 = vsel %vm10352, %v6551, -inf
    %v11328 = vsel %vm10353, %v6552, -inf
    %v11329 = vsel %vm10353, %v6553, -inf
    %v11330 = vsel %vm10353, %v6554, -inf
    %v11331 = vsel %vm10353, %v6555, -inf
    %v11332 = vsel %vm10353, %v6556, -inf
    %v11333 = vsel %vm10353, %v6557, -inf
    %v11334 = vsel %vm10353, %v6558, -inf
    %v11335 = vsel %vm10353, %v6559, -inf
    %v11336 = vsel %vm10354, %v6560, -inf
    %v11337 = vsel %vm10354, %v6561, -inf
    %v11338 = vsel %vm10354, %v6562, -inf
    %v11339 = vsel %vm10354, %v6563, -inf
    %v11340 = vsel %vm10354, %v6564, -inf
    %v11341 = vsel %vm10354, %v6565, -inf
    %v11342 = vsel %vm10354, %v6566, -inf
    %v11343 = vsel %vm10354, %v6567, -inf
    %v11344 = vsel %vm10355, %v6568, -inf
    %v11345 = vsel %vm10355, %v6569, -inf
    %v11346 = vsel %vm10355, %v6570, -inf
    %v11347 = vsel %vm10355, %v6571, -inf
    %v11348 = vsel %vm10355, %v6572, -inf
    %v11349 = vsel %vm10355, %v6573, -inf
    %v11350 = vsel %vm10355, %v6574, -inf
    %v11351 = vsel %vm10355, %v6575, -inf
    %v11352 = vsel %vm10356, %v6576, -inf
    %v11353 = vsel %vm10356, %v6577, -inf
    %v11354 = vsel %vm10356, %v6578, -inf
    %v11355 = vsel %vm10356, %v6579, -inf
    %v11356 = vsel %vm10356, %v6580, -inf
    %v11357 = vsel %vm10356, %v6581, -inf
    %v11358 = vsel %vm10356, %v6582, -inf
    %v11359 = vsel %vm10356, %v6583, -inf
    %v11360 = vsel %vm10357, %v6584, -inf
    %v11361 = vsel %vm10357, %v6585, -inf
    %v11362 = vsel %vm10357, %v6586, -inf
    %v11363 = vsel %vm10357, %v6587, -inf
    %v11364 = vsel %vm10357, %v6588, -inf
    %v11365 = vsel %vm10357, %v6589, -inf
    %v11366 = vsel %vm10357, %v6590, -inf
    %v11367 = vsel %vm10357, %v6591, -inf
    %v11368 = vsel %vm10358, %v6592, -inf
    %v11369 = vsel %vm10358, %v6593, -inf
    %v11370 = vsel %vm10358, %v6594, -inf
    %v11371 = vsel %vm10358, %v6595, -inf
    %v11372 = vsel %vm10358, %v6596, -inf
    %v11373 = vsel %vm10358, %v6597, -inf
    %v11374 = vsel %vm10358, %v6598, -inf
    %v11375 = vsel %vm10358, %v6599, -inf
    %v11376 = vsel %vm10359, %v6600, -inf
    %v11377 = vsel %vm10359, %v6601, -inf
    %v11378 = vsel %vm10359, %v6602, -inf
    %v11379 = vsel %vm10359, %v6603, -inf
    %v11380 = vsel %vm10359, %v6604, -inf
    %v11381 = vsel %vm10359, %v6605, -inf
    %v11382 = vsel %vm10359, %v6606, -inf
    %v11383 = vsel %vm10359, %v6607, -inf
    %v11384 = vmax.f32 %v10360, %v10368
    %v11385 = vmax.f32 %v11384, %v10376
    %v11386 = vmax.f32 %v11385, %v10384
    %v11387 = vmax.f32 %v11386, %v10392
    %v11388 = vmax.f32 %v11387, %v10400
    %v11389 = vmax.f32 %v11388, %v10408
    %v11390 = vmax.f32 %v11389, %v10416
    %v11391 = vmax.f32 %v11390, %v10424
    %v11392 = vmax.f32 %v11391, %v10432
    %v11393 = vmax.f32 %v11392, %v10440
    %v11394 = vmax.f32 %v11393, %v10448
    %v11395 = vmax.f32 %v11394, %v10456
    %v11396 = vmax.f32 %v11395, %v10464
    %v11397 = vmax.f32 %v11396, %v10472
    %v11398 = vmax.f32 %v11397, %v10480
    %v11399 = vmax.f32 %v11398, %v10488
    %v11400 = vmax.f32 %v11399, %v10496
    %v11401 = vmax.f32 %v11400, %v10504
    %v11402 = vmax.f32 %v11401, %v10512
    %v11403 = vmax.f32 %v11402, %v10520
    %v11404 = vmax.f32 %v11403, %v10528
    %v11405 = vmax.f32 %v11404, %v10536
    %v11406 = vmax.f32 %v11405, %v10544
    %v11407 = vmax.f32 %v11406, %v10552
    %v11408 = vmax.f32 %v11407, %v10560
    %v11409 = vmax.f32 %v11408, %v10568
    %v11410 = vmax.f32 %v11409, %v10576
    %v11411 = vmax.f32 %v11410, %v10584
    %v11412 = vmax.f32 %v11411, %v10592
    %v11413 = vmax.f32 %v11412, %v10600
    %v11414 = vmax.f32 %v11413, %v10608
    %v11415 = vmax.f32 %v11414, %v10616
    %v11416 = vmax.f32 %v11415, %v10624
    %v11417 = vmax.f32 %v11416, %v10632
    %v11418 = vmax.f32 %v11417, %v10640
    %v11419 = vmax.f32 %v11418, %v10648
    %v11420 = vmax.f32 %v11419, %v10656
    %v11421 = vmax.f32 %v11420, %v10664
    %v11422 = vmax.f32 %v11421, %v10672
    %v11423 = vmax.f32 %v11422, %v10680
    %v11424 = vmax.f32 %v11423, %v10688
    %v11425 = vmax.f32 %v11424, %v10696
    %v11426 = vmax.f32 %v11425, %v10704
    %v11427 = vmax.f32 %v11426, %v10712
    %v11428 = vmax.f32 %v11427, %v10720
    %v11429 = vmax.f32 %v11428, %v10728
    %v11430 = vmax.f32 %v11429, %v10736
    %v11431 = vmax.f32 %v11430, %v10744
    %v11432 = vmax.f32 %v11431, %v10752
    %v11433 = vmax.f32 %v11432, %v10760
    %v11434 = vmax.f32 %v11433, %v10768
    %v11435 = vmax.f32 %v11434, %v10776
    %v11436 = vmax.f32 %v11435, %v10784
    %v11437 = vmax.f32 %v11436, %v10792
    %v11438 = vmax.f32 %v11437, %v10800
    %v11439 = vmax.f32 %v11438, %v10808
    %v11440 = vmax.f32 %v11439, %v10816
    %v11441 = vmax.f32 %v11440, %v10824
    %v11442 = vmax.f32 %v11441, %v10832
    %v11443 = vmax.f32 %v11442, %v10840
    %v11444 = vmax.f32 %v11443, %v10848
    %v11445 = vmax.f32 %v11444, %v10856
    %v11446 = vmax.f32 %v11445, %v10864
    %v11447 = vmax.f32 %v11446, %v10872
    %v11448 = vmax.f32 %v11447, %v10880
    %v11449 = vmax.f32 %v11448, %v10888
    %v11450 = vmax.f32 %v11449, %v10896
    %v11451 = vmax.f32 %v11450, %v10904
    %v11452 = vmax.f32 %v11451, %v10912
    %v11453 = vmax.f32 %v11452, %v10920
    %v11454 = vmax.f32 %v11453, %v10928
    %v11455 = vmax.f32 %v11454, %v10936
    %v11456 = vmax.f32 %v11455, %v10944
    %v11457 = vmax.f32 %v11456, %v10952
    %v11458 = vmax.f32 %v11457, %v10960
    %v11459 = vmax.f32 %v11458, %v10968
    %v11460 = vmax.f32 %v11459, %v10976
    %v11461 = vmax.f32 %v11460, %v10984
    %v11462 = vmax.f32 %v11461, %v10992
    %v11463 = vmax.f32 %v11462, %v11000
    %v11464 = vmax.f32 %v11463, %v11008
    %v11465 = vmax.f32 %v11464, %v11016
    %v11466 = vmax.f32 %v11465, %v11024
    %v11467 = vmax.f32 %v11466, %v11032
    %v11468 = vmax.f32 %v11467, %v11040
    %v11469 = vmax.f32 %v11468, %v11048
    %v11470 = vmax.f32 %v11469, %v11056
    %v11471 = vmax.f32 %v11470, %v11064
    %v11472 = vmax.f32 %v11471, %v11072
    %v11473 = vmax.f32 %v11472, %v11080
    %v11474 = vmax.f32 %v11473, %v11088
    %v11475 = vmax.f32 %v11474, %v11096
    %v11476 = vmax.f32 %v11475, %v11104
    %v11477 = vmax.f32 %v11476, %v11112
    %v11478 = vmax.f32 %v11477, %v11120
    %v11479 = vmax.f32 %v11478, %v11128
    %v11480 = vmax.f32 %v11479, %v11136
    %v11481 = vmax.f32 %v11480, %v11144
    %v11482 = vmax.f32 %v11481, %v11152
    %v11483 = vmax.f32 %v11482, %v11160
    %v11484 = vmax.f32 %v11483, %v11168
    %v11485 = vmax.f32 %v11484, %v11176
    %v11486 = vmax.f32 %v11485, %v11184
    %v11487 = vmax.f32 %v11486, %v11192
    %v11488 = vmax.f32 %v11487, %v11200
    %v11489 = vmax.f32 %v11488, %v11208
    %v11490 = vmax.f32 %v11489, %v11216
    %v11491 = vmax.f32 %v11490, %v11224
    %v11492 = vmax.f32 %v11491, %v11232
    %v11493 = vmax.f32 %v11492, %v11240
    %v11494 = vmax.f32 %v11493, %v11248
    %v11495 = vmax.f32 %v11494, %v11256
    %v11496 = vmax.f32 %v11495, %v11264
    %v11497 = vmax.f32 %v11496, %v11272
    %v11498 = vmax.f32 %v11497, %v11280
    %v11499 = vmax.f32 %v11498, %v11288
    %v11500 = vmax.f32 %v11499, %v11296
    %v11501 = vmax.f32 %v11500, %v11304
    %v11502 = vmax.f32 %v11501, %v11312
    %v11503 = vmax.f32 %v11502, %v11320
    %v11504 = vmax.f32 %v11503, %v11328
    %v11505 = vmax.f32 %v11504, %v11336
    %v11506 = vmax.f32 %v11505, %v11344
    %v11507 = vmax.f32 %v11506, %v11352
    %v11508 = vmax.f32 %v11507, %v11360
    %v11509 = vmax.f32 %v11508, %v11368
    %v11510 = vmax.f32 %v11509, %v11376
    %v11511 = vrot.slane %v11510, 4
    %v11512 = vmax.f32 %v11510, %v11511
    %v11513 = vrot.slane %v11512, 2
    %v11514 = vmax.f32 %v11512, %v11513
    %v11515 = vrot.slane %v11514, 1
    %v11516 = vmax.f32 %v11514, %v11515
    %v11517 = vmax.f32 %v10361, %v10369
    %v11518 = vmax.f32 %v11517, %v10377
    %v11519 = vmax.f32 %v11518, %v10385
    %v11520 = vmax.f32 %v11519, %v10393
    %v11521 = vmax.f32 %v11520, %v10401
    %v11522 = vmax.f32 %v11521, %v10409
    %v11523 = vmax.f32 %v11522, %v10417
    %v11524 = vmax.f32 %v11523, %v10425
    %v11525 = vmax.f32 %v11524, %v10433
    %v11526 = vmax.f32 %v11525, %v10441
    %v11527 = vmax.f32 %v11526, %v10449
    %v11528 = vmax.f32 %v11527, %v10457
    %v11529 = vmax.f32 %v11528, %v10465
    %v11530 = vmax.f32 %v11529, %v10473
    %v11531 = vmax.f32 %v11530, %v10481
    %v11532 = vmax.f32 %v11531, %v10489
    %v11533 = vmax.f32 %v11532, %v10497
    %v11534 = vmax.f32 %v11533, %v10505
    %v11535 = vmax.f32 %v11534, %v10513
    %v11536 = vmax.f32 %v11535, %v10521
    %v11537 = vmax.f32 %v11536, %v10529
    %v11538 = vmax.f32 %v11537, %v10537
    %v11539 = vmax.f32 %v11538, %v10545
    %v11540 = vmax.f32 %v11539, %v10553
    %v11541 = vmax.f32 %v11540, %v10561
    %v11542 = vmax.f32 %v11541, %v10569
    %v11543 = vmax.f32 %v11542, %v10577
    %v11544 = vmax.f32 %v11543, %v10585
    %v11545 = vmax.f32 %v11544, %v10593
    %v11546 = vmax.f32 %v11545, %v10601
    %v11547 = vmax.f32 %v11546, %v10609
    %v11548 = vmax.f32 %v11547, %v10617
    %v11549 = vmax.f32 %v11548, %v10625
    %v11550 = vmax.f32 %v11549, %v10633
    %v11551 = vmax.f32 %v11550, %v10641
    %v11552 = vmax.f32 %v11551, %v10649
    %v11553 = vmax.f32 %v11552, %v10657
    %v11554 = vmax.f32 %v11553, %v10665
    %v11555 = vmax.f32 %v11554, %v10673
    %v11556 = vmax.f32 %v11555, %v10681
    %v11557 = vmax.f32 %v11556, %v10689
    %v11558 = vmax.f32 %v11557, %v10697
    %v11559 = vmax.f32 %v11558, %v10705
    %v11560 = vmax.f32 %v11559, %v10713
    %v11561 = vmax.f32 %v11560, %v10721
    %v11562 = vmax.f32 %v11561, %v10729
    %v11563 = vmax.f32 %v11562, %v10737
    %v11564 = vmax.f32 %v11563, %v10745
    %v11565 = vmax.f32 %v11564, %v10753
    %v11566 = vmax.f32 %v11565, %v10761
    %v11567 = vmax.f32 %v11566, %v10769
    %v11568 = vmax.f32 %v11567, %v10777
    %v11569 = vmax.f32 %v11568, %v10785
    %v11570 = vmax.f32 %v11569, %v10793
    %v11571 = vmax.f32 %v11570, %v10801
    %v11572 = vmax.f32 %v11571, %v10809
    %v11573 = vmax.f32 %v11572, %v10817
    %v11574 = vmax.f32 %v11573, %v10825
    %v11575 = vmax.f32 %v11574, %v10833
    %v11576 = vmax.f32 %v11575, %v10841
    %v11577 = vmax.f32 %v11576, %v10849
    %v11578 = vmax.f32 %v11577, %v10857
    %v11579 = vmax.f32 %v11578, %v10865
    %v11580 = vmax.f32 %v11579, %v10873
    %v11581 = vmax.f32 %v11580, %v10881
    %v11582 = vmax.f32 %v11581, %v10889
    %v11583 = vmax.f32 %v11582, %v10897
    %v11584 = vmax.f32 %v11583, %v10905
    %v11585 = vmax.f32 %v11584, %v10913
    %v11586 = vmax.f32 %v11585, %v10921
    %v11587 = vmax.f32 %v11586, %v10929
    %v11588 = vmax.f32 %v11587, %v10937
    %v11589 = vmax.f32 %v11588, %v10945
    %v11590 = vmax.f32 %v11589, %v10953
    %v11591 = vmax.f32 %v11590, %v10961
    %v11592 = vmax.f32 %v11591, %v10969
    %v11593 = vmax.f32 %v11592, %v10977
    %v11594 = vmax.f32 %v11593, %v10985
    %v11595 = vmax.f32 %v11594, %v10993
    %v11596 = vmax.f32 %v11595, %v11001
    %v11597 = vmax.f32 %v11596, %v11009
    %v11598 = vmax.f32 %v11597, %v11017
    %v11599 = vmax.f32 %v11598, %v11025
    %v11600 = vmax.f32 %v11599, %v11033
    %v11601 = vmax.f32 %v11600, %v11041
    %v11602 = vmax.f32 %v11601, %v11049
    %v11603 = vmax.f32 %v11602, %v11057
    %v11604 = vmax.f32 %v11603, %v11065
    %v11605 = vmax.f32 %v11604, %v11073
    %v11606 = vmax.f32 %v11605, %v11081
    %v11607 = vmax.f32 %v11606, %v11089
    %v11608 = vmax.f32 %v11607, %v11097
    %v11609 = vmax.f32 %v11608, %v11105
    %v11610 = vmax.f32 %v11609, %v11113
    %v11611 = vmax.f32 %v11610, %v11121
    %v11612 = vmax.f32 %v11611, %v11129
    %v11613 = vmax.f32 %v11612, %v11137
    %v11614 = vmax.f32 %v11613, %v11145
    %v11615 = vmax.f32 %v11614, %v11153
    %v11616 = vmax.f32 %v11615, %v11161
    %v11617 = vmax.f32 %v11616, %v11169
    %v11618 = vmax.f32 %v11617, %v11177
    %v11619 = vmax.f32 %v11618, %v11185
    %v11620 = vmax.f32 %v11619, %v11193
    %v11621 = vmax.f32 %v11620, %v11201
    %v11622 = vmax.f32 %v11621, %v11209
    %v11623 = vmax.f32 %v11622, %v11217
    %v11624 = vmax.f32 %v11623, %v11225
    %v11625 = vmax.f32 %v11624, %v11233
    %v11626 = vmax.f32 %v11625, %v11241
    %v11627 = vmax.f32 %v11626, %v11249
    %v11628 = vmax.f32 %v11627, %v11257
    %v11629 = vmax.f32 %v11628, %v11265
    %v11630 = vmax.f32 %v11629, %v11273
    %v11631 = vmax.f32 %v11630, %v11281
    %v11632 = vmax.f32 %v11631, %v11289
    %v11633 = vmax.f32 %v11632, %v11297
    %v11634 = vmax.f32 %v11633, %v11305
    %v11635 = vmax.f32 %v11634, %v11313
    %v11636 = vmax.f32 %v11635, %v11321
    %v11637 = vmax.f32 %v11636, %v11329
    %v11638 = vmax.f32 %v11637, %v11337
    %v11639 = vmax.f32 %v11638, %v11345
    %v11640 = vmax.f32 %v11639, %v11353
    %v11641 = vmax.f32 %v11640, %v11361
    %v11642 = vmax.f32 %v11641, %v11369
    %v11643 = vmax.f32 %v11642, %v11377
    %v11644 = vrot.slane %v11643, 4
    %v11645 = vmax.f32 %v11643, %v11644
    %v11646 = vrot.slane %v11645, 2
    %v11647 = vmax.f32 %v11645, %v11646
    %v11648 = vrot.slane %v11647, 1
    %v11649 = vmax.f32 %v11647, %v11648
    %v11650 = vmax.f32 %v10362, %v10370
    %v11651 = vmax.f32 %v11650, %v10378
    %v11652 = vmax.f32 %v11651, %v10386
    %v11653 = vmax.f32 %v11652, %v10394
    %v11654 = vmax.f32 %v11653, %v10402
    %v11655 = vmax.f32 %v11654, %v10410
    %v11656 = vmax.f32 %v11655, %v10418
    %v11657 = vmax.f32 %v11656, %v10426
    %v11658 = vmax.f32 %v11657, %v10434
    %v11659 = vmax.f32 %v11658, %v10442
    %v11660 = vmax.f32 %v11659, %v10450
    %v11661 = vmax.f32 %v11660, %v10458
    %v11662 = vmax.f32 %v11661, %v10466
    %v11663 = vmax.f32 %v11662, %v10474
    %v11664 = vmax.f32 %v11663, %v10482
    %v11665 = vmax.f32 %v11664, %v10490
    %v11666 = vmax.f32 %v11665, %v10498
    %v11667 = vmax.f32 %v11666, %v10506
    %v11668 = vmax.f32 %v11667, %v10514
    %v11669 = vmax.f32 %v11668, %v10522
    %v11670 = vmax.f32 %v11669, %v10530
    %v11671 = vmax.f32 %v11670, %v10538
    %v11672 = vmax.f32 %v11671, %v10546
    %v11673 = vmax.f32 %v11672, %v10554
    %v11674 = vmax.f32 %v11673, %v10562
    %v11675 = vmax.f32 %v11674, %v10570
    %v11676 = vmax.f32 %v11675, %v10578
    %v11677 = vmax.f32 %v11676, %v10586
    %v11678 = vmax.f32 %v11677, %v10594
    %v11679 = vmax.f32 %v11678, %v10602
    %v11680 = vmax.f32 %v11679, %v10610
    %v11681 = vmax.f32 %v11680, %v10618
    %v11682 = vmax.f32 %v11681, %v10626
    %v11683 = vmax.f32 %v11682, %v10634
    %v11684 = vmax.f32 %v11683, %v10642
    %v11685 = vmax.f32 %v11684, %v10650
    %v11686 = vmax.f32 %v11685, %v10658
    %v11687 = vmax.f32 %v11686, %v10666
    %v11688 = vmax.f32 %v11687, %v10674
    %v11689 = vmax.f32 %v11688, %v10682
    %v11690 = vmax.f32 %v11689, %v10690
    %v11691 = vmax.f32 %v11690, %v10698
    %v11692 = vmax.f32 %v11691, %v10706
    %v11693 = vmax.f32 %v11692, %v10714
    %v11694 = vmax.f32 %v11693, %v10722
    %v11695 = vmax.f32 %v11694, %v10730
    %v11696 = vmax.f32 %v11695, %v10738
    %v11697 = vmax.f32 %v11696, %v10746
    %v11698 = vmax.f32 %v11697, %v10754
    %v11699 = vmax.f32 %v11698, %v10762
    %v11700 = vmax.f32 %v11699, %v10770
    %v11701 = vmax.f32 %v11700, %v10778
    %v11702 = vmax.f32 %v11701, %v10786
    %v11703 = vmax.f32 %v11702, %v10794
    %v11704 = vmax.f32 %v11703, %v10802
    %v11705 = vmax.f32 %v11704, %v10810
    %v11706 = vmax.f32 %v11705, %v10818
    %v11707 = vmax.f32 %v11706, %v10826
    %v11708 = vmax.f32 %v11707, %v10834
    %v11709 = vmax.f32 %v11708, %v10842
    %v11710 = vmax.f32 %v11709, %v10850
    %v11711 = vmax.f32 %v11710, %v10858
    %v11712 = vmax.f32 %v11711, %v10866
    %v11713 = vmax.f32 %v11712, %v10874
    %v11714 = vmax.f32 %v11713, %v10882
    %v11715 = vmax.f32 %v11714, %v10890
    %v11716 = vmax.f32 %v11715, %v10898
    %v11717 = vmax.f32 %v11716, %v10906
    %v11718 = vmax.f32 %v11717, %v10914
    %v11719 = vmax.f32 %v11718, %v10922
    %v11720 = vmax.f32 %v11719, %v10930
    %v11721 = vmax.f32 %v11720, %v10938
    %v11722 = vmax.f32 %v11721, %v10946
    %v11723 = vmax.f32 %v11722, %v10954
    %v11724 = vmax.f32 %v11723, %v10962
    %v11725 = vmax.f32 %v11724, %v10970
    %v11726 = vmax.f32 %v11725, %v10978
    %v11727 = vmax.f32 %v11726, %v10986
    %v11728 = vmax.f32 %v11727, %v10994
    %v11729 = vmax.f32 %v11728, %v11002
    %v11730 = vmax.f32 %v11729, %v11010
    %v11731 = vmax.f32 %v11730, %v11018
    %v11732 = vmax.f32 %v11731, %v11026
    %v11733 = vmax.f32 %v11732, %v11034
    %v11734 = vmax.f32 %v11733, %v11042
    %v11735 = vmax.f32 %v11734, %v11050
    %v11736 = vmax.f32 %v11735, %v11058
    %v11737 = vmax.f32 %v11736, %v11066
    %v11738 = vmax.f32 %v11737, %v11074
    %v11739 = vmax.f32 %v11738, %v11082
    %v11740 = vmax.f32 %v11739, %v11090
    %v11741 = vmax.f32 %v11740, %v11098
    %v11742 = vmax.f32 %v11741, %v11106
    %v11743 = vmax.f32 %v11742, %v11114
    %v11744 = vmax.f32 %v11743, %v11122
    %v11745 = vmax.f32 %v11744, %v11130
    %v11746 = vmax.f32 %v11745, %v11138
    %v11747 = vmax.f32 %v11746, %v11146
    %v11748 = vmax.f32 %v11747, %v11154
    %v11749 = vmax.f32 %v11748, %v11162
    %v11750 = vmax.f32 %v11749, %v11170
    %v11751 = vmax.f32 %v11750, %v11178
    %v11752 = vmax.f32 %v11751, %v11186
    %v11753 = vmax.f32 %v11752, %v11194
    %v11754 = vmax.f32 %v11753, %v11202
    %v11755 = vmax.f32 %v11754, %v11210
    %v11756 = vmax.f32 %v11755, %v11218
    %v11757 = vmax.f32 %v11756, %v11226
    %v11758 = vmax.f32 %v11757, %v11234
    %v11759 = vmax.f32 %v11758, %v11242
    %v11760 = vmax.f32 %v11759, %v11250
    %v11761 = vmax.f32 %v11760, %v11258
    %v11762 = vmax.f32 %v11761, %v11266
    %v11763 = vmax.f32 %v11762, %v11274
    %v11764 = vmax.f32 %v11763, %v11282
    %v11765 = vmax.f32 %v11764, %v11290
    %v11766 = vmax.f32 %v11765, %v11298
    %v11767 = vmax.f32 %v11766, %v11306
    %v11768 = vmax.f32 %v11767, %v11314
    %v11769 = vmax.f32 %v11768, %v11322
    %v11770 = vmax.f32 %v11769, %v11330
    %v11771 = vmax.f32 %v11770, %v11338
    %v11772 = vmax.f32 %v11771, %v11346
    %v11773 = vmax.f32 %v11772, %v11354
    %v11774 = vmax.f32 %v11773, %v11362
    %v11775 = vmax.f32 %v11774, %v11370
    %v11776 = vmax.f32 %v11775, %v11378
    %v11777 = vrot.slane %v11776, 4
    %v11778 = vmax.f32 %v11776, %v11777
    %v11779 = vrot.slane %v11778, 2
    %v11780 = vmax.f32 %v11778, %v11779
    %v11781 = vrot.slane %v11780, 1
    %v11782 = vmax.f32 %v11780, %v11781
    %v11783 = vmax.f32 %v10363, %v10371
    %v11784 = vmax.f32 %v11783, %v10379
    %v11785 = vmax.f32 %v11784, %v10387
    %v11786 = vmax.f32 %v11785, %v10395
    %v11787 = vmax.f32 %v11786, %v10403
    %v11788 = vmax.f32 %v11787, %v10411
    %v11789 = vmax.f32 %v11788, %v10419
    %v11790 = vmax.f32 %v11789, %v10427
    %v11791 = vmax.f32 %v11790, %v10435
    %v11792 = vmax.f32 %v11791, %v10443
    %v11793 = vmax.f32 %v11792, %v10451
    %v11794 = vmax.f32 %v11793, %v10459
    %v11795 = vmax.f32 %v11794, %v10467
    %v11796 = vmax.f32 %v11795, %v10475
    %v11797 = vmax.f32 %v11796, %v10483
    %v11798 = vmax.f32 %v11797, %v10491
    %v11799 = vmax.f32 %v11798, %v10499
    %v11800 = vmax.f32 %v11799, %v10507
    %v11801 = vmax.f32 %v11800, %v10515
    %v11802 = vmax.f32 %v11801, %v10523
    %v11803 = vmax.f32 %v11802, %v10531
    %v11804 = vmax.f32 %v11803, %v10539
    %v11805 = vmax.f32 %v11804, %v10547
    %v11806 = vmax.f32 %v11805, %v10555
    %v11807 = vmax.f32 %v11806, %v10563
    %v11808 = vmax.f32 %v11807, %v10571
    %v11809 = vmax.f32 %v11808, %v10579
    %v11810 = vmax.f32 %v11809, %v10587
    %v11811 = vmax.f32 %v11810, %v10595
    %v11812 = vmax.f32 %v11811, %v10603
    %v11813 = vmax.f32 %v11812, %v10611
    %v11814 = vmax.f32 %v11813, %v10619
    %v11815 = vmax.f32 %v11814, %v10627
    %v11816 = vmax.f32 %v11815, %v10635
    %v11817 = vmax.f32 %v11816, %v10643
    %v11818 = vmax.f32 %v11817, %v10651
    %v11819 = vmax.f32 %v11818, %v10659
    %v11820 = vmax.f32 %v11819, %v10667
    %v11821 = vmax.f32 %v11820, %v10675
    %v11822 = vmax.f32 %v11821, %v10683
    %v11823 = vmax.f32 %v11822, %v10691
    %v11824 = vmax.f32 %v11823, %v10699
    %v11825 = vmax.f32 %v11824, %v10707
    %v11826 = vmax.f32 %v11825, %v10715
    %v11827 = vmax.f32 %v11826, %v10723
    %v11828 = vmax.f32 %v11827, %v10731
    %v11829 = vmax.f32 %v11828, %v10739
    %v11830 = vmax.f32 %v11829, %v10747
    %v11831 = vmax.f32 %v11830, %v10755
    %v11832 = vmax.f32 %v11831, %v10763
    %v11833 = vmax.f32 %v11832, %v10771
    %v11834 = vmax.f32 %v11833, %v10779
    %v11835 = vmax.f32 %v11834, %v10787
    %v11836 = vmax.f32 %v11835, %v10795
    %v11837 = vmax.f32 %v11836, %v10803
    %v11838 = vmax.f32 %v11837, %v10811
    %v11839 = vmax.f32 %v11838, %v10819
    %v11840 = vmax.f32 %v11839, %v10827
    %v11841 = vmax.f32 %v11840, %v10835
    %v11842 = vmax.f32 %v11841, %v10843
    %v11843 = vmax.f32 %v11842, %v10851
    %v11844 = vmax.f32 %v11843, %v10859
    %v11845 = vmax.f32 %v11844, %v10867
    %v11846 = vmax.f32 %v11845, %v10875
    %v11847 = vmax.f32 %v11846, %v10883
    %v11848 = vmax.f32 %v11847, %v10891
    %v11849 = vmax.f32 %v11848, %v10899
    %v11850 = vmax.f32 %v11849, %v10907
    %v11851 = vmax.f32 %v11850, %v10915
    %v11852 = vmax.f32 %v11851, %v10923
    %v11853 = vmax.f32 %v11852, %v10931
    %v11854 = vmax.f32 %v11853, %v10939
    %v11855 = vmax.f32 %v11854, %v10947
    %v11856 = vmax.f32 %v11855, %v10955
    %v11857 = vmax.f32 %v11856, %v10963
    %v11858 = vmax.f32 %v11857, %v10971
    %v11859 = vmax.f32 %v11858, %v10979
    %v11860 = vmax.f32 %v11859, %v10987
    %v11861 = vmax.f32 %v11860, %v10995
    %v11862 = vmax.f32 %v11861, %v11003
    %v11863 = vmax.f32 %v11862, %v11011
    %v11864 = vmax.f32 %v11863, %v11019
    %v11865 = vmax.f32 %v11864, %v11027
    %v11866 = vmax.f32 %v11865, %v11035
    %v11867 = vmax.f32 %v11866, %v11043
    %v11868 = vmax.f32 %v11867, %v11051
    %v11869 = vmax.f32 %v11868, %v11059
    %v11870 = vmax.f32 %v11869, %v11067
    %v11871 = vmax.f32 %v11870, %v11075
    %v11872 = vmax.f32 %v11871, %v11083
    %v11873 = vmax.f32 %v11872, %v11091
    %v11874 = vmax.f32 %v11873, %v11099
    %v11875 = vmax.f32 %v11874, %v11107
    %v11876 = vmax.f32 %v11875, %v11115
    %v11877 = vmax.f32 %v11876, %v11123
    %v11878 = vmax.f32 %v11877, %v11131
    %v11879 = vmax.f32 %v11878, %v11139
    %v11880 = vmax.f32 %v11879, %v11147
    %v11881 = vmax.f32 %v11880, %v11155
    %v11882 = vmax.f32 %v11881, %v11163
    %v11883 = vmax.f32 %v11882, %v11171
    %v11884 = vmax.f32 %v11883, %v11179
    %v11885 = vmax.f32 %v11884, %v11187
    %v11886 = vmax.f32 %v11885, %v11195
    %v11887 = vmax.f32 %v11886, %v11203
    %v11888 = vmax.f32 %v11887, %v11211
    %v11889 = vmax.f32 %v11888, %v11219
    %v11890 = vmax.f32 %v11889, %v11227
    %v11891 = vmax.f32 %v11890, %v11235
    %v11892 = vmax.f32 %v11891, %v11243
    %v11893 = vmax.f32 %v11892, %v11251
    %v11894 = vmax.f32 %v11893, %v11259
    %v11895 = vmax.f32 %v11894, %v11267
    %v11896 = vmax.f32 %v11895, %v11275
    %v11897 = vmax.f32 %v11896, %v11283
    %v11898 = vmax.f32 %v11897, %v11291
    %v11899 = vmax.f32 %v11898, %v11299
    %v11900 = vmax.f32 %v11899, %v11307
    %v11901 = vmax.f32 %v11900, %v11315
    %v11902 = vmax.f32 %v11901, %v11323
    %v11903 = vmax.f32 %v11902, %v11331
    %v11904 = vmax.f32 %v11903, %v11339
    %v11905 = vmax.f32 %v11904, %v11347
    %v11906 = vmax.f32 %v11905, %v11355
    %v11907 = vmax.f32 %v11906, %v11363
    %v11908 = vmax.f32 %v11907, %v11371
    %v11909 = vmax.f32 %v11908, %v11379
    %v11910 = vrot.slane %v11909, 4
    %v11911 = vmax.f32 %v11909, %v11910
    %v11912 = vrot.slane %v11911, 2
    %v11913 = vmax.f32 %v11911, %v11912
    %v11914 = vrot.slane %v11913, 1
    %v11915 = vmax.f32 %v11913, %v11914
    %v11916 = vmax.f32 %v10364, %v10372
    %v11917 = vmax.f32 %v11916, %v10380
    %v11918 = vmax.f32 %v11917, %v10388
    %v11919 = vmax.f32 %v11918, %v10396
    %v11920 = vmax.f32 %v11919, %v10404
    %v11921 = vmax.f32 %v11920, %v10412
    %v11922 = vmax.f32 %v11921, %v10420
    %v11923 = vmax.f32 %v11922, %v10428
    %v11924 = vmax.f32 %v11923, %v10436
    %v11925 = vmax.f32 %v11924, %v10444
    %v11926 = vmax.f32 %v11925, %v10452
    %v11927 = vmax.f32 %v11926, %v10460
    %v11928 = vmax.f32 %v11927, %v10468
    %v11929 = vmax.f32 %v11928, %v10476
    %v11930 = vmax.f32 %v11929, %v10484
    %v11931 = vmax.f32 %v11930, %v10492
    %v11932 = vmax.f32 %v11931, %v10500
    %v11933 = vmax.f32 %v11932, %v10508
    %v11934 = vmax.f32 %v11933, %v10516
    %v11935 = vmax.f32 %v11934, %v10524
    %v11936 = vmax.f32 %v11935, %v10532
    %v11937 = vmax.f32 %v11936, %v10540
    %v11938 = vmax.f32 %v11937, %v10548
    %v11939 = vmax.f32 %v11938, %v10556
    %v11940 = vmax.f32 %v11939, %v10564
    %v11941 = vmax.f32 %v11940, %v10572
    %v11942 = vmax.f32 %v11941, %v10580
    %v11943 = vmax.f32 %v11942, %v10588
    %v11944 = vmax.f32 %v11943, %v10596
    %v11945 = vmax.f32 %v11944, %v10604
    %v11946 = vmax.f32 %v11945, %v10612
    %v11947 = vmax.f32 %v11946, %v10620
    %v11948 = vmax.f32 %v11947, %v10628
    %v11949 = vmax.f32 %v11948, %v10636
    %v11950 = vmax.f32 %v11949, %v10644
    %v11951 = vmax.f32 %v11950, %v10652
    %v11952 = vmax.f32 %v11951, %v10660
    %v11953 = vmax.f32 %v11952, %v10668
    %v11954 = vmax.f32 %v11953, %v10676
    %v11955 = vmax.f32 %v11954, %v10684
    %v11956 = vmax.f32 %v11955, %v10692
    %v11957 = vmax.f32 %v11956, %v10700
    %v11958 = vmax.f32 %v11957, %v10708
    %v11959 = vmax.f32 %v11958, %v10716
    %v11960 = vmax.f32 %v11959, %v10724
    %v11961 = vmax.f32 %v11960, %v10732
    %v11962 = vmax.f32 %v11961, %v10740
    %v11963 = vmax.f32 %v11962, %v10748
    %v11964 = vmax.f32 %v11963, %v10756
    %v11965 = vmax.f32 %v11964, %v10764
    %v11966 = vmax.f32 %v11965, %v10772
    %v11967 = vmax.f32 %v11966, %v10780
    %v11968 = vmax.f32 %v11967, %v10788
    %v11969 = vmax.f32 %v11968, %v10796
    %v11970 = vmax.f32 %v11969, %v10804
    %v11971 = vmax.f32 %v11970, %v10812
    %v11972 = vmax.f32 %v11971, %v10820
    %v11973 = vmax.f32 %v11972, %v10828
    %v11974 = vmax.f32 %v11973, %v10836
    %v11975 = vmax.f32 %v11974, %v10844
    %v11976 = vmax.f32 %v11975, %v10852
    %v11977 = vmax.f32 %v11976, %v10860
    %v11978 = vmax.f32 %v11977, %v10868
    %v11979 = vmax.f32 %v11978, %v10876
    %v11980 = vmax.f32 %v11979, %v10884
    %v11981 = vmax.f32 %v11980, %v10892
    %v11982 = vmax.f32 %v11981, %v10900
    %v11983 = vmax.f32 %v11982, %v10908
    %v11984 = vmax.f32 %v11983, %v10916
    %v11985 = vmax.f32 %v11984, %v10924
    %v11986 = vmax.f32 %v11985, %v10932
    %v11987 = vmax.f32 %v11986, %v10940
    %v11988 = vmax.f32 %v11987, %v10948
    %v11989 = vmax.f32 %v11988, %v10956
    %v11990 = vmax.f32 %v11989, %v10964
    %v11991 = vmax.f32 %v11990, %v10972
    %v11992 = vmax.f32 %v11991, %v10980
    %v11993 = vmax.f32 %v11992, %v10988
    %v11994 = vmax.f32 %v11993, %v10996
    %v11995 = vmax.f32 %v11994, %v11004
    %v11996 = vmax.f32 %v11995, %v11012
    %v11997 = vmax.f32 %v11996, %v11020
    %v11998 = vmax.f32 %v11997, %v11028
    %v11999 = vmax.f32 %v11998, %v11036
    %v12000 = vmax.f32 %v11999, %v11044
    %v12001 = vmax.f32 %v12000, %v11052
    %v12002 = vmax.f32 %v12001, %v11060
    %v12003 = vmax.f32 %v12002, %v11068
    %v12004 = vmax.f32 %v12003, %v11076
    %v12005 = vmax.f32 %v12004, %v11084
    %v12006 = vmax.f32 %v12005, %v11092
    %v12007 = vmax.f32 %v12006, %v11100
    %v12008 = vmax.f32 %v12007, %v11108
    %v12009 = vmax.f32 %v12008, %v11116
    %v12010 = vmax.f32 %v12009, %v11124
    %v12011 = vmax.f32 %v12010, %v11132
    %v12012 = vmax.f32 %v12011, %v11140
    %v12013 = vmax.f32 %v12012, %v11148
    %v12014 = vmax.f32 %v12013, %v11156
    %v12015 = vmax.f32 %v12014, %v11164
    %v12016 = vmax.f32 %v12015, %v11172
    %v12017 = vmax.f32 %v12016, %v11180
    %v12018 = vmax.f32 %v12017, %v11188
    %v12019 = vmax.f32 %v12018, %v11196
    %v12020 = vmax.f32 %v12019, %v11204
    %v12021 = vmax.f32 %v12020, %v11212
    %v12022 = vmax.f32 %v12021, %v11220
    %v12023 = vmax.f32 %v12022, %v11228
    %v12024 = vmax.f32 %v12023, %v11236
    %v12025 = vmax.f32 %v12024, %v11244
    %v12026 = vmax.f32 %v12025, %v11252
    %v12027 = vmax.f32 %v12026, %v11260
    %v12028 = vmax.f32 %v12027, %v11268
    %v12029 = vmax.f32 %v12028, %v11276
    %v12030 = vmax.f32 %v12029, %v11284
    %v12031 = vmax.f32 %v12030, %v11292
    %v12032 = vmax.f32 %v12031, %v11300
    %v12033 = vmax.f32 %v12032, %v11308
    %v12034 = vmax.f32 %v12033, %v11316
    %v12035 = vmax.f32 %v12034, %v11324
    %v12036 = vmax.f32 %v12035, %v11332
    %v12037 = vmax.f32 %v12036, %v11340
    %v12038 = vmax.f32 %v12037, %v11348
    %v12039 = vmax.f32 %v12038, %v11356
    %v12040 = vmax.f32 %v12039, %v11364
    %v12041 = vmax.f32 %v12040, %v11372
    %v12042 = vmax.f32 %v12041, %v11380
    %v12043 = vrot.slane %v12042, 4
    %v12044 = vmax.f32 %v12042, %v12043
    %v12045 = vrot.slane %v12044, 2
    %v12046 = vmax.f32 %v12044, %v12045
    %v12047 = vrot.slane %v12046, 1
    %v12048 = vmax.f32 %v12046, %v12047
    %v12049 = vmax.f32 %v10365, %v10373
    %v12050 = vmax.f32 %v12049, %v10381
    %v12051 = vmax.f32 %v12050, %v10389
    %v12052 = vmax.f32 %v12051, %v10397
    %v12053 = vmax.f32 %v12052, %v10405
    %v12054 = vmax.f32 %v12053, %v10413
    %v12055 = vmax.f32 %v12054, %v10421
    %v12056 = vmax.f32 %v12055, %v10429
    %v12057 = vmax.f32 %v12056, %v10437
    %v12058 = vmax.f32 %v12057, %v10445
    %v12059 = vmax.f32 %v12058, %v10453
    %v12060 = vmax.f32 %v12059, %v10461
    %v12061 = vmax.f32 %v12060, %v10469
    %v12062 = vmax.f32 %v12061, %v10477
    %v12063 = vmax.f32 %v12062, %v10485
    %v12064 = vmax.f32 %v12063, %v10493
    %v12065 = vmax.f32 %v12064, %v10501
    %v12066 = vmax.f32 %v12065, %v10509
    %v12067 = vmax.f32 %v12066, %v10517
    %v12068 = vmax.f32 %v12067, %v10525
    %v12069 = vmax.f32 %v12068, %v10533
    %v12070 = vmax.f32 %v12069, %v10541
    %v12071 = vmax.f32 %v12070, %v10549
    %v12072 = vmax.f32 %v12071, %v10557
    %v12073 = vmax.f32 %v12072, %v10565
    %v12074 = vmax.f32 %v12073, %v10573
    %v12075 = vmax.f32 %v12074, %v10581
    %v12076 = vmax.f32 %v12075, %v10589
    %v12077 = vmax.f32 %v12076, %v10597
    %v12078 = vmax.f32 %v12077, %v10605
    %v12079 = vmax.f32 %v12078, %v10613
    %v12080 = vmax.f32 %v12079, %v10621
    %v12081 = vmax.f32 %v12080, %v10629
    %v12082 = vmax.f32 %v12081, %v10637
    %v12083 = vmax.f32 %v12082, %v10645
    %v12084 = vmax.f32 %v12083, %v10653
    %v12085 = vmax.f32 %v12084, %v10661
    %v12086 = vmax.f32 %v12085, %v10669
    %v12087 = vmax.f32 %v12086, %v10677
    %v12088 = vmax.f32 %v12087, %v10685
    %v12089 = vmax.f32 %v12088, %v10693
    %v12090 = vmax.f32 %v12089, %v10701
    %v12091 = vmax.f32 %v12090, %v10709
    %v12092 = vmax.f32 %v12091, %v10717
    %v12093 = vmax.f32 %v12092, %v10725
    %v12094 = vmax.f32 %v12093, %v10733
    %v12095 = vmax.f32 %v12094, %v10741
    %v12096 = vmax.f32 %v12095, %v10749
    %v12097 = vmax.f32 %v12096, %v10757
    %v12098 = vmax.f32 %v12097, %v10765
    %v12099 = vmax.f32 %v12098, %v10773
    %v12100 = vmax.f32 %v12099, %v10781
    %v12101 = vmax.f32 %v12100, %v10789
    %v12102 = vmax.f32 %v12101, %v10797
    %v12103 = vmax.f32 %v12102, %v10805
    %v12104 = vmax.f32 %v12103, %v10813
    %v12105 = vmax.f32 %v12104, %v10821
    %v12106 = vmax.f32 %v12105, %v10829
    %v12107 = vmax.f32 %v12106, %v10837
    %v12108 = vmax.f32 %v12107, %v10845
    %v12109 = vmax.f32 %v12108, %v10853
    %v12110 = vmax.f32 %v12109, %v10861
    %v12111 = vmax.f32 %v12110, %v10869
    %v12112 = vmax.f32 %v12111, %v10877
    %v12113 = vmax.f32 %v12112, %v10885
    %v12114 = vmax.f32 %v12113, %v10893
    %v12115 = vmax.f32 %v12114, %v10901
    %v12116 = vmax.f32 %v12115, %v10909
    %v12117 = vmax.f32 %v12116, %v10917
    %v12118 = vmax.f32 %v12117, %v10925
    %v12119 = vmax.f32 %v12118, %v10933
    %v12120 = vmax.f32 %v12119, %v10941
    %v12121 = vmax.f32 %v12120, %v10949
    %v12122 = vmax.f32 %v12121, %v10957
    %v12123 = vmax.f32 %v12122, %v10965
    %v12124 = vmax.f32 %v12123, %v10973
    %v12125 = vmax.f32 %v12124, %v10981
    %v12126 = vmax.f32 %v12125, %v10989
    %v12127 = vmax.f32 %v12126, %v10997
    %v12128 = vmax.f32 %v12127, %v11005
    %v12129 = vmax.f32 %v12128, %v11013
    %v12130 = vmax.f32 %v12129, %v11021
    %v12131 = vmax.f32 %v12130, %v11029
    %v12132 = vmax.f32 %v12131, %v11037
    %v12133 = vmax.f32 %v12132, %v11045
    %v12134 = vmax.f32 %v12133, %v11053
    %v12135 = vmax.f32 %v12134, %v11061
    %v12136 = vmax.f32 %v12135, %v11069
    %v12137 = vmax.f32 %v12136, %v11077
    %v12138 = vmax.f32 %v12137, %v11085
    %v12139 = vmax.f32 %v12138, %v11093
    %v12140 = vmax.f32 %v12139, %v11101
    %v12141 = vmax.f32 %v12140, %v11109
    %v12142 = vmax.f32 %v12141, %v11117
    %v12143 = vmax.f32 %v12142, %v11125
    %v12144 = vmax.f32 %v12143, %v11133
    %v12145 = vmax.f32 %v12144, %v11141
    %v12146 = vmax.f32 %v12145, %v11149
    %v12147 = vmax.f32 %v12146, %v11157
    %v12148 = vmax.f32 %v12147, %v11165
    %v12149 = vmax.f32 %v12148, %v11173
    %v12150 = vmax.f32 %v12149, %v11181
    %v12151 = vmax.f32 %v12150, %v11189
    %v12152 = vmax.f32 %v12151, %v11197
    %v12153 = vmax.f32 %v12152, %v11205
    %v12154 = vmax.f32 %v12153, %v11213
    %v12155 = vmax.f32 %v12154, %v11221
    %v12156 = vmax.f32 %v12155, %v11229
    %v12157 = vmax.f32 %v12156, %v11237
    %v12158 = vmax.f32 %v12157, %v11245
    %v12159 = vmax.f32 %v12158, %v11253
    %v12160 = vmax.f32 %v12159, %v11261
    %v12161 = vmax.f32 %v12160, %v11269
    %v12162 = vmax.f32 %v12161, %v11277
    %v12163 = vmax.f32 %v12162, %v11285
    %v12164 = vmax.f32 %v12163, %v11293
    %v12165 = vmax.f32 %v12164, %v11301
    %v12166 = vmax.f32 %v12165, %v11309
    %v12167 = vmax.f32 %v12166, %v11317
    %v12168 = vmax.f32 %v12167, %v11325
    %v12169 = vmax.f32 %v12168, %v11333
    %v12170 = vmax.f32 %v12169, %v11341
    %v12171 = vmax.f32 %v12170, %v11349
    %v12172 = vmax.f32 %v12171, %v11357
    %v12173 = vmax.f32 %v12172, %v11365
    %v12174 = vmax.f32 %v12173, %v11373
    %v12175 = vmax.f32 %v12174, %v11381
    %v12176 = vrot.slane %v12175, 4
    %v12177 = vmax.f32 %v12175, %v12176
    %v12178 = vrot.slane %v12177, 2
    %v12179 = vmax.f32 %v12177, %v12178
    %v12180 = vrot.slane %v12179, 1
    %v12181 = vmax.f32 %v12179, %v12180
    %v12182 = vmax.f32 %v10366, %v10374
    %v12183 = vmax.f32 %v12182, %v10382
    %v12184 = vmax.f32 %v12183, %v10390
    %v12185 = vmax.f32 %v12184, %v10398
    %v12186 = vmax.f32 %v12185, %v10406
    %v12187 = vmax.f32 %v12186, %v10414
    %v12188 = vmax.f32 %v12187, %v10422
    %v12189 = vmax.f32 %v12188, %v10430
    %v12190 = vmax.f32 %v12189, %v10438
    %v12191 = vmax.f32 %v12190, %v10446
    %v12192 = vmax.f32 %v12191, %v10454
    %v12193 = vmax.f32 %v12192, %v10462
    %v12194 = vmax.f32 %v12193, %v10470
    %v12195 = vmax.f32 %v12194, %v10478
    %v12196 = vmax.f32 %v12195, %v10486
    %v12197 = vmax.f32 %v12196, %v10494
    %v12198 = vmax.f32 %v12197, %v10502
    %v12199 = vmax.f32 %v12198, %v10510
    %v12200 = vmax.f32 %v12199, %v10518
    %v12201 = vmax.f32 %v12200, %v10526
    %v12202 = vmax.f32 %v12201, %v10534
    %v12203 = vmax.f32 %v12202, %v10542
    %v12204 = vmax.f32 %v12203, %v10550
    %v12205 = vmax.f32 %v12204, %v10558
    %v12206 = vmax.f32 %v12205, %v10566
    %v12207 = vmax.f32 %v12206, %v10574
    %v12208 = vmax.f32 %v12207, %v10582
    %v12209 = vmax.f32 %v12208, %v10590
    %v12210 = vmax.f32 %v12209, %v10598
    %v12211 = vmax.f32 %v12210, %v10606
    %v12212 = vmax.f32 %v12211, %v10614
    %v12213 = vmax.f32 %v12212, %v10622
    %v12214 = vmax.f32 %v12213, %v10630
    %v12215 = vmax.f32 %v12214, %v10638
    %v12216 = vmax.f32 %v12215, %v10646
    %v12217 = vmax.f32 %v12216, %v10654
    %v12218 = vmax.f32 %v12217, %v10662
    %v12219 = vmax.f32 %v12218, %v10670
    %v12220 = vmax.f32 %v12219, %v10678
    %v12221 = vmax.f32 %v12220, %v10686
    %v12222 = vmax.f32 %v12221, %v10694
    %v12223 = vmax.f32 %v12222, %v10702
    %v12224 = vmax.f32 %v12223, %v10710
    %v12225 = vmax.f32 %v12224, %v10718
    %v12226 = vmax.f32 %v12225, %v10726
    %v12227 = vmax.f32 %v12226, %v10734
    %v12228 = vmax.f32 %v12227, %v10742
    %v12229 = vmax.f32 %v12228, %v10750
    %v12230 = vmax.f32 %v12229, %v10758
    %v12231 = vmax.f32 %v12230, %v10766
    %v12232 = vmax.f32 %v12231, %v10774
    %v12233 = vmax.f32 %v12232, %v10782
    %v12234 = vmax.f32 %v12233, %v10790
    %v12235 = vmax.f32 %v12234, %v10798
    %v12236 = vmax.f32 %v12235, %v10806
    %v12237 = vmax.f32 %v12236, %v10814
    %v12238 = vmax.f32 %v12237, %v10822
    %v12239 = vmax.f32 %v12238, %v10830
    %v12240 = vmax.f32 %v12239, %v10838
    %v12241 = vmax.f32 %v12240, %v10846
    %v12242 = vmax.f32 %v12241, %v10854
    %v12243 = vmax.f32 %v12242, %v10862
    %v12244 = vmax.f32 %v12243, %v10870
    %v12245 = vmax.f32 %v12244, %v10878
    %v12246 = vmax.f32 %v12245, %v10886
    %v12247 = vmax.f32 %v12246, %v10894
    %v12248 = vmax.f32 %v12247, %v10902
    %v12249 = vmax.f32 %v12248, %v10910
    %v12250 = vmax.f32 %v12249, %v10918
    %v12251 = vmax.f32 %v12250, %v10926
    %v12252 = vmax.f32 %v12251, %v10934
    %v12253 = vmax.f32 %v12252, %v10942
    %v12254 = vmax.f32 %v12253, %v10950
    %v12255 = vmax.f32 %v12254, %v10958
    %v12256 = vmax.f32 %v12255, %v10966
    %v12257 = vmax.f32 %v12256, %v10974
    %v12258 = vmax.f32 %v12257, %v10982
    %v12259 = vmax.f32 %v12258, %v10990
    %v12260 = vmax.f32 %v12259, %v10998
    %v12261 = vmax.f32 %v12260, %v11006
    %v12262 = vmax.f32 %v12261, %v11014
    %v12263 = vmax.f32 %v12262, %v11022
    %v12264 = vmax.f32 %v12263, %v11030
    %v12265 = vmax.f32 %v12264, %v11038
    %v12266 = vmax.f32 %v12265, %v11046
    %v12267 = vmax.f32 %v12266, %v11054
    %v12268 = vmax.f32 %v12267, %v11062
    %v12269 = vmax.f32 %v12268, %v11070
    %v12270 = vmax.f32 %v12269, %v11078
    %v12271 = vmax.f32 %v12270, %v11086
    %v12272 = vmax.f32 %v12271, %v11094
    %v12273 = vmax.f32 %v12272, %v11102
    %v12274 = vmax.f32 %v12273, %v11110
    %v12275 = vmax.f32 %v12274, %v11118
    %v12276 = vmax.f32 %v12275, %v11126
    %v12277 = vmax.f32 %v12276, %v11134
    %v12278 = vmax.f32 %v12277, %v11142
    %v12279 = vmax.f32 %v12278, %v11150
    %v12280 = vmax.f32 %v12279, %v11158
    %v12281 = vmax.f32 %v12280, %v11166
    %v12282 = vmax.f32 %v12281, %v11174
    %v12283 = vmax.f32 %v12282, %v11182
    %v12284 = vmax.f32 %v12283, %v11190
    %v12285 = vmax.f32 %v12284, %v11198
    %v12286 = vmax.f32 %v12285, %v11206
    %v12287 = vmax.f32 %v12286, %v11214
    %v12288 = vmax.f32 %v12287, %v11222
    %v12289 = vmax.f32 %v12288, %v11230
    %v12290 = vmax.f32 %v12289, %v11238
    %v12291 = vmax.f32 %v12290, %v11246
    %v12292 = vmax.f32 %v12291, %v11254
    %v12293 = vmax.f32 %v12292, %v11262
    %v12294 = vmax.f32 %v12293, %v11270
    %v12295 = vmax.f32 %v12294, %v11278
    %v12296 = vmax.f32 %v12295, %v11286
    %v12297 = vmax.f32 %v12296, %v11294
    %v12298 = vmax.f32 %v12297, %v11302
    %v12299 = vmax.f32 %v12298, %v11310
    %v12300 = vmax.f32 %v12299, %v11318
    %v12301 = vmax.f32 %v12300, %v11326
    %v12302 = vmax.f32 %v12301, %v11334
    %v12303 = vmax.f32 %v12302, %v11342
    %v12304 = vmax.f32 %v12303, %v11350
    %v12305 = vmax.f32 %v12304, %v11358
    %v12306 = vmax.f32 %v12305, %v11366
    %v12307 = vmax.f32 %v12306, %v11374
    %v12308 = vmax.f32 %v12307, %v11382
    %v12309 = vrot.slane %v12308, 4
    %v12310 = vmax.f32 %v12308, %v12309
    %v12311 = vrot.slane %v12310, 2
    %v12312 = vmax.f32 %v12310, %v12311
    %v12313 = vrot.slane %v12312, 1
    %v12314 = vmax.f32 %v12312, %v12313
    %v12315 = vmax.f32 %v10367, %v10375
    %v12316 = vmax.f32 %v12315, %v10383
    %v12317 = vmax.f32 %v12316, %v10391
    %v12318 = vmax.f32 %v12317, %v10399
    %v12319 = vmax.f32 %v12318, %v10407
    %v12320 = vmax.f32 %v12319, %v10415
    %v12321 = vmax.f32 %v12320, %v10423
    %v12322 = vmax.f32 %v12321, %v10431
    %v12323 = vmax.f32 %v12322, %v10439
    %v12324 = vmax.f32 %v12323, %v10447
    %v12325 = vmax.f32 %v12324, %v10455
    %v12326 = vmax.f32 %v12325, %v10463
    %v12327 = vmax.f32 %v12326, %v10471
    %v12328 = vmax.f32 %v12327, %v10479
    %v12329 = vmax.f32 %v12328, %v10487
    %v12330 = vmax.f32 %v12329, %v10495
    %v12331 = vmax.f32 %v12330, %v10503
    %v12332 = vmax.f32 %v12331, %v10511
    %v12333 = vmax.f32 %v12332, %v10519
    %v12334 = vmax.f32 %v12333, %v10527
    %v12335 = vmax.f32 %v12334, %v10535
    %v12336 = vmax.f32 %v12335, %v10543
    %v12337 = vmax.f32 %v12336, %v10551
    %v12338 = vmax.f32 %v12337, %v10559
    %v12339 = vmax.f32 %v12338, %v10567
    %v12340 = vmax.f32 %v12339, %v10575
    %v12341 = vmax.f32 %v12340, %v10583
    %v12342 = vmax.f32 %v12341, %v10591
    %v12343 = vmax.f32 %v12342, %v10599
    %v12344 = vmax.f32 %v12343, %v10607
    %v12345 = vmax.f32 %v12344, %v10615
    %v12346 = vmax.f32 %v12345, %v10623
    %v12347 = vmax.f32 %v12346, %v10631
    %v12348 = vmax.f32 %v12347, %v10639
    %v12349 = vmax.f32 %v12348, %v10647
    %v12350 = vmax.f32 %v12349, %v10655
    %v12351 = vmax.f32 %v12350, %v10663
    %v12352 = vmax.f32 %v12351, %v10671
    %v12353 = vmax.f32 %v12352, %v10679
    %v12354 = vmax.f32 %v12353, %v10687
    %v12355 = vmax.f32 %v12354, %v10695
    %v12356 = vmax.f32 %v12355, %v10703
    %v12357 = vmax.f32 %v12356, %v10711
    %v12358 = vmax.f32 %v12357, %v10719
    %v12359 = vmax.f32 %v12358, %v10727
    %v12360 = vmax.f32 %v12359, %v10735
    %v12361 = vmax.f32 %v12360, %v10743
    %v12362 = vmax.f32 %v12361, %v10751
    %v12363 = vmax.f32 %v12362, %v10759
    %v12364 = vmax.f32 %v12363, %v10767
    %v12365 = vmax.f32 %v12364, %v10775
    %v12366 = vmax.f32 %v12365, %v10783
    %v12367 = vmax.f32 %v12366, %v10791
    %v12368 = vmax.f32 %v12367, %v10799
    %v12369 = vmax.f32 %v12368, %v10807
    %v12370 = vmax.f32 %v12369, %v10815
    %v12371 = vmax.f32 %v12370, %v10823
    %v12372 = vmax.f32 %v12371, %v10831
    %v12373 = vmax.f32 %v12372, %v10839
    %v12374 = vmax.f32 %v12373, %v10847
    %v12375 = vmax.f32 %v12374, %v10855
    %v12376 = vmax.f32 %v12375, %v10863
    %v12377 = vmax.f32 %v12376, %v10871
    %v12378 = vmax.f32 %v12377, %v10879
    %v12379 = vmax.f32 %v12378, %v10887
    %v12380 = vmax.f32 %v12379, %v10895
    %v12381 = vmax.f32 %v12380, %v10903
    %v12382 = vmax.f32 %v12381, %v10911
    %v12383 = vmax.f32 %v12382, %v10919
    %v12384 = vmax.f32 %v12383, %v10927
    %v12385 = vmax.f32 %v12384, %v10935
    %v12386 = vmax.f32 %v12385, %v10943
    %v12387 = vmax.f32 %v12386, %v10951
    %v12388 = vmax.f32 %v12387, %v10959
    %v12389 = vmax.f32 %v12388, %v10967
    %v12390 = vmax.f32 %v12389, %v10975
    %v12391 = vmax.f32 %v12390, %v10983
    %v12392 = vmax.f32 %v12391, %v10991
    %v12393 = vmax.f32 %v12392, %v10999
    %v12394 = vmax.f32 %v12393, %v11007
    %v12395 = vmax.f32 %v12394, %v11015
    %v12396 = vmax.f32 %v12395, %v11023
    %v12397 = vmax.f32 %v12396, %v11031
    %v12398 = vmax.f32 %v12397, %v11039
    %v12399 = vmax.f32 %v12398, %v11047
    %v12400 = vmax.f32 %v12399, %v11055
    %v12401 = vmax.f32 %v12400, %v11063
    %v12402 = vmax.f32 %v12401, %v11071
    %v12403 = vmax.f32 %v12402, %v11079
    %v12404 = vmax.f32 %v12403, %v11087
    %v12405 = vmax.f32 %v12404, %v11095
    %v12406 = vmax.f32 %v12405, %v11103
    %v12407 = vmax.f32 %v12406, %v11111
    %v12408 = vmax.f32 %v12407, %v11119
    %v12409 = vmax.f32 %v12408, %v11127
    %v12410 = vmax.f32 %v12409, %v11135
    %v12411 = vmax.f32 %v12410, %v11143
    %v12412 = vmax.f32 %v12411, %v11151
    %v12413 = vmax.f32 %v12412, %v11159
    %v12414 = vmax.f32 %v12413, %v11167
    %v12415 = vmax.f32 %v12414, %v11175
    %v12416 = vmax.f32 %v12415, %v11183
    %v12417 = vmax.f32 %v12416, %v11191
    %v12418 = vmax.f32 %v12417, %v11199
    %v12419 = vmax.f32 %v12418, %v11207
    %v12420 = vmax.f32 %v12419, %v11215
    %v12421 = vmax.f32 %v12420, %v11223
    %v12422 = vmax.f32 %v12421, %v11231
    %v12423 = vmax.f32 %v12422, %v11239
    %v12424 = vmax.f32 %v12423, %v11247
    %v12425 = vmax.f32 %v12424, %v11255
    %v12426 = vmax.f32 %v12425, %v11263
    %v12427 = vmax.f32 %v12426, %v11271
    %v12428 = vmax.f32 %v12427, %v11279
    %v12429 = vmax.f32 %v12428, %v11287
    %v12430 = vmax.f32 %v12429, %v11295
    %v12431 = vmax.f32 %v12430, %v11303
    %v12432 = vmax.f32 %v12431, %v11311
    %v12433 = vmax.f32 %v12432, %v11319
    %v12434 = vmax.f32 %v12433, %v11327
    %v12435 = vmax.f32 %v12434, %v11335
    %v12436 = vmax.f32 %v12435, %v11343
    %v12437 = vmax.f32 %v12436, %v11351
    %v12438 = vmax.f32 %v12437, %v11359
    %v12439 = vmax.f32 %v12438, %v11367
    %v12440 = vmax.f32 %v12439, %v11375
    %v12441 = vmax.f32 %v12440, %v11383
    %v12442 = vrot.slane %v12441, 4
    %v12443 = vmax.f32 %v12441, %v12442
    %v12444 = vrot.slane %v12443, 2
    %v12445 = vmax.f32 %v12443, %v12444
    %v12446 = vrot.slane %v12445, 1
    %v12447 = vmax.f32 %v12445, %v12446
    %vm12448 = vcmask 1040384
    %v12449 = vsel %vm12448, %v8660, %v11516
    %v12450 = vsel %vm12448, %v8793, %v11649
    %v12451 = vsel %vm12448, %v8926, %v11782
    %v12452 = vsel %vm12448, %v9059, %v11915
    %v12453 = vsel %vm12448, %v9192, %v12048
    %v12454 = vsel %vm12448, %v9325, %v12181
    %v12455 = vsel %vm12448, %v9458, %v12314
    %v12456 = vsel %vm12448, %v9591, %v12447
    %v12457 = vld [vmem:[#allocation2] sm:$0xff]
    %v12458 = vld [vmem:[#allocation2 + $0x8] sm:$0xff]
    %v12467 = vcombine.low %v12449, %v12450
    %v12468 = vcombine.low %v12451, %v12452
    %v12470 = vunpack.c.l.s4 1983009808
    %v12471 = vunpack.c.0.s8 %v12470
    %v12472 = vlaneseq
    %v12473 = vshrl.u32 %v12472, 7
    %v12474 = vsub.s32 %v12471, %v12473
    %v12475 = vrot.slane %v12467, %v12474
    %v12477 = vunpack.c.l.s4 1983009808
    %v12478 = vunpack.c.0.s8 %v12477
    %v12479 = vlaneseq
    %v12480 = vshrl.u32 %v12479, 7
    %v12481 = vsub.s32 %v12478, %v12480
    %v12482 = vrot.slane %v12468, %v12481
    %v12483 = vcombine.low %v12475, %v12482
    %v12484 = vcombine.low %v12453, %v12454
    %v12485 = vcombine.low %v12455, %v12456
    %v12487 = vunpack.c.l.s4 1983009808
    %v12488 = vunpack.c.0.s8 %v12487
    %v12489 = vlaneseq
    %v12490 = vshrl.u32 %v12489, 7
    %v12491 = vsub.s32 %v12488, %v12490
    %v12492 = vrot.slane %v12484, %v12491
    %v12494 = vunpack.c.l.s4 1983009808
    %v12495 = vunpack.c.0.s8 %v12494
    %v12496 = vlaneseq
    %v12497 = vshrl.u32 %v12496, 7
    %v12498 = vsub.s32 %v12495, %v12497
    %v12499 = vrot.slane %v12485, %v12498
    %v12500 = vcombine.low %v12492, %v12499
    %v12503 = vmax.f32 %v12457, %v12483
    %v12504 = vmax.f32 %v12458, %v12500
    %12505 = vst [vmem:[#allocation2] sm:$0xff] %v12503
    %12506 = vst [vmem:[#allocation2 + $0x8] sm:$0xff] %v12504
    // Predicated region
    $region38: #{tpu_custom_call.1} parent=1 // pred_check
      _
    $region39: #{tpu_custom_call.1} parent=1 // pred_check_branch
      %12508 = sbr.rel (0) target = $region41
    $region40: #{tpu_custom_call.1} parent=1 // pred_region
      %s12510 = ssub.s32 256, 256
      %12511 = vsyncadd [#allocation3], %s12510
      %s12513 = sshll.u32 [#allocation2], 4
      %s12514 = int_to_ptr.vmem [resolvable:$true] %s12513
      %12516 = dma.vmem_to_hbm [thread:$0]  %s12514, 256, %s8, [#allocation3]
    $region41: #{tpu_custom_call.1} parent=1 // pred_fallthru
      _
    // Predicated region
    $region42: #{tpu_custom_call.1} parent=1 // pred_check
      _
    $region43: #{tpu_custom_call.1} parent=1 // pred_check_branch
      %12518 = sbr.rel (0) target = $region45
    $region44: #{tpu_custom_call.1} parent=1 // pred_region
      %12519 = dma.done [#allocation3], 256
    $region45: #{tpu_custom_call.1} parent=1 // pred_fallthru
      _
    %12520 = vsyncpa [#allocation3], 1

</llo_original>
